<compile_context>
chip_gen: v6e
topology: v6e:2x2x1
jax: 0.10.0
libtpu: 0.0.40
codegen_flags: <defaults>
</compile_context>

<pallas_src>
import math

import jax
import jax.numpy as jnp
from jax import lax
from jax.experimental import pallas as pl
from jax.experimental.pallas import tpu as pltpu


# ----------------------------- Pallas kernel ---------------------------------

def _fasttext_lstm_kernel(x_ref,      # (T*Bp, Ip)   bf16, time-major flattened input
                          len_ref,    # (Bp, 1)      int32 sequence lengths
                          wih_ref,    # (Ip, 4Hp)    bf16, W_ih^T (gate-padded)
                          whh_ref,    # (Hp, 4Hp)    bf16, W_hh^T (gate-padded)
                          b_ref,      # (1, 4Hp)     f32,  b_ih + b_hh (gate-padded)
                          wcls_ref,   # (1, Hp)      f32,  classifier weight row
                          bcls_ref,   # (1, 1)       f32,  classifier bias
                          out_ref,    # (Bp, 1)      f32,  final logits
                          xp_scr):    # (T*Bp, 4Hp)  f32,  hoisted input projection
    TBp, fourHp = xp_scr.shape
    Bp = len_ref.shape[0]
    Hp = fourHp // 4
    T = TBp // Bp

    # ---- 1) Hoisted input projection: one large parallel MXU matmul over all timesteps,
    #         bias fused. Stored f32 so the recurrence only adds the h-projection.
    xp_scr[...] = (jnp.dot(x_ref[...], wih_ref[...],
                           preferred_element_type=jnp.float32)
                   + b_ref[...])

    last_step = len_ref[...] - 1                     # (Bp, 1) int32

    # ---- 2) Recurrence: small h @ W_hh^T matmul + gate math per step, fully unrolled.
    def step(t, carry):
        h, c, lasts = carry
        start = pl.multiple_of(t * Bp, Bp)
        xp_t = xp_scr[pl.ds(start, Bp), :]           # (Bp, 4Hp) f32
        gates = xp_t + jnp.dot(h.astype(jnp.bfloat16), whh_ref[...],
                               preferred_element_type=jnp.float32)

        # PyTorch gate order i, f, g, o; slice starts are 128-lane aligned (Hp = 384).
        gi = gates[:, 0 * Hp:1 * Hp]
        gf = gates[:, 1 * Hp:2 * Hp]
        gg = gates[:, 2 * Hp:3 * Hp]
        go = gates[:, 3 * Hp:4 * Hp]

        # sigmoid(x) = 0.5 * tanh(0.5 * x) + 0.5   (single EUP op per gate)
        i_g = 0.5 * jnp.tanh(0.5 * gi) + 0.5
        f_g = 0.5 * jnp.tanh(0.5 * gf) + 0.5
        o_g = 0.5 * jnp.tanh(0.5 * go) + 0.5
        g_g = jnp.tanh(gg)

        c_new = f_g * c + i_g * g_g
        h_new = o_g * jnp.tanh(c_new)

        # capture h at the last valid timestep of each sequence (one vsel per step)
        lasts_new = jnp.where(last_step == t, h_new, lasts)
        return h_new, c_new, lasts_new

    zeros = jnp.zeros((Bp, Hp), jnp.float32)
    _, _, lasts = lax.fori_loop(0, T, step, (zeros, zeros, zeros), unroll=True)

    # ---- 3) Head: ReLU -> Linear(300, 1). Tiny; VPU mul + XLU lane-reduce (MXU at M=8,
    #         N=1 would be pure drain latency).
    feat = jnp.maximum(lasts, 0.0)
    out_ref[...] = (jnp.sum(feat * wcls_ref[...], axis=1, keepdims=True)
                    + bcls_ref[...])


# ------------------------------- wrapper --------------------------------------

def fasttext_lstm_forward(x, lengths, params):
    """x: (B, T, I) float32 (batch_first), lengths: (B,) int with 1 <= lengths <= T.
    Returns (B,) float32 logits (matches torch .squeeze() for B > 1)."""
    B, T, I = x.shape
    H = params["whh"].shape[1]               # whh is (4H, H) torch layout
    assert params["wih"].shape == (4 * H, I)

    LANE, SUB = 128, 8
    Hp = ((H + LANE - 1) // LANE) * LANE     # 300 -> 384  (4Hp = 1536 = 12 x 128)
    Ip = ((I + LANE - 1) // LANE) * LANE     # 300 -> 384
    Bp = ((B + SUB - 1) // SUB) * SUB        # 2   -> 8

    # time-major, pad batch & feature dims, flatten so step t occupies rows [t*Bp, (t+1)*Bp)
    x_tm = jnp.swapaxes(x.astype(jnp.float32), 0, 1)               # (T, B, I)
    x_tm = jnp.pad(x_tm, ((0, 0), (0, Bp - B), (0, Ip - I)))       # (T, Bp, Ip)
    x_flat = x_tm.reshape(T * Bp, Ip).astype(jnp.bfloat16)         # (T*Bp, Ip)

    def pad_gates_kn(w):
        # w: (4H, K) torch layout (gates i,f,g,o stacked) -> (K, 4Hp), each gate padded to Hp
        K = w.shape[1]
        w4 = w.reshape(4, H, K)
        w4 = jnp.pad(w4, ((0, 0), (0, Hp - H), (0, 0)))            # (4, Hp, K)
        return jnp.swapaxes(w4.reshape(4 * Hp, K), 0, 1)           # (K, 4Hp)

    wih_t = jnp.pad(pad_gates_kn(params["wih"].astype(jnp.float32)),
                    ((0, Ip - I), (0, 0))).astype(jnp.bfloat16)    # (Ip, 4Hp)
    whh_t = jnp.pad(pad_gates_kn(params["whh"].astype(jnp.float32)),
                    ((0, Hp - H), (0, 0))).astype(jnp.bfloat16)    # (Hp, 4Hp)

    b = (params["b_ih"] + params["b_hh"]).astype(jnp.float32).reshape(4, H)
    b = jnp.pad(b, ((0, 0), (0, Hp - H))).reshape(1, 4 * Hp)       # (1, 4Hp)

    wcls = jnp.pad(params["wcls"].astype(jnp.float32).reshape(1, H),
                   ((0, 0), (0, Hp - H)))                          # (1, Hp)
    bcls = params["bcls"].astype(jnp.float32).reshape(1, 1)        # (1, 1)

    # padded batch rows get length 1 (their outputs are sliced off below)
    len2d = jnp.pad(lengths.astype(jnp.int32).reshape(B, 1),
                    ((0, Bp - B), (0, 0)), constant_values=1)

    vmem = pl.BlockSpec(memory_space=pltpu.MemorySpace.VMEM)
    out = pl.pallas_call(
        _fasttext_lstm_kernel,
        out_shape=jax.ShapeDtypeStruct((Bp, 1), jnp.float32),
        in_specs=[vmem] * 7,
        out_specs=vmem,
        scratch_shapes=[pltpu.VMEM((T * Bp, 4 * Hp), jnp.float32)],   # hoisted x-projection
    )(x_flat, len2d, wih_t, whh_t, b, wcls, bcls)

    return out[:B, 0]


# ------------------------- parameter init (deterministic) ---------------------

def init_params(key, input_size=300, hidden_size=300):
    I, H = input_size, hidden_size
    k_lstm = 1.0 / math.sqrt(H)
    k_cls = 1.0 / math.sqrt(H)
    ks = jax.random.split(key, 6)
    return {
        "wih": jax.random.uniform(ks[0], (4 * H, I), jnp.float32, -k_lstm, k_lstm),
        "whh": jax.random.uniform(ks[1], (4 * H, H), jnp.float32, -k_lstm, k_lstm),
        "b_ih": jax.random.uniform(ks[2], (4 * H,), jnp.float32, -k_lstm, k_lstm),
        "b_hh": jax.random.uniform(ks[3], (4 * H,), jnp.float32, -k_lstm, k_lstm),
        "wcls": jax.random.uniform(ks[4], (1, H), jnp.float32, -k_cls, k_cls),
        "bcls": jax.random.uniform(ks[5], (1,), jnp.float32, -k_cls, k_cls),
    }


# ------------------------------ pure-JAX reference -----------------------------

def fasttext_lstm_ref(x, lengths, params):
    B, T, I = x.shape
    H = params["whh"].shape[1]
    wih, whh = params["wih"], params["whh"]
    b = params["b_ih"] + params["b_hh"]

    def step(carry, x_t):
        h, c = carry
        gates = x_t @ wih.T + h @ whh.T + b
        i = jax.nn.sigmoid(gates[:, 0 * H:1 * H])
        f = jax.nn.sigmoid(gates[:, 1 * H:2 * H])
        g = jnp.tanh(gates[:, 2 * H:3 * H])
        o = jax.nn.sigmoid(gates[:, 3 * H:4 * H])
        c = f * c + i * g
        h = o * jnp.tanh(c)
        return (h, c), h

    init = (jnp.zeros((B, H), jnp.float32), jnp.zeros((B, H), jnp.float32))
    _, outs = lax.scan(step, init, jnp.swapaxes(x, 0, 1))
    outs = jnp.swapaxes(outs, 0, 1)                       # (B, T, H)
    lasts = outs[jnp.arange(B), lengths - 1]              # (B, H)
    feat = jnp.maximum(lasts, 0.0)
    return (feat @ params["wcls"].T + params["bcls"]).squeeze()


# ------------------------------------ main -------------------------------------

if __name__ == "__main__":
    key = jax.random.PRNGKey(0)
    k_param, k_x = jax.random.split(key)

    B, T, I, H = 2, 8, 300, 300   # fixed by the module: input_size=hidden_size=300
    params = init_params(k_param, I, H)

    x = jax.random.normal(k_x, (B, T, I), dtype=jnp.float32)
    lengths = jnp.array([5, 8], dtype=jnp.int32)

    out = fasttext_lstm_forward(x, lengths, params)
    out = jax.block_until_ready(out)

    ref = fasttext_lstm_ref(x, lengths, params)
    assert out.shape == (B,)
    assert jnp.allclose(out, ref, rtol=2e-2, atol=2e-2), (out, ref)

    print("KERNEL_OK")
</pallas_src>

<mosaic_0001>
module attributes {stable_mosaic.version = 11 : i64} {
  func.func @_fasttext_lstm_kernel(%arg0: memref<64x384xbf16, #tpu.memory_space<vmem>>, %arg1: memref<8x1xi32, #tpu.memory_space<vmem>>, %arg2: memref<384x1536xbf16, #tpu.memory_space<vmem>>, %arg3: memref<384x1536xbf16, #tpu.memory_space<vmem>>, %arg4: memref<1x1536xf32, #tpu.memory_space<vmem>>, %arg5: memref<1x384xf32, #tpu.memory_space<vmem>>, %arg6: memref<1x1xf32, #tpu.memory_space<vmem>>, %arg7: memref<8x1xf32, #tpu.memory_space<vmem>>, %arg8: memref<64x1536xf32, #tpu.memory_space<vmem>>) attributes {dimension_semantics = [], scalar_prefetch = 0 : i64, scratch_operands = 1 : i64, tpu.core_type = #tpu.core_type<tc>} {
    %c0 = arith.constant 0 : index
    %c0_0 = arith.constant 0 : index
    %0 = vector.load %arg0[%c0, %c0_0] : memref<64x384xbf16, #tpu.memory_space<vmem>>, vector<64x384xbf16>
    %c0_1 = arith.constant 0 : index
    %c0_2 = arith.constant 0 : index
    %1 = vector.load %arg2[%c0_1, %c0_2] : memref<384x1536xbf16, #tpu.memory_space<vmem>>, vector<384x1536xbf16>
    %cst = arith.constant dense<0.000000e+00> : vector<64x1536xf32>
    %2 = tpu.matmul %0, %1, %cst {dimension_numbers = #tpu.dot_dimension_numbers<[1], [0], [0], [1], [0, 0, 1, 1], [], []>} : vector<64x384xbf16>, vector<384x1536xbf16>, vector<64x1536xf32> -> vector<64x1536xf32>
    %c0_3 = arith.constant 0 : index
    %c0_4 = arith.constant 0 : index
    %3 = vector.load %arg4[%c0_3, %c0_4] : memref<1x1536xf32, #tpu.memory_space<vmem>>, vector<1x1536xf32>
    %4 = vector.broadcast %3 : vector<1x1536xf32> to vector<64x1536xf32>
    %5 = arith.addf %2, %4 : vector<64x1536xf32>
    %c0_5 = arith.constant 0 : index
    %c0_6 = arith.constant 0 : index
    %6 = vector.load %arg8[%c0_5, %c0_6] : memref<64x1536xf32, #tpu.memory_space<vmem>>, vector<64x1536xf32>
    tpu.vector_store %arg8[%c0_5, %c0_6], %5 {strides = array<i32>} : memref<64x1536xf32, #tpu.memory_space<vmem>>, vector<64x1536xf32>,
    %c0_7 = arith.constant 0 : index
    %c0_8 = arith.constant 0 : index
    %7 = vector.load %arg1[%c0_7, %c0_8] : memref<8x1xi32, #tpu.memory_space<vmem>>, vector<8x1xi32>
    %c1_i32 = arith.constant 1 : i32
    %8 = vector.broadcast %c1_i32 : i32 to vector<8x1xi32>
    %9 = arith.subi %7, %8 : vector<8x1xi32>
    %cst_9 = arith.constant 0.000000e+00 : f32
    %10 = vector.broadcast %cst_9 : f32 to vector<8x384xf32>
    %c0_i32 = arith.constant 0 : i32
    %c8_i32 = arith.constant 8 : i32
    %11 = arith.muli %c0_i32, %c8_i32 : i32
    %12 = tpu.assume_multiple %11, 8 : i32
    %13 = arith.index_cast %12 : i32 to index
    %c0_10 = arith.constant 0 : index
    %14 = vector.load %arg8[%13, %c0_10] : memref<64x1536xf32, #tpu.memory_space<vmem>>, vector<8x1536xf32>
    %15 = arith.truncf %10 : vector<8x384xf32> to vector<8x384xbf16>
    %c0_11 = arith.constant 0 : index
    %c0_12 = arith.constant 0 : index
    %16 = vector.load %arg3[%c0_11, %c0_12] : memref<384x1536xbf16, #tpu.memory_space<vmem>>, vector<384x1536xbf16>
    %cst_13 = arith.constant dense<0.000000e+00> : vector<8x1536xf32>
    %17 = tpu.matmul %15, %16, %cst_13 {dimension_numbers = #tpu.dot_dimension_numbers<[1], [0], [0], [1], [0, 0, 1, 1], [], []>} : vector<8x384xbf16>, vector<384x1536xbf16>, vector<8x1536xf32> -> vector<8x1536xf32>
    %18 = arith.addf %14, %17 : vector<8x1536xf32>
    %19 = vector.extract_strided_slice %18 {offsets = [0, 0], sizes = [8, 384], strides = [1, 1]} : vector<8x1536xf32> to vector<8x384xf32>
    %20 = vector.extract_strided_slice %18 {offsets = [0, 384], sizes = [8, 384], strides = [1, 1]} : vector<8x1536xf32> to vector<8x384xf32>
    %21 = vector.extract_strided_slice %18 {offsets = [0, 768], sizes = [8, 384], strides = [1, 1]} : vector<8x1536xf32> to vector<8x384xf32>
    %22 = vector.extract_strided_slice %18 {offsets = [0, 1152], sizes = [8, 384], strides = [1, 1]} : vector<8x1536xf32> to vector<8x384xf32>
    %cst_14 = arith.constant 5.000000e-01 : f32
    %23 = vector.broadcast %cst_14 : f32 to vector<8x384xf32>
    %24 = arith.mulf %23, %19 : vector<8x384xf32>
    %25 = math.tanh %24 : vector<8x384xf32>
    %cst_15 = arith.constant 5.000000e-01 : f32
    %26 = vector.broadcast %cst_15 : f32 to vector<8x384xf32>
    %27 = arith.mulf %26, %25 : vector<8x384xf32>
    %cst_16 = arith.constant 5.000000e-01 : f32
    %28 = vector.broadcast %cst_16 : f32 to vector<8x384xf32>
    %29 = arith.addf %27, %28 : vector<8x384xf32>
    %cst_17 = arith.constant 5.000000e-01 : f32
    %30 = vector.broadcast %cst_17 : f32 to vector<8x384xf32>
    %31 = arith.mulf %30, %20 : vector<8x384xf32>
    %32 = math.tanh %31 : vector<8x384xf32>
    %cst_18 = arith.constant 5.000000e-01 : f32
    %33 = vector.broadcast %cst_18 : f32 to vector<8x384xf32>
    %34 = arith.mulf %33, %32 : vector<8x384xf32>
    %cst_19 = arith.constant 5.000000e-01 : f32
    %35 = vector.broadcast %cst_19 : f32 to vector<8x384xf32>
    %36 = arith.addf %34, %35 : vector<8x384xf32>
    %cst_20 = arith.constant 5.000000e-01 : f32
    %37 = vector.broadcast %cst_20 : f32 to vector<8x384xf32>
    %38 = arith.mulf %37, %22 : vector<8x384xf32>
    %39 = math.tanh %38 : vector<8x384xf32>
    %cst_21 = arith.constant 5.000000e-01 : f32
    %40 = vector.broadcast %cst_21 : f32 to vector<8x384xf32>
    %41 = arith.mulf %40, %39 : vector<8x384xf32>
    %cst_22 = arith.constant 5.000000e-01 : f32
    %42 = vector.broadcast %cst_22 : f32 to vector<8x384xf32>
    %43 = arith.addf %41, %42 : vector<8x384xf32>
    %44 = math.tanh %21 : vector<8x384xf32>
    %45 = arith.mulf %36, %10 : vector<8x384xf32>
    %46 = arith.mulf %29, %44 : vector<8x384xf32>
    %47 = arith.addf %45, %46 : vector<8x384xf32>
    %48 = math.tanh %47 : vector<8x384xf32>
    %49 = arith.mulf %43, %48 : vector<8x384xf32>
    %50 = vector.broadcast %c0_i32 : i32 to vector<8x1xi32>
    %51 = arith.cmpi eq, %9, %50 : vector<8x1xi32>
    %52 = vector.shape_cast %51 : vector<8x1xi1> to vector<8x1xi1>
    %53 = vector.broadcast %52 : vector<8x1xi1> to vector<8x384xi1>
    %54 = arith.select %53, %49, %10 : vector<8x384xi1>, vector<8x384xf32>
    %c1_i32_23 = arith.constant 1 : i32
    %c8_i32_24 = arith.constant 8 : i32
    %55 = arith.muli %c1_i32_23, %c8_i32_24 : i32
    %56 = tpu.assume_multiple %55, 8 : i32
    %57 = arith.index_cast %56 : i32 to index
    %c0_25 = arith.constant 0 : index
    %58 = vector.load %arg8[%57, %c0_25] : memref<64x1536xf32, #tpu.memory_space<vmem>>, vector<8x1536xf32>
    %59 = arith.truncf %49 : vector<8x384xf32> to vector<8x384xbf16>
    %c0_26 = arith.constant 0 : index
    %c0_27 = arith.constant 0 : index
    %60 = vector.load %arg3[%c0_26, %c0_27] : memref<384x1536xbf16, #tpu.memory_space<vmem>>, vector<384x1536xbf16>
    %cst_28 = arith.constant dense<0.000000e+00> : vector<8x1536xf32>
    %61 = tpu.matmul %59, %60, %cst_28 {dimension_numbers = #tpu.dot_dimension_numbers<[1], [0], [0], [1], [0, 0, 1, 1], [], []>} : vector<8x384xbf16>, vector<384x1536xbf16>, vector<8x1536xf32> -> vector<8x1536xf32>
    %62 = arith.addf %58, %61 : vector<8x1536xf32>
    %63 = vector.extract_strided_slice %62 {offsets = [0, 0], sizes = [8, 384], strides = [1, 1]} : vector<8x1536xf32> to vector<8x384xf32>
    %64 = vector.extract_strided_slice %62 {offsets = [0, 384], sizes = [8, 384], strides = [1, 1]} : vector<8x1536xf32> to vector<8x384xf32>
    %65 = vector.extract_strided_slice %62 {offsets = [0, 768], sizes = [8, 384], strides = [1, 1]} : vector<8x1536xf32> to vector<8x384xf32>
    %66 = vector.extract_strided_slice %62 {offsets = [0, 1152], sizes = [8, 384], strides = [1, 1]} : vector<8x1536xf32> to vector<8x384xf32>
    %cst_29 = arith.constant 5.000000e-01 : f32
    %67 = vector.broadcast %cst_29 : f32 to vector<8x384xf32>
    %68 = arith.mulf %67, %63 : vector<8x384xf32>
    %69 = math.tanh %68 : vector<8x384xf32>
    %cst_30 = arith.constant 5.000000e-01 : f32
    %70 = vector.broadcast %cst_30 : f32 to vector<8x384xf32>
    %71 = arith.mulf %70, %69 : vector<8x384xf32>
    %cst_31 = arith.constant 5.000000e-01 : f32
    %72 = vector.broadcast %cst_31 : f32 to vector<8x384xf32>
    %73 = arith.addf %71, %72 : vector<8x384xf32>
    %cst_32 = arith.constant 5.000000e-01 : f32
    %74 = vector.broadcast %cst_32 : f32 to vector<8x384xf32>
    %75 = arith.mulf %74, %64 : vector<8x384xf32>
    %76 = math.tanh %75 : vector<8x384xf32>
    %cst_33 = arith.constant 5.000000e-01 : f32
    %77 = vector.broadcast %cst_33 : f32 to vector<8x384xf32>
    %78 = arith.mulf %77, %76 : vector<8x384xf32>
    %cst_34 = arith.constant 5.000000e-01 : f32
    %79 = vector.broadcast %cst_34 : f32 to vector<8x384xf32>
    %80 = arith.addf %78, %79 : vector<8x384xf32>
    %cst_35 = arith.constant 5.000000e-01 : f32
    %81 = vector.broadcast %cst_35 : f32 to vector<8x384xf32>
    %82 = arith.mulf %81, %66 : vector<8x384xf32>
    %83 = math.tanh %82 : vector<8x384xf32>
    %cst_36 = arith.constant 5.000000e-01 : f32
    %84 = vector.broadcast %cst_36 : f32 to vector<8x384xf32>
    %85 = arith.mulf %84, %83 : vector<8x384xf32>
    %cst_37 = arith.constant 5.000000e-01 : f32
    %86 = vector.broadcast %cst_37 : f32 to vector<8x384xf32>
    %87 = arith.addf %85, %86 : vector<8x384xf32>
    %88 = math.tanh %65 : vector<8x384xf32>
    %89 = arith.mulf %80, %47 : vector<8x384xf32>
    %90 = arith.mulf %73, %88 : vector<8x384xf32>
    %91 = arith.addf %89, %90 : vector<8x384xf32>
    %92 = math.tanh %91 : vector<8x384xf32>
    %93 = arith.mulf %87, %92 : vector<8x384xf32>
    %94 = vector.broadcast %c1_i32_23 : i32 to vector<8x1xi32>
    %95 = arith.cmpi eq, %9, %94 : vector<8x1xi32>
    %96 = vector.shape_cast %95 : vector<8x1xi1> to vector<8x1xi1>
    %97 = vector.broadcast %96 : vector<8x1xi1> to vector<8x384xi1>
    %98 = arith.select %97, %93, %54 : vector<8x384xi1>, vector<8x384xf32>
    %c2_i32 = arith.constant 2 : i32
    %c8_i32_38 = arith.constant 8 : i32
    %99 = arith.muli %c2_i32, %c8_i32_38 : i32
    %100 = tpu.assume_multiple %99, 8 : i32
    %101 = arith.index_cast %100 : i32 to index
    %c0_39 = arith.constant 0 : index
    %102 = vector.load %arg8[%101, %c0_39] : memref<64x1536xf32, #tpu.memory_space<vmem>>, vector<8x1536xf32>
    %103 = arith.truncf %93 : vector<8x384xf32> to vector<8x384xbf16>
    %c0_40 = arith.constant 0 : index
    %c0_41 = arith.constant 0 : index
    %104 = vector.load %arg3[%c0_40, %c0_41] : memref<384x1536xbf16, #tpu.memory_space<vmem>>, vector<384x1536xbf16>
    %cst_42 = arith.constant dense<0.000000e+00> : vector<8x1536xf32>
    %105 = tpu.matmul %103, %104, %cst_42 {dimension_numbers = #tpu.dot_dimension_numbers<[1], [0], [0], [1], [0, 0, 1, 1], [], []>} : vector<8x384xbf16>, vector<384x1536xbf16>, vector<8x1536xf32> -> vector<8x1536xf32>
    %106 = arith.addf %102, %105 : vector<8x1536xf32>
    %107 = vector.extract_strided_slice %106 {offsets = [0, 0], sizes = [8, 384], strides = [1, 1]} : vector<8x1536xf32> to vector<8x384xf32>
    %108 = vector.extract_strided_slice %106 {offsets = [0, 384], sizes = [8, 384], strides = [1, 1]} : vector<8x1536xf32> to vector<8x384xf32>
    %109 = vector.extract_strided_slice %106 {offsets = [0, 768], sizes = [8, 384], strides = [1, 1]} : vector<8x1536xf32> to vector<8x384xf32>
    %110 = vector.extract_strided_slice %106 {offsets = [0, 1152], sizes = [8, 384], strides = [1, 1]} : vector<8x1536xf32> to vector<8x384xf32>
    %cst_43 = arith.constant 5.000000e-01 : f32
    %111 = vector.broadcast %cst_43 : f32 to vector<8x384xf32>
    %112 = arith.mulf %111, %107 : vector<8x384xf32>
    %113 = math.tanh %112 : vector<8x384xf32>
    %cst_44 = arith.constant 5.000000e-01 : f32
    %114 = vector.broadcast %cst_44 : f32 to vector<8x384xf32>
    %115 = arith.mulf %114, %113 : vector<8x384xf32>
    %cst_45 = arith.constant 5.000000e-01 : f32
    %116 = vector.broadcast %cst_45 : f32 to vector<8x384xf32>
    %117 = arith.addf %115, %116 : vector<8x384xf32>
    %cst_46 = arith.constant 5.000000e-01 : f32
    %118 = vector.broadcast %cst_46 : f32 to vector<8x384xf32>
    %119 = arith.mulf %118, %108 : vector<8x384xf32>
    %120 = math.tanh %119 : vector<8x384xf32>
    %cst_47 = arith.constant 5.000000e-01 : f32
    %121 = vector.broadcast %cst_47 : f32 to vector<8x384xf32>
    %122 = arith.mulf %121, %120 : vector<8x384xf32>
    %cst_48 = arith.constant 5.000000e-01 : f32
    %123 = vector.broadcast %cst_48 : f32 to vector<8x384xf32>
    %124 = arith.addf %122, %123 : vector<8x384xf32>
    %cst_49 = arith.constant 5.000000e-01 : f32
    %125 = vector.broadcast %cst_49 : f32 to vector<8x384xf32>
    %126 = arith.mulf %125, %110 : vector<8x384xf32>
    %127 = math.tanh %126 : vector<8x384xf32>
    %cst_50 = arith.constant 5.000000e-01 : f32
    %128 = vector.broadcast %cst_50 : f32 to vector<8x384xf32>
    %129 = arith.mulf %128, %127 : vector<8x384xf32>
    %cst_51 = arith.constant 5.000000e-01 : f32
    %130 = vector.broadcast %cst_51 : f32 to vector<8x384xf32>
    %131 = arith.addf %129, %130 : vector<8x384xf32>
    %132 = math.tanh %109 : vector<8x384xf32>
    %133 = arith.mulf %124, %91 : vector<8x384xf32>
    %134 = arith.mulf %117, %132 : vector<8x384xf32>
    %135 = arith.addf %133, %134 : vector<8x384xf32>
    %136 = math.tanh %135 : vector<8x384xf32>
    %137 = arith.mulf %131, %136 : vector<8x384xf32>
    %138 = vector.broadcast %c2_i32 : i32 to vector<8x1xi32>
    %139 = arith.cmpi eq, %9, %138 : vector<8x1xi32>
    %140 = vector.shape_cast %139 : vector<8x1xi1> to vector<8x1xi1>
    %141 = vector.broadcast %140 : vector<8x1xi1> to vector<8x384xi1>
    %142 = arith.select %141, %137, %98 : vector<8x384xi1>, vector<8x384xf32>
    %c3_i32 = arith.constant 3 : i32
    %c8_i32_52 = arith.constant 8 : i32
    %143 = arith.muli %c3_i32, %c8_i32_52 : i32
    %144 = tpu.assume_multiple %143, 8 : i32
    %145 = arith.index_cast %144 : i32 to index
    %c0_53 = arith.constant 0 : index
    %146 = vector.load %arg8[%145, %c0_53] : memref<64x1536xf32, #tpu.memory_space<vmem>>, vector<8x1536xf32>
    %147 = arith.truncf %137 : vector<8x384xf32> to vector<8x384xbf16>
    %c0_54 = arith.constant 0 : index
    %c0_55 = arith.constant 0 : index
    %148 = vector.load %arg3[%c0_54, %c0_55] : memref<384x1536xbf16, #tpu.memory_space<vmem>>, vector<384x1536xbf16>
    %cst_56 = arith.constant dense<0.000000e+00> : vector<8x1536xf32>
    %149 = tpu.matmul %147, %148, %cst_56 {dimension_numbers = #tpu.dot_dimension_numbers<[1], [0], [0], [1], [0, 0, 1, 1], [], []>} : vector<8x384xbf16>, vector<384x1536xbf16>, vector<8x1536xf32> -> vector<8x1536xf32>
    %150 = arith.addf %146, %149 : vector<8x1536xf32>
    %151 = vector.extract_strided_slice %150 {offsets = [0, 0], sizes = [8, 384], strides = [1, 1]} : vector<8x1536xf32> to vector<8x384xf32>
    %152 = vector.extract_strided_slice %150 {offsets = [0, 384], sizes = [8, 384], strides = [1, 1]} : vector<8x1536xf32> to vector<8x384xf32>
    %153 = vector.extract_strided_slice %150 {offsets = [0, 768], sizes = [8, 384], strides = [1, 1]} : vector<8x1536xf32> to vector<8x384xf32>
    %154 = vector.extract_strided_slice %150 {offsets = [0, 1152], sizes = [8, 384], strides = [1, 1]} : vector<8x1536xf32> to vector<8x384xf32>
    %cst_57 = arith.constant 5.000000e-01 : f32
    %155 = vector.broadcast %cst_57 : f32 to vector<8x384xf32>
    %156 = arith.mulf %155, %151 : vector<8x384xf32>
    %157 = math.tanh %156 : vector<8x384xf32>
    %cst_58 = arith.constant 5.000000e-01 : f32
    %158 = vector.broadcast %cst_58 : f32 to vector<8x384xf32>
    %159 = arith.mulf %158, %157 : vector<8x384xf32>
    %cst_59 = arith.constant 5.000000e-01 : f32
    %160 = vector.broadcast %cst_59 : f32 to vector<8x384xf32>
    %161 = arith.addf %159, %160 : vector<8x384xf32>
    %cst_60 = arith.constant 5.000000e-01 : f32
    %162 = vector.broadcast %cst_60 : f32 to vector<8x384xf32>
    %163 = arith.mulf %162, %152 : vector<8x384xf32>
    %164 = math.tanh %163 : vector<8x384xf32>
    %cst_61 = arith.constant 5.000000e-01 : f32
    %165 = vector.broadcast %cst_61 : f32 to vector<8x384xf32>
    %166 = arith.mulf %165, %164 : vector<8x384xf32>
    %cst_62 = arith.constant 5.000000e-01 : f32
    %167 = vector.broadcast %cst_62 : f32 to vector<8x384xf32>
    %168 = arith.addf %166, %167 : vector<8x384xf32>
    %cst_63 = arith.constant 5.000000e-01 : f32
    %169 = vector.broadcast %cst_63 : f32 to vector<8x384xf32>
    %170 = arith.mulf %169, %154 : vector<8x384xf32>
    %171 = math.tanh %170 : vector<8x384xf32>
    %cst_64 = arith.constant 5.000000e-01 : f32
    %172 = vector.broadcast %cst_64 : f32 to vector<8x384xf32>
    %173 = arith.mulf %172, %171 : vector<8x384xf32>
    %cst_65 = arith.constant 5.000000e-01 : f32
    %174 = vector.broadcast %cst_65 : f32 to vector<8x384xf32>
    %175 = arith.addf %173, %174 : vector<8x384xf32>
    %176 = math.tanh %153 : vector<8x384xf32>
    %177 = arith.mulf %168, %135 : vector<8x384xf32>
    %178 = arith.mulf %161, %176 : vector<8x384xf32>
    %179 = arith.addf %177, %178 : vector<8x384xf32>
    %180 = math.tanh %179 : vector<8x384xf32>
    %181 = arith.mulf %175, %180 : vector<8x384xf32>
    %182 = vector.broadcast %c3_i32 : i32 to vector<8x1xi32>
    %183 = arith.cmpi eq, %9, %182 : vector<8x1xi32>
    %184 = vector.shape_cast %183 : vector<8x1xi1> to vector<8x1xi1>
    %185 = vector.broadcast %184 : vector<8x1xi1> to vector<8x384xi1>
    %186 = arith.select %185, %181, %142 : vector<8x384xi1>, vector<8x384xf32>
    %c4_i32 = arith.constant 4 : i32
    %c8_i32_66 = arith.constant 8 : i32
    %187 = arith.muli %c4_i32, %c8_i32_66 : i32
    %188 = tpu.assume_multiple %187, 8 : i32
    %189 = arith.index_cast %188 : i32 to index
    %c0_67 = arith.constant 0 : index
    %190 = vector.load %arg8[%189, %c0_67] : memref<64x1536xf32, #tpu.memory_space<vmem>>, vector<8x1536xf32>
    %191 = arith.truncf %181 : vector<8x384xf32> to vector<8x384xbf16>
    %c0_68 = arith.constant 0 : index
    %c0_69 = arith.constant 0 : index
    %192 = vector.load %arg3[%c0_68, %c0_69] : memref<384x1536xbf16, #tpu.memory_space<vmem>>, vector<384x1536xbf16>
    %cst_70 = arith.constant dense<0.000000e+00> : vector<8x1536xf32>
    %193 = tpu.matmul %191, %192, %cst_70 {dimension_numbers = #tpu.dot_dimension_numbers<[1], [0], [0], [1], [0, 0, 1, 1], [], []>} : vector<8x384xbf16>, vector<384x1536xbf16>, vector<8x1536xf32> -> vector<8x1536xf32>
    %194 = arith.addf %190, %193 : vector<8x1536xf32>
    %195 = vector.extract_strided_slice %194 {offsets = [0, 0], sizes = [8, 384], strides = [1, 1]} : vector<8x1536xf32> to vector<8x384xf32>
    %196 = vector.extract_strided_slice %194 {offsets = [0, 384], sizes = [8, 384], strides = [1, 1]} : vector<8x1536xf32> to vector<8x384xf32>
    %197 = vector.extract_strided_slice %194 {offsets = [0, 768], sizes = [8, 384], strides = [1, 1]} : vector<8x1536xf32> to vector<8x384xf32>
    %198 = vector.extract_strided_slice %194 {offsets = [0, 1152], sizes = [8, 384], strides = [1, 1]} : vector<8x1536xf32> to vector<8x384xf32>
    %cst_71 = arith.constant 5.000000e-01 : f32
    %199 = vector.broadcast %cst_71 : f32 to vector<8x384xf32>
    %200 = arith.mulf %199, %195 : vector<8x384xf32>
    %201 = math.tanh %200 : vector<8x384xf32>
    %cst_72 = arith.constant 5.000000e-01 : f32
    %202 = vector.broadcast %cst_72 : f32 to vector<8x384xf32>
    %203 = arith.mulf %202, %201 : vector<8x384xf32>
    %cst_73 = arith.constant 5.000000e-01 : f32
    %204 = vector.broadcast %cst_73 : f32 to vector<8x384xf32>
    %205 = arith.addf %203, %204 : vector<8x384xf32>
    %cst_74 = arith.constant 5.000000e-01 : f32
    %206 = vector.broadcast %cst_74 : f32 to vector<8x384xf32>
    %207 = arith.mulf %206, %196 : vector<8x384xf32>
    %208 = math.tanh %207 : vector<8x384xf32>
    %cst_75 = arith.constant 5.000000e-01 : f32
    %209 = vector.broadcast %cst_75 : f32 to vector<8x384xf32>
    %210 = arith.mulf %209, %208 : vector<8x384xf32>
    %cst_76 = arith.constant 5.000000e-01 : f32
    %211 = vector.broadcast %cst_76 : f32 to vector<8x384xf32>
    %212 = arith.addf %210, %211 : vector<8x384xf32>
    %cst_77 = arith.constant 5.000000e-01 : f32
    %213 = vector.broadcast %cst_77 : f32 to vector<8x384xf32>
    %214 = arith.mulf %213, %198 : vector<8x384xf32>
    %215 = math.tanh %214 : vector<8x384xf32>
    %cst_78 = arith.constant 5.000000e-01 : f32
    %216 = vector.broadcast %cst_78 : f32 to vector<8x384xf32>
    %217 = arith.mulf %216, %215 : vector<8x384xf32>
    %cst_79 = arith.constant 5.000000e-01 : f32
    %218 = vector.broadcast %cst_79 : f32 to vector<8x384xf32>
    %219 = arith.addf %217, %218 : vector<8x384xf32>
    %220 = math.tanh %197 : vector<8x384xf32>
    %221 = arith.mulf %212, %179 : vector<8x384xf32>
    %222 = arith.mulf %205, %220 : vector<8x384xf32>
    %223 = arith.addf %221, %222 : vector<8x384xf32>
    %224 = math.tanh %223 : vector<8x384xf32>
    %225 = arith.mulf %219, %224 : vector<8x384xf32>
    %226 = vector.broadcast %c4_i32 : i32 to vector<8x1xi32>
    %227 = arith.cmpi eq, %9, %226 : vector<8x1xi32>
    %228 = vector.shape_cast %227 : vector<8x1xi1> to vector<8x1xi1>
    %229 = vector.broadcast %228 : vector<8x1xi1> to vector<8x384xi1>
    %230 = arith.select %229, %225, %186 : vector<8x384xi1>, vector<8x384xf32>
    %c5_i32 = arith.constant 5 : i32
    %c8_i32_80 = arith.constant 8 : i32
    %231 = arith.muli %c5_i32, %c8_i32_80 : i32
    %232 = tpu.assume_multiple %231, 8 : i32
    %233 = arith.index_cast %232 : i32 to index
    %c0_81 = arith.constant 0 : index
    %234 = vector.load %arg8[%233, %c0_81] : memref<64x1536xf32, #tpu.memory_space<vmem>>, vector<8x1536xf32>
    %235 = arith.truncf %225 : vector<8x384xf32> to vector<8x384xbf16>
    %c0_82 = arith.constant 0 : index
    %c0_83 = arith.constant 0 : index
    %236 = vector.load %arg3[%c0_82, %c0_83] : memref<384x1536xbf16, #tpu.memory_space<vmem>>, vector<384x1536xbf16>
    %cst_84 = arith.constant dense<0.000000e+00> : vector<8x1536xf32>
    %237 = tpu.matmul %235, %236, %cst_84 {dimension_numbers = #tpu.dot_dimension_numbers<[1], [0], [0], [1], [0, 0, 1, 1], [], []>} : vector<8x384xbf16>, vector<384x1536xbf16>, vector<8x1536xf32> -> vector<8x1536xf32>
    %238 = arith.addf %234, %237 : vector<8x1536xf32>
    %239 = vector.extract_strided_slice %238 {offsets = [0, 0], sizes = [8, 384], strides = [1, 1]} : vector<8x1536xf32> to vector<8x384xf32>
    %240 = vector.extract_strided_slice %238 {offsets = [0, 384], sizes = [8, 384], strides = [1, 1]} : vector<8x1536xf32> to vector<8x384xf32>
    %241 = vector.extract_strided_slice %238 {offsets = [0, 768], sizes = [8, 384], strides = [1, 1]} : vector<8x1536xf32> to vector<8x384xf32>
    %242 = vector.extract_strided_slice %238 {offsets = [0, 1152], sizes = [8, 384], strides = [1, 1]} : vector<8x1536xf32> to vector<8x384xf32>
    %cst_85 = arith.constant 5.000000e-01 : f32
    %243 = vector.broadcast %cst_85 : f32 to vector<8x384xf32>
    %244 = arith.mulf %243, %239 : vector<8x384xf32>
    %245 = math.tanh %244 : vector<8x384xf32>
    %cst_86 = arith.constant 5.000000e-01 : f32
    %246 = vector.broadcast %cst_86 : f32 to vector<8x384xf32>
    %247 = arith.mulf %246, %245 : vector<8x384xf32>
    %cst_87 = arith.constant 5.000000e-01 : f32
    %248 = vector.broadcast %cst_87 : f32 to vector<8x384xf32>
    %249 = arith.addf %247, %248 : vector<8x384xf32>
    %cst_88 = arith.constant 5.000000e-01 : f32
    %250 = vector.broadcast %cst_88 : f32 to vector<8x384xf32>
    %251 = arith.mulf %250, %240 : vector<8x384xf32>
    %252 = math.tanh %251 : vector<8x384xf32>
    %cst_89 = arith.constant 5.000000e-01 : f32
    %253 = vector.broadcast %cst_89 : f32 to vector<8x384xf32>
    %254 = arith.mulf %253, %252 : vector<8x384xf32>
    %cst_90 = arith.constant 5.000000e-01 : f32
    %255 = vector.broadcast %cst_90 : f32 to vector<8x384xf32>
    %256 = arith.addf %254, %255 : vector<8x384xf32>
    %cst_91 = arith.constant 5.000000e-01 : f32
    %257 = vector.broadcast %cst_91 : f32 to vector<8x384xf32>
    %258 = arith.mulf %257, %242 : vector<8x384xf32>
    %259 = math.tanh %258 : vector<8x384xf32>
    %cst_92 = arith.constant 5.000000e-01 : f32
    %260 = vector.broadcast %cst_92 : f32 to vector<8x384xf32>
    %261 = arith.mulf %260, %259 : vector<8x384xf32>
    %cst_93 = arith.constant 5.000000e-01 : f32
    %262 = vector.broadcast %cst_93 : f32 to vector<8x384xf32>
    %263 = arith.addf %261, %262 : vector<8x384xf32>
    %264 = math.tanh %241 : vector<8x384xf32>
    %265 = arith.mulf %256, %223 : vector<8x384xf32>
    %266 = arith.mulf %249, %264 : vector<8x384xf32>
    %267 = arith.addf %265, %266 : vector<8x384xf32>
    %268 = math.tanh %267 : vector<8x384xf32>
    %269 = arith.mulf %263, %268 : vector<8x384xf32>
    %270 = vector.broadcast %c5_i32 : i32 to vector<8x1xi32>
    %271 = arith.cmpi eq, %9, %270 : vector<8x1xi32>
    %272 = vector.shape_cast %271 : vector<8x1xi1> to vector<8x1xi1>
    %273 = vector.broadcast %272 : vector<8x1xi1> to vector<8x384xi1>
    %274 = arith.select %273, %269, %230 : vector<8x384xi1>, vector<8x384xf32>
    %c6_i32 = arith.constant 6 : i32
    %c8_i32_94 = arith.constant 8 : i32
    %275 = arith.muli %c6_i32, %c8_i32_94 : i32
    %276 = tpu.assume_multiple %275, 8 : i32
    %277 = arith.index_cast %276 : i32 to index
    %c0_95 = arith.constant 0 : index
    %278 = vector.load %arg8[%277, %c0_95] : memref<64x1536xf32, #tpu.memory_space<vmem>>, vector<8x1536xf32>
    %279 = arith.truncf %269 : vector<8x384xf32> to vector<8x384xbf16>
    %c0_96 = arith.constant 0 : index
    %c0_97 = arith.constant 0 : index
    %280 = vector.load %arg3[%c0_96, %c0_97] : memref<384x1536xbf16, #tpu.memory_space<vmem>>, vector<384x1536xbf16>
    %cst_98 = arith.constant dense<0.000000e+00> : vector<8x1536xf32>
    %281 = tpu.matmul %279, %280, %cst_98 {dimension_numbers = #tpu.dot_dimension_numbers<[1], [0], [0], [1], [0, 0, 1, 1], [], []>} : vector<8x384xbf16>, vector<384x1536xbf16>, vector<8x1536xf32> -> vector<8x1536xf32>
    %282 = arith.addf %278, %281 : vector<8x1536xf32>
    %283 = vector.extract_strided_slice %282 {offsets = [0, 0], sizes = [8, 384], strides = [1, 1]} : vector<8x1536xf32> to vector<8x384xf32>
    %284 = vector.extract_strided_slice %282 {offsets = [0, 384], sizes = [8, 384], strides = [1, 1]} : vector<8x1536xf32> to vector<8x384xf32>
    %285 = vector.extract_strided_slice %282 {offsets = [0, 768], sizes = [8, 384], strides = [1, 1]} : vector<8x1536xf32> to vector<8x384xf32>
    %286 = vector.extract_strided_slice %282 {offsets = [0, 1152], sizes = [8, 384], strides = [1, 1]} : vector<8x1536xf32> to vector<8x384xf32>
    %cst_99 = arith.constant 5.000000e-01 : f32
    %287 = vector.broadcast %cst_99 : f32 to vector<8x384xf32>
    %288 = arith.mulf %287, %283 : vector<8x384xf32>
    %289 = math.tanh %288 : vector<8x384xf32>
    %cst_100 = arith.constant 5.000000e-01 : f32
    %290 = vector.broadcast %cst_100 : f32 to vector<8x384xf32>
    %291 = arith.mulf %290, %289 : vector<8x384xf32>
    %cst_101 = arith.constant 5.000000e-01 : f32
    %292 = vector.broadcast %cst_101 : f32 to vector<8x384xf32>
    %293 = arith.addf %291, %292 : vector<8x384xf32>
    %cst_102 = arith.constant 5.000000e-01 : f32
    %294 = vector.broadcast %cst_102 : f32 to vector<8x384xf32>
    %295 = arith.mulf %294, %284 : vector<8x384xf32>
    %296 = math.tanh %295 : vector<8x384xf32>
    %cst_103 = arith.constant 5.000000e-01 : f32
    %297 = vector.broadcast %cst_103 : f32 to vector<8x384xf32>
    %298 = arith.mulf %297, %296 : vector<8x384xf32>
    %cst_104 = arith.constant 5.000000e-01 : f32
    %299 = vector.broadcast %cst_104 : f32 to vector<8x384xf32>
    %300 = arith.addf %298, %299 : vector<8x384xf32>
    %cst_105 = arith.constant 5.000000e-01 : f32
    %301 = vector.broadcast %cst_105 : f32 to vector<8x384xf32>
    %302 = arith.mulf %301, %286 : vector<8x384xf32>
    %303 = math.tanh %302 : vector<8x384xf32>
    %cst_106 = arith.constant 5.000000e-01 : f32
    %304 = vector.broadcast %cst_106 : f32 to vector<8x384xf32>
    %305 = arith.mulf %304, %303 : vector<8x384xf32>
    %cst_107 = arith.constant 5.000000e-01 : f32
    %306 = vector.broadcast %cst_107 : f32 to vector<8x384xf32>
    %307 = arith.addf %305, %306 : vector<8x384xf32>
    %308 = math.tanh %285 : vector<8x384xf32>
    %309 = arith.mulf %300, %267 : vector<8x384xf32>
    %310 = arith.mulf %293, %308 : vector<8x384xf32>
    %311 = arith.addf %309, %310 : vector<8x384xf32>
    %312 = math.tanh %311 : vector<8x384xf32>
    %313 = arith.mulf %307, %312 : vector<8x384xf32>
    %314 = vector.broadcast %c6_i32 : i32 to vector<8x1xi32>
    %315 = arith.cmpi eq, %9, %314 : vector<8x1xi32>
    %316 = vector.shape_cast %315 : vector<8x1xi1> to vector<8x1xi1>
    %317 = vector.broadcast %316 : vector<8x1xi1> to vector<8x384xi1>
    %318 = arith.select %317, %313, %274 : vector<8x384xi1>, vector<8x384xf32>
    %c7_i32 = arith.constant 7 : i32
    %c8_i32_108 = arith.constant 8 : i32
    %319 = arith.muli %c7_i32, %c8_i32_108 : i32
    %320 = tpu.assume_multiple %319, 8 : i32
    %321 = arith.index_cast %320 : i32 to index
    %c0_109 = arith.constant 0 : index
    %322 = vector.load %arg8[%321, %c0_109] : memref<64x1536xf32, #tpu.memory_space<vmem>>, vector<8x1536xf32>
    %323 = arith.truncf %313 : vector<8x384xf32> to vector<8x384xbf16>
    %c0_110 = arith.constant 0 : index
    %c0_111 = arith.constant 0 : index
    %324 = vector.load %arg3[%c0_110, %c0_111] : memref<384x1536xbf16, #tpu.memory_space<vmem>>, vector<384x1536xbf16>
    %cst_112 = arith.constant dense<0.000000e+00> : vector<8x1536xf32>
    %325 = tpu.matmul %323, %324, %cst_112 {dimension_numbers = #tpu.dot_dimension_numbers<[1], [0], [0], [1], [0, 0, 1, 1], [], []>} : vector<8x384xbf16>, vector<384x1536xbf16>, vector<8x1536xf32> -> vector<8x1536xf32>
    %326 = arith.addf %322, %325 : vector<8x1536xf32>
    %327 = vector.extract_strided_slice %326 {offsets = [0, 0], sizes = [8, 384], strides = [1, 1]} : vector<8x1536xf32> to vector<8x384xf32>
    %328 = vector.extract_strided_slice %326 {offsets = [0, 384], sizes = [8, 384], strides = [1, 1]} : vector<8x1536xf32> to vector<8x384xf32>
    %329 = vector.extract_strided_slice %326 {offsets = [0, 768], sizes = [8, 384], strides = [1, 1]} : vector<8x1536xf32> to vector<8x384xf32>
    %330 = vector.extract_strided_slice %326 {offsets = [0, 1152], sizes = [8, 384], strides = [1, 1]} : vector<8x1536xf32> to vector<8x384xf32>
    %cst_113 = arith.constant 5.000000e-01 : f32
    %331 = vector.broadcast %cst_113 : f32 to vector<8x384xf32>
    %332 = arith.mulf %331, %327 : vector<8x384xf32>
    %333 = math.tanh %332 : vector<8x384xf32>
    %cst_114 = arith.constant 5.000000e-01 : f32
    %334 = vector.broadcast %cst_114 : f32 to vector<8x384xf32>
    %335 = arith.mulf %334, %333 : vector<8x384xf32>
    %cst_115 = arith.constant 5.000000e-01 : f32
    %336 = vector.broadcast %cst_115 : f32 to vector<8x384xf32>
    %337 = arith.addf %335, %336 : vector<8x384xf32>
    %cst_116 = arith.constant 5.000000e-01 : f32
    %338 = vector.broadcast %cst_116 : f32 to vector<8x384xf32>
    %339 = arith.mulf %338, %328 : vector<8x384xf32>
    %340 = math.tanh %339 : vector<8x384xf32>
    %cst_117 = arith.constant 5.000000e-01 : f32
    %341 = vector.broadcast %cst_117 : f32 to vector<8x384xf32>
    %342 = arith.mulf %341, %340 : vector<8x384xf32>
    %cst_118 = arith.constant 5.000000e-01 : f32
    %343 = vector.broadcast %cst_118 : f32 to vector<8x384xf32>
    %344 = arith.addf %342, %343 : vector<8x384xf32>
    %cst_119 = arith.constant 5.000000e-01 : f32
    %345 = vector.broadcast %cst_119 : f32 to vector<8x384xf32>
    %346 = arith.mulf %345, %330 : vector<8x384xf32>
    %347 = math.tanh %346 : vector<8x384xf32>
    %cst_120 = arith.constant 5.000000e-01 : f32
    %348 = vector.broadcast %cst_120 : f32 to vector<8x384xf32>
    %349 = arith.mulf %348, %347 : vector<8x384xf32>
    %cst_121 = arith.constant 5.000000e-01 : f32
    %350 = vector.broadcast %cst_121 : f32 to vector<8x384xf32>
    %351 = arith.addf %349, %350 : vector<8x384xf32>
    %352 = math.tanh %329 : vector<8x384xf32>
    %353 = arith.mulf %344, %311 : vector<8x384xf32>
    %354 = arith.mulf %337, %352 : vector<8x384xf32>
    %355 = arith.addf %353, %354 : vector<8x384xf32>
    %356 = math.tanh %355 : vector<8x384xf32>
    %357 = arith.mulf %351, %356 : vector<8x384xf32>
    %358 = vector.broadcast %c7_i32 : i32 to vector<8x1xi32>
    %359 = arith.cmpi eq, %9, %358 : vector<8x1xi32>
    %360 = vector.shape_cast %359 : vector<8x1xi1> to vector<8x1xi1>
    %361 = vector.broadcast %360 : vector<8x1xi1> to vector<8x384xi1>
    %362 = arith.select %361, %357, %318 : vector<8x384xi1>, vector<8x384xf32>
    %c8_i32_122 = arith.constant 8 : i32
    %cst_123 = arith.constant 0.000000e+00 : f32
    %363 = vector.broadcast %cst_123 : f32 to vector<8x384xf32>
    %364 = arith.maximumf %362, %363 : vector<8x384xf32>
    %c0_124 = arith.constant 0 : index
    %c0_125 = arith.constant 0 : index
    %365 = vector.load %arg5[%c0_124, %c0_125] : memref<1x384xf32, #tpu.memory_space<vmem>>, vector<1x384xf32>
    %366 = vector.broadcast %365 : vector<1x384xf32> to vector<8x384xf32>
    %367 = arith.mulf %364, %366 : vector<8x384xf32>
    %cst_126 = arith.constant dense<0.000000e+00> : vector<8xf32>
    %368 = vector.multi_reduction <add>, %367, %cst_126 [1] : vector<8x384xf32> to vector<8xf32>
    %369 = vector.shape_cast %368 : vector<8xf32> to vector<8x1xf32>
    %c0_127 = arith.constant 0 : index
    %c0_128 = arith.constant 0 : index
    %370 = vector.load %arg6[%c0_127, %c0_128] : memref<1x1xf32, #tpu.memory_space<vmem>>, vector<1x1xf32>
    %371 = vector.broadcast %370 : vector<1x1xf32> to vector<8x1xf32>
    %372 = arith.addf %369, %371 : vector<8x1xf32>
    %c0_129 = arith.constant 0 : index
    %c0_130 = arith.constant 0 : index
    %373 = vector.load %arg7[%c0_129, %c0_130] : memref<8x1xf32, #tpu.memory_space<vmem>>, vector<8x1xf32>
    tpu.vector_store %arg7[%c0_129, %c0_130], %372 {strides = array<i32>} : memref<8x1xf32, #tpu.memory_space<vmem>>, vector<8x1xf32>,
    return
  }
}

</mosaic_0001>

<llo_original>
// kernel: tpu_custom_call.1
$region0: #{tpu_custom_call.1}
  #allocation0 [shape = 'u32[]', space=smem, size = 0x4, offset = 0x4, fixed_abs, tag = 'smem constant byte address 0x4 - core index']
  #allocation1 [shape = 'u32[144,128]{1,0:T(1,128)}', space=vmem, size = 0x12000, scoped, tag = 'internal scratch']
  #allocation2 [shape = 'f32[64,1536]{1,0:T(8,128)}', space=vmem, size = 0x60000, scoped, tag = 'scratch operand']
  #allocation3 [shape = 'f32[1,1]{1,0:T(1,128)S(1)}', space=vmem, size = 0x200, scoped, tag = 'scoped memory for tpu_custom_call.1']
  %s0 = inlined_call_operand.hbm [shape: bf16[64,384], index: 0, kind: input, shape index: {}]
  %s1 = inlined_call_operand.vmem [shape: s32[8,1], index: 1, kind: input, shape index: {}]
  %s2 = inlined_call_operand.hbm [shape: bf16[384,1536], index: 2, kind: input, shape index: {}]
  %s3 = inlined_call_operand.hbm [shape: bf16[384,1536], index: 3, kind: input, shape index: {}]
  %s4 = inlined_call_operand.hbm [shape: f32[1,1536], index: 4, kind: input, shape index: {}]
  %s5 = inlined_call_operand.hbm [shape: f32[1,384], index: 5, kind: input, shape index: {}]
  %s6 = inlined_call_operand.<no memory space> [shape: f32[1,1], index: 6, kind: input, shape index: {}]
  %s7 = inlined_call_operand.vmem [shape: f32[8,1], index: 7, kind: output, shape index: {}]
  %s8 = sld [smem:[#allocation0]]
  $region58: #{tpu_custom_call.1} parent=0
    _
  %s10 = ssub.s32 1, %s8
  %s11 = scalar_select 0, %s10, %s8
  %v12 = vstv %s6
  %13 = vst [vmem:[#allocation3] sm:$0x1] %v12
  $region1: #{tpu_custom_call.1} parent=0
    #allocation4 [shape = 'u8[49152]{0}', space=vmem, size = 0xc000, scoped, tag = 'input window, operand 0, single buffered']
    #allocation5 [shape = 's32[1]{0}', space=sflag, size = 0x4, scoped, tag = 'scoped memory for tpu_custom_call.1']
    #allocation6 [shape = 'u8[1179648]{0}', space=vmem, size = 0x120000, scoped, tag = 'input window, operand 2, single buffered']
    #allocation7 [shape = 's32[1]{0}', space=sflag, size = 0x4, scoped, tag = 'scoped memory for tpu_custom_call.1']
    #allocation8 [shape = 'u8[1179648]{0}', space=vmem, size = 0x120000, scoped, tag = 'input window, operand 3, single buffered']
    #allocation9 [shape = 'u8[6144]{0}', space=vmem, size = 0x1800, scoped, tag = 'input window, operand 4, single buffered']
    #allocation10 [shape = 's32[1]{0}', space=sflag, size = 0x4, scoped, tag = 'scoped memory for tpu_custom_call.1']
    #allocation11 [shape = 'u8[1536]{0}', space=vmem, size = 0x800, scoped, tag = 'input window, operand 5, single buffered']
    %14 = vsyncpa [#allocation5], 0
    %15 = vsyncpa [#allocation7], 0
    %16 = vsyncpa [#allocation10], 0
    // Predicated region
    $region2: #{tpu_custom_call.1} parent=1 // pred_check
      _
    $region3: #{tpu_custom_call.1} parent=1 // pred_check_branch
      %18 = sbr.rel (0) target = $region5
    $region4: #{tpu_custom_call.1} parent=1 // pred_region
      %s20 = ssub.s32 1536, 1536
      %21 = vsyncadd [#allocation5], %s20
      %s22 = sshll.u32 [#allocation4], 4
      %s23 = int_to_ptr.vmem [resolvable:$true] %s22
      %28 = dma.hbm_to_vmem [thread:$0]  %s0, 1536, %s23, [#allocation5], 192, 192, 12
    $region5: #{tpu_custom_call.1} parent=1 // pred_fallthru
      _
    // Predicated region
    $region6: #{tpu_custom_call.1} parent=1 // pred_check
      _
    $region7: #{tpu_custom_call.1} parent=1 // pred_check_branch
      %30 = sbr.rel (0) target = $region9
    $region8: #{tpu_custom_call.1} parent=1 // pred_region
      _
    $region9: #{tpu_custom_call.1} parent=1 // pred_fallthru
      _
    // Predicated region
    $region10: #{tpu_custom_call.1} parent=1 // pred_check
      _
    $region11: #{tpu_custom_call.1} parent=1 // pred_check_branch
      %32 = sbr.rel (0) target = $region13
    $region12: #{tpu_custom_call.1} parent=1 // pred_region
      %s34 = ssub.s32 36864, 36864
      %35 = vsyncadd [#allocation7], %s34
      %s36 = sshll.u32 [#allocation6], 4
      %s37 = int_to_ptr.vmem [resolvable:$true] %s36
      %42 = dma.hbm_to_vmem [thread:$0]  %s2, 36864, %s37, [#allocation7], 768, 768, 48
    $region13: #{tpu_custom_call.1} parent=1 // pred_fallthru
      _
    // Predicated region
    $region14: #{tpu_custom_call.1} parent=1 // pred_check
      _
    $region15: #{tpu_custom_call.1} parent=1 // pred_check_branch
      %44 = sbr.rel (0) target = $region17
    $region16: #{tpu_custom_call.1} parent=1 // pred_region
      %s46 = ssub.s32 36864, 36864
      %47 = vsyncadd [#allocation7], %s46
      %s48 = sshll.u32 [#allocation8], 4
      %s49 = int_to_ptr.vmem [resolvable:$true] %s48
      %54 = dma.hbm_to_vmem [thread:$0]  %s3, 36864, %s49, [#allocation7], 768, 768, 48
    $region17: #{tpu_custom_call.1} parent=1 // pred_fallthru
      _
    // Predicated region
    $region18: #{tpu_custom_call.1} parent=1 // pred_check
      _
    $region19: #{tpu_custom_call.1} parent=1 // pred_check_branch
      %56 = sbr.rel (0) target = $region21
    $region20: #{tpu_custom_call.1} parent=1 // pred_region
      %s58 = ssub.s32 192, 192
      %59 = vsyncadd [#allocation10], %s58
      %s61 = sshll.u32 [#allocation9], 4
      %s62 = int_to_ptr.vmem [resolvable:$true] %s61
      %64 = dma.hbm_to_vmem [thread:$0]  %s4, 192, %s62, [#allocation10]
    $region21: #{tpu_custom_call.1} parent=1 // pred_fallthru
      _
    // Predicated region
    $region22: #{tpu_custom_call.1} parent=1 // pred_check
      _
    $region23: #{tpu_custom_call.1} parent=1 // pred_check_branch
      %66 = sbr.rel (0) target = $region25
    $region24: #{tpu_custom_call.1} parent=1 // pred_region
      %s68 = ssub.s32 48, 48
      %69 = vsyncadd [#allocation10], %s68
      %s71 = sshll.u32 [#allocation11], 4
      %s72 = int_to_ptr.vmem [resolvable:$true] %s71
      %74 = dma.hbm_to_vmem [thread:$0]  %s5, 48, %s72, [#allocation10]
    $region25: #{tpu_custom_call.1} parent=1 // pred_fallthru
      _
    // Predicated region
    $region26: #{tpu_custom_call.1} parent=1 // pred_check
      _
    $region27: #{tpu_custom_call.1} parent=1 // pred_check_branch
      %76 = sbr.rel (0) target = $region29
    $region28: #{tpu_custom_call.1} parent=1 // pred_region
      _
    $region29: #{tpu_custom_call.1} parent=1 // pred_fallthru
      _
    // Predicated region
    $region30: #{tpu_custom_call.1} parent=1 // pred_check
      _
    $region31: #{tpu_custom_call.1} parent=1 // pred_check_branch
      %78 = sbr.rel (0) target = $region33
    $region32: #{tpu_custom_call.1} parent=1 // pred_region
      %79 = dma.done [#allocation5], 1536
    $region33: #{tpu_custom_call.1} parent=1 // pred_fallthru
      _
    // Predicated region
    $region34: #{tpu_custom_call.1} parent=1 // pred_check
      _
    $region35: #{tpu_custom_call.1} parent=1 // pred_check_branch
      %81 = sbr.rel (0) target = $region37
    $region36: #{tpu_custom_call.1} parent=1 // pred_region
      %82 = dma.done [#allocation7], 36864
    $region37: #{tpu_custom_call.1} parent=1 // pred_fallthru
      _
    // Predicated region
    $region38: #{tpu_custom_call.1} parent=1 // pred_check
      _
    $region39: #{tpu_custom_call.1} parent=1 // pred_check_branch
      %84 = sbr.rel (0) target = $region41
    $region40: #{tpu_custom_call.1} parent=1 // pred_region
      %85 = dma.done [#allocation7], 36864
    $region41: #{tpu_custom_call.1} parent=1 // pred_fallthru
      _
    // Predicated region
    $region42: #{tpu_custom_call.1} parent=1 // pred_check
      _
    $region43: #{tpu_custom_call.1} parent=1 // pred_check_branch
      %87 = sbr.rel (0) target = $region45
    $region44: #{tpu_custom_call.1} parent=1 // pred_region
      %88 = dma.done [#allocation10], 192
    $region45: #{tpu_custom_call.1} parent=1 // pred_fallthru
      _
    // Predicated region
    $region46: #{tpu_custom_call.1} parent=1 // pred_check
      _
    $region47: #{tpu_custom_call.1} parent=1 // pred_check_branch
      %90 = sbr.rel (0) target = $region49
    $region48: #{tpu_custom_call.1} parent=1 // pred_region
      %91 = dma.done [#allocation10], 48
    $region49: #{tpu_custom_call.1} parent=1 // pred_fallthru
      _
    %v93 = vld [vmem:[#allocation4] sm:$0xff]
    %v94 = vld [vmem:[#allocation4 + $0x8] sm:$0xf]
    %v95 = vld [vmem:[#allocation4 + $0xc] sm:$0xff]
    %v96 = vld [vmem:[#allocation4 + $0x14] sm:$0xf]
    %v97 = vld [vmem:[#allocation4 + $0x18] sm:$0xff]
    %v98 = vld [vmem:[#allocation4 + $0x20] sm:$0xf]
    %v99 = vld [vmem:[#allocation4 + $0x24] sm:$0xff]
    %v100 = vld [vmem:[#allocation4 + $0x2c] sm:$0xf]
    %v101 = vld [vmem:[#allocation4 + $0x30] sm:$0xff]
    %v102 = vld [vmem:[#allocation4 + $0x38] sm:$0xf]
    %v103 = vld [vmem:[#allocation4 + $0x3c] sm:$0xff]
    %v104 = vld [vmem:[#allocation4 + $0x44] sm:$0xf]
    %v105 = vld [vmem:[#allocation4 + $0x48] sm:$0xff]
    %v106 = vld [vmem:[#allocation4 + $0x50] sm:$0xf]
    %v107 = vld [vmem:[#allocation4 + $0x54] sm:$0xff]
    %v108 = vld [vmem:[#allocation4 + $0x5c] sm:$0xf]
    %v109 = vld [vmem:[#allocation6] sm:$0xff]
    %v110 = vld [vmem:[#allocation6 + $0x8] sm:$0xff]
    %v111 = vld [vmem:[#allocation6 + $0x10] sm:$0xff]
    %v112 = vld [vmem:[#allocation6 + $0x18] sm:$0xff]
    %v113 = vld [vmem:[#allocation6 + $0x20] sm:$0xff]
    %v114 = vld [vmem:[#allocation6 + $0x28] sm:$0xff]
    %v115 = vld [vmem:[#allocation6 + $0x30] sm:$0xff]
    %v116 = vld [vmem:[#allocation6 + $0x38] sm:$0xff]
    %v117 = vld [vmem:[#allocation6 + $0x40] sm:$0xff]
    %v118 = vld [vmem:[#allocation6 + $0x48] sm:$0xff]
    %v119 = vld [vmem:[#allocation6 + $0x50] sm:$0xff]
    %v120 = vld [vmem:[#allocation6 + $0x58] sm:$0xff]
    %v121 = vld [vmem:[#allocation6 + $0x60] sm:$0xff]
    %v122 = vld [vmem:[#allocation6 + $0x68] sm:$0xff]
    %v123 = vld [vmem:[#allocation6 + $0x70] sm:$0xff]
    %v124 = vld [vmem:[#allocation6 + $0x78] sm:$0xff]
    %v125 = vld [vmem:[#allocation6 + $0x80] sm:$0xff]
    %v126 = vld [vmem:[#allocation6 + $0x88] sm:$0xff]
    %v127 = vld [vmem:[#allocation6 + $0x90] sm:$0xff]
    %v128 = vld [vmem:[#allocation6 + $0x98] sm:$0xff]
    %v129 = vld [vmem:[#allocation6 + $0xa0] sm:$0xff]
    %v130 = vld [vmem:[#allocation6 + $0xa8] sm:$0xff]
    %v131 = vld [vmem:[#allocation6 + $0xb0] sm:$0xff]
    %v132 = vld [vmem:[#allocation6 + $0xb8] sm:$0xff]
    %v133 = vld [vmem:[#allocation6 + $0xc0] sm:$0xff]
    %v134 = vld [vmem:[#allocation6 + $0xc8] sm:$0xff]
    %v135 = vld [vmem:[#allocation6 + $0xd0] sm:$0xff]
    %v136 = vld [vmem:[#allocation6 + $0xd8] sm:$0xff]
    %v137 = vld [vmem:[#allocation6 + $0xe0] sm:$0xff]
    %v138 = vld [vmem:[#allocation6 + $0xe8] sm:$0xff]
    %v139 = vld [vmem:[#allocation6 + $0xf0] sm:$0xff]
    %v140 = vld [vmem:[#allocation6 + $0xf8] sm:$0xff]
    %v141 = vld [vmem:[#allocation6 + $0x100] sm:$0xff]
    %v142 = vld [vmem:[#allocation6 + $0x108] sm:$0xff]
    %v143 = vld [vmem:[#allocation6 + $0x110] sm:$0xff]
    %v144 = vld [vmem:[#allocation6 + $0x118] sm:$0xff]
    %v145 = vld [vmem:[#allocation6 + $0x120] sm:$0xff]
    %v146 = vld [vmem:[#allocation6 + $0x128] sm:$0xff]
    %v147 = vld [vmem:[#allocation6 + $0x130] sm:$0xff]
    %v148 = vld [vmem:[#allocation6 + $0x138] sm:$0xff]
    %v149 = vld [vmem:[#allocation6 + $0x140] sm:$0xff]
    %v150 = vld [vmem:[#allocation6 + $0x148] sm:$0xff]
    %v151 = vld [vmem:[#allocation6 + $0x150] sm:$0xff]
    %v152 = vld [vmem:[#allocation6 + $0x158] sm:$0xff]
    %v153 = vld [vmem:[#allocation6 + $0x160] sm:$0xff]
    %v154 = vld [vmem:[#allocation6 + $0x168] sm:$0xff]
    %v155 = vld [vmem:[#allocation6 + $0x170] sm:$0xff]
    %v156 = vld [vmem:[#allocation6 + $0x178] sm:$0xff]
    %v157 = vld [vmem:[#allocation6 + $0x180] sm:$0xff]
    %v158 = vld [vmem:[#allocation6 + $0x188] sm:$0xff]
    %v159 = vld [vmem:[#allocation6 + $0x190] sm:$0xff]
    %v160 = vld [vmem:[#allocation6 + $0x198] sm:$0xff]
    %v161 = vld [vmem:[#allocation6 + $0x1a0] sm:$0xff]
    %v162 = vld [vmem:[#allocation6 + $0x1a8] sm:$0xff]
    %v163 = vld [vmem:[#allocation6 + $0x1b0] sm:$0xff]
    %v164 = vld [vmem:[#allocation6 + $0x1b8] sm:$0xff]
    %v165 = vld [vmem:[#allocation6 + $0x1c0] sm:$0xff]
    %v166 = vld [vmem:[#allocation6 + $0x1c8] sm:$0xff]
    %v167 = vld [vmem:[#allocation6 + $0x1d0] sm:$0xff]
    %v168 = vld [vmem:[#allocation6 + $0x1d8] sm:$0xff]
    %v169 = vld [vmem:[#allocation6 + $0x1e0] sm:$0xff]
    %v170 = vld [vmem:[#allocation6 + $0x1e8] sm:$0xff]
    %v171 = vld [vmem:[#allocation6 + $0x1f0] sm:$0xff]
    %v172 = vld [vmem:[#allocation6 + $0x1f8] sm:$0xff]
    %v173 = vld [vmem:[#allocation6 + $0x200] sm:$0xff]
    %v174 = vld [vmem:[#allocation6 + $0x208] sm:$0xff]
    %v175 = vld [vmem:[#allocation6 + $0x210] sm:$0xff]
    %v176 = vld [vmem:[#allocation6 + $0x218] sm:$0xff]
    %v177 = vld [vmem:[#allocation6 + $0x220] sm:$0xff]
    %v178 = vld [vmem:[#allocation6 + $0x228] sm:$0xff]
    %v179 = vld [vmem:[#allocation6 + $0x230] sm:$0xff]
    %v180 = vld [vmem:[#allocation6 + $0x238] sm:$0xff]
    %v181 = vld [vmem:[#allocation6 + $0x240] sm:$0xff]
    %v182 = vld [vmem:[#allocation6 + $0x248] sm:$0xff]
    %v183 = vld [vmem:[#allocation6 + $0x250] sm:$0xff]
    %v184 = vld [vmem:[#allocation6 + $0x258] sm:$0xff]
    %v185 = vld [vmem:[#allocation6 + $0x260] sm:$0xff]
    %v186 = vld [vmem:[#allocation6 + $0x268] sm:$0xff]
    %v187 = vld [vmem:[#allocation6 + $0x270] sm:$0xff]
    %v188 = vld [vmem:[#allocation6 + $0x278] sm:$0xff]
    %v189 = vld [vmem:[#allocation6 + $0x280] sm:$0xff]
    %v190 = vld [vmem:[#allocation6 + $0x288] sm:$0xff]
    %v191 = vld [vmem:[#allocation6 + $0x290] sm:$0xff]
    %v192 = vld [vmem:[#allocation6 + $0x298] sm:$0xff]
    %v193 = vld [vmem:[#allocation6 + $0x2a0] sm:$0xff]
    %v194 = vld [vmem:[#allocation6 + $0x2a8] sm:$0xff]
    %v195 = vld [vmem:[#allocation6 + $0x2b0] sm:$0xff]
    %v196 = vld [vmem:[#allocation6 + $0x2b8] sm:$0xff]
    %v197 = vld [vmem:[#allocation6 + $0x2c0] sm:$0xff]
    %v198 = vld [vmem:[#allocation6 + $0x2c8] sm:$0xff]
    %v199 = vld [vmem:[#allocation6 + $0x2d0] sm:$0xff]
    %v200 = vld [vmem:[#allocation6 + $0x2d8] sm:$0xff]
    %v201 = vld [vmem:[#allocation6 + $0x2e0] sm:$0xff]
    %v202 = vld [vmem:[#allocation6 + $0x2e8] sm:$0xff]
    %v203 = vld [vmem:[#allocation6 + $0x2f0] sm:$0xff]
    %v204 = vld [vmem:[#allocation6 + $0x2f8] sm:$0xff]
    %v205 = vld [vmem:[#allocation6 + $0x300] sm:$0xff]
    %v206 = vld [vmem:[#allocation6 + $0x308] sm:$0xff]
    %v207 = vld [vmem:[#allocation6 + $0x310] sm:$0xff]
    %v208 = vld [vmem:[#allocation6 + $0x318] sm:$0xff]
    %v209 = vld [vmem:[#allocation6 + $0x320] sm:$0xff]
    %v210 = vld [vmem:[#allocation6 + $0x328] sm:$0xff]
    %v211 = vld [vmem:[#allocation6 + $0x330] sm:$0xff]
    %v212 = vld [vmem:[#allocation6 + $0x338] sm:$0xff]
    %v213 = vld [vmem:[#allocation6 + $0x340] sm:$0xff]
    %v214 = vld [vmem:[#allocation6 + $0x348] sm:$0xff]
    %v215 = vld [vmem:[#allocation6 + $0x350] sm:$0xff]
    %v216 = vld [vmem:[#allocation6 + $0x358] sm:$0xff]
    %v217 = vld [vmem:[#allocation6 + $0x360] sm:$0xff]
    %v218 = vld [vmem:[#allocation6 + $0x368] sm:$0xff]
    %v219 = vld [vmem:[#allocation6 + $0x370] sm:$0xff]
    %v220 = vld [vmem:[#allocation6 + $0x378] sm:$0xff]
    %v221 = vld [vmem:[#allocation6 + $0x380] sm:$0xff]
    %v222 = vld [vmem:[#allocation6 + $0x388] sm:$0xff]
    %v223 = vld [vmem:[#allocation6 + $0x390] sm:$0xff]
    %v224 = vld [vmem:[#allocation6 + $0x398] sm:$0xff]
    %v225 = vld [vmem:[#allocation6 + $0x3a0] sm:$0xff]
    %v226 = vld [vmem:[#allocation6 + $0x3a8] sm:$0xff]
    %v227 = vld [vmem:[#allocation6 + $0x3b0] sm:$0xff]
    %v228 = vld [vmem:[#allocation6 + $0x3b8] sm:$0xff]
    %v229 = vld [vmem:[#allocation6 + $0x3c0] sm:$0xff]
    %v230 = vld [vmem:[#allocation6 + $0x3c8] sm:$0xff]
    %v231 = vld [vmem:[#allocation6 + $0x3d0] sm:$0xff]
    %v232 = vld [vmem:[#allocation6 + $0x3d8] sm:$0xff]
    %v233 = vld [vmem:[#allocation6 + $0x3e0] sm:$0xff]
    %v234 = vld [vmem:[#allocation6 + $0x3e8] sm:$0xff]
    %v235 = vld [vmem:[#allocation6 + $0x3f0] sm:$0xff]
    %v236 = vld [vmem:[#allocation6 + $0x3f8] sm:$0xff]
    %v237 = vld [vmem:[#allocation6 + $0x400] sm:$0xff]
    %v238 = vld [vmem:[#allocation6 + $0x408] sm:$0xff]
    %v239 = vld [vmem:[#allocation6 + $0x410] sm:$0xff]
    %v240 = vld [vmem:[#allocation6 + $0x418] sm:$0xff]
    %v241 = vld [vmem:[#allocation6 + $0x420] sm:$0xff]
    %v242 = vld [vmem:[#allocation6 + $0x428] sm:$0xff]
    %v243 = vld [vmem:[#allocation6 + $0x430] sm:$0xff]
    %v244 = vld [vmem:[#allocation6 + $0x438] sm:$0xff]
    %v245 = vld [vmem:[#allocation6 + $0x440] sm:$0xff]
    %v246 = vld [vmem:[#allocation6 + $0x448] sm:$0xff]
    %v247 = vld [vmem:[#allocation6 + $0x450] sm:$0xff]
    %v248 = vld [vmem:[#allocation6 + $0x458] sm:$0xff]
    %v249 = vld [vmem:[#allocation6 + $0x460] sm:$0xff]
    %v250 = vld [vmem:[#allocation6 + $0x468] sm:$0xff]
    %v251 = vld [vmem:[#allocation6 + $0x470] sm:$0xff]
    %v252 = vld [vmem:[#allocation6 + $0x478] sm:$0xff]
    %v253 = vld [vmem:[#allocation6 + $0x480] sm:$0xff]
    %v254 = vld [vmem:[#allocation6 + $0x488] sm:$0xff]
    %v255 = vld [vmem:[#allocation6 + $0x490] sm:$0xff]
    %v256 = vld [vmem:[#allocation6 + $0x498] sm:$0xff]
    %v257 = vld [vmem:[#allocation6 + $0x4a0] sm:$0xff]
    %v258 = vld [vmem:[#allocation6 + $0x4a8] sm:$0xff]
    %v259 = vld [vmem:[#allocation6 + $0x4b0] sm:$0xff]
    %v260 = vld [vmem:[#allocation6 + $0x4b8] sm:$0xff]
    %v261 = vld [vmem:[#allocation6 + $0x4c0] sm:$0xff]
    %v262 = vld [vmem:[#allocation6 + $0x4c8] sm:$0xff]
    %v263 = vld [vmem:[#allocation6 + $0x4d0] sm:$0xff]
    %v264 = vld [vmem:[#allocation6 + $0x4d8] sm:$0xff]
    %v265 = vld [vmem:[#allocation6 + $0x4e0] sm:$0xff]
    %v266 = vld [vmem:[#allocation6 + $0x4e8] sm:$0xff]
    %v267 = vld [vmem:[#allocation6 + $0x4f0] sm:$0xff]
    %v268 = vld [vmem:[#allocation6 + $0x4f8] sm:$0xff]
    %v269 = vld [vmem:[#allocation6 + $0x500] sm:$0xff]
    %v270 = vld [vmem:[#allocation6 + $0x508] sm:$0xff]
    %v271 = vld [vmem:[#allocation6 + $0x510] sm:$0xff]
    %v272 = vld [vmem:[#allocation6 + $0x518] sm:$0xff]
    %v273 = vld [vmem:[#allocation6 + $0x520] sm:$0xff]
    %v274 = vld [vmem:[#allocation6 + $0x528] sm:$0xff]
    %v275 = vld [vmem:[#allocation6 + $0x530] sm:$0xff]
    %v276 = vld [vmem:[#allocation6 + $0x538] sm:$0xff]
    %v277 = vld [vmem:[#allocation6 + $0x540] sm:$0xff]
    %v278 = vld [vmem:[#allocation6 + $0x548] sm:$0xff]
    %v279 = vld [vmem:[#allocation6 + $0x550] sm:$0xff]
    %v280 = vld [vmem:[#allocation6 + $0x558] sm:$0xff]
    %v281 = vld [vmem:[#allocation6 + $0x560] sm:$0xff]
    %v282 = vld [vmem:[#allocation6 + $0x568] sm:$0xff]
    %v283 = vld [vmem:[#allocation6 + $0x570] sm:$0xff]
    %v284 = vld [vmem:[#allocation6 + $0x578] sm:$0xff]
    %v285 = vld [vmem:[#allocation6 + $0x580] sm:$0xff]
    %v286 = vld [vmem:[#allocation6 + $0x588] sm:$0xff]
    %v287 = vld [vmem:[#allocation6 + $0x590] sm:$0xff]
    %v288 = vld [vmem:[#allocation6 + $0x598] sm:$0xff]
    %v289 = vld [vmem:[#allocation6 + $0x5a0] sm:$0xff]
    %v290 = vld [vmem:[#allocation6 + $0x5a8] sm:$0xff]
    %v291 = vld [vmem:[#allocation6 + $0x5b0] sm:$0xff]
    %v292 = vld [vmem:[#allocation6 + $0x5b8] sm:$0xff]
    %v293 = vld [vmem:[#allocation6 + $0x5c0] sm:$0xff]
    %v294 = vld [vmem:[#allocation6 + $0x5c8] sm:$0xff]
    %v295 = vld [vmem:[#allocation6 + $0x5d0] sm:$0xff]
    %v296 = vld [vmem:[#allocation6 + $0x5d8] sm:$0xff]
    %v297 = vld [vmem:[#allocation6 + $0x5e0] sm:$0xff]
    %v298 = vld [vmem:[#allocation6 + $0x5e8] sm:$0xff]
    %v299 = vld [vmem:[#allocation6 + $0x5f0] sm:$0xff]
    %v300 = vld [vmem:[#allocation6 + $0x5f8] sm:$0xff]
    %v301 = vld [vmem:[#allocation6 + $0x600] sm:$0xff]
    %v302 = vld [vmem:[#allocation6 + $0x608] sm:$0xff]
    %v303 = vld [vmem:[#allocation6 + $0x610] sm:$0xff]
    %v304 = vld [vmem:[#allocation6 + $0x618] sm:$0xff]
    %v305 = vld [vmem:[#allocation6 + $0x620] sm:$0xff]
    %v306 = vld [vmem:[#allocation6 + $0x628] sm:$0xff]
    %v307 = vld [vmem:[#allocation6 + $0x630] sm:$0xff]
    %v308 = vld [vmem:[#allocation6 + $0x638] sm:$0xff]
    %v309 = vld [vmem:[#allocation6 + $0x640] sm:$0xff]
    %v310 = vld [vmem:[#allocation6 + $0x648] sm:$0xff]
    %v311 = vld [vmem:[#allocation6 + $0x650] sm:$0xff]
    %v312 = vld [vmem:[#allocation6 + $0x658] sm:$0xff]
    %v313 = vld [vmem:[#allocation6 + $0x660] sm:$0xff]
    %v314 = vld [vmem:[#allocation6 + $0x668] sm:$0xff]
    %v315 = vld [vmem:[#allocation6 + $0x670] sm:$0xff]
    %v316 = vld [vmem:[#allocation6 + $0x678] sm:$0xff]
    %v317 = vld [vmem:[#allocation6 + $0x680] sm:$0xff]
    %v318 = vld [vmem:[#allocation6 + $0x688] sm:$0xff]
    %v319 = vld [vmem:[#allocation6 + $0x690] sm:$0xff]
    %v320 = vld [vmem:[#allocation6 + $0x698] sm:$0xff]
    %v321 = vld [vmem:[#allocation6 + $0x6a0] sm:$0xff]
    %v322 = vld [vmem:[#allocation6 + $0x6a8] sm:$0xff]
    %v323 = vld [vmem:[#allocation6 + $0x6b0] sm:$0xff]
    %v324 = vld [vmem:[#allocation6 + $0x6b8] sm:$0xff]
    %v325 = vld [vmem:[#allocation6 + $0x6c0] sm:$0xff]
    %v326 = vld [vmem:[#allocation6 + $0x6c8] sm:$0xff]
    %v327 = vld [vmem:[#allocation6 + $0x6d0] sm:$0xff]
    %v328 = vld [vmem:[#allocation6 + $0x6d8] sm:$0xff]
    %v329 = vld [vmem:[#allocation6 + $0x6e0] sm:$0xff]
    %v330 = vld [vmem:[#allocation6 + $0x6e8] sm:$0xff]
    %v331 = vld [vmem:[#allocation6 + $0x6f0] sm:$0xff]
    %v332 = vld [vmem:[#allocation6 + $0x6f8] sm:$0xff]
    %v333 = vld [vmem:[#allocation6 + $0x700] sm:$0xff]
    %v334 = vld [vmem:[#allocation6 + $0x708] sm:$0xff]
    %v335 = vld [vmem:[#allocation6 + $0x710] sm:$0xff]
    %v336 = vld [vmem:[#allocation6 + $0x718] sm:$0xff]
    %v337 = vld [vmem:[#allocation6 + $0x720] sm:$0xff]
    %v338 = vld [vmem:[#allocation6 + $0x728] sm:$0xff]
    %v339 = vld [vmem:[#allocation6 + $0x730] sm:$0xff]
    %v340 = vld [vmem:[#allocation6 + $0x738] sm:$0xff]
    %v341 = vld [vmem:[#allocation6 + $0x740] sm:$0xff]
    %v342 = vld [vmem:[#allocation6 + $0x748] sm:$0xff]
    %v343 = vld [vmem:[#allocation6 + $0x750] sm:$0xff]
    %v344 = vld [vmem:[#allocation6 + $0x758] sm:$0xff]
    %v345 = vld [vmem:[#allocation6 + $0x760] sm:$0xff]
    %v346 = vld [vmem:[#allocation6 + $0x768] sm:$0xff]
    %v347 = vld [vmem:[#allocation6 + $0x770] sm:$0xff]
    %v348 = vld [vmem:[#allocation6 + $0x778] sm:$0xff]
    %v349 = vld [vmem:[#allocation6 + $0x780] sm:$0xff]
    %v350 = vld [vmem:[#allocation6 + $0x788] sm:$0xff]
    %v351 = vld [vmem:[#allocation6 + $0x790] sm:$0xff]
    %v352 = vld [vmem:[#allocation6 + $0x798] sm:$0xff]
    %v353 = vld [vmem:[#allocation6 + $0x7a0] sm:$0xff]
    %v354 = vld [vmem:[#allocation6 + $0x7a8] sm:$0xff]
    %v355 = vld [vmem:[#allocation6 + $0x7b0] sm:$0xff]
    %v356 = vld [vmem:[#allocation6 + $0x7b8] sm:$0xff]
    %v357 = vld [vmem:[#allocation6 + $0x7c0] sm:$0xff]
    %v358 = vld [vmem:[#allocation6 + $0x7c8] sm:$0xff]
    %v359 = vld [vmem:[#allocation6 + $0x7d0] sm:$0xff]
    %v360 = vld [vmem:[#allocation6 + $0x7d8] sm:$0xff]
    %v361 = vld [vmem:[#allocation6 + $0x7e0] sm:$0xff]
    %v362 = vld [vmem:[#allocation6 + $0x7e8] sm:$0xff]
    %v363 = vld [vmem:[#allocation6 + $0x7f0] sm:$0xff]
    %v364 = vld [vmem:[#allocation6 + $0x7f8] sm:$0xff]
    %v365 = vld [vmem:[#allocation6 + $0x800] sm:$0xff]
    %v366 = vld [vmem:[#allocation6 + $0x808] sm:$0xff]
    %v367 = vld [vmem:[#allocation6 + $0x810] sm:$0xff]
    %v368 = vld [vmem:[#allocation6 + $0x818] sm:$0xff]
    %v369 = vld [vmem:[#allocation6 + $0x820] sm:$0xff]
    %v370 = vld [vmem:[#allocation6 + $0x828] sm:$0xff]
    %v371 = vld [vmem:[#allocation6 + $0x830] sm:$0xff]
    %v372 = vld [vmem:[#allocation6 + $0x838] sm:$0xff]
    %v373 = vld [vmem:[#allocation6 + $0x840] sm:$0xff]
    %v374 = vld [vmem:[#allocation6 + $0x848] sm:$0xff]
    %v375 = vld [vmem:[#allocation6 + $0x850] sm:$0xff]
    %v376 = vld [vmem:[#allocation6 + $0x858] sm:$0xff]
    %v377 = vld [vmem:[#allocation6 + $0x860] sm:$0xff]
    %v378 = vld [vmem:[#allocation6 + $0x868] sm:$0xff]
    %v379 = vld [vmem:[#allocation6 + $0x870] sm:$0xff]
    %v380 = vld [vmem:[#allocation6 + $0x878] sm:$0xff]
    %v381 = vld [vmem:[#allocation6 + $0x880] sm:$0xff]
    %v382 = vld [vmem:[#allocation6 + $0x888] sm:$0xff]
    %v383 = vld [vmem:[#allocation6 + $0x890] sm:$0xff]
    %v384 = vld [vmem:[#allocation6 + $0x898] sm:$0xff]
    %v385 = vld [vmem:[#allocation6 + $0x8a0] sm:$0xff]
    %v386 = vld [vmem:[#allocation6 + $0x8a8] sm:$0xff]
    %v387 = vld [vmem:[#allocation6 + $0x8b0] sm:$0xff]
    %v388 = vld [vmem:[#allocation6 + $0x8b8] sm:$0xff]
    %v389 = vld [vmem:[#allocation6 + $0x8c0] sm:$0xff]
    %v390 = vld [vmem:[#allocation6 + $0x8c8] sm:$0xff]
    %v391 = vld [vmem:[#allocation6 + $0x8d0] sm:$0xff]
    %v392 = vld [vmem:[#allocation6 + $0x8d8] sm:$0xff]
    %v393 = vld [vmem:[#allocation6 + $0x8e0] sm:$0xff]
    %v394 = vld [vmem:[#allocation6 + $0x8e8] sm:$0xff]
    %v395 = vld [vmem:[#allocation6 + $0x8f0] sm:$0xff]
    %v396 = vld [vmem:[#allocation6 + $0x8f8] sm:$0xff]
    %v397 = vld [vmem:[#allocation9] sm:$0xff]
    %v398 = vld [vmem:[#allocation9 + $0x8] sm:$0xf]
    %v401 = vlaneseq
    %v402 = vshrl.u32 %v401, 7
    %v403 = vsub.s32 0, %v402
    %v404 = vrot.slane %v397, %v403
    %v405 = vlaneseq
    %v406 = vshrl.u32 %v405, 7
    %v407 = vsub.s32 1, %v406
    %v408 = vrot.slane %v397, %v407
    %v409 = vlaneseq
    %v410 = vshrl.u32 %v409, 7
    %v411 = vsub.s32 2, %v410
    %v412 = vrot.slane %v397, %v411
    %v413 = vlaneseq
    %v414 = vshrl.u32 %v413, 7
    %v415 = vsub.s32 3, %v414
    %v416 = vrot.slane %v397, %v415
    %v417 = vlaneseq
    %v418 = vshrl.u32 %v417, 7
    %v419 = vsub.s32 4, %v418
    %v420 = vrot.slane %v397, %v419
    %v421 = vlaneseq
    %v422 = vshrl.u32 %v421, 7
    %v423 = vsub.s32 5, %v422
    %v424 = vrot.slane %v397, %v423
    %v425 = vlaneseq
    %v426 = vshrl.u32 %v425, 7
    %v427 = vsub.s32 6, %v426
    %v428 = vrot.slane %v397, %v427
    %v429 = vlaneseq
    %v430 = vshrl.u32 %v429, 7
    %v431 = vsub.s32 7, %v430
    %v432 = vrot.slane %v397, %v431
    %v433 = vlaneseq
    %v434 = vshrl.u32 %v433, 7
    %v435 = vsub.s32 0, %v434
    %v436 = vrot.slane %v398, %v435
    %v437 = vlaneseq
    %v438 = vshrl.u32 %v437, 7
    %v439 = vsub.s32 1, %v438
    %v440 = vrot.slane %v398, %v439
    %v441 = vlaneseq
    %v442 = vshrl.u32 %v441, 7
    %v443 = vsub.s32 2, %v442
    %v444 = vrot.slane %v398, %v443
    %v445 = vlaneseq
    %v446 = vshrl.u32 %v445, 7
    %v447 = vsub.s32 3, %v446
    %v448 = vrot.slane %v398, %v447
    %v477 = vunpack.c.l.b16 %v93
    %v478 = vunpack.c.h.b16 %v93
    %v479 = vunpack.c.l.b16 %v94
    %v480 = vunpack.c.l.b16 %v95
    %v481 = vunpack.c.h.b16 %v95
    %v482 = vunpack.c.l.b16 %v96
    %v483 = vunpack.c.l.b16 %v97
    %v484 = vunpack.c.h.b16 %v97
    %v485 = vunpack.c.l.b16 %v98
    %v486 = vunpack.c.l.b16 %v99
    %v487 = vunpack.c.h.b16 %v99
    %v488 = vunpack.c.l.b16 %v100
    %v489 = vunpack.c.l.b16 %v101
    %v490 = vunpack.c.h.b16 %v101
    %v491 = vunpack.c.l.b16 %v102
    %v492 = vunpack.c.l.b16 %v103
    %v493 = vunpack.c.h.b16 %v103
    %v494 = vunpack.c.l.b16 %v104
    %v495 = vunpack.c.l.b16 %v105
    %v496 = vunpack.c.h.b16 %v105
    %v497 = vunpack.c.l.b16 %v106
    %v498 = vunpack.c.l.b16 %v107
    %v499 = vunpack.c.h.b16 %v107
    %v500 = vunpack.c.l.b16 %v108
    %v501 = vpack.c.b16 %v480, %v477
    %v502 = vpack.c.b16 %v481, %v478
    %v503 = vpack.c.b16 %v482, %v479
    %v504 = vpack.c.b16 %v486, %v483
    %v505 = vpack.c.b16 %v487, %v484
    %v506 = vpack.c.b16 %v488, %v485
    %v507 = vpack.c.b16 %v492, %v489
    %v508 = vpack.c.b16 %v493, %v490
    %v509 = vpack.c.b16 %v494, %v491
    %v510 = vpack.c.b16 %v498, %v495
    %v511 = vpack.c.b16 %v499, %v496
    %v512 = vpack.c.b16 %v500, %v497
    %v813 = vunpack.c.l.b16 %v109
    %v814 = vunpack.c.h.b16 %v109
    %v815 = vunpack.c.l.b16 %v110
    %v816 = vunpack.c.h.b16 %v110
    %v817 = vunpack.c.l.b16 %v111
    %v818 = vunpack.c.h.b16 %v111
    %v819 = vunpack.c.l.b16 %v112
    %v820 = vunpack.c.h.b16 %v112
    %v821 = vunpack.c.l.b16 %v113
    %v822 = vunpack.c.h.b16 %v113
    %v823 = vunpack.c.l.b16 %v114
    %v824 = vunpack.c.h.b16 %v114
    %v825 = vunpack.c.l.b16 %v115
    %v826 = vunpack.c.h.b16 %v115
    %v827 = vunpack.c.l.b16 %v116
    %v828 = vunpack.c.h.b16 %v116
    %v829 = vunpack.c.l.b16 %v117
    %v830 = vunpack.c.h.b16 %v117
    %v831 = vunpack.c.l.b16 %v118
    %v832 = vunpack.c.h.b16 %v118
    %v833 = vunpack.c.l.b16 %v119
    %v834 = vunpack.c.h.b16 %v119
    %v835 = vunpack.c.l.b16 %v120
    %v836 = vunpack.c.h.b16 %v120
    %v837 = vunpack.c.l.b16 %v121
    %v838 = vunpack.c.h.b16 %v121
    %v839 = vunpack.c.l.b16 %v122
    %v840 = vunpack.c.h.b16 %v122
    %v841 = vunpack.c.l.b16 %v123
    %v842 = vunpack.c.h.b16 %v123
    %v843 = vunpack.c.l.b16 %v124
    %v844 = vunpack.c.h.b16 %v124
    %v845 = vunpack.c.l.b16 %v125
    %v846 = vunpack.c.h.b16 %v125
    %v847 = vunpack.c.l.b16 %v126
    %v848 = vunpack.c.h.b16 %v126
    %v849 = vunpack.c.l.b16 %v127
    %v850 = vunpack.c.h.b16 %v127
    %v851 = vunpack.c.l.b16 %v128
    %v852 = vunpack.c.h.b16 %v128
    %v853 = vunpack.c.l.b16 %v129
    %v854 = vunpack.c.h.b16 %v129
    %v855 = vunpack.c.l.b16 %v130
    %v856 = vunpack.c.h.b16 %v130
    %v857 = vunpack.c.l.b16 %v131
    %v858 = vunpack.c.h.b16 %v131
    %v859 = vunpack.c.l.b16 %v132
    %v860 = vunpack.c.h.b16 %v132
    %v861 = vunpack.c.l.b16 %v133
    %v862 = vunpack.c.h.b16 %v133
    %v863 = vunpack.c.l.b16 %v134
    %v864 = vunpack.c.h.b16 %v134
    %v865 = vunpack.c.l.b16 %v135
    %v866 = vunpack.c.h.b16 %v135
    %v867 = vunpack.c.l.b16 %v136
    %v868 = vunpack.c.h.b16 %v136
    %v869 = vunpack.c.l.b16 %v137
    %v870 = vunpack.c.h.b16 %v137
    %v871 = vunpack.c.l.b16 %v138
    %v872 = vunpack.c.h.b16 %v138
    %v873 = vunpack.c.l.b16 %v139
    %v874 = vunpack.c.h.b16 %v139
    %v875 = vunpack.c.l.b16 %v140
    %v876 = vunpack.c.h.b16 %v140
    %v877 = vunpack.c.l.b16 %v141
    %v878 = vunpack.c.h.b16 %v141
    %v879 = vunpack.c.l.b16 %v142
    %v880 = vunpack.c.h.b16 %v142
    %v881 = vunpack.c.l.b16 %v143
    %v882 = vunpack.c.h.b16 %v143
    %v883 = vunpack.c.l.b16 %v144
    %v884 = vunpack.c.h.b16 %v144
    %v885 = vunpack.c.l.b16 %v145
    %v886 = vunpack.c.h.b16 %v145
    %v887 = vunpack.c.l.b16 %v146
    %v888 = vunpack.c.h.b16 %v146
    %v889 = vunpack.c.l.b16 %v147
    %v890 = vunpack.c.h.b16 %v147
    %v891 = vunpack.c.l.b16 %v148
    %v892 = vunpack.c.h.b16 %v148
    %v893 = vunpack.c.l.b16 %v149
    %v894 = vunpack.c.h.b16 %v149
    %v895 = vunpack.c.l.b16 %v150
    %v896 = vunpack.c.h.b16 %v150
    %v897 = vunpack.c.l.b16 %v151
    %v898 = vunpack.c.h.b16 %v151
    %v899 = vunpack.c.l.b16 %v152
    %v900 = vunpack.c.h.b16 %v152
    %v901 = vunpack.c.l.b16 %v153
    %v902 = vunpack.c.h.b16 %v153
    %v903 = vunpack.c.l.b16 %v154
    %v904 = vunpack.c.h.b16 %v154
    %v905 = vunpack.c.l.b16 %v155
    %v906 = vunpack.c.h.b16 %v155
    %v907 = vunpack.c.l.b16 %v156
    %v908 = vunpack.c.h.b16 %v156
    %v909 = vunpack.c.l.b16 %v157
    %v910 = vunpack.c.h.b16 %v157
    %v911 = vunpack.c.l.b16 %v158
    %v912 = vunpack.c.h.b16 %v158
    %v913 = vunpack.c.l.b16 %v159
    %v914 = vunpack.c.h.b16 %v159
    %v915 = vunpack.c.l.b16 %v160
    %v916 = vunpack.c.h.b16 %v160
    %v917 = vunpack.c.l.b16 %v161
    %v918 = vunpack.c.h.b16 %v161
    %v919 = vunpack.c.l.b16 %v162
    %v920 = vunpack.c.h.b16 %v162
    %v921 = vunpack.c.l.b16 %v163
    %v922 = vunpack.c.h.b16 %v163
    %v923 = vunpack.c.l.b16 %v164
    %v924 = vunpack.c.h.b16 %v164
    %v925 = vunpack.c.l.b16 %v165
    %v926 = vunpack.c.h.b16 %v165
    %v927 = vunpack.c.l.b16 %v166
    %v928 = vunpack.c.h.b16 %v166
    %v929 = vunpack.c.l.b16 %v167
    %v930 = vunpack.c.h.b16 %v167
    %v931 = vunpack.c.l.b16 %v168
    %v932 = vunpack.c.h.b16 %v168
    %v933 = vunpack.c.l.b16 %v169
    %v934 = vunpack.c.h.b16 %v169
    %v935 = vunpack.c.l.b16 %v170
    %v936 = vunpack.c.h.b16 %v170
    %v937 = vunpack.c.l.b16 %v171
    %v938 = vunpack.c.h.b16 %v171
    %v939 = vunpack.c.l.b16 %v172
    %v940 = vunpack.c.h.b16 %v172
    %v941 = vunpack.c.l.b16 %v173
    %v942 = vunpack.c.h.b16 %v173
    %v943 = vunpack.c.l.b16 %v174
    %v944 = vunpack.c.h.b16 %v174
    %v945 = vunpack.c.l.b16 %v175
    %v946 = vunpack.c.h.b16 %v175
    %v947 = vunpack.c.l.b16 %v176
    %v948 = vunpack.c.h.b16 %v176
    %v949 = vunpack.c.l.b16 %v177
    %v950 = vunpack.c.h.b16 %v177
    %v951 = vunpack.c.l.b16 %v178
    %v952 = vunpack.c.h.b16 %v178
    %v953 = vunpack.c.l.b16 %v179
    %v954 = vunpack.c.h.b16 %v179
    %v955 = vunpack.c.l.b16 %v180
    %v956 = vunpack.c.h.b16 %v180
    %v957 = vunpack.c.l.b16 %v181
    %v958 = vunpack.c.h.b16 %v181
    %v959 = vunpack.c.l.b16 %v182
    %v960 = vunpack.c.h.b16 %v182
    %v961 = vunpack.c.l.b16 %v183
    %v962 = vunpack.c.h.b16 %v183
    %v963 = vunpack.c.l.b16 %v184
    %v964 = vunpack.c.h.b16 %v184
    %v965 = vunpack.c.l.b16 %v185
    %v966 = vunpack.c.h.b16 %v185
    %v967 = vunpack.c.l.b16 %v186
    %v968 = vunpack.c.h.b16 %v186
    %v969 = vunpack.c.l.b16 %v187
    %v970 = vunpack.c.h.b16 %v187
    %v971 = vunpack.c.l.b16 %v188
    %v972 = vunpack.c.h.b16 %v188
    %v973 = vunpack.c.l.b16 %v189
    %v974 = vunpack.c.h.b16 %v189
    %v975 = vunpack.c.l.b16 %v190
    %v976 = vunpack.c.h.b16 %v190
    %v977 = vunpack.c.l.b16 %v191
    %v978 = vunpack.c.h.b16 %v191
    %v979 = vunpack.c.l.b16 %v192
    %v980 = vunpack.c.h.b16 %v192
    %v981 = vunpack.c.l.b16 %v193
    %v982 = vunpack.c.h.b16 %v193
    %v983 = vunpack.c.l.b16 %v194
    %v984 = vunpack.c.h.b16 %v194
    %v985 = vunpack.c.l.b16 %v195
    %v986 = vunpack.c.h.b16 %v195
    %v987 = vunpack.c.l.b16 %v196
    %v988 = vunpack.c.h.b16 %v196
    %v989 = vunpack.c.l.b16 %v197
    %v990 = vunpack.c.h.b16 %v197
    %v991 = vunpack.c.l.b16 %v198
    %v992 = vunpack.c.h.b16 %v198
    %v993 = vunpack.c.l.b16 %v199
    %v994 = vunpack.c.h.b16 %v199
    %v995 = vunpack.c.l.b16 %v200
    %v996 = vunpack.c.h.b16 %v200
    %v997 = vunpack.c.l.b16 %v201
    %v998 = vunpack.c.h.b16 %v201
    %v999 = vunpack.c.l.b16 %v202
    %v1000 = vunpack.c.h.b16 %v202
    %v1001 = vunpack.c.l.b16 %v203
    %v1002 = vunpack.c.h.b16 %v203
    %v1003 = vunpack.c.l.b16 %v204
    %v1004 = vunpack.c.h.b16 %v204
    %v1005 = vunpack.c.l.b16 %v205
    %v1006 = vunpack.c.h.b16 %v205
    %v1007 = vunpack.c.l.b16 %v206
    %v1008 = vunpack.c.h.b16 %v206
    %v1009 = vunpack.c.l.b16 %v207
    %v1010 = vunpack.c.h.b16 %v207
    %v1011 = vunpack.c.l.b16 %v208
    %v1012 = vunpack.c.h.b16 %v208
    %v1013 = vunpack.c.l.b16 %v209
    %v1014 = vunpack.c.h.b16 %v209
    %v1015 = vunpack.c.l.b16 %v210
    %v1016 = vunpack.c.h.b16 %v210
    %v1017 = vunpack.c.l.b16 %v211
    %v1018 = vunpack.c.h.b16 %v211
    %v1019 = vunpack.c.l.b16 %v212
    %v1020 = vunpack.c.h.b16 %v212
    %v1021 = vunpack.c.l.b16 %v213
    %v1022 = vunpack.c.h.b16 %v213
    %v1023 = vunpack.c.l.b16 %v214
    %v1024 = vunpack.c.h.b16 %v214
    %v1025 = vunpack.c.l.b16 %v215
    %v1026 = vunpack.c.h.b16 %v215
    %v1027 = vunpack.c.l.b16 %v216
    %v1028 = vunpack.c.h.b16 %v216
    %v1029 = vunpack.c.l.b16 %v217
    %v1030 = vunpack.c.h.b16 %v217
    %v1031 = vunpack.c.l.b16 %v218
    %v1032 = vunpack.c.h.b16 %v218
    %v1033 = vunpack.c.l.b16 %v219
    %v1034 = vunpack.c.h.b16 %v219
    %v1035 = vunpack.c.l.b16 %v220
    %v1036 = vunpack.c.h.b16 %v220
    %v1037 = vunpack.c.l.b16 %v221
    %v1038 = vunpack.c.h.b16 %v221
    %v1039 = vunpack.c.l.b16 %v222
    %v1040 = vunpack.c.h.b16 %v222
    %v1041 = vunpack.c.l.b16 %v223
    %v1042 = vunpack.c.h.b16 %v223
    %v1043 = vunpack.c.l.b16 %v224
    %v1044 = vunpack.c.h.b16 %v224
    %v1045 = vunpack.c.l.b16 %v225
    %v1046 = vunpack.c.h.b16 %v225
    %v1047 = vunpack.c.l.b16 %v226
    %v1048 = vunpack.c.h.b16 %v226
    %v1049 = vunpack.c.l.b16 %v227
    %v1050 = vunpack.c.h.b16 %v227
    %v1051 = vunpack.c.l.b16 %v228
    %v1052 = vunpack.c.h.b16 %v228
    %v1053 = vunpack.c.l.b16 %v229
    %v1054 = vunpack.c.h.b16 %v229
    %v1055 = vunpack.c.l.b16 %v230
    %v1056 = vunpack.c.h.b16 %v230
    %v1057 = vunpack.c.l.b16 %v231
    %v1058 = vunpack.c.h.b16 %v231
    %v1059 = vunpack.c.l.b16 %v232
    %v1060 = vunpack.c.h.b16 %v232
    %v1061 = vunpack.c.l.b16 %v233
    %v1062 = vunpack.c.h.b16 %v233
    %v1063 = vunpack.c.l.b16 %v234
    %v1064 = vunpack.c.h.b16 %v234
    %v1065 = vunpack.c.l.b16 %v235
    %v1066 = vunpack.c.h.b16 %v235
    %v1067 = vunpack.c.l.b16 %v236
    %v1068 = vunpack.c.h.b16 %v236
    %v1069 = vunpack.c.l.b16 %v237
    %v1070 = vunpack.c.h.b16 %v237
    %v1071 = vunpack.c.l.b16 %v238
    %v1072 = vunpack.c.h.b16 %v238
    %v1073 = vunpack.c.l.b16 %v239
    %v1074 = vunpack.c.h.b16 %v239
    %v1075 = vunpack.c.l.b16 %v240
    %v1076 = vunpack.c.h.b16 %v240
    %v1077 = vunpack.c.l.b16 %v241
    %v1078 = vunpack.c.h.b16 %v241
    %v1079 = vunpack.c.l.b16 %v242
    %v1080 = vunpack.c.h.b16 %v242
    %v1081 = vunpack.c.l.b16 %v243
    %v1082 = vunpack.c.h.b16 %v243
    %v1083 = vunpack.c.l.b16 %v244
    %v1084 = vunpack.c.h.b16 %v244
    %v1085 = vunpack.c.l.b16 %v245
    %v1086 = vunpack.c.h.b16 %v245
    %v1087 = vunpack.c.l.b16 %v246
    %v1088 = vunpack.c.h.b16 %v246
    %v1089 = vunpack.c.l.b16 %v247
    %v1090 = vunpack.c.h.b16 %v247
    %v1091 = vunpack.c.l.b16 %v248
    %v1092 = vunpack.c.h.b16 %v248
    %v1093 = vunpack.c.l.b16 %v249
    %v1094 = vunpack.c.h.b16 %v249
    %v1095 = vunpack.c.l.b16 %v250
    %v1096 = vunpack.c.h.b16 %v250
    %v1097 = vunpack.c.l.b16 %v251
    %v1098 = vunpack.c.h.b16 %v251
    %v1099 = vunpack.c.l.b16 %v252
    %v1100 = vunpack.c.h.b16 %v252
    %v1101 = vunpack.c.l.b16 %v253
    %v1102 = vunpack.c.h.b16 %v253
    %v1103 = vunpack.c.l.b16 %v254
    %v1104 = vunpack.c.h.b16 %v254
    %v1105 = vunpack.c.l.b16 %v255
    %v1106 = vunpack.c.h.b16 %v255
    %v1107 = vunpack.c.l.b16 %v256
    %v1108 = vunpack.c.h.b16 %v256
    %v1109 = vunpack.c.l.b16 %v257
    %v1110 = vunpack.c.h.b16 %v257
    %v1111 = vunpack.c.l.b16 %v258
    %v1112 = vunpack.c.h.b16 %v258
    %v1113 = vunpack.c.l.b16 %v259
    %v1114 = vunpack.c.h.b16 %v259
    %v1115 = vunpack.c.l.b16 %v260
    %v1116 = vunpack.c.h.b16 %v260
    %v1117 = vunpack.c.l.b16 %v261
    %v1118 = vunpack.c.h.b16 %v261
    %v1119 = vunpack.c.l.b16 %v262
    %v1120 = vunpack.c.h.b16 %v262
    %v1121 = vunpack.c.l.b16 %v263
    %v1122 = vunpack.c.h.b16 %v263
    %v1123 = vunpack.c.l.b16 %v264
    %v1124 = vunpack.c.h.b16 %v264
    %v1125 = vunpack.c.l.b16 %v265
    %v1126 = vunpack.c.h.b16 %v265
    %v1127 = vunpack.c.l.b16 %v266
    %v1128 = vunpack.c.h.b16 %v266
    %v1129 = vunpack.c.l.b16 %v267
    %v1130 = vunpack.c.h.b16 %v267
    %v1131 = vunpack.c.l.b16 %v268
    %v1132 = vunpack.c.h.b16 %v268
    %v1133 = vunpack.c.l.b16 %v269
    %v1134 = vunpack.c.h.b16 %v269
    %v1135 = vunpack.c.l.b16 %v270
    %v1136 = vunpack.c.h.b16 %v270
    %v1137 = vunpack.c.l.b16 %v271
    %v1138 = vunpack.c.h.b16 %v271
    %v1139 = vunpack.c.l.b16 %v272
    %v1140 = vunpack.c.h.b16 %v272
    %v1141 = vunpack.c.l.b16 %v273
    %v1142 = vunpack.c.h.b16 %v273
    %v1143 = vunpack.c.l.b16 %v274
    %v1144 = vunpack.c.h.b16 %v274
    %v1145 = vunpack.c.l.b16 %v275
    %v1146 = vunpack.c.h.b16 %v275
    %v1147 = vunpack.c.l.b16 %v276
    %v1148 = vunpack.c.h.b16 %v276
    %v1149 = vunpack.c.l.b16 %v277
    %v1150 = vunpack.c.h.b16 %v277
    %v1151 = vunpack.c.l.b16 %v278
    %v1152 = vunpack.c.h.b16 %v278
    %v1153 = vunpack.c.l.b16 %v279
    %v1154 = vunpack.c.h.b16 %v279
    %v1155 = vunpack.c.l.b16 %v280
    %v1156 = vunpack.c.h.b16 %v280
    %v1157 = vunpack.c.l.b16 %v281
    %v1158 = vunpack.c.h.b16 %v281
    %v1159 = vunpack.c.l.b16 %v282
    %v1160 = vunpack.c.h.b16 %v282
    %v1161 = vunpack.c.l.b16 %v283
    %v1162 = vunpack.c.h.b16 %v283
    %v1163 = vunpack.c.l.b16 %v284
    %v1164 = vunpack.c.h.b16 %v284
    %v1165 = vunpack.c.l.b16 %v285
    %v1166 = vunpack.c.h.b16 %v285
    %v1167 = vunpack.c.l.b16 %v286
    %v1168 = vunpack.c.h.b16 %v286
    %v1169 = vunpack.c.l.b16 %v287
    %v1170 = vunpack.c.h.b16 %v287
    %v1171 = vunpack.c.l.b16 %v288
    %v1172 = vunpack.c.h.b16 %v288
    %v1173 = vunpack.c.l.b16 %v289
    %v1174 = vunpack.c.h.b16 %v289
    %v1175 = vunpack.c.l.b16 %v290
    %v1176 = vunpack.c.h.b16 %v290
    %v1177 = vunpack.c.l.b16 %v291
    %v1178 = vunpack.c.h.b16 %v291
    %v1179 = vunpack.c.l.b16 %v292
    %v1180 = vunpack.c.h.b16 %v292
    %v1181 = vunpack.c.l.b16 %v293
    %v1182 = vunpack.c.h.b16 %v293
    %v1183 = vunpack.c.l.b16 %v294
    %v1184 = vunpack.c.h.b16 %v294
    %v1185 = vunpack.c.l.b16 %v295
    %v1186 = vunpack.c.h.b16 %v295
    %v1187 = vunpack.c.l.b16 %v296
    %v1188 = vunpack.c.h.b16 %v296
    %v1189 = vunpack.c.l.b16 %v297
    %v1190 = vunpack.c.h.b16 %v297
    %v1191 = vunpack.c.l.b16 %v298
    %v1192 = vunpack.c.h.b16 %v298
    %v1193 = vunpack.c.l.b16 %v299
    %v1194 = vunpack.c.h.b16 %v299
    %v1195 = vunpack.c.l.b16 %v300
    %v1196 = vunpack.c.h.b16 %v300
    %v1197 = vunpack.c.l.b16 %v301
    %v1198 = vunpack.c.h.b16 %v301
    %v1199 = vunpack.c.l.b16 %v302
    %v1200 = vunpack.c.h.b16 %v302
    %v1201 = vunpack.c.l.b16 %v303
    %v1202 = vunpack.c.h.b16 %v303
    %v1203 = vunpack.c.l.b16 %v304
    %v1204 = vunpack.c.h.b16 %v304
    %v1205 = vunpack.c.l.b16 %v305
    %v1206 = vunpack.c.h.b16 %v305
    %v1207 = vunpack.c.l.b16 %v306
    %v1208 = vunpack.c.h.b16 %v306
    %v1209 = vunpack.c.l.b16 %v307
    %v1210 = vunpack.c.h.b16 %v307
    %v1211 = vunpack.c.l.b16 %v308
    %v1212 = vunpack.c.h.b16 %v308
    %v1213 = vunpack.c.l.b16 %v309
    %v1214 = vunpack.c.h.b16 %v309
    %v1215 = vunpack.c.l.b16 %v310
    %v1216 = vunpack.c.h.b16 %v310
    %v1217 = vunpack.c.l.b16 %v311
    %v1218 = vunpack.c.h.b16 %v311
    %v1219 = vunpack.c.l.b16 %v312
    %v1220 = vunpack.c.h.b16 %v312
    %v1221 = vunpack.c.l.b16 %v313
    %v1222 = vunpack.c.h.b16 %v313
    %v1223 = vunpack.c.l.b16 %v314
    %v1224 = vunpack.c.h.b16 %v314
    %v1225 = vunpack.c.l.b16 %v315
    %v1226 = vunpack.c.h.b16 %v315
    %v1227 = vunpack.c.l.b16 %v316
    %v1228 = vunpack.c.h.b16 %v316
    %v1229 = vunpack.c.l.b16 %v317
    %v1230 = vunpack.c.h.b16 %v317
    %v1231 = vunpack.c.l.b16 %v318
    %v1232 = vunpack.c.h.b16 %v318
    %v1233 = vunpack.c.l.b16 %v319
    %v1234 = vunpack.c.h.b16 %v319
    %v1235 = vunpack.c.l.b16 %v320
    %v1236 = vunpack.c.h.b16 %v320
    %v1237 = vunpack.c.l.b16 %v321
    %v1238 = vunpack.c.h.b16 %v321
    %v1239 = vunpack.c.l.b16 %v322
    %v1240 = vunpack.c.h.b16 %v322
    %v1241 = vunpack.c.l.b16 %v323
    %v1242 = vunpack.c.h.b16 %v323
    %v1243 = vunpack.c.l.b16 %v324
    %v1244 = vunpack.c.h.b16 %v324
    %v1245 = vunpack.c.l.b16 %v325
    %v1246 = vunpack.c.h.b16 %v325
    %v1247 = vunpack.c.l.b16 %v326
    %v1248 = vunpack.c.h.b16 %v326
    %v1249 = vunpack.c.l.b16 %v327
    %v1250 = vunpack.c.h.b16 %v327
    %v1251 = vunpack.c.l.b16 %v328
    %v1252 = vunpack.c.h.b16 %v328
    %v1253 = vunpack.c.l.b16 %v329
    %v1254 = vunpack.c.h.b16 %v329
    %v1255 = vunpack.c.l.b16 %v330
    %v1256 = vunpack.c.h.b16 %v330
    %v1257 = vunpack.c.l.b16 %v331
    %v1258 = vunpack.c.h.b16 %v331
    %v1259 = vunpack.c.l.b16 %v332
    %v1260 = vunpack.c.h.b16 %v332
    %v1261 = vunpack.c.l.b16 %v333
    %v1262 = vunpack.c.h.b16 %v333
    %v1263 = vunpack.c.l.b16 %v334
    %v1264 = vunpack.c.h.b16 %v334
    %v1265 = vunpack.c.l.b16 %v335
    %v1266 = vunpack.c.h.b16 %v335
    %v1267 = vunpack.c.l.b16 %v336
    %v1268 = vunpack.c.h.b16 %v336
    %v1269 = vunpack.c.l.b16 %v337
    %v1270 = vunpack.c.h.b16 %v337
    %v1271 = vunpack.c.l.b16 %v338
    %v1272 = vunpack.c.h.b16 %v338
    %v1273 = vunpack.c.l.b16 %v339
    %v1274 = vunpack.c.h.b16 %v339
    %v1275 = vunpack.c.l.b16 %v340
    %v1276 = vunpack.c.h.b16 %v340
    %v1277 = vunpack.c.l.b16 %v341
    %v1278 = vunpack.c.h.b16 %v341
    %v1279 = vunpack.c.l.b16 %v342
    %v1280 = vunpack.c.h.b16 %v342
    %v1281 = vunpack.c.l.b16 %v343
    %v1282 = vunpack.c.h.b16 %v343
    %v1283 = vunpack.c.l.b16 %v344
    %v1284 = vunpack.c.h.b16 %v344
    %v1285 = vunpack.c.l.b16 %v345
    %v1286 = vunpack.c.h.b16 %v345
    %v1287 = vunpack.c.l.b16 %v346
    %v1288 = vunpack.c.h.b16 %v346
    %v1289 = vunpack.c.l.b16 %v347
    %v1290 = vunpack.c.h.b16 %v347
    %v1291 = vunpack.c.l.b16 %v348
    %v1292 = vunpack.c.h.b16 %v348
    %v1293 = vunpack.c.l.b16 %v349
    %v1294 = vunpack.c.h.b16 %v349
    %v1295 = vunpack.c.l.b16 %v350
    %v1296 = vunpack.c.h.b16 %v350
    %v1297 = vunpack.c.l.b16 %v351
    %v1298 = vunpack.c.h.b16 %v351
    %v1299 = vunpack.c.l.b16 %v352
    %v1300 = vunpack.c.h.b16 %v352
    %v1301 = vunpack.c.l.b16 %v353
    %v1302 = vunpack.c.h.b16 %v353
    %v1303 = vunpack.c.l.b16 %v354
    %v1304 = vunpack.c.h.b16 %v354
    %v1305 = vunpack.c.l.b16 %v355
    %v1306 = vunpack.c.h.b16 %v355
    %v1307 = vunpack.c.l.b16 %v356
    %v1308 = vunpack.c.h.b16 %v356
    %v1309 = vunpack.c.l.b16 %v357
    %v1310 = vunpack.c.h.b16 %v357
    %v1311 = vunpack.c.l.b16 %v358
    %v1312 = vunpack.c.h.b16 %v358
    %v1313 = vunpack.c.l.b16 %v359
    %v1314 = vunpack.c.h.b16 %v359
    %v1315 = vunpack.c.l.b16 %v360
    %v1316 = vunpack.c.h.b16 %v360
    %v1317 = vunpack.c.l.b16 %v361
    %v1318 = vunpack.c.h.b16 %v361
    %v1319 = vunpack.c.l.b16 %v362
    %v1320 = vunpack.c.h.b16 %v362
    %v1321 = vunpack.c.l.b16 %v363
    %v1322 = vunpack.c.h.b16 %v363
    %v1323 = vunpack.c.l.b16 %v364
    %v1324 = vunpack.c.h.b16 %v364
    %v1325 = vunpack.c.l.b16 %v365
    %v1326 = vunpack.c.h.b16 %v365
    %v1327 = vunpack.c.l.b16 %v366
    %v1328 = vunpack.c.h.b16 %v366
    %v1329 = vunpack.c.l.b16 %v367
    %v1330 = vunpack.c.h.b16 %v367
    %v1331 = vunpack.c.l.b16 %v368
    %v1332 = vunpack.c.h.b16 %v368
    %v1333 = vunpack.c.l.b16 %v369
    %v1334 = vunpack.c.h.b16 %v369
    %v1335 = vunpack.c.l.b16 %v370
    %v1336 = vunpack.c.h.b16 %v370
    %v1337 = vunpack.c.l.b16 %v371
    %v1338 = vunpack.c.h.b16 %v371
    %v1339 = vunpack.c.l.b16 %v372
    %v1340 = vunpack.c.h.b16 %v372
    %v1341 = vunpack.c.l.b16 %v373
    %v1342 = vunpack.c.h.b16 %v373
    %v1343 = vunpack.c.l.b16 %v374
    %v1344 = vunpack.c.h.b16 %v374
    %v1345 = vunpack.c.l.b16 %v375
    %v1346 = vunpack.c.h.b16 %v375
    %v1347 = vunpack.c.l.b16 %v376
    %v1348 = vunpack.c.h.b16 %v376
    %v1349 = vunpack.c.l.b16 %v377
    %v1350 = vunpack.c.h.b16 %v377
    %v1351 = vunpack.c.l.b16 %v378
    %v1352 = vunpack.c.h.b16 %v378
    %v1353 = vunpack.c.l.b16 %v379
    %v1354 = vunpack.c.h.b16 %v379
    %v1355 = vunpack.c.l.b16 %v380
    %v1356 = vunpack.c.h.b16 %v380
    %v1357 = vunpack.c.l.b16 %v381
    %v1358 = vunpack.c.h.b16 %v381
    %v1359 = vunpack.c.l.b16 %v382
    %v1360 = vunpack.c.h.b16 %v382
    %v1361 = vunpack.c.l.b16 %v383
    %v1362 = vunpack.c.h.b16 %v383
    %v1363 = vunpack.c.l.b16 %v384
    %v1364 = vunpack.c.h.b16 %v384
    %v1365 = vunpack.c.l.b16 %v385
    %v1366 = vunpack.c.h.b16 %v385
    %v1367 = vunpack.c.l.b16 %v386
    %v1368 = vunpack.c.h.b16 %v386
    %v1369 = vunpack.c.l.b16 %v387
    %v1370 = vunpack.c.h.b16 %v387
    %v1371 = vunpack.c.l.b16 %v388
    %v1372 = vunpack.c.h.b16 %v388
    %v1373 = vunpack.c.l.b16 %v389
    %v1374 = vunpack.c.h.b16 %v389
    %v1375 = vunpack.c.l.b16 %v390
    %v1376 = vunpack.c.h.b16 %v390
    %v1377 = vunpack.c.l.b16 %v391
    %v1378 = vunpack.c.h.b16 %v391
    %v1379 = vunpack.c.l.b16 %v392
    %v1380 = vunpack.c.h.b16 %v392
    %v1381 = vunpack.c.l.b16 %v393
    %v1382 = vunpack.c.h.b16 %v393
    %v1383 = vunpack.c.l.b16 %v394
    %v1384 = vunpack.c.h.b16 %v394
    %v1385 = vunpack.c.l.b16 %v395
    %v1386 = vunpack.c.h.b16 %v395
    %v1387 = vunpack.c.l.b16 %v396
    %v1388 = vunpack.c.h.b16 %v396
    %v1389 = vpack.c.b16 %v825, %v813
    %v1390 = vpack.c.b16 %v826, %v814
    %v1391 = vpack.c.b16 %v827, %v815
    %v1392 = vpack.c.b16 %v828, %v816
    %v1393 = vpack.c.b16 %v829, %v817
    %v1394 = vpack.c.b16 %v830, %v818
    %v1395 = vpack.c.b16 %v831, %v819
    %v1396 = vpack.c.b16 %v832, %v820
    %v1397 = vpack.c.b16 %v833, %v821
    %v1398 = vpack.c.b16 %v834, %v822
    %v1399 = vpack.c.b16 %v835, %v823
    %v1400 = vpack.c.b16 %v836, %v824
    %v1401 = vpack.c.b16 %v849, %v837
    %v1402 = vpack.c.b16 %v850, %v838
    %v1403 = vpack.c.b16 %v851, %v839
    %v1404 = vpack.c.b16 %v852, %v840
    %v1405 = vpack.c.b16 %v853, %v841
    %v1406 = vpack.c.b16 %v854, %v842
    %v1407 = vpack.c.b16 %v855, %v843
    %v1408 = vpack.c.b16 %v856, %v844
    %v1409 = vpack.c.b16 %v857, %v845
    %v1410 = vpack.c.b16 %v858, %v846
    %v1411 = vpack.c.b16 %v859, %v847
    %v1412 = vpack.c.b16 %v860, %v848
    %v1413 = vpack.c.b16 %v873, %v861
    %v1414 = vpack.c.b16 %v874, %v862
    %v1415 = vpack.c.b16 %v875, %v863
    %v1416 = vpack.c.b16 %v876, %v864
    %v1417 = vpack.c.b16 %v877, %v865
    %v1418 = vpack.c.b16 %v878, %v866
    %v1419 = vpack.c.b16 %v879, %v867
    %v1420 = vpack.c.b16 %v880, %v868
    %v1421 = vpack.c.b16 %v881, %v869
    %v1422 = vpack.c.b16 %v882, %v870
    %v1423 = vpack.c.b16 %v883, %v871
    %v1424 = vpack.c.b16 %v884, %v872
    %v1425 = vpack.c.b16 %v897, %v885
    %v1426 = vpack.c.b16 %v898, %v886
    %v1427 = vpack.c.b16 %v899, %v887
    %v1428 = vpack.c.b16 %v900, %v888
    %v1429 = vpack.c.b16 %v901, %v889
    %v1430 = vpack.c.b16 %v902, %v890
    %v1431 = vpack.c.b16 %v903, %v891
    %v1432 = vpack.c.b16 %v904, %v892
    %v1433 = vpack.c.b16 %v905, %v893
    %v1434 = vpack.c.b16 %v906, %v894
    %v1435 = vpack.c.b16 %v907, %v895
    %v1436 = vpack.c.b16 %v908, %v896
    %v1437 = vpack.c.b16 %v921, %v909
    %v1438 = vpack.c.b16 %v922, %v910
    %v1439 = vpack.c.b16 %v923, %v911
    %v1440 = vpack.c.b16 %v924, %v912
    %v1441 = vpack.c.b16 %v925, %v913
    %v1442 = vpack.c.b16 %v926, %v914
    %v1443 = vpack.c.b16 %v927, %v915
    %v1444 = vpack.c.b16 %v928, %v916
    %v1445 = vpack.c.b16 %v929, %v917
    %v1446 = vpack.c.b16 %v930, %v918
    %v1447 = vpack.c.b16 %v931, %v919
    %v1448 = vpack.c.b16 %v932, %v920
    %v1449 = vpack.c.b16 %v945, %v933
    %v1450 = vpack.c.b16 %v946, %v934
    %v1451 = vpack.c.b16 %v947, %v935
    %v1452 = vpack.c.b16 %v948, %v936
    %v1453 = vpack.c.b16 %v949, %v937
    %v1454 = vpack.c.b16 %v950, %v938
    %v1455 = vpack.c.b16 %v951, %v939
    %v1456 = vpack.c.b16 %v952, %v940
    %v1457 = vpack.c.b16 %v953, %v941
    %v1458 = vpack.c.b16 %v954, %v942
    %v1459 = vpack.c.b16 %v955, %v943
    %v1460 = vpack.c.b16 %v956, %v944
    %v1461 = vpack.c.b16 %v969, %v957
    %v1462 = vpack.c.b16 %v970, %v958
    %v1463 = vpack.c.b16 %v971, %v959
    %v1464 = vpack.c.b16 %v972, %v960
    %v1465 = vpack.c.b16 %v973, %v961
    %v1466 = vpack.c.b16 %v974, %v962
    %v1467 = vpack.c.b16 %v975, %v963
    %v1468 = vpack.c.b16 %v976, %v964
    %v1469 = vpack.c.b16 %v977, %v965
    %v1470 = vpack.c.b16 %v978, %v966
    %v1471 = vpack.c.b16 %v979, %v967
    %v1472 = vpack.c.b16 %v980, %v968
    %v1473 = vpack.c.b16 %v993, %v981
    %v1474 = vpack.c.b16 %v994, %v982
    %v1475 = vpack.c.b16 %v995, %v983
    %v1476 = vpack.c.b16 %v996, %v984
    %v1477 = vpack.c.b16 %v997, %v985
    %v1478 = vpack.c.b16 %v998, %v986
    %v1479 = vpack.c.b16 %v999, %v987
    %v1480 = vpack.c.b16 %v1000, %v988
    %v1481 = vpack.c.b16 %v1001, %v989
    %v1482 = vpack.c.b16 %v1002, %v990
    %v1483 = vpack.c.b16 %v1003, %v991
    %v1484 = vpack.c.b16 %v1004, %v992
    %v1485 = vpack.c.b16 %v1017, %v1005
    %v1486 = vpack.c.b16 %v1018, %v1006
    %v1487 = vpack.c.b16 %v1019, %v1007
    %v1488 = vpack.c.b16 %v1020, %v1008
    %v1489 = vpack.c.b16 %v1021, %v1009
    %v1490 = vpack.c.b16 %v1022, %v1010
    %v1491 = vpack.c.b16 %v1023, %v1011
    %v1492 = vpack.c.b16 %v1024, %v1012
    %v1493 = vpack.c.b16 %v1025, %v1013
    %v1494 = vpack.c.b16 %v1026, %v1014
    %v1495 = vpack.c.b16 %v1027, %v1015
    %v1496 = vpack.c.b16 %v1028, %v1016
    %v1497 = vpack.c.b16 %v1041, %v1029
    %v1498 = vpack.c.b16 %v1042, %v1030
    %v1499 = vpack.c.b16 %v1043, %v1031
    %v1500 = vpack.c.b16 %v1044, %v1032
    %v1501 = vpack.c.b16 %v1045, %v1033
    %v1502 = vpack.c.b16 %v1046, %v1034
    %v1503 = vpack.c.b16 %v1047, %v1035
    %v1504 = vpack.c.b16 %v1048, %v1036
    %v1505 = vpack.c.b16 %v1049, %v1037
    %v1506 = vpack.c.b16 %v1050, %v1038
    %v1507 = vpack.c.b16 %v1051, %v1039
    %v1508 = vpack.c.b16 %v1052, %v1040
    %v1509 = vpack.c.b16 %v1065, %v1053
    %v1510 = vpack.c.b16 %v1066, %v1054
    %v1511 = vpack.c.b16 %v1067, %v1055
    %v1512 = vpack.c.b16 %v1068, %v1056
    %v1513 = vpack.c.b16 %v1069, %v1057
    %v1514 = vpack.c.b16 %v1070, %v1058
    %v1515 = vpack.c.b16 %v1071, %v1059
    %v1516 = vpack.c.b16 %v1072, %v1060
    %v1517 = vpack.c.b16 %v1073, %v1061
    %v1518 = vpack.c.b16 %v1074, %v1062
    %v1519 = vpack.c.b16 %v1075, %v1063
    %v1520 = vpack.c.b16 %v1076, %v1064
    %v1521 = vpack.c.b16 %v1089, %v1077
    %v1522 = vpack.c.b16 %v1090, %v1078
    %v1523 = vpack.c.b16 %v1091, %v1079
    %v1524 = vpack.c.b16 %v1092, %v1080
    %v1525 = vpack.c.b16 %v1093, %v1081
    %v1526 = vpack.c.b16 %v1094, %v1082
    %v1527 = vpack.c.b16 %v1095, %v1083
    %v1528 = vpack.c.b16 %v1096, %v1084
    %v1529 = vpack.c.b16 %v1097, %v1085
    %v1530 = vpack.c.b16 %v1098, %v1086
    %v1531 = vpack.c.b16 %v1099, %v1087
    %v1532 = vpack.c.b16 %v1100, %v1088
    %v1533 = vpack.c.b16 %v1113, %v1101
    %v1534 = vpack.c.b16 %v1114, %v1102
    %v1535 = vpack.c.b16 %v1115, %v1103
    %v1536 = vpack.c.b16 %v1116, %v1104
    %v1537 = vpack.c.b16 %v1117, %v1105
    %v1538 = vpack.c.b16 %v1118, %v1106
    %v1539 = vpack.c.b16 %v1119, %v1107
    %v1540 = vpack.c.b16 %v1120, %v1108
    %v1541 = vpack.c.b16 %v1121, %v1109
    %v1542 = vpack.c.b16 %v1122, %v1110
    %v1543 = vpack.c.b16 %v1123, %v1111
    %v1544 = vpack.c.b16 %v1124, %v1112
    %v1545 = vpack.c.b16 %v1137, %v1125
    %v1546 = vpack.c.b16 %v1138, %v1126
    %v1547 = vpack.c.b16 %v1139, %v1127
    %v1548 = vpack.c.b16 %v1140, %v1128
    %v1549 = vpack.c.b16 %v1141, %v1129
    %v1550 = vpack.c.b16 %v1142, %v1130
    %v1551 = vpack.c.b16 %v1143, %v1131
    %v1552 = vpack.c.b16 %v1144, %v1132
    %v1553 = vpack.c.b16 %v1145, %v1133
    %v1554 = vpack.c.b16 %v1146, %v1134
    %v1555 = vpack.c.b16 %v1147, %v1135
    %v1556 = vpack.c.b16 %v1148, %v1136
    %v1557 = vpack.c.b16 %v1161, %v1149
    %v1558 = vpack.c.b16 %v1162, %v1150
    %v1559 = vpack.c.b16 %v1163, %v1151
    %v1560 = vpack.c.b16 %v1164, %v1152
    %v1561 = vpack.c.b16 %v1165, %v1153
    %v1562 = vpack.c.b16 %v1166, %v1154
    %v1563 = vpack.c.b16 %v1167, %v1155
    %v1564 = vpack.c.b16 %v1168, %v1156
    %v1565 = vpack.c.b16 %v1169, %v1157
    %v1566 = vpack.c.b16 %v1170, %v1158
    %v1567 = vpack.c.b16 %v1171, %v1159
    %v1568 = vpack.c.b16 %v1172, %v1160
    %v1569 = vpack.c.b16 %v1185, %v1173
    %v1570 = vpack.c.b16 %v1186, %v1174
    %v1571 = vpack.c.b16 %v1187, %v1175
    %v1572 = vpack.c.b16 %v1188, %v1176
    %v1573 = vpack.c.b16 %v1189, %v1177
    %v1574 = vpack.c.b16 %v1190, %v1178
    %v1575 = vpack.c.b16 %v1191, %v1179
    %v1576 = vpack.c.b16 %v1192, %v1180
    %v1577 = vpack.c.b16 %v1193, %v1181
    %v1578 = vpack.c.b16 %v1194, %v1182
    %v1579 = vpack.c.b16 %v1195, %v1183
    %v1580 = vpack.c.b16 %v1196, %v1184
    %v1581 = vpack.c.b16 %v1209, %v1197
    %v1582 = vpack.c.b16 %v1210, %v1198
    %v1583 = vpack.c.b16 %v1211, %v1199
    %v1584 = vpack.c.b16 %v1212, %v1200
    %v1585 = vpack.c.b16 %v1213, %v1201
    %v1586 = vpack.c.b16 %v1214, %v1202
    %v1587 = vpack.c.b16 %v1215, %v1203
    %v1588 = vpack.c.b16 %v1216, %v1204
    %v1589 = vpack.c.b16 %v1217, %v1205
    %v1590 = vpack.c.b16 %v1218, %v1206
    %v1591 = vpack.c.b16 %v1219, %v1207
    %v1592 = vpack.c.b16 %v1220, %v1208
    %v1593 = vpack.c.b16 %v1233, %v1221
    %v1594 = vpack.c.b16 %v1234, %v1222
    %v1595 = vpack.c.b16 %v1235, %v1223
    %v1596 = vpack.c.b16 %v1236, %v1224
    %v1597 = vpack.c.b16 %v1237, %v1225
    %v1598 = vpack.c.b16 %v1238, %v1226
    %v1599 = vpack.c.b16 %v1239, %v1227
    %v1600 = vpack.c.b16 %v1240, %v1228
    %v1601 = vpack.c.b16 %v1241, %v1229
    %v1602 = vpack.c.b16 %v1242, %v1230
    %v1603 = vpack.c.b16 %v1243, %v1231
    %v1604 = vpack.c.b16 %v1244, %v1232
    %v1605 = vpack.c.b16 %v1257, %v1245
    %v1606 = vpack.c.b16 %v1258, %v1246
    %v1607 = vpack.c.b16 %v1259, %v1247
    %v1608 = vpack.c.b16 %v1260, %v1248
    %v1609 = vpack.c.b16 %v1261, %v1249
    %v1610 = vpack.c.b16 %v1262, %v1250
    %v1611 = vpack.c.b16 %v1263, %v1251
    %v1612 = vpack.c.b16 %v1264, %v1252
    %v1613 = vpack.c.b16 %v1265, %v1253
    %v1614 = vpack.c.b16 %v1266, %v1254
    %v1615 = vpack.c.b16 %v1267, %v1255
    %v1616 = vpack.c.b16 %v1268, %v1256
    %v1617 = vpack.c.b16 %v1281, %v1269
    %v1618 = vpack.c.b16 %v1282, %v1270
    %v1619 = vpack.c.b16 %v1283, %v1271
    %v1620 = vpack.c.b16 %v1284, %v1272
    %v1621 = vpack.c.b16 %v1285, %v1273
    %v1622 = vpack.c.b16 %v1286, %v1274
    %v1623 = vpack.c.b16 %v1287, %v1275
    %v1624 = vpack.c.b16 %v1288, %v1276
    %v1625 = vpack.c.b16 %v1289, %v1277
    %v1626 = vpack.c.b16 %v1290, %v1278
    %v1627 = vpack.c.b16 %v1291, %v1279
    %v1628 = vpack.c.b16 %v1292, %v1280
    %v1629 = vpack.c.b16 %v1305, %v1293
    %v1630 = vpack.c.b16 %v1306, %v1294
    %v1631 = vpack.c.b16 %v1307, %v1295
    %v1632 = vpack.c.b16 %v1308, %v1296
    %v1633 = vpack.c.b16 %v1309, %v1297
    %v1634 = vpack.c.b16 %v1310, %v1298
    %v1635 = vpack.c.b16 %v1311, %v1299
    %v1636 = vpack.c.b16 %v1312, %v1300
    %v1637 = vpack.c.b16 %v1313, %v1301
    %v1638 = vpack.c.b16 %v1314, %v1302
    %v1639 = vpack.c.b16 %v1315, %v1303
    %v1640 = vpack.c.b16 %v1316, %v1304
    %v1641 = vpack.c.b16 %v1329, %v1317
    %v1642 = vpack.c.b16 %v1330, %v1318
    %v1643 = vpack.c.b16 %v1331, %v1319
    %v1644 = vpack.c.b16 %v1332, %v1320
    %v1645 = vpack.c.b16 %v1333, %v1321
    %v1646 = vpack.c.b16 %v1334, %v1322
    %v1647 = vpack.c.b16 %v1335, %v1323
    %v1648 = vpack.c.b16 %v1336, %v1324
    %v1649 = vpack.c.b16 %v1337, %v1325
    %v1650 = vpack.c.b16 %v1338, %v1326
    %v1651 = vpack.c.b16 %v1339, %v1327
    %v1652 = vpack.c.b16 %v1340, %v1328
    %v1653 = vpack.c.b16 %v1353, %v1341
    %v1654 = vpack.c.b16 %v1354, %v1342
    %v1655 = vpack.c.b16 %v1355, %v1343
    %v1656 = vpack.c.b16 %v1356, %v1344
    %v1657 = vpack.c.b16 %v1357, %v1345
    %v1658 = vpack.c.b16 %v1358, %v1346
    %v1659 = vpack.c.b16 %v1359, %v1347
    %v1660 = vpack.c.b16 %v1360, %v1348
    %v1661 = vpack.c.b16 %v1361, %v1349
    %v1662 = vpack.c.b16 %v1362, %v1350
    %v1663 = vpack.c.b16 %v1363, %v1351
    %v1664 = vpack.c.b16 %v1364, %v1352
    %v1665 = vpack.c.b16 %v1377, %v1365
    %v1666 = vpack.c.b16 %v1378, %v1366
    %v1667 = vpack.c.b16 %v1379, %v1367
    %v1668 = vpack.c.b16 %v1380, %v1368
    %v1669 = vpack.c.b16 %v1381, %v1369
    %v1670 = vpack.c.b16 %v1382, %v1370
    %v1671 = vpack.c.b16 %v1383, %v1371
    %v1672 = vpack.c.b16 %v1384, %v1372
    %v1673 = vpack.c.b16 %v1385, %v1373
    %v1674 = vpack.c.b16 %v1386, %v1374
    %v1675 = vpack.c.b16 %v1387, %v1375
    %v1676 = vpack.c.b16 %v1388, %v1376
    %1965 = vmatprep.subr.bf16.mxu0 %v1474
    %1966 = vmatpush1.bf16.msra.mxu0 %v1473
    %1967 = vmatprep.subr.bf16.mxu0 %v1462
    %1968 = vmatpush1.bf16.msra.mxu0 %v1461
    %1969 = vmatprep.subr.bf16.mxu0 %v1450
    %1970 = vmatpush1.bf16.msra.mxu0 %v1449
    %1971 = vmatprep.subr.bf16.mxu0 %v1438
    %1972 = vmatpush1.bf16.msra.mxu0 %v1437
    %1973 = vmatprep.subr.bf16.mxu0 %v1426
    %1974 = vmatpush1.bf16.msra.mxu0 %v1425
    %1975 = vmatprep.subr.bf16.mxu0 %v1414
    %1976 = vmatpush1.bf16.msra.mxu0 %v1413
    %1977 = vmatprep.subr.bf16.mxu0 %v1402
    %1978 = vmatpush1.bf16.msra.mxu0 %v1401
    %1979 = vmatprep.subr.bf16.mxu0 %v1390
    %1980 = vmatpush1.bf16.msra.mxu0 %v1389
    %1981 = vmatprep.subr.bf16.mxu0 %v1570
    %1982 = vmatpush2.bf16.msra.mxu0 %v1569
    %1983 = vmatprep.subr.bf16.mxu0 %v1558
    %1984 = vmatpush2.bf16.msra.mxu0 %v1557
    %1985 = vmatprep.subr.bf16.mxu0 %v1546
    %1986 = vmatpush2.bf16.msra.mxu0 %v1545
    %1987 = vmatprep.subr.bf16.mxu0 %v1534
    %1988 = vmatpush2.bf16.msra.mxu0 %v1533
    %1989 = vmatprep.subr.bf16.mxu0 %v1522
    %1990 = vmatpush2.bf16.msra.mxu0 %v1521
    %1991 = vmatprep.subr.bf16.mxu0 %v1510
    %1992 = vmatpush2.bf16.msra.mxu0 %v1509
    %1993 = vmatprep.subr.bf16.mxu0 %v1498
    %1994 = vmatpush2.bf16.msra.mxu0 %v1497
    %1995 = vmatprep.subr.bf16.mxu0 %v1486
    %1996 = vmatpush2.bf16.msra.mxu0 %v1485
    %1997 = vmatprep.mubr.bf16.mxu0 %v502
    %1998 = vmatmul.mubr.bf16.gmra.mxu0 %v501
    %v1999 = vpop.f32.mrf.mxu0
    %v2000 = vadd.f32 %v404, %v1999
    %v2001 = vpop.f32.mrf.mxu0
    %v2002 = vadd.f32 %v408, %v2001
    %v2003 = vpop.f32.mrf.mxu0
    %v2004 = vadd.f32 %v404, %v2003
    %v2005 = vpop.f32.mrf.mxu0
    %v2006 = vadd.f32 %v408, %v2005
    %2007 = vmatprep.mubr.bf16.mxu0 %v505
    %2008 = vmatmul.mubr.bf16.gmra.mxu0 %v504
    %v2009 = vpop.f32.mrf.mxu0
    %v2010 = vadd.f32 %v404, %v2009
    %v2011 = vpop.f32.mrf.mxu0
    %v2012 = vadd.f32 %v408, %v2011
    %v2013 = vpop.f32.mrf.mxu0
    %v2014 = vadd.f32 %v404, %v2013
    %v2015 = vpop.f32.mrf.mxu0
    %v2016 = vadd.f32 %v408, %v2015
    %2017 = vmatprep.mubr.bf16.mxu0 %v508
    %2018 = vmatmul.mubr.bf16.gmra.mxu0 %v507
    %v2019 = vpop.f32.mrf.mxu0
    %v2020 = vadd.f32 %v404, %v2019
    %v2021 = vpop.f32.mrf.mxu0
    %v2022 = vadd.f32 %v408, %v2021
    %v2023 = vpop.f32.mrf.mxu0
    %v2024 = vadd.f32 %v404, %v2023
    %v2025 = vpop.f32.mrf.mxu0
    %v2026 = vadd.f32 %v408, %v2025
    %2027 = vmatprep.mubr.bf16.mxu0 %v511
    %2028 = vmatmul.mubr.bf16.gmra.mxu0 %v510
    %v2029 = vpop.f32.mrf.mxu0
    %v2030 = vadd.f32 %v404, %v2029
    %v2031 = vpop.f32.mrf.mxu0
    %v2032 = vadd.f32 %v408, %v2031
    %v2033 = vpop.f32.mrf.mxu0
    %v2034 = vadd.f32 %v404, %v2033
    %v2035 = vpop.f32.mrf.mxu0
    %v2036 = vadd.f32 %v408, %v2035
    %2037 = vdwg.mxu0
    %2038 = vmatprep.subr.bf16.mxu0 %v1666
    %2039 = vmatpush1.bf16.msra.mxu0 %v1665
    %2040 = vmatprep.subr.bf16.mxu0 %v1654
    %2041 = vmatpush1.bf16.msra.mxu0 %v1653
    %2042 = vmatprep.subr.bf16.mxu0 %v1642
    %2043 = vmatpush1.bf16.msra.mxu0 %v1641
    %2044 = vmatprep.subr.bf16.mxu0 %v1630
    %2045 = vmatpush1.bf16.msra.mxu0 %v1629
    %2046 = vmatprep.subr.bf16.mxu0 %v1618
    %2047 = vmatpush1.bf16.msra.mxu0 %v1617
    %2048 = vmatprep.subr.bf16.mxu0 %v1606
    %2049 = vmatpush1.bf16.msra.mxu0 %v1605
    %2050 = vmatprep.subr.bf16.mxu0 %v1594
    %2051 = vmatpush1.bf16.msra.mxu0 %v1593
    %2052 = vmatprep.subr.bf16.mxu0 %v1582
    %2053 = vmatpush1.bf16.msra.mxu0 %v1581
    %2054 = vmatprep.subr.bf16.mxu0 0
    %2055 = vmatpush2.bf16.msra.mxu0 0
    %2056 = vmatprep.subr.bf16.mxu0 0
    %2057 = vmatpush2.bf16.msra.mxu0 0
    %2058 = vmatprep.subr.bf16.mxu0 0
    %2059 = vmatpush2.bf16.msra.mxu0 0
    %2060 = vmatprep.subr.bf16.mxu0 0
    %2061 = vmatpush2.bf16.msra.mxu0 0
    %2062 = vmatprep.subr.bf16.mxu0 0
    %2063 = vmatpush2.bf16.msra.mxu0 0
    %2064 = vmatprep.subr.bf16.mxu0 0
    %2065 = vmatpush2.bf16.msra.mxu0 0
    %2066 = vmatprep.subr.bf16.mxu0 0
    %2067 = vmatpush2.bf16.msra.mxu0 0
    %2068 = vmatprep.subr.bf16.mxu0 0
    %2069 = vmatpush2.bf16.msra.mxu0 0
    %2070 = vmatprep.mubr.bf16.mxu0 0
    %2071 = vmatmul.mubr.bf16.gmra.mxu0 %v503
    %v2072 = vpop.f32.mrf.mxu0
    %v2073 = vadd.f32 %v2000, %v2072
    %v2074 = vpop.f32.mrf.mxu0
    %v2075 = vadd.f32 %v2002, %v2074
    %v2076 = vpop.f32.mrf.mxu0
    %v2077 = vadd.f32 %v2004, %v2076
    %v2078 = vpop.f32.mrf.mxu0
    %v2079 = vadd.f32 %v2006, %v2078
    %2080 = vmatprep.mubr.bf16.mxu0 0
    %2081 = vmatmul.mubr.bf16.gmra.mxu0 %v506
    %v2082 = vpop.f32.mrf.mxu0
    %v2083 = vadd.f32 %v2010, %v2082
    %v2084 = vpop.f32.mrf.mxu0
    %v2085 = vadd.f32 %v2012, %v2084
    %v2086 = vpop.f32.mrf.mxu0
    %v2087 = vadd.f32 %v2014, %v2086
    %v2088 = vpop.f32.mrf.mxu0
    %v2089 = vadd.f32 %v2016, %v2088
    %2090 = vmatprep.mubr.bf16.mxu0 0
    %2091 = vmatmul.mubr.bf16.gmra.mxu0 %v509
    %v2092 = vpop.f32.mrf.mxu0
    %v2093 = vadd.f32 %v2020, %v2092
    %v2094 = vpop.f32.mrf.mxu0
    %v2095 = vadd.f32 %v2022, %v2094
    %v2096 = vpop.f32.mrf.mxu0
    %v2097 = vadd.f32 %v2024, %v2096
    %v2098 = vpop.f32.mrf.mxu0
    %v2099 = vadd.f32 %v2026, %v2098
    %2100 = vmatprep.mubr.bf16.mxu0 0
    %2101 = vmatmul.mubr.bf16.gmra.mxu0 %v512
    %v2102 = vpop.f32.mrf.mxu0
    %v2103 = vadd.f32 %v2030, %v2102
    %v2104 = vpop.f32.mrf.mxu0
    %v2105 = vadd.f32 %v2032, %v2104
    %v2106 = vpop.f32.mrf.mxu0
    %v2107 = vadd.f32 %v2034, %v2106
    %v2108 = vpop.f32.mrf.mxu0
    %v2109 = vadd.f32 %v2036, %v2108
    %2110 = vdwg.mxu0
    %2111 = vmatprep.subr.bf16.mxu0 %v1476
    %2112 = vmatpush1.bf16.msra.mxu0 %v1475
    %2113 = vmatprep.subr.bf16.mxu0 %v1464
    %2114 = vmatpush1.bf16.msra.mxu0 %v1463
    %2115 = vmatprep.subr.bf16.mxu0 %v1452
    %2116 = vmatpush1.bf16.msra.mxu0 %v1451
    %2117 = vmatprep.subr.bf16.mxu0 %v1440
    %2118 = vmatpush1.bf16.msra.mxu0 %v1439
    %2119 = vmatprep.subr.bf16.mxu0 %v1428
    %2120 = vmatpush1.bf16.msra.mxu0 %v1427
    %2121 = vmatprep.subr.bf16.mxu0 %v1416
    %2122 = vmatpush1.bf16.msra.mxu0 %v1415
    %2123 = vmatprep.subr.bf16.mxu0 %v1404
    %2124 = vmatpush1.bf16.msra.mxu0 %v1403
    %2125 = vmatprep.subr.bf16.mxu0 %v1392
    %2126 = vmatpush1.bf16.msra.mxu0 %v1391
    %2127 = vmatprep.subr.bf16.mxu0 %v1572
    %2128 = vmatpush2.bf16.msra.mxu0 %v1571
    %2129 = vmatprep.subr.bf16.mxu0 %v1560
    %2130 = vmatpush2.bf16.msra.mxu0 %v1559
    %2131 = vmatprep.subr.bf16.mxu0 %v1548
    %2132 = vmatpush2.bf16.msra.mxu0 %v1547
    %2133 = vmatprep.subr.bf16.mxu0 %v1536
    %2134 = vmatpush2.bf16.msra.mxu0 %v1535
    %2135 = vmatprep.subr.bf16.mxu0 %v1524
    %2136 = vmatpush2.bf16.msra.mxu0 %v1523
    %2137 = vmatprep.subr.bf16.mxu0 %v1512
    %2138 = vmatpush2.bf16.msra.mxu0 %v1511
    %2139 = vmatprep.subr.bf16.mxu0 %v1500
    %2140 = vmatpush2.bf16.msra.mxu0 %v1499
    %2141 = vmatprep.subr.bf16.mxu0 %v1488
    %2142 = vmatpush2.bf16.msra.mxu0 %v1487
    %2143 = vmatprep.mubr.bf16.mxu0 %v502
    %2144 = vmatmul.mubr.bf16.gmra.mxu0 %v501
    %v2145 = vpop.f32.mrf.mxu0
    %v2146 = vadd.f32 %v412, %v2145
    %v2147 = vpop.f32.mrf.mxu0
    %v2148 = vadd.f32 %v416, %v2147
    %v2149 = vpop.f32.mrf.mxu0
    %v2150 = vadd.f32 %v412, %v2149
    %v2151 = vpop.f32.mrf.mxu0
    %v2152 = vadd.f32 %v416, %v2151
    %2153 = vmatprep.mubr.bf16.mxu0 %v505
    %2154 = vmatmul.mubr.bf16.gmra.mxu0 %v504
    %v2155 = vpop.f32.mrf.mxu0
    %v2156 = vadd.f32 %v412, %v2155
    %v2157 = vpop.f32.mrf.mxu0
    %v2158 = vadd.f32 %v416, %v2157
    %v2159 = vpop.f32.mrf.mxu0
    %v2160 = vadd.f32 %v412, %v2159
    %v2161 = vpop.f32.mrf.mxu0
    %v2162 = vadd.f32 %v416, %v2161
    %2163 = vmatprep.mubr.bf16.mxu0 %v508
    %2164 = vmatmul.mubr.bf16.gmra.mxu0 %v507
    %v2165 = vpop.f32.mrf.mxu0
    %v2166 = vadd.f32 %v412, %v2165
    %v2167 = vpop.f32.mrf.mxu0
    %v2168 = vadd.f32 %v416, %v2167
    %v2169 = vpop.f32.mrf.mxu0
    %v2170 = vadd.f32 %v412, %v2169
    %v2171 = vpop.f32.mrf.mxu0
    %v2172 = vadd.f32 %v416, %v2171
    %2173 = vmatprep.mubr.bf16.mxu0 %v511
    %2174 = vmatmul.mubr.bf16.gmra.mxu0 %v510
    %v2175 = vpop.f32.mrf.mxu0
    %v2176 = vadd.f32 %v412, %v2175
    %v2177 = vpop.f32.mrf.mxu0
    %v2178 = vadd.f32 %v416, %v2177
    %v2179 = vpop.f32.mrf.mxu0
    %v2180 = vadd.f32 %v412, %v2179
    %v2181 = vpop.f32.mrf.mxu0
    %v2182 = vadd.f32 %v416, %v2181
    %2183 = vdwg.mxu0
    %2184 = vmatprep.subr.bf16.mxu0 %v1668
    %2185 = vmatpush1.bf16.msra.mxu0 %v1667
    %2186 = vmatprep.subr.bf16.mxu0 %v1656
    %2187 = vmatpush1.bf16.msra.mxu0 %v1655
    %2188 = vmatprep.subr.bf16.mxu0 %v1644
    %2189 = vmatpush1.bf16.msra.mxu0 %v1643
    %2190 = vmatprep.subr.bf16.mxu0 %v1632
    %2191 = vmatpush1.bf16.msra.mxu0 %v1631
    %2192 = vmatprep.subr.bf16.mxu0 %v1620
    %2193 = vmatpush1.bf16.msra.mxu0 %v1619
    %2194 = vmatprep.subr.bf16.mxu0 %v1608
    %2195 = vmatpush1.bf16.msra.mxu0 %v1607
    %2196 = vmatprep.subr.bf16.mxu0 %v1596
    %2197 = vmatpush1.bf16.msra.mxu0 %v1595
    %2198 = vmatprep.subr.bf16.mxu0 %v1584
    %2199 = vmatpush1.bf16.msra.mxu0 %v1583
    %2200 = vmatprep.subr.bf16.mxu0 0
    %2201 = vmatpush2.bf16.msra.mxu0 0
    %2202 = vmatprep.subr.bf16.mxu0 0
    %2203 = vmatpush2.bf16.msra.mxu0 0
    %2204 = vmatprep.subr.bf16.mxu0 0
    %2205 = vmatpush2.bf16.msra.mxu0 0
    %2206 = vmatprep.subr.bf16.mxu0 0
    %2207 = vmatpush2.bf16.msra.mxu0 0
    %2208 = vmatprep.subr.bf16.mxu0 0
    %2209 = vmatpush2.bf16.msra.mxu0 0
    %2210 = vmatprep.subr.bf16.mxu0 0
    %2211 = vmatpush2.bf16.msra.mxu0 0
    %2212 = vmatprep.subr.bf16.mxu0 0
    %2213 = vmatpush2.bf16.msra.mxu0 0
    %2214 = vmatprep.subr.bf16.mxu0 0
    %2215 = vmatpush2.bf16.msra.mxu0 0
    %2216 = vmatprep.mubr.bf16.mxu0 0
    %2217 = vmatmul.mubr.bf16.gmra.mxu0 %v503
    %v2218 = vpop.f32.mrf.mxu0
    %v2219 = vadd.f32 %v2146, %v2218
    %v2220 = vpop.f32.mrf.mxu0
    %v2221 = vadd.f32 %v2148, %v2220
    %v2222 = vpop.f32.mrf.mxu0
    %v2223 = vadd.f32 %v2150, %v2222
    %v2224 = vpop.f32.mrf.mxu0
    %v2225 = vadd.f32 %v2152, %v2224
    %2226 = vmatprep.mubr.bf16.mxu0 0
    %2227 = vmatmul.mubr.bf16.gmra.mxu0 %v506
    %v2228 = vpop.f32.mrf.mxu0
    %v2229 = vadd.f32 %v2156, %v2228
    %v2230 = vpop.f32.mrf.mxu0
    %v2231 = vadd.f32 %v2158, %v2230
    %v2232 = vpop.f32.mrf.mxu0
    %v2233 = vadd.f32 %v2160, %v2232
    %v2234 = vpop.f32.mrf.mxu0
    %v2235 = vadd.f32 %v2162, %v2234
    %2236 = vmatprep.mubr.bf16.mxu0 0
    %2237 = vmatmul.mubr.bf16.gmra.mxu0 %v509
    %v2238 = vpop.f32.mrf.mxu0
    %v2239 = vadd.f32 %v2166, %v2238
    %v2240 = vpop.f32.mrf.mxu0
    %v2241 = vadd.f32 %v2168, %v2240
    %v2242 = vpop.f32.mrf.mxu0
    %v2243 = vadd.f32 %v2170, %v2242
    %v2244 = vpop.f32.mrf.mxu0
    %v2245 = vadd.f32 %v2172, %v2244
    %2246 = vmatprep.mubr.bf16.mxu0 0
    %2247 = vmatmul.mubr.bf16.gmra.mxu0 %v512
    %v2248 = vpop.f32.mrf.mxu0
    %v2249 = vadd.f32 %v2176, %v2248
    %v2250 = vpop.f32.mrf.mxu0
    %v2251 = vadd.f32 %v2178, %v2250
    %v2252 = vpop.f32.mrf.mxu0
    %v2253 = vadd.f32 %v2180, %v2252
    %v2254 = vpop.f32.mrf.mxu0
    %v2255 = vadd.f32 %v2182, %v2254
    %2256 = vdwg.mxu0
    %2257 = vmatprep.subr.bf16.mxu0 %v1478
    %2258 = vmatpush1.bf16.msra.mxu0 %v1477
    %2259 = vmatprep.subr.bf16.mxu0 %v1466
    %2260 = vmatpush1.bf16.msra.mxu0 %v1465
    %2261 = vmatprep.subr.bf16.mxu0 %v1454
    %2262 = vmatpush1.bf16.msra.mxu0 %v1453
    %2263 = vmatprep.subr.bf16.mxu0 %v1442
    %2264 = vmatpush1.bf16.msra.mxu0 %v1441
    %2265 = vmatprep.subr.bf16.mxu0 %v1430
    %2266 = vmatpush1.bf16.msra.mxu0 %v1429
    %2267 = vmatprep.subr.bf16.mxu0 %v1418
    %2268 = vmatpush1.bf16.msra.mxu0 %v1417
    %2269 = vmatprep.subr.bf16.mxu0 %v1406
    %2270 = vmatpush1.bf16.msra.mxu0 %v1405
    %2271 = vmatprep.subr.bf16.mxu0 %v1394
    %2272 = vmatpush1.bf16.msra.mxu0 %v1393
    %2273 = vmatprep.subr.bf16.mxu0 %v1574
    %2274 = vmatpush2.bf16.msra.mxu0 %v1573
    %2275 = vmatprep.subr.bf16.mxu0 %v1562
    %2276 = vmatpush2.bf16.msra.mxu0 %v1561
    %2277 = vmatprep.subr.bf16.mxu0 %v1550
    %2278 = vmatpush2.bf16.msra.mxu0 %v1549
    %2279 = vmatprep.subr.bf16.mxu0 %v1538
    %2280 = vmatpush2.bf16.msra.mxu0 %v1537
    %2281 = vmatprep.subr.bf16.mxu0 %v1526
    %2282 = vmatpush2.bf16.msra.mxu0 %v1525
    %2283 = vmatprep.subr.bf16.mxu0 %v1514
    %2284 = vmatpush2.bf16.msra.mxu0 %v1513
    %2285 = vmatprep.subr.bf16.mxu0 %v1502
    %2286 = vmatpush2.bf16.msra.mxu0 %v1501
    %2287 = vmatprep.subr.bf16.mxu0 %v1490
    %2288 = vmatpush2.bf16.msra.mxu0 %v1489
    %2289 = vmatprep.mubr.bf16.mxu0 %v502
    %2290 = vmatmul.mubr.bf16.gmra.mxu0 %v501
    %v2291 = vpop.f32.mrf.mxu0
    %v2292 = vadd.f32 %v420, %v2291
    %v2293 = vpop.f32.mrf.mxu0
    %v2294 = vadd.f32 %v424, %v2293
    %v2295 = vpop.f32.mrf.mxu0
    %v2296 = vadd.f32 %v420, %v2295
    %v2297 = vpop.f32.mrf.mxu0
    %v2298 = vadd.f32 %v424, %v2297
    %2299 = vmatprep.mubr.bf16.mxu0 %v505
    %2300 = vmatmul.mubr.bf16.gmra.mxu0 %v504
    %v2301 = vpop.f32.mrf.mxu0
    %v2302 = vadd.f32 %v420, %v2301
    %v2303 = vpop.f32.mrf.mxu0
    %v2304 = vadd.f32 %v424, %v2303
    %v2305 = vpop.f32.mrf.mxu0
    %v2306 = vadd.f32 %v420, %v2305
    %v2307 = vpop.f32.mrf.mxu0
    %v2308 = vadd.f32 %v424, %v2307
    %2309 = vmatprep.mubr.bf16.mxu0 %v508
    %2310 = vmatmul.mubr.bf16.gmra.mxu0 %v507
    %v2311 = vpop.f32.mrf.mxu0
    %v2312 = vadd.f32 %v420, %v2311
    %v2313 = vpop.f32.mrf.mxu0
    %v2314 = vadd.f32 %v424, %v2313
    %v2315 = vpop.f32.mrf.mxu0
    %v2316 = vadd.f32 %v420, %v2315
    %v2317 = vpop.f32.mrf.mxu0
    %v2318 = vadd.f32 %v424, %v2317
    %2319 = vmatprep.mubr.bf16.mxu0 %v511
    %2320 = vmatmul.mubr.bf16.gmra.mxu0 %v510
    %v2321 = vpop.f32.mrf.mxu0
    %v2322 = vadd.f32 %v420, %v2321
    %v2323 = vpop.f32.mrf.mxu0
    %v2324 = vadd.f32 %v424, %v2323
    %v2325 = vpop.f32.mrf.mxu0
    %v2326 = vadd.f32 %v420, %v2325
    %v2327 = vpop.f32.mrf.mxu0
    %v2328 = vadd.f32 %v424, %v2327
    %2329 = vdwg.mxu0
    %2330 = vmatprep.subr.bf16.mxu0 %v1670
    %2331 = vmatpush1.bf16.msra.mxu0 %v1669
    %2332 = vmatprep.subr.bf16.mxu0 %v1658
    %2333 = vmatpush1.bf16.msra.mxu0 %v1657
    %2334 = vmatprep.subr.bf16.mxu0 %v1646
    %2335 = vmatpush1.bf16.msra.mxu0 %v1645
    %2336 = vmatprep.subr.bf16.mxu0 %v1634
    %2337 = vmatpush1.bf16.msra.mxu0 %v1633
    %2338 = vmatprep.subr.bf16.mxu0 %v1622
    %2339 = vmatpush1.bf16.msra.mxu0 %v1621
    %2340 = vmatprep.subr.bf16.mxu0 %v1610
    %2341 = vmatpush1.bf16.msra.mxu0 %v1609
    %2342 = vmatprep.subr.bf16.mxu0 %v1598
    %2343 = vmatpush1.bf16.msra.mxu0 %v1597
    %2344 = vmatprep.subr.bf16.mxu0 %v1586
    %2345 = vmatpush1.bf16.msra.mxu0 %v1585
    %2346 = vmatprep.subr.bf16.mxu0 0
    %2347 = vmatpush2.bf16.msra.mxu0 0
    %2348 = vmatprep.subr.bf16.mxu0 0
    %2349 = vmatpush2.bf16.msra.mxu0 0
    %2350 = vmatprep.subr.bf16.mxu0 0
    %2351 = vmatpush2.bf16.msra.mxu0 0
    %2352 = vmatprep.subr.bf16.mxu0 0
    %2353 = vmatpush2.bf16.msra.mxu0 0
    %2354 = vmatprep.subr.bf16.mxu0 0
    %2355 = vmatpush2.bf16.msra.mxu0 0
    %2356 = vmatprep.subr.bf16.mxu0 0
    %2357 = vmatpush2.bf16.msra.mxu0 0
    %2358 = vmatprep.subr.bf16.mxu0 0
    %2359 = vmatpush2.bf16.msra.mxu0 0
    %2360 = vmatprep.subr.bf16.mxu0 0
    %2361 = vmatpush2.bf16.msra.mxu0 0
    %2362 = vmatprep.mubr.bf16.mxu0 0
    %2363 = vmatmul.mubr.bf16.gmra.mxu0 %v503
    %v2364 = vpop.f32.mrf.mxu0
    %v2365 = vadd.f32 %v2292, %v2364
    %v2366 = vpop.f32.mrf.mxu0
    %v2367 = vadd.f32 %v2294, %v2366
    %v2368 = vpop.f32.mrf.mxu0
    %v2369 = vadd.f32 %v2296, %v2368
    %v2370 = vpop.f32.mrf.mxu0
    %v2371 = vadd.f32 %v2298, %v2370
    %2372 = vmatprep.mubr.bf16.mxu0 0
    %2373 = vmatmul.mubr.bf16.gmra.mxu0 %v506
    %v2374 = vpop.f32.mrf.mxu0
    %v2375 = vadd.f32 %v2302, %v2374
    %v2376 = vpop.f32.mrf.mxu0
    %v2377 = vadd.f32 %v2304, %v2376
    %v2378 = vpop.f32.mrf.mxu0
    %v2379 = vadd.f32 %v2306, %v2378
    %v2380 = vpop.f32.mrf.mxu0
    %v2381 = vadd.f32 %v2308, %v2380
    %2382 = vmatprep.mubr.bf16.mxu0 0
    %2383 = vmatmul.mubr.bf16.gmra.mxu0 %v509
    %v2384 = vpop.f32.mrf.mxu0
    %v2385 = vadd.f32 %v2312, %v2384
    %v2386 = vpop.f32.mrf.mxu0
    %v2387 = vadd.f32 %v2314, %v2386
    %v2388 = vpop.f32.mrf.mxu0
    %v2389 = vadd.f32 %v2316, %v2388
    %v2390 = vpop.f32.mrf.mxu0
    %v2391 = vadd.f32 %v2318, %v2390
    %2392 = vmatprep.mubr.bf16.mxu0 0
    %2393 = vmatmul.mubr.bf16.gmra.mxu0 %v512
    %v2394 = vpop.f32.mrf.mxu0
    %v2395 = vadd.f32 %v2322, %v2394
    %v2396 = vpop.f32.mrf.mxu0
    %v2397 = vadd.f32 %v2324, %v2396
    %v2398 = vpop.f32.mrf.mxu0
    %v2399 = vadd.f32 %v2326, %v2398
    %v2400 = vpop.f32.mrf.mxu0
    %v2401 = vadd.f32 %v2328, %v2400
    %2402 = vdwg.mxu0
    %2403 = vmatprep.subr.bf16.mxu0 %v1480
    %2404 = vmatpush1.bf16.msra.mxu0 %v1479
    %2405 = vmatprep.subr.bf16.mxu0 %v1468
    %2406 = vmatpush1.bf16.msra.mxu0 %v1467
    %2407 = vmatprep.subr.bf16.mxu0 %v1456
    %2408 = vmatpush1.bf16.msra.mxu0 %v1455
    %2409 = vmatprep.subr.bf16.mxu0 %v1444
    %2410 = vmatpush1.bf16.msra.mxu0 %v1443
    %2411 = vmatprep.subr.bf16.mxu0 %v1432
    %2412 = vmatpush1.bf16.msra.mxu0 %v1431
    %2413 = vmatprep.subr.bf16.mxu0 %v1420
    %2414 = vmatpush1.bf16.msra.mxu0 %v1419
    %2415 = vmatprep.subr.bf16.mxu0 %v1408
    %2416 = vmatpush1.bf16.msra.mxu0 %v1407
    %2417 = vmatprep.subr.bf16.mxu0 %v1396
    %2418 = vmatpush1.bf16.msra.mxu0 %v1395
    %2419 = vmatprep.subr.bf16.mxu0 %v1576
    %2420 = vmatpush2.bf16.msra.mxu0 %v1575
    %2421 = vmatprep.subr.bf16.mxu0 %v1564
    %2422 = vmatpush2.bf16.msra.mxu0 %v1563
    %2423 = vmatprep.subr.bf16.mxu0 %v1552
    %2424 = vmatpush2.bf16.msra.mxu0 %v1551
    %2425 = vmatprep.subr.bf16.mxu0 %v1540
    %2426 = vmatpush2.bf16.msra.mxu0 %v1539
    %2427 = vmatprep.subr.bf16.mxu0 %v1528
    %2428 = vmatpush2.bf16.msra.mxu0 %v1527
    %2429 = vmatprep.subr.bf16.mxu0 %v1516
    %2430 = vmatpush2.bf16.msra.mxu0 %v1515
    %2431 = vmatprep.subr.bf16.mxu0 %v1504
    %2432 = vmatpush2.bf16.msra.mxu0 %v1503
    %2433 = vmatprep.subr.bf16.mxu0 %v1492
    %2434 = vmatpush2.bf16.msra.mxu0 %v1491
    %2435 = vmatprep.mubr.bf16.mxu0 %v502
    %2436 = vmatmul.mubr.bf16.gmra.mxu0 %v501
    %v2437 = vpop.f32.mrf.mxu0
    %v2438 = vadd.f32 %v428, %v2437
    %v2439 = vpop.f32.mrf.mxu0
    %v2440 = vadd.f32 %v432, %v2439
    %v2441 = vpop.f32.mrf.mxu0
    %v2442 = vadd.f32 %v428, %v2441
    %v2443 = vpop.f32.mrf.mxu0
    %v2444 = vadd.f32 %v432, %v2443
    %2445 = vmatprep.mubr.bf16.mxu0 %v505
    %2446 = vmatmul.mubr.bf16.gmra.mxu0 %v504
    %v2447 = vpop.f32.mrf.mxu0
    %v2448 = vadd.f32 %v428, %v2447
    %v2449 = vpop.f32.mrf.mxu0
    %v2450 = vadd.f32 %v432, %v2449
    %v2451 = vpop.f32.mrf.mxu0
    %v2452 = vadd.f32 %v428, %v2451
    %v2453 = vpop.f32.mrf.mxu0
    %v2454 = vadd.f32 %v432, %v2453
    %2455 = vmatprep.mubr.bf16.mxu0 %v508
    %2456 = vmatmul.mubr.bf16.gmra.mxu0 %v507
    %v2457 = vpop.f32.mrf.mxu0
    %v2458 = vadd.f32 %v428, %v2457
    %v2459 = vpop.f32.mrf.mxu0
    %v2460 = vadd.f32 %v432, %v2459
    %v2461 = vpop.f32.mrf.mxu0
    %v2462 = vadd.f32 %v428, %v2461
    %v2463 = vpop.f32.mrf.mxu0
    %v2464 = vadd.f32 %v432, %v2463
    %2465 = vmatprep.mubr.bf16.mxu0 %v511
    %2466 = vmatmul.mubr.bf16.gmra.mxu0 %v510
    %v2467 = vpop.f32.mrf.mxu0
    %v2468 = vadd.f32 %v428, %v2467
    %v2469 = vpop.f32.mrf.mxu0
    %v2470 = vadd.f32 %v432, %v2469
    %v2471 = vpop.f32.mrf.mxu0
    %v2472 = vadd.f32 %v428, %v2471
    %v2473 = vpop.f32.mrf.mxu0
    %v2474 = vadd.f32 %v432, %v2473
    %2475 = vdwg.mxu0
    %2476 = vmatprep.subr.bf16.mxu0 %v1672
    %2477 = vmatpush1.bf16.msra.mxu0 %v1671
    %2478 = vmatprep.subr.bf16.mxu0 %v1660
    %2479 = vmatpush1.bf16.msra.mxu0 %v1659
    %2480 = vmatprep.subr.bf16.mxu0 %v1648
    %2481 = vmatpush1.bf16.msra.mxu0 %v1647
    %2482 = vmatprep.subr.bf16.mxu0 %v1636
    %2483 = vmatpush1.bf16.msra.mxu0 %v1635
    %2484 = vmatprep.subr.bf16.mxu0 %v1624
    %2485 = vmatpush1.bf16.msra.mxu0 %v1623
    %2486 = vmatprep.subr.bf16.mxu0 %v1612
    %2487 = vmatpush1.bf16.msra.mxu0 %v1611
    %2488 = vmatprep.subr.bf16.mxu0 %v1600
    %2489 = vmatpush1.bf16.msra.mxu0 %v1599
    %2490 = vmatprep.subr.bf16.mxu0 %v1588
    %2491 = vmatpush1.bf16.msra.mxu0 %v1587
    %2492 = vmatprep.subr.bf16.mxu0 0
    %2493 = vmatpush2.bf16.msra.mxu0 0
    %2494 = vmatprep.subr.bf16.mxu0 0
    %2495 = vmatpush2.bf16.msra.mxu0 0
    %2496 = vmatprep.subr.bf16.mxu0 0
    %2497 = vmatpush2.bf16.msra.mxu0 0
    %2498 = vmatprep.subr.bf16.mxu0 0
    %2499 = vmatpush2.bf16.msra.mxu0 0
    %2500 = vmatprep.subr.bf16.mxu0 0
    %2501 = vmatpush2.bf16.msra.mxu0 0
    %2502 = vmatprep.subr.bf16.mxu0 0
    %2503 = vmatpush2.bf16.msra.mxu0 0
    %2504 = vmatprep.subr.bf16.mxu0 0
    %2505 = vmatpush2.bf16.msra.mxu0 0
    %2506 = vmatprep.subr.bf16.mxu0 0
    %2507 = vmatpush2.bf16.msra.mxu0 0
    %2508 = vmatprep.mubr.bf16.mxu0 0
    %2509 = vmatmul.mubr.bf16.gmra.mxu0 %v503
    %v2510 = vpop.f32.mrf.mxu0
    %v2511 = vadd.f32 %v2438, %v2510
    %v2512 = vpop.f32.mrf.mxu0
    %v2513 = vadd.f32 %v2440, %v2512
    %v2514 = vpop.f32.mrf.mxu0
    %v2515 = vadd.f32 %v2442, %v2514
    %v2516 = vpop.f32.mrf.mxu0
    %v2517 = vadd.f32 %v2444, %v2516
    %2518 = vmatprep.mubr.bf16.mxu0 0
    %2519 = vmatmul.mubr.bf16.gmra.mxu0 %v506
    %v2520 = vpop.f32.mrf.mxu0
    %v2521 = vadd.f32 %v2448, %v2520
    %v2522 = vpop.f32.mrf.mxu0
    %v2523 = vadd.f32 %v2450, %v2522
    %v2524 = vpop.f32.mrf.mxu0
    %v2525 = vadd.f32 %v2452, %v2524
    %v2526 = vpop.f32.mrf.mxu0
    %v2527 = vadd.f32 %v2454, %v2526
    %2528 = vmatprep.mubr.bf16.mxu0 0
    %2529 = vmatmul.mubr.bf16.gmra.mxu0 %v509
    %v2530 = vpop.f32.mrf.mxu0
    %v2531 = vadd.f32 %v2458, %v2530
    %v2532 = vpop.f32.mrf.mxu0
    %v2533 = vadd.f32 %v2460, %v2532
    %v2534 = vpop.f32.mrf.mxu0
    %v2535 = vadd.f32 %v2462, %v2534
    %v2536 = vpop.f32.mrf.mxu0
    %v2537 = vadd.f32 %v2464, %v2536
    %2538 = vmatprep.mubr.bf16.mxu0 0
    %2539 = vmatmul.mubr.bf16.gmra.mxu0 %v512
    %v2540 = vpop.f32.mrf.mxu0
    %v2541 = vadd.f32 %v2468, %v2540
    %v2542 = vpop.f32.mrf.mxu0
    %v2543 = vadd.f32 %v2470, %v2542
    %v2544 = vpop.f32.mrf.mxu0
    %v2545 = vadd.f32 %v2472, %v2544
    %v2546 = vpop.f32.mrf.mxu0
    %v2547 = vadd.f32 %v2474, %v2546
    %2548 = vdwg.mxu0
    %2549 = vmatprep.subr.bf16.mxu0 %v1482
    %2550 = vmatpush1.bf16.msra.mxu0 %v1481
    %2551 = vmatprep.subr.bf16.mxu0 %v1470
    %2552 = vmatpush1.bf16.msra.mxu0 %v1469
    %2553 = vmatprep.subr.bf16.mxu0 %v1458
    %2554 = vmatpush1.bf16.msra.mxu0 %v1457
    %2555 = vmatprep.subr.bf16.mxu0 %v1446
    %2556 = vmatpush1.bf16.msra.mxu0 %v1445
    %2557 = vmatprep.subr.bf16.mxu0 %v1434
    %2558 = vmatpush1.bf16.msra.mxu0 %v1433
    %2559 = vmatprep.subr.bf16.mxu0 %v1422
    %2560 = vmatpush1.bf16.msra.mxu0 %v1421
    %2561 = vmatprep.subr.bf16.mxu0 %v1410
    %2562 = vmatpush1.bf16.msra.mxu0 %v1409
    %2563 = vmatprep.subr.bf16.mxu0 %v1398
    %2564 = vmatpush1.bf16.msra.mxu0 %v1397
    %2565 = vmatprep.subr.bf16.mxu0 %v1578
    %2566 = vmatpush2.bf16.msra.mxu0 %v1577
    %2567 = vmatprep.subr.bf16.mxu0 %v1566
    %2568 = vmatpush2.bf16.msra.mxu0 %v1565
    %2569 = vmatprep.subr.bf16.mxu0 %v1554
    %2570 = vmatpush2.bf16.msra.mxu0 %v1553
    %2571 = vmatprep.subr.bf16.mxu0 %v1542
    %2572 = vmatpush2.bf16.msra.mxu0 %v1541
    %2573 = vmatprep.subr.bf16.mxu0 %v1530
    %2574 = vmatpush2.bf16.msra.mxu0 %v1529
    %2575 = vmatprep.subr.bf16.mxu0 %v1518
    %2576 = vmatpush2.bf16.msra.mxu0 %v1517
    %2577 = vmatprep.subr.bf16.mxu0 %v1506
    %2578 = vmatpush2.bf16.msra.mxu0 %v1505
    %2579 = vmatprep.subr.bf16.mxu0 %v1494
    %2580 = vmatpush2.bf16.msra.mxu0 %v1493
    %2581 = vmatprep.mubr.bf16.mxu0 %v502
    %2582 = vmatmul.mubr.bf16.gmra.mxu0 %v501
    %v2583 = vpop.f32.mrf.mxu0
    %v2584 = vadd.f32 %v436, %v2583
    %v2585 = vpop.f32.mrf.mxu0
    %v2586 = vadd.f32 %v440, %v2585
    %v2587 = vpop.f32.mrf.mxu0
    %v2588 = vadd.f32 %v436, %v2587
    %v2589 = vpop.f32.mrf.mxu0
    %v2590 = vadd.f32 %v440, %v2589
    %2591 = vmatprep.mubr.bf16.mxu0 %v505
    %2592 = vmatmul.mubr.bf16.gmra.mxu0 %v504
    %v2593 = vpop.f32.mrf.mxu0
    %v2594 = vadd.f32 %v436, %v2593
    %v2595 = vpop.f32.mrf.mxu0
    %v2596 = vadd.f32 %v440, %v2595
    %v2597 = vpop.f32.mrf.mxu0
    %v2598 = vadd.f32 %v436, %v2597
    %v2599 = vpop.f32.mrf.mxu0
    %v2600 = vadd.f32 %v440, %v2599
    %2601 = vmatprep.mubr.bf16.mxu0 %v508
    %2602 = vmatmul.mubr.bf16.gmra.mxu0 %v507
    %v2603 = vpop.f32.mrf.mxu0
    %v2604 = vadd.f32 %v436, %v2603
    %v2605 = vpop.f32.mrf.mxu0
    %v2606 = vadd.f32 %v440, %v2605
    %v2607 = vpop.f32.mrf.mxu0
    %v2608 = vadd.f32 %v436, %v2607
    %v2609 = vpop.f32.mrf.mxu0
    %v2610 = vadd.f32 %v440, %v2609
    %2611 = vmatprep.mubr.bf16.mxu0 %v511
    %2612 = vmatmul.mubr.bf16.gmra.mxu0 %v510
    %v2613 = vpop.f32.mrf.mxu0
    %v2614 = vadd.f32 %v436, %v2613
    %v2615 = vpop.f32.mrf.mxu0
    %v2616 = vadd.f32 %v440, %v2615
    %v2617 = vpop.f32.mrf.mxu0
    %v2618 = vadd.f32 %v436, %v2617
    %v2619 = vpop.f32.mrf.mxu0
    %v2620 = vadd.f32 %v440, %v2619
    %2621 = vdwg.mxu0
    %2622 = vmatprep.subr.bf16.mxu0 %v1674
    %2623 = vmatpush1.bf16.msra.mxu0 %v1673
    %2624 = vmatprep.subr.bf16.mxu0 %v1662
    %2625 = vmatpush1.bf16.msra.mxu0 %v1661
    %2626 = vmatprep.subr.bf16.mxu0 %v1650
    %2627 = vmatpush1.bf16.msra.mxu0 %v1649
    %2628 = vmatprep.subr.bf16.mxu0 %v1638
    %2629 = vmatpush1.bf16.msra.mxu0 %v1637
    %2630 = vmatprep.subr.bf16.mxu0 %v1626
    %2631 = vmatpush1.bf16.msra.mxu0 %v1625
    %2632 = vmatprep.subr.bf16.mxu0 %v1614
    %2633 = vmatpush1.bf16.msra.mxu0 %v1613
    %2634 = vmatprep.subr.bf16.mxu0 %v1602
    %2635 = vmatpush1.bf16.msra.mxu0 %v1601
    %2636 = vmatprep.subr.bf16.mxu0 %v1590
    %2637 = vmatpush1.bf16.msra.mxu0 %v1589
    %2638 = vmatprep.subr.bf16.mxu0 0
    %2639 = vmatpush2.bf16.msra.mxu0 0
    %2640 = vmatprep.subr.bf16.mxu0 0
    %2641 = vmatpush2.bf16.msra.mxu0 0
    %2642 = vmatprep.subr.bf16.mxu0 0
    %2643 = vmatpush2.bf16.msra.mxu0 0
    %2644 = vmatprep.subr.bf16.mxu0 0
    %2645 = vmatpush2.bf16.msra.mxu0 0
    %2646 = vmatprep.subr.bf16.mxu0 0
    %2647 = vmatpush2.bf16.msra.mxu0 0
    %2648 = vmatprep.subr.bf16.mxu0 0
    %2649 = vmatpush2.bf16.msra.mxu0 0
    %2650 = vmatprep.subr.bf16.mxu0 0
    %2651 = vmatpush2.bf16.msra.mxu0 0
    %2652 = vmatprep.subr.bf16.mxu0 0
    %2653 = vmatpush2.bf16.msra.mxu0 0
    %2654 = vmatprep.mubr.bf16.mxu0 0
    %2655 = vmatmul.mubr.bf16.gmra.mxu0 %v503
    %v2656 = vpop.f32.mrf.mxu0
    %v2657 = vadd.f32 %v2584, %v2656
    %v2658 = vpop.f32.mrf.mxu0
    %v2659 = vadd.f32 %v2586, %v2658
    %v2660 = vpop.f32.mrf.mxu0
    %v2661 = vadd.f32 %v2588, %v2660
    %v2662 = vpop.f32.mrf.mxu0
    %v2663 = vadd.f32 %v2590, %v2662
    %2664 = vmatprep.mubr.bf16.mxu0 0
    %2665 = vmatmul.mubr.bf16.gmra.mxu0 %v506
    %v2666 = vpop.f32.mrf.mxu0
    %v2667 = vadd.f32 %v2594, %v2666
    %v2668 = vpop.f32.mrf.mxu0
    %v2669 = vadd.f32 %v2596, %v2668
    %v2670 = vpop.f32.mrf.mxu0
    %v2671 = vadd.f32 %v2598, %v2670
    %v2672 = vpop.f32.mrf.mxu0
    %v2673 = vadd.f32 %v2600, %v2672
    %2674 = vmatprep.mubr.bf16.mxu0 0
    %2675 = vmatmul.mubr.bf16.gmra.mxu0 %v509
    %v2676 = vpop.f32.mrf.mxu0
    %v2677 = vadd.f32 %v2604, %v2676
    %v2678 = vpop.f32.mrf.mxu0
    %v2679 = vadd.f32 %v2606, %v2678
    %v2680 = vpop.f32.mrf.mxu0
    %v2681 = vadd.f32 %v2608, %v2680
    %v2682 = vpop.f32.mrf.mxu0
    %v2683 = vadd.f32 %v2610, %v2682
    %2684 = vmatprep.mubr.bf16.mxu0 0
    %2685 = vmatmul.mubr.bf16.gmra.mxu0 %v512
    %v2686 = vpop.f32.mrf.mxu0
    %v2687 = vadd.f32 %v2614, %v2686
    %v2688 = vpop.f32.mrf.mxu0
    %v2689 = vadd.f32 %v2616, %v2688
    %v2690 = vpop.f32.mrf.mxu0
    %v2691 = vadd.f32 %v2618, %v2690
    %v2692 = vpop.f32.mrf.mxu0
    %v2693 = vadd.f32 %v2620, %v2692
    %2694 = vdwg.mxu0
    %2695 = vmatprep.subr.bf16.mxu0 %v1484
    %2696 = vmatpush1.bf16.msra.mxu0 %v1483
    %2697 = vmatprep.subr.bf16.mxu0 %v1472
    %2698 = vmatpush1.bf16.msra.mxu0 %v1471
    %2699 = vmatprep.subr.bf16.mxu0 %v1460
    %2700 = vmatpush1.bf16.msra.mxu0 %v1459
    %2701 = vmatprep.subr.bf16.mxu0 %v1448
    %2702 = vmatpush1.bf16.msra.mxu0 %v1447
    %2703 = vmatprep.subr.bf16.mxu0 %v1436
    %2704 = vmatpush1.bf16.msra.mxu0 %v1435
    %2705 = vmatprep.subr.bf16.mxu0 %v1424
    %2706 = vmatpush1.bf16.msra.mxu0 %v1423
    %2707 = vmatprep.subr.bf16.mxu0 %v1412
    %2708 = vmatpush1.bf16.msra.mxu0 %v1411
    %2709 = vmatprep.subr.bf16.mxu0 %v1400
    %2710 = vmatpush1.bf16.msra.mxu0 %v1399
    %2711 = vmatprep.subr.bf16.mxu0 %v1580
    %2712 = vmatpush2.bf16.msra.mxu0 %v1579
    %2713 = vmatprep.subr.bf16.mxu0 %v1568
    %2714 = vmatpush2.bf16.msra.mxu0 %v1567
    %2715 = vmatprep.subr.bf16.mxu0 %v1556
    %2716 = vmatpush2.bf16.msra.mxu0 %v1555
    %2717 = vmatprep.subr.bf16.mxu0 %v1544
    %2718 = vmatpush2.bf16.msra.mxu0 %v1543
    %2719 = vmatprep.subr.bf16.mxu0 %v1532
    %2720 = vmatpush2.bf16.msra.mxu0 %v1531
    %2721 = vmatprep.subr.bf16.mxu0 %v1520
    %2722 = vmatpush2.bf16.msra.mxu0 %v1519
    %2723 = vmatprep.subr.bf16.mxu0 %v1508
    %2724 = vmatpush2.bf16.msra.mxu0 %v1507
    %2725 = vmatprep.subr.bf16.mxu0 %v1496
    %2726 = vmatpush2.bf16.msra.mxu0 %v1495
    %2727 = vmatprep.mubr.bf16.mxu0 %v502
    %2728 = vmatmul.mubr.bf16.gmra.mxu0 %v501
    %v2729 = vpop.f32.mrf.mxu0
    %v2730 = vadd.f32 %v444, %v2729
    %v2731 = vpop.f32.mrf.mxu0
    %v2732 = vadd.f32 %v448, %v2731
    %v2733 = vpop.f32.mrf.mxu0
    %v2734 = vadd.f32 %v444, %v2733
    %v2735 = vpop.f32.mrf.mxu0
    %v2736 = vadd.f32 %v448, %v2735
    %2737 = vmatprep.mubr.bf16.mxu0 %v505
    %2738 = vmatmul.mubr.bf16.gmra.mxu0 %v504
    %v2739 = vpop.f32.mrf.mxu0
    %v2740 = vadd.f32 %v444, %v2739
    %v2741 = vpop.f32.mrf.mxu0
    %v2742 = vadd.f32 %v448, %v2741
    %v2743 = vpop.f32.mrf.mxu0
    %v2744 = vadd.f32 %v444, %v2743
    %v2745 = vpop.f32.mrf.mxu0
    %v2746 = vadd.f32 %v448, %v2745
    %2747 = vmatprep.mubr.bf16.mxu0 %v508
    %2748 = vmatmul.mubr.bf16.gmra.mxu0 %v507
    %v2749 = vpop.f32.mrf.mxu0
    %v2750 = vadd.f32 %v444, %v2749
    %v2751 = vpop.f32.mrf.mxu0
    %v2752 = vadd.f32 %v448, %v2751
    %v2753 = vpop.f32.mrf.mxu0
    %v2754 = vadd.f32 %v444, %v2753
    %v2755 = vpop.f32.mrf.mxu0
    %v2756 = vadd.f32 %v448, %v2755
    %2757 = vmatprep.mubr.bf16.mxu0 %v511
    %2758 = vmatmul.mubr.bf16.gmra.mxu0 %v510
    %v2759 = vpop.f32.mrf.mxu0
    %v2760 = vadd.f32 %v444, %v2759
    %v2761 = vpop.f32.mrf.mxu0
    %v2762 = vadd.f32 %v448, %v2761
    %v2763 = vpop.f32.mrf.mxu0
    %v2764 = vadd.f32 %v444, %v2763
    %v2765 = vpop.f32.mrf.mxu0
    %v2766 = vadd.f32 %v448, %v2765
    %2767 = vdwg.mxu0
    %2768 = vmatprep.subr.bf16.mxu0 %v1676
    %2769 = vmatpush1.bf16.msra.mxu0 %v1675
    %2770 = vmatprep.subr.bf16.mxu0 %v1664
    %2771 = vmatpush1.bf16.msra.mxu0 %v1663
    %2772 = vmatprep.subr.bf16.mxu0 %v1652
    %2773 = vmatpush1.bf16.msra.mxu0 %v1651
    %2774 = vmatprep.subr.bf16.mxu0 %v1640
    %2775 = vmatpush1.bf16.msra.mxu0 %v1639
    %2776 = vmatprep.subr.bf16.mxu0 %v1628
    %2777 = vmatpush1.bf16.msra.mxu0 %v1627
    %2778 = vmatprep.subr.bf16.mxu0 %v1616
    %2779 = vmatpush1.bf16.msra.mxu0 %v1615
    %2780 = vmatprep.subr.bf16.mxu0 %v1604
    %2781 = vmatpush1.bf16.msra.mxu0 %v1603
    %2782 = vmatprep.subr.bf16.mxu0 %v1592
    %2783 = vmatpush1.bf16.msra.mxu0 %v1591
    %2784 = vmatprep.subr.bf16.mxu0 0
    %2785 = vmatpush2.bf16.msra.mxu0 0
    %2786 = vmatprep.subr.bf16.mxu0 0
    %2787 = vmatpush2.bf16.msra.mxu0 0
    %2788 = vmatprep.subr.bf16.mxu0 0
    %2789 = vmatpush2.bf16.msra.mxu0 0
    %2790 = vmatprep.subr.bf16.mxu0 0
    %2791 = vmatpush2.bf16.msra.mxu0 0
    %2792 = vmatprep.subr.bf16.mxu0 0
    %2793 = vmatpush2.bf16.msra.mxu0 0
    %2794 = vmatprep.subr.bf16.mxu0 0
    %2795 = vmatpush2.bf16.msra.mxu0 0
    %2796 = vmatprep.subr.bf16.mxu0 0
    %2797 = vmatpush2.bf16.msra.mxu0 0
    %2798 = vmatprep.subr.bf16.mxu0 0
    %2799 = vmatpush2.bf16.msra.mxu0 0
    %2800 = vmatprep.mubr.bf16.mxu0 0
    %2801 = vmatmul.mubr.bf16.gmra.mxu0 %v503
    %v2802 = vpop.f32.mrf.mxu0
    %v2803 = vadd.f32 %v2730, %v2802
    %v2804 = vpop.f32.mrf.mxu0
    %v2805 = vadd.f32 %v2732, %v2804
    %v2806 = vpop.f32.mrf.mxu0
    %v2807 = vadd.f32 %v2734, %v2806
    %v2808 = vpop.f32.mrf.mxu0
    %v2809 = vadd.f32 %v2736, %v2808
    %2810 = vmatprep.mubr.bf16.mxu0 0
    %2811 = vmatmul.mubr.bf16.gmra.mxu0 %v506
    %v2812 = vpop.f32.mrf.mxu0
    %v2813 = vadd.f32 %v2740, %v2812
    %v2814 = vpop.f32.mrf.mxu0
    %v2815 = vadd.f32 %v2742, %v2814
    %v2816 = vpop.f32.mrf.mxu0
    %v2817 = vadd.f32 %v2744, %v2816
    %v2818 = vpop.f32.mrf.mxu0
    %v2819 = vadd.f32 %v2746, %v2818
    %2820 = vmatprep.mubr.bf16.mxu0 0
    %2821 = vmatmul.mubr.bf16.gmra.mxu0 %v509
    %v2822 = vpop.f32.mrf.mxu0
    %v2823 = vadd.f32 %v2750, %v2822
    %v2824 = vpop.f32.mrf.mxu0
    %v2825 = vadd.f32 %v2752, %v2824
    %v2826 = vpop.f32.mrf.mxu0
    %v2827 = vadd.f32 %v2754, %v2826
    %v2828 = vpop.f32.mrf.mxu0
    %v2829 = vadd.f32 %v2756, %v2828
    %2830 = vmatprep.mubr.bf16.mxu0 0
    %2831 = vmatmul.mubr.bf16.gmra.mxu0 %v512
    %v2832 = vpop.f32.mrf.mxu0
    %v2833 = vadd.f32 %v2760, %v2832
    %v2834 = vpop.f32.mrf.mxu0
    %v2835 = vadd.f32 %v2762, %v2834
    %v2836 = vpop.f32.mrf.mxu0
    %v2837 = vadd.f32 %v2764, %v2836
    %v2838 = vpop.f32.mrf.mxu0
    %v2839 = vadd.f32 %v2766, %v2838
    %2840 = vdwg.mxu0
    %2841 = vst [vmem:[#allocation2] sm:$0xff] %v2073
    %2842 = vst [vmem:[#allocation2 + $0x8] sm:$0xff] %v2075
    %2843 = vst [vmem:[#allocation2 + $0x10] sm:$0xff] %v2219
    %2844 = vst [vmem:[#allocation2 + $0x18] sm:$0xff] %v2221
    %2845 = vst [vmem:[#allocation2 + $0x20] sm:$0xff] %v2365
    %2846 = vst [vmem:[#allocation2 + $0x28] sm:$0xff] %v2367
    %2847 = vst [vmem:[#allocation2 + $0x30] sm:$0xff] %v2511
    %2848 = vst [vmem:[#allocation2 + $0x38] sm:$0xff] %v2513
    %2849 = vst [vmem:[#allocation2 + $0x40] sm:$0xff] %v2657
    %2850 = vst [vmem:[#allocation2 + $0x48] sm:$0xff] %v2659
    %2851 = vst [vmem:[#allocation2 + $0x50] sm:$0xff] %v2803
    %2852 = vst [vmem:[#allocation2 + $0x58] sm:$0xff] %v2805
    %2853 = vst [vmem:[#allocation2 + $0x60] sm:$0xff] %v2077
    %2854 = vst [vmem:[#allocation2 + $0x68] sm:$0xff] %v2079
    %2855 = vst [vmem:[#allocation2 + $0x70] sm:$0xff] %v2223
    %2856 = vst [vmem:[#allocation2 + $0x78] sm:$0xff] %v2225
    %2857 = vst [vmem:[#allocation2 + $0x80] sm:$0xff] %v2369
    %2858 = vst [vmem:[#allocation2 + $0x88] sm:$0xff] %v2371
    %2859 = vst [vmem:[#allocation2 + $0x90] sm:$0xff] %v2515
    %2860 = vst [vmem:[#allocation2 + $0x98] sm:$0xff] %v2517
    %2861 = vst [vmem:[#allocation2 + $0xa0] sm:$0xff] %v2661
    %2862 = vst [vmem:[#allocation2 + $0xa8] sm:$0xff] %v2663
    %2863 = vst [vmem:[#allocation2 + $0xb0] sm:$0xff] %v2807
    %2864 = vst [vmem:[#allocation2 + $0xb8] sm:$0xff] %v2809
    %2865 = vst [vmem:[#allocation2 + $0xc0] sm:$0xff] %v2083
    %2866 = vst [vmem:[#allocation2 + $0xc8] sm:$0xff] %v2085
    %2867 = vst [vmem:[#allocation2 + $0xd0] sm:$0xff] %v2229
    %2868 = vst [vmem:[#allocation2 + $0xd8] sm:$0xff] %v2231
    %2869 = vst [vmem:[#allocation2 + $0xe0] sm:$0xff] %v2375
    %2870 = vst [vmem:[#allocation2 + $0xe8] sm:$0xff] %v2377
    %2871 = vst [vmem:[#allocation2 + $0xf0] sm:$0xff] %v2521
    %2872 = vst [vmem:[#allocation2 + $0xf8] sm:$0xff] %v2523
    %2873 = vst [vmem:[#allocation2 + $0x100] sm:$0xff] %v2667
    %2874 = vst [vmem:[#allocation2 + $0x108] sm:$0xff] %v2669
    %2875 = vst [vmem:[#allocation2 + $0x110] sm:$0xff] %v2813
    %2876 = vst [vmem:[#allocation2 + $0x118] sm:$0xff] %v2815
    %2877 = vst [vmem:[#allocation2 + $0x120] sm:$0xff] %v2087
    %2878 = vst [vmem:[#allocation2 + $0x128] sm:$0xff] %v2089
    %2879 = vst [vmem:[#allocation2 + $0x130] sm:$0xff] %v2233
    %2880 = vst [vmem:[#allocation2 + $0x138] sm:$0xff] %v2235
    %2881 = vst [vmem:[#allocation2 + $0x140] sm:$0xff] %v2379
    %2882 = vst [vmem:[#allocation2 + $0x148] sm:$0xff] %v2381
    %2883 = vst [vmem:[#allocation2 + $0x150] sm:$0xff] %v2525
    %2884 = vst [vmem:[#allocation2 + $0x158] sm:$0xff] %v2527
    %2885 = vst [vmem:[#allocation2 + $0x160] sm:$0xff] %v2671
    %2886 = vst [vmem:[#allocation2 + $0x168] sm:$0xff] %v2673
    %2887 = vst [vmem:[#allocation2 + $0x170] sm:$0xff] %v2817
    %2888 = vst [vmem:[#allocation2 + $0x178] sm:$0xff] %v2819
    %2889 = vst [vmem:[#allocation2 + $0x180] sm:$0xff] %v2093
    %2890 = vst [vmem:[#allocation2 + $0x188] sm:$0xff] %v2095
    %2891 = vst [vmem:[#allocation2 + $0x190] sm:$0xff] %v2239
    %2892 = vst [vmem:[#allocation2 + $0x198] sm:$0xff] %v2241
    %2893 = vst [vmem:[#allocation2 + $0x1a0] sm:$0xff] %v2385
    %2894 = vst [vmem:[#allocation2 + $0x1a8] sm:$0xff] %v2387
    %2895 = vst [vmem:[#allocation2 + $0x1b0] sm:$0xff] %v2531
    %2896 = vst [vmem:[#allocation2 + $0x1b8] sm:$0xff] %v2533
    %2897 = vst [vmem:[#allocation2 + $0x1c0] sm:$0xff] %v2677
    %2898 = vst [vmem:[#allocation2 + $0x1c8] sm:$0xff] %v2679
    %2899 = vst [vmem:[#allocation2 + $0x1d0] sm:$0xff] %v2823
    %2900 = vst [vmem:[#allocation2 + $0x1d8] sm:$0xff] %v2825
    %2901 = vst [vmem:[#allocation2 + $0x1e0] sm:$0xff] %v2097
    %2902 = vst [vmem:[#allocation2 + $0x1e8] sm:$0xff] %v2099
    %2903 = vst [vmem:[#allocation2 + $0x1f0] sm:$0xff] %v2243
    %2904 = vst [vmem:[#allocation2 + $0x1f8] sm:$0xff] %v2245
    %2905 = vst [vmem:[#allocation2 + $0x200] sm:$0xff] %v2389
    %2906 = vst [vmem:[#allocation2 + $0x208] sm:$0xff] %v2391
    %2907 = vst [vmem:[#allocation2 + $0x210] sm:$0xff] %v2535
    %2908 = vst [vmem:[#allocation2 + $0x218] sm:$0xff] %v2537
    %2909 = vst [vmem:[#allocation2 + $0x220] sm:$0xff] %v2681
    %2910 = vst [vmem:[#allocation2 + $0x228] sm:$0xff] %v2683
    %2911 = vst [vmem:[#allocation2 + $0x230] sm:$0xff] %v2827
    %2912 = vst [vmem:[#allocation2 + $0x238] sm:$0xff] %v2829
    %2913 = vst [vmem:[#allocation2 + $0x240] sm:$0xff] %v2103
    %2914 = vst [vmem:[#allocation2 + $0x248] sm:$0xff] %v2105
    %2915 = vst [vmem:[#allocation2 + $0x250] sm:$0xff] %v2249
    %2916 = vst [vmem:[#allocation2 + $0x258] sm:$0xff] %v2251
    %2917 = vst [vmem:[#allocation2 + $0x260] sm:$0xff] %v2395
    %2918 = vst [vmem:[#allocation2 + $0x268] sm:$0xff] %v2397
    %2919 = vst [vmem:[#allocation2 + $0x270] sm:$0xff] %v2541
    %2920 = vst [vmem:[#allocation2 + $0x278] sm:$0xff] %v2543
    %2921 = vst [vmem:[#allocation2 + $0x280] sm:$0xff] %v2687
    %2922 = vst [vmem:[#allocation2 + $0x288] sm:$0xff] %v2689
    %2923 = vst [vmem:[#allocation2 + $0x290] sm:$0xff] %v2833
    %2924 = vst [vmem:[#allocation2 + $0x298] sm:$0xff] %v2835
    %2925 = vst [vmem:[#allocation2 + $0x2a0] sm:$0xff] %v2107
    %2926 = vst [vmem:[#allocation2 + $0x2a8] sm:$0xff] %v2109
    %2927 = vst [vmem:[#allocation2 + $0x2b0] sm:$0xff] %v2253
    %2928 = vst [vmem:[#allocation2 + $0x2b8] sm:$0xff] %v2255
    %2929 = vst [vmem:[#allocation2 + $0x2c0] sm:$0xff] %v2399
    %2930 = vst [vmem:[#allocation2 + $0x2c8] sm:$0xff] %v2401
    %2931 = vst [vmem:[#allocation2 + $0x2d0] sm:$0xff] %v2545
    %2932 = vst [vmem:[#allocation2 + $0x2d8] sm:$0xff] %v2547
    %2933 = vst [vmem:[#allocation2 + $0x2e0] sm:$0xff] %v2691
    %2934 = vst [vmem:[#allocation2 + $0x2e8] sm:$0xff] %v2693
    %2935 = vst [vmem:[#allocation2 + $0x2f0] sm:$0xff] %v2837
    %2936 = vst [vmem:[#allocation2 + $0x2f8] sm:$0xff] %v2839
    %v2937 = vld [vmem:[%s1] sm:$0xff]
    %v2938 = vsub.s32 %v2937, 1
    %s2939 = smul.u32 0, 12
    %s2940 = smul.addr %s2939, 8
    %s2941 = scalar_lea.vmem [#allocation2], %s2940
    %v2942 = vld [vmem:[%s2941] sm:$0xff]
    %v2943 = vld [vmem:[%s2941 + $0x8] sm:$0xff]
    %v2944 = vld [vmem:[%s2941 + $0x10] sm:$0xff]
    %v2945 = vld [vmem:[%s2941 + $0x18] sm:$0xff]
    %v2946 = vld [vmem:[%s2941 + $0x20] sm:$0xff]
    %v2947 = vld [vmem:[%s2941 + $0x28] sm:$0xff]
    %v2948 = vld [vmem:[%s2941 + $0x30] sm:$0xff]
    %v2949 = vld [vmem:[%s2941 + $0x38] sm:$0xff]
    %v2950 = vld [vmem:[%s2941 + $0x40] sm:$0xff]
    %v2951 = vld [vmem:[%s2941 + $0x48] sm:$0xff]
    %v2952 = vld [vmem:[%s2941 + $0x50] sm:$0xff]
    %v2953 = vld [vmem:[%s2941 + $0x58] sm:$0xff]
    %v2954 = vld [vmem:[#allocation8] sm:$0xff]
    %v2955 = vld [vmem:[#allocation8 + $0x8] sm:$0xff]
    %v2956 = vld [vmem:[#allocation8 + $0x10] sm:$0xff]
    %v2957 = vld [vmem:[#allocation8 + $0x18] sm:$0xff]
    %v2958 = vld [vmem:[#allocation8 + $0x20] sm:$0xff]
    %v2959 = vld [vmem:[#allocation8 + $0x28] sm:$0xff]
    %v2960 = vld [vmem:[#allocation8 + $0x30] sm:$0xff]
    %v2961 = vld [vmem:[#allocation8 + $0x38] sm:$0xff]
    %v2962 = vld [vmem:[#allocation8 + $0x40] sm:$0xff]
    %v2963 = vld [vmem:[#allocation8 + $0x48] sm:$0xff]
    %v2964 = vld [vmem:[#allocation8 + $0x50] sm:$0xff]
    %v2965 = vld [vmem:[#allocation8 + $0x58] sm:$0xff]
    %v2966 = vld [vmem:[#allocation8 + $0x60] sm:$0xff]
    %v2967 = vld [vmem:[#allocation8 + $0x68] sm:$0xff]
    %v2968 = vld [vmem:[#allocation8 + $0x70] sm:$0xff]
    %v2969 = vld [vmem:[#allocation8 + $0x78] sm:$0xff]
    %v2970 = vld [vmem:[#allocation8 + $0x80] sm:$0xff]
    %v2971 = vld [vmem:[#allocation8 + $0x88] sm:$0xff]
    %v2972 = vld [vmem:[#allocation8 + $0x90] sm:$0xff]
    %v2973 = vld [vmem:[#allocation8 + $0x98] sm:$0xff]
    %v2974 = vld [vmem:[#allocation8 + $0xa0] sm:$0xff]
    %v2975 = vld [vmem:[#allocation8 + $0xa8] sm:$0xff]
    %v2976 = vld [vmem:[#allocation8 + $0xb0] sm:$0xff]
    %v2977 = vld [vmem:[#allocation8 + $0xb8] sm:$0xff]
    %v2978 = vld [vmem:[#allocation8 + $0xc0] sm:$0xff]
    %v2979 = vld [vmem:[#allocation8 + $0xc8] sm:$0xff]
    %v2980 = vld [vmem:[#allocation8 + $0xd0] sm:$0xff]
    %v2981 = vld [vmem:[#allocation8 + $0xd8] sm:$0xff]
    %v2982 = vld [vmem:[#allocation8 + $0xe0] sm:$0xff]
    %v2983 = vld [vmem:[#allocation8 + $0xe8] sm:$0xff]
    %v2984 = vld [vmem:[#allocation8 + $0xf0] sm:$0xff]
    %v2985 = vld [vmem:[#allocation8 + $0xf8] sm:$0xff]
    %v2986 = vld [vmem:[#allocation8 + $0x100] sm:$0xff]
    %v2987 = vld [vmem:[#allocation8 + $0x108] sm:$0xff]
    %v2988 = vld [vmem:[#allocation8 + $0x110] sm:$0xff]
    %v2989 = vld [vmem:[#allocation8 + $0x118] sm:$0xff]
    %v2990 = vld [vmem:[#allocation8 + $0x120] sm:$0xff]
    %v2991 = vld [vmem:[#allocation8 + $0x128] sm:$0xff]
    %v2992 = vld [vmem:[#allocation8 + $0x130] sm:$0xff]
    %v2993 = vld [vmem:[#allocation8 + $0x138] sm:$0xff]
    %v2994 = vld [vmem:[#allocation8 + $0x140] sm:$0xff]
    %v2995 = vld [vmem:[#allocation8 + $0x148] sm:$0xff]
    %v2996 = vld [vmem:[#allocation8 + $0x150] sm:$0xff]
    %v2997 = vld [vmem:[#allocation8 + $0x158] sm:$0xff]
    %v2998 = vld [vmem:[#allocation8 + $0x160] sm:$0xff]
    %v2999 = vld [vmem:[#allocation8 + $0x168] sm:$0xff]
    %v3000 = vld [vmem:[#allocation8 + $0x170] sm:$0xff]
    %v3001 = vld [vmem:[#allocation8 + $0x178] sm:$0xff]
    %v3002 = vld [vmem:[#allocation8 + $0x180] sm:$0xff]
    %v3003 = vld [vmem:[#allocation8 + $0x188] sm:$0xff]
    %v3004 = vld [vmem:[#allocation8 + $0x190] sm:$0xff]
    %v3005 = vld [vmem:[#allocation8 + $0x198] sm:$0xff]
    %v3006 = vld [vmem:[#allocation8 + $0x1a0] sm:$0xff]
    %v3007 = vld [vmem:[#allocation8 + $0x1a8] sm:$0xff]
    %v3008 = vld [vmem:[#allocation8 + $0x1b0] sm:$0xff]
    %v3009 = vld [vmem:[#allocation8 + $0x1b8] sm:$0xff]
    %v3010 = vld [vmem:[#allocation8 + $0x1c0] sm:$0xff]
    %v3011 = vld [vmem:[#allocation8 + $0x1c8] sm:$0xff]
    %v3012 = vld [vmem:[#allocation8 + $0x1d0] sm:$0xff]
    %v3013 = vld [vmem:[#allocation8 + $0x1d8] sm:$0xff]
    %v3014 = vld [vmem:[#allocation8 + $0x1e0] sm:$0xff]
    %v3015 = vld [vmem:[#allocation8 + $0x1e8] sm:$0xff]
    %v3016 = vld [vmem:[#allocation8 + $0x1f0] sm:$0xff]
    %v3017 = vld [vmem:[#allocation8 + $0x1f8] sm:$0xff]
    %v3018 = vld [vmem:[#allocation8 + $0x200] sm:$0xff]
    %v3019 = vld [vmem:[#allocation8 + $0x208] sm:$0xff]
    %v3020 = vld [vmem:[#allocation8 + $0x210] sm:$0xff]
    %v3021 = vld [vmem:[#allocation8 + $0x218] sm:$0xff]
    %v3022 = vld [vmem:[#allocation8 + $0x220] sm:$0xff]
    %v3023 = vld [vmem:[#allocation8 + $0x228] sm:$0xff]
    %v3024 = vld [vmem:[#allocation8 + $0x230] sm:$0xff]
    %v3025 = vld [vmem:[#allocation8 + $0x238] sm:$0xff]
    %v3026 = vld [vmem:[#allocation8 + $0x240] sm:$0xff]
    %v3027 = vld [vmem:[#allocation8 + $0x248] sm:$0xff]
    %v3028 = vld [vmem:[#allocation8 + $0x250] sm:$0xff]
    %v3029 = vld [vmem:[#allocation8 + $0x258] sm:$0xff]
    %v3030 = vld [vmem:[#allocation8 + $0x260] sm:$0xff]
    %v3031 = vld [vmem:[#allocation8 + $0x268] sm:$0xff]
    %v3032 = vld [vmem:[#allocation8 + $0x270] sm:$0xff]
    %v3033 = vld [vmem:[#allocation8 + $0x278] sm:$0xff]
    %v3034 = vld [vmem:[#allocation8 + $0x280] sm:$0xff]
    %v3035 = vld [vmem:[#allocation8 + $0x288] sm:$0xff]
    %v3036 = vld [vmem:[#allocation8 + $0x290] sm:$0xff]
    %v3037 = vld [vmem:[#allocation8 + $0x298] sm:$0xff]
    %v3038 = vld [vmem:[#allocation8 + $0x2a0] sm:$0xff]
    %v3039 = vld [vmem:[#allocation8 + $0x2a8] sm:$0xff]
    %v3040 = vld [vmem:[#allocation8 + $0x2b0] sm:$0xff]
    %v3041 = vld [vmem:[#allocation8 + $0x2b8] sm:$0xff]
    %v3042 = vld [vmem:[#allocation8 + $0x2c0] sm:$0xff]
    %v3043 = vld [vmem:[#allocation8 + $0x2c8] sm:$0xff]
    %v3044 = vld [vmem:[#allocation8 + $0x2d0] sm:$0xff]
    %v3045 = vld [vmem:[#allocation8 + $0x2d8] sm:$0xff]
    %v3046 = vld [vmem:[#allocation8 + $0x2e0] sm:$0xff]
    %v3047 = vld [vmem:[#allocation8 + $0x2e8] sm:$0xff]
    %v3048 = vld [vmem:[#allocation8 + $0x2f0] sm:$0xff]
    %v3049 = vld [vmem:[#allocation8 + $0x2f8] sm:$0xff]
    %v3050 = vld [vmem:[#allocation8 + $0x300] sm:$0xff]
    %v3051 = vld [vmem:[#allocation8 + $0x308] sm:$0xff]
    %v3052 = vld [vmem:[#allocation8 + $0x310] sm:$0xff]
    %v3053 = vld [vmem:[#allocation8 + $0x318] sm:$0xff]
    %v3054 = vld [vmem:[#allocation8 + $0x320] sm:$0xff]
    %v3055 = vld [vmem:[#allocation8 + $0x328] sm:$0xff]
    %v3056 = vld [vmem:[#allocation8 + $0x330] sm:$0xff]
    %v3057 = vld [vmem:[#allocation8 + $0x338] sm:$0xff]
    %v3058 = vld [vmem:[#allocation8 + $0x340] sm:$0xff]
    %v3059 = vld [vmem:[#allocation8 + $0x348] sm:$0xff]
    %v3060 = vld [vmem:[#allocation8 + $0x350] sm:$0xff]
    %v3061 = vld [vmem:[#allocation8 + $0x358] sm:$0xff]
    %v3062 = vld [vmem:[#allocation8 + $0x360] sm:$0xff]
    %v3063 = vld [vmem:[#allocation8 + $0x368] sm:$0xff]
    %v3064 = vld [vmem:[#allocation8 + $0x370] sm:$0xff]
    %v3065 = vld [vmem:[#allocation8 + $0x378] sm:$0xff]
    %v3066 = vld [vmem:[#allocation8 + $0x380] sm:$0xff]
    %v3067 = vld [vmem:[#allocation8 + $0x388] sm:$0xff]
    %v3068 = vld [vmem:[#allocation8 + $0x390] sm:$0xff]
    %v3069 = vld [vmem:[#allocation8 + $0x398] sm:$0xff]
    %v3070 = vld [vmem:[#allocation8 + $0x3a0] sm:$0xff]
    %v3071 = vld [vmem:[#allocation8 + $0x3a8] sm:$0xff]
    %v3072 = vld [vmem:[#allocation8 + $0x3b0] sm:$0xff]
    %v3073 = vld [vmem:[#allocation8 + $0x3b8] sm:$0xff]
    %v3074 = vld [vmem:[#allocation8 + $0x3c0] sm:$0xff]
    %v3075 = vld [vmem:[#allocation8 + $0x3c8] sm:$0xff]
    %v3076 = vld [vmem:[#allocation8 + $0x3d0] sm:$0xff]
    %v3077 = vld [vmem:[#allocation8 + $0x3d8] sm:$0xff]
    %v3078 = vld [vmem:[#allocation8 + $0x3e0] sm:$0xff]
    %v3079 = vld [vmem:[#allocation8 + $0x3e8] sm:$0xff]
    %v3080 = vld [vmem:[#allocation8 + $0x3f0] sm:$0xff]
    %v3081 = vld [vmem:[#allocation8 + $0x3f8] sm:$0xff]
    %v3082 = vld [vmem:[#allocation8 + $0x400] sm:$0xff]
    %v3083 = vld [vmem:[#allocation8 + $0x408] sm:$0xff]
    %v3084 = vld [vmem:[#allocation8 + $0x410] sm:$0xff]
    %v3085 = vld [vmem:[#allocation8 + $0x418] sm:$0xff]
    %v3086 = vld [vmem:[#allocation8 + $0x420] sm:$0xff]
    %v3087 = vld [vmem:[#allocation8 + $0x428] sm:$0xff]
    %v3088 = vld [vmem:[#allocation8 + $0x430] sm:$0xff]
    %v3089 = vld [vmem:[#allocation8 + $0x438] sm:$0xff]
    %v3090 = vld [vmem:[#allocation8 + $0x440] sm:$0xff]
    %v3091 = vld [vmem:[#allocation8 + $0x448] sm:$0xff]
    %v3092 = vld [vmem:[#allocation8 + $0x450] sm:$0xff]
    %v3093 = vld [vmem:[#allocation8 + $0x458] sm:$0xff]
    %v3094 = vld [vmem:[#allocation8 + $0x460] sm:$0xff]
    %v3095 = vld [vmem:[#allocation8 + $0x468] sm:$0xff]
    %v3096 = vld [vmem:[#allocation8 + $0x470] sm:$0xff]
    %v3097 = vld [vmem:[#allocation8 + $0x478] sm:$0xff]
    %v3098 = vld [vmem:[#allocation8 + $0x480] sm:$0xff]
    %v3099 = vld [vmem:[#allocation8 + $0x488] sm:$0xff]
    %v3100 = vld [vmem:[#allocation8 + $0x490] sm:$0xff]
    %v3101 = vld [vmem:[#allocation8 + $0x498] sm:$0xff]
    %v3102 = vld [vmem:[#allocation8 + $0x4a0] sm:$0xff]
    %v3103 = vld [vmem:[#allocation8 + $0x4a8] sm:$0xff]
    %v3104 = vld [vmem:[#allocation8 + $0x4b0] sm:$0xff]
    %v3105 = vld [vmem:[#allocation8 + $0x4b8] sm:$0xff]
    %v3106 = vld [vmem:[#allocation8 + $0x4c0] sm:$0xff]
    %v3107 = vld [vmem:[#allocation8 + $0x4c8] sm:$0xff]
    %v3108 = vld [vmem:[#allocation8 + $0x4d0] sm:$0xff]
    %v3109 = vld [vmem:[#allocation8 + $0x4d8] sm:$0xff]
    %v3110 = vld [vmem:[#allocation8 + $0x4e0] sm:$0xff]
    %v3111 = vld [vmem:[#allocation8 + $0x4e8] sm:$0xff]
    %v3112 = vld [vmem:[#allocation8 + $0x4f0] sm:$0xff]
    %v3113 = vld [vmem:[#allocation8 + $0x4f8] sm:$0xff]
    %v3114 = vld [vmem:[#allocation8 + $0x500] sm:$0xff]
    %v3115 = vld [vmem:[#allocation8 + $0x508] sm:$0xff]
    %v3116 = vld [vmem:[#allocation8 + $0x510] sm:$0xff]
    %v3117 = vld [vmem:[#allocation8 + $0x518] sm:$0xff]
    %v3118 = vld [vmem:[#allocation8 + $0x520] sm:$0xff]
    %v3119 = vld [vmem:[#allocation8 + $0x528] sm:$0xff]
    %v3120 = vld [vmem:[#allocation8 + $0x530] sm:$0xff]
    %v3121 = vld [vmem:[#allocation8 + $0x538] sm:$0xff]
    %v3122 = vld [vmem:[#allocation8 + $0x540] sm:$0xff]
    %v3123 = vld [vmem:[#allocation8 + $0x548] sm:$0xff]
    %v3124 = vld [vmem:[#allocation8 + $0x550] sm:$0xff]
    %v3125 = vld [vmem:[#allocation8 + $0x558] sm:$0xff]
    %v3126 = vld [vmem:[#allocation8 + $0x560] sm:$0xff]
    %v3127 = vld [vmem:[#allocation8 + $0x568] sm:$0xff]
    %v3128 = vld [vmem:[#allocation8 + $0x570] sm:$0xff]
    %v3129 = vld [vmem:[#allocation8 + $0x578] sm:$0xff]
    %v3130 = vld [vmem:[#allocation8 + $0x580] sm:$0xff]
    %v3131 = vld [vmem:[#allocation8 + $0x588] sm:$0xff]
    %v3132 = vld [vmem:[#allocation8 + $0x590] sm:$0xff]
    %v3133 = vld [vmem:[#allocation8 + $0x598] sm:$0xff]
    %v3134 = vld [vmem:[#allocation8 + $0x5a0] sm:$0xff]
    %v3135 = vld [vmem:[#allocation8 + $0x5a8] sm:$0xff]
    %v3136 = vld [vmem:[#allocation8 + $0x5b0] sm:$0xff]
    %v3137 = vld [vmem:[#allocation8 + $0x5b8] sm:$0xff]
    %v3138 = vld [vmem:[#allocation8 + $0x5c0] sm:$0xff]
    %v3139 = vld [vmem:[#allocation8 + $0x5c8] sm:$0xff]
    %v3140 = vld [vmem:[#allocation8 + $0x5d0] sm:$0xff]
    %v3141 = vld [vmem:[#allocation8 + $0x5d8] sm:$0xff]
    %v3142 = vld [vmem:[#allocation8 + $0x5e0] sm:$0xff]
    %v3143 = vld [vmem:[#allocation8 + $0x5e8] sm:$0xff]
    %v3144 = vld [vmem:[#allocation8 + $0x5f0] sm:$0xff]
    %v3145 = vld [vmem:[#allocation8 + $0x5f8] sm:$0xff]
    %v3146 = vld [vmem:[#allocation8 + $0x600] sm:$0xff]
    %v3147 = vld [vmem:[#allocation8 + $0x608] sm:$0xff]
    %v3148 = vld [vmem:[#allocation8 + $0x610] sm:$0xff]
    %v3149 = vld [vmem:[#allocation8 + $0x618] sm:$0xff]
    %v3150 = vld [vmem:[#allocation8 + $0x620] sm:$0xff]
    %v3151 = vld [vmem:[#allocation8 + $0x628] sm:$0xff]
    %v3152 = vld [vmem:[#allocation8 + $0x630] sm:$0xff]
    %v3153 = vld [vmem:[#allocation8 + $0x638] sm:$0xff]
    %v3154 = vld [vmem:[#allocation8 + $0x640] sm:$0xff]
    %v3155 = vld [vmem:[#allocation8 + $0x648] sm:$0xff]
    %v3156 = vld [vmem:[#allocation8 + $0x650] sm:$0xff]
    %v3157 = vld [vmem:[#allocation8 + $0x658] sm:$0xff]
    %v3158 = vld [vmem:[#allocation8 + $0x660] sm:$0xff]
    %v3159 = vld [vmem:[#allocation8 + $0x668] sm:$0xff]
    %v3160 = vld [vmem:[#allocation8 + $0x670] sm:$0xff]
    %v3161 = vld [vmem:[#allocation8 + $0x678] sm:$0xff]
    %v3162 = vld [vmem:[#allocation8 + $0x680] sm:$0xff]
    %v3163 = vld [vmem:[#allocation8 + $0x688] sm:$0xff]
    %v3164 = vld [vmem:[#allocation8 + $0x690] sm:$0xff]
    %v3165 = vld [vmem:[#allocation8 + $0x698] sm:$0xff]
    %v3166 = vld [vmem:[#allocation8 + $0x6a0] sm:$0xff]
    %v3167 = vld [vmem:[#allocation8 + $0x6a8] sm:$0xff]
    %v3168 = vld [vmem:[#allocation8 + $0x6b0] sm:$0xff]
    %v3169 = vld [vmem:[#allocation8 + $0x6b8] sm:$0xff]
    %v3170 = vld [vmem:[#allocation8 + $0x6c0] sm:$0xff]
    %v3171 = vld [vmem:[#allocation8 + $0x6c8] sm:$0xff]
    %v3172 = vld [vmem:[#allocation8 + $0x6d0] sm:$0xff]
    %v3173 = vld [vmem:[#allocation8 + $0x6d8] sm:$0xff]
    %v3174 = vld [vmem:[#allocation8 + $0x6e0] sm:$0xff]
    %v3175 = vld [vmem:[#allocation8 + $0x6e8] sm:$0xff]
    %v3176 = vld [vmem:[#allocation8 + $0x6f0] sm:$0xff]
    %v3177 = vld [vmem:[#allocation8 + $0x6f8] sm:$0xff]
    %v3178 = vld [vmem:[#allocation8 + $0x700] sm:$0xff]
    %v3179 = vld [vmem:[#allocation8 + $0x708] sm:$0xff]
    %v3180 = vld [vmem:[#allocation8 + $0x710] sm:$0xff]
    %v3181 = vld [vmem:[#allocation8 + $0x718] sm:$0xff]
    %v3182 = vld [vmem:[#allocation8 + $0x720] sm:$0xff]
    %v3183 = vld [vmem:[#allocation8 + $0x728] sm:$0xff]
    %v3184 = vld [vmem:[#allocation8 + $0x730] sm:$0xff]
    %v3185 = vld [vmem:[#allocation8 + $0x738] sm:$0xff]
    %v3186 = vld [vmem:[#allocation8 + $0x740] sm:$0xff]
    %v3187 = vld [vmem:[#allocation8 + $0x748] sm:$0xff]
    %v3188 = vld [vmem:[#allocation8 + $0x750] sm:$0xff]
    %v3189 = vld [vmem:[#allocation8 + $0x758] sm:$0xff]
    %v3190 = vld [vmem:[#allocation8 + $0x760] sm:$0xff]
    %v3191 = vld [vmem:[#allocation8 + $0x768] sm:$0xff]
    %v3192 = vld [vmem:[#allocation8 + $0x770] sm:$0xff]
    %v3193 = vld [vmem:[#allocation8 + $0x778] sm:$0xff]
    %v3194 = vld [vmem:[#allocation8 + $0x780] sm:$0xff]
    %v3195 = vld [vmem:[#allocation8 + $0x788] sm:$0xff]
    %v3196 = vld [vmem:[#allocation8 + $0x790] sm:$0xff]
    %v3197 = vld [vmem:[#allocation8 + $0x798] sm:$0xff]
    %v3198 = vld [vmem:[#allocation8 + $0x7a0] sm:$0xff]
    %v3199 = vld [vmem:[#allocation8 + $0x7a8] sm:$0xff]
    %v3200 = vld [vmem:[#allocation8 + $0x7b0] sm:$0xff]
    %v3201 = vld [vmem:[#allocation8 + $0x7b8] sm:$0xff]
    %v3202 = vld [vmem:[#allocation8 + $0x7c0] sm:$0xff]
    %v3203 = vld [vmem:[#allocation8 + $0x7c8] sm:$0xff]
    %v3204 = vld [vmem:[#allocation8 + $0x7d0] sm:$0xff]
    %v3205 = vld [vmem:[#allocation8 + $0x7d8] sm:$0xff]
    %v3206 = vld [vmem:[#allocation8 + $0x7e0] sm:$0xff]
    %v3207 = vld [vmem:[#allocation8 + $0x7e8] sm:$0xff]
    %v3208 = vld [vmem:[#allocation8 + $0x7f0] sm:$0xff]
    %v3209 = vld [vmem:[#allocation8 + $0x7f8] sm:$0xff]
    %v3210 = vld [vmem:[#allocation8 + $0x800] sm:$0xff]
    %v3211 = vld [vmem:[#allocation8 + $0x808] sm:$0xff]
    %v3212 = vld [vmem:[#allocation8 + $0x810] sm:$0xff]
    %v3213 = vld [vmem:[#allocation8 + $0x818] sm:$0xff]
    %v3214 = vld [vmem:[#allocation8 + $0x820] sm:$0xff]
    %v3215 = vld [vmem:[#allocation8 + $0x828] sm:$0xff]
    %v3216 = vld [vmem:[#allocation8 + $0x830] sm:$0xff]
    %v3217 = vld [vmem:[#allocation8 + $0x838] sm:$0xff]
    %v3218 = vld [vmem:[#allocation8 + $0x840] sm:$0xff]
    %v3219 = vld [vmem:[#allocation8 + $0x848] sm:$0xff]
    %v3220 = vld [vmem:[#allocation8 + $0x850] sm:$0xff]
    %v3221 = vld [vmem:[#allocation8 + $0x858] sm:$0xff]
    %v3222 = vld [vmem:[#allocation8 + $0x860] sm:$0xff]
    %v3223 = vld [vmem:[#allocation8 + $0x868] sm:$0xff]
    %v3224 = vld [vmem:[#allocation8 + $0x870] sm:$0xff]
    %v3225 = vld [vmem:[#allocation8 + $0x878] sm:$0xff]
    %v3226 = vld [vmem:[#allocation8 + $0x880] sm:$0xff]
    %v3227 = vld [vmem:[#allocation8 + $0x888] sm:$0xff]
    %v3228 = vld [vmem:[#allocation8 + $0x890] sm:$0xff]
    %v3229 = vld [vmem:[#allocation8 + $0x898] sm:$0xff]
    %v3230 = vld [vmem:[#allocation8 + $0x8a0] sm:$0xff]
    %v3231 = vld [vmem:[#allocation8 + $0x8a8] sm:$0xff]
    %v3232 = vld [vmem:[#allocation8 + $0x8b0] sm:$0xff]
    %v3233 = vld [vmem:[#allocation8 + $0x8b8] sm:$0xff]
    %v3234 = vld [vmem:[#allocation8 + $0x8c0] sm:$0xff]
    %v3235 = vld [vmem:[#allocation8 + $0x8c8] sm:$0xff]
    %v3236 = vld [vmem:[#allocation8 + $0x8d0] sm:$0xff]
    %v3237 = vld [vmem:[#allocation8 + $0x8d8] sm:$0xff]
    %v3238 = vld [vmem:[#allocation8 + $0x8e0] sm:$0xff]
    %v3239 = vld [vmem:[#allocation8 + $0x8e8] sm:$0xff]
    %v3240 = vld [vmem:[#allocation8 + $0x8f0] sm:$0xff]
    %v3241 = vld [vmem:[#allocation8 + $0x8f8] sm:$0xff]
    %v3530 = vunpack.c.l.b16 %v2954
    %v3531 = vunpack.c.h.b16 %v2954
    %v3532 = vunpack.c.l.b16 %v2955
    %v3533 = vunpack.c.h.b16 %v2955
    %v3534 = vunpack.c.l.b16 %v2956
    %v3535 = vunpack.c.h.b16 %v2956
    %v3536 = vunpack.c.l.b16 %v2957
    %v3537 = vunpack.c.h.b16 %v2957
    %v3538 = vunpack.c.l.b16 %v2958
    %v3539 = vunpack.c.h.b16 %v2958
    %v3540 = vunpack.c.l.b16 %v2959
    %v3541 = vunpack.c.h.b16 %v2959
    %v3542 = vunpack.c.l.b16 %v2960
    %v3543 = vunpack.c.h.b16 %v2960
    %v3544 = vunpack.c.l.b16 %v2961
    %v3545 = vunpack.c.h.b16 %v2961
    %v3546 = vunpack.c.l.b16 %v2962
    %v3547 = vunpack.c.h.b16 %v2962
    %v3548 = vunpack.c.l.b16 %v2963
    %v3549 = vunpack.c.h.b16 %v2963
    %v3550 = vunpack.c.l.b16 %v2964
    %v3551 = vunpack.c.h.b16 %v2964
    %v3552 = vunpack.c.l.b16 %v2965
    %v3553 = vunpack.c.h.b16 %v2965
    %v3554 = vunpack.c.l.b16 %v2966
    %v3555 = vunpack.c.h.b16 %v2966
    %v3556 = vunpack.c.l.b16 %v2967
    %v3557 = vunpack.c.h.b16 %v2967
    %v3558 = vunpack.c.l.b16 %v2968
    %v3559 = vunpack.c.h.b16 %v2968
    %v3560 = vunpack.c.l.b16 %v2969
    %v3561 = vunpack.c.h.b16 %v2969
    %v3562 = vunpack.c.l.b16 %v2970
    %v3563 = vunpack.c.h.b16 %v2970
    %v3564 = vunpack.c.l.b16 %v2971
    %v3565 = vunpack.c.h.b16 %v2971
    %v3566 = vunpack.c.l.b16 %v2972
    %v3567 = vunpack.c.h.b16 %v2972
    %v3568 = vunpack.c.l.b16 %v2973
    %v3569 = vunpack.c.h.b16 %v2973
    %v3570 = vunpack.c.l.b16 %v2974
    %v3571 = vunpack.c.h.b16 %v2974
    %v3572 = vunpack.c.l.b16 %v2975
    %v3573 = vunpack.c.h.b16 %v2975
    %v3574 = vunpack.c.l.b16 %v2976
    %v3575 = vunpack.c.h.b16 %v2976
    %v3576 = vunpack.c.l.b16 %v2977
    %v3577 = vunpack.c.h.b16 %v2977
    %v3578 = vunpack.c.l.b16 %v2978
    %v3579 = vunpack.c.h.b16 %v2978
    %v3580 = vunpack.c.l.b16 %v2979
    %v3581 = vunpack.c.h.b16 %v2979
    %v3582 = vunpack.c.l.b16 %v2980
    %v3583 = vunpack.c.h.b16 %v2980
    %v3584 = vunpack.c.l.b16 %v2981
    %v3585 = vunpack.c.h.b16 %v2981
    %v3586 = vunpack.c.l.b16 %v2982
    %v3587 = vunpack.c.h.b16 %v2982
    %v3588 = vunpack.c.l.b16 %v2983
    %v3589 = vunpack.c.h.b16 %v2983
    %v3590 = vunpack.c.l.b16 %v2984
    %v3591 = vunpack.c.h.b16 %v2984
    %v3592 = vunpack.c.l.b16 %v2985
    %v3593 = vunpack.c.h.b16 %v2985
    %v3594 = vunpack.c.l.b16 %v2986
    %v3595 = vunpack.c.h.b16 %v2986
    %v3596 = vunpack.c.l.b16 %v2987
    %v3597 = vunpack.c.h.b16 %v2987
    %v3598 = vunpack.c.l.b16 %v2988
    %v3599 = vunpack.c.h.b16 %v2988
    %v3600 = vunpack.c.l.b16 %v2989
    %v3601 = vunpack.c.h.b16 %v2989
    %v3602 = vunpack.c.l.b16 %v2990
    %v3603 = vunpack.c.h.b16 %v2990
    %v3604 = vunpack.c.l.b16 %v2991
    %v3605 = vunpack.c.h.b16 %v2991
    %v3606 = vunpack.c.l.b16 %v2992
    %v3607 = vunpack.c.h.b16 %v2992
    %v3608 = vunpack.c.l.b16 %v2993
    %v3609 = vunpack.c.h.b16 %v2993
    %v3610 = vunpack.c.l.b16 %v2994
    %v3611 = vunpack.c.h.b16 %v2994
    %v3612 = vunpack.c.l.b16 %v2995
    %v3613 = vunpack.c.h.b16 %v2995
    %v3614 = vunpack.c.l.b16 %v2996
    %v3615 = vunpack.c.h.b16 %v2996
    %v3616 = vunpack.c.l.b16 %v2997
    %v3617 = vunpack.c.h.b16 %v2997
    %v3618 = vunpack.c.l.b16 %v2998
    %v3619 = vunpack.c.h.b16 %v2998
    %v3620 = vunpack.c.l.b16 %v2999
    %v3621 = vunpack.c.h.b16 %v2999
    %v3622 = vunpack.c.l.b16 %v3000
    %v3623 = vunpack.c.h.b16 %v3000
    %v3624 = vunpack.c.l.b16 %v3001
    %v3625 = vunpack.c.h.b16 %v3001
    %v3626 = vunpack.c.l.b16 %v3002
    %v3627 = vunpack.c.h.b16 %v3002
    %v3628 = vunpack.c.l.b16 %v3003
    %v3629 = vunpack.c.h.b16 %v3003
    %v3630 = vunpack.c.l.b16 %v3004
    %v3631 = vunpack.c.h.b16 %v3004
    %v3632 = vunpack.c.l.b16 %v3005
    %v3633 = vunpack.c.h.b16 %v3005
    %v3634 = vunpack.c.l.b16 %v3006
    %v3635 = vunpack.c.h.b16 %v3006
    %v3636 = vunpack.c.l.b16 %v3007
    %v3637 = vunpack.c.h.b16 %v3007
    %v3638 = vunpack.c.l.b16 %v3008
    %v3639 = vunpack.c.h.b16 %v3008
    %v3640 = vunpack.c.l.b16 %v3009
    %v3641 = vunpack.c.h.b16 %v3009
    %v3642 = vunpack.c.l.b16 %v3010
    %v3643 = vunpack.c.h.b16 %v3010
    %v3644 = vunpack.c.l.b16 %v3011
    %v3645 = vunpack.c.h.b16 %v3011
    %v3646 = vunpack.c.l.b16 %v3012
    %v3647 = vunpack.c.h.b16 %v3012
    %v3648 = vunpack.c.l.b16 %v3013
    %v3649 = vunpack.c.h.b16 %v3013
    %v3650 = vunpack.c.l.b16 %v3014
    %v3651 = vunpack.c.h.b16 %v3014
    %v3652 = vunpack.c.l.b16 %v3015
    %v3653 = vunpack.c.h.b16 %v3015
    %v3654 = vunpack.c.l.b16 %v3016
    %v3655 = vunpack.c.h.b16 %v3016
    %v3656 = vunpack.c.l.b16 %v3017
    %v3657 = vunpack.c.h.b16 %v3017
    %v3658 = vunpack.c.l.b16 %v3018
    %v3659 = vunpack.c.h.b16 %v3018
    %v3660 = vunpack.c.l.b16 %v3019
    %v3661 = vunpack.c.h.b16 %v3019
    %v3662 = vunpack.c.l.b16 %v3020
    %v3663 = vunpack.c.h.b16 %v3020
    %v3664 = vunpack.c.l.b16 %v3021
    %v3665 = vunpack.c.h.b16 %v3021
    %v3666 = vunpack.c.l.b16 %v3022
    %v3667 = vunpack.c.h.b16 %v3022
    %v3668 = vunpack.c.l.b16 %v3023
    %v3669 = vunpack.c.h.b16 %v3023
    %v3670 = vunpack.c.l.b16 %v3024
    %v3671 = vunpack.c.h.b16 %v3024
    %v3672 = vunpack.c.l.b16 %v3025
    %v3673 = vunpack.c.h.b16 %v3025
    %v3674 = vunpack.c.l.b16 %v3026
    %v3675 = vunpack.c.h.b16 %v3026
    %v3676 = vunpack.c.l.b16 %v3027
    %v3677 = vunpack.c.h.b16 %v3027
    %v3678 = vunpack.c.l.b16 %v3028
    %v3679 = vunpack.c.h.b16 %v3028
    %v3680 = vunpack.c.l.b16 %v3029
    %v3681 = vunpack.c.h.b16 %v3029
    %v3682 = vunpack.c.l.b16 %v3030
    %v3683 = vunpack.c.h.b16 %v3030
    %v3684 = vunpack.c.l.b16 %v3031
    %v3685 = vunpack.c.h.b16 %v3031
    %v3686 = vunpack.c.l.b16 %v3032
    %v3687 = vunpack.c.h.b16 %v3032
    %v3688 = vunpack.c.l.b16 %v3033
    %v3689 = vunpack.c.h.b16 %v3033
    %v3690 = vunpack.c.l.b16 %v3034
    %v3691 = vunpack.c.h.b16 %v3034
    %v3692 = vunpack.c.l.b16 %v3035
    %v3693 = vunpack.c.h.b16 %v3035
    %v3694 = vunpack.c.l.b16 %v3036
    %v3695 = vunpack.c.h.b16 %v3036
    %v3696 = vunpack.c.l.b16 %v3037
    %v3697 = vunpack.c.h.b16 %v3037
    %v3698 = vunpack.c.l.b16 %v3038
    %v3699 = vunpack.c.h.b16 %v3038
    %v3700 = vunpack.c.l.b16 %v3039
    %v3701 = vunpack.c.h.b16 %v3039
    %v3702 = vunpack.c.l.b16 %v3040
    %v3703 = vunpack.c.h.b16 %v3040
    %v3704 = vunpack.c.l.b16 %v3041
    %v3705 = vunpack.c.h.b16 %v3041
    %v3706 = vunpack.c.l.b16 %v3042
    %v3707 = vunpack.c.h.b16 %v3042
    %v3708 = vunpack.c.l.b16 %v3043
    %v3709 = vunpack.c.h.b16 %v3043
    %v3710 = vunpack.c.l.b16 %v3044
    %v3711 = vunpack.c.h.b16 %v3044
    %v3712 = vunpack.c.l.b16 %v3045
    %v3713 = vunpack.c.h.b16 %v3045
    %v3714 = vunpack.c.l.b16 %v3046
    %v3715 = vunpack.c.h.b16 %v3046
    %v3716 = vunpack.c.l.b16 %v3047
    %v3717 = vunpack.c.h.b16 %v3047
    %v3718 = vunpack.c.l.b16 %v3048
    %v3719 = vunpack.c.h.b16 %v3048
    %v3720 = vunpack.c.l.b16 %v3049
    %v3721 = vunpack.c.h.b16 %v3049
    %v3722 = vunpack.c.l.b16 %v3050
    %v3723 = vunpack.c.h.b16 %v3050
    %v3724 = vunpack.c.l.b16 %v3051
    %v3725 = vunpack.c.h.b16 %v3051
    %v3726 = vunpack.c.l.b16 %v3052
    %v3727 = vunpack.c.h.b16 %v3052
    %v3728 = vunpack.c.l.b16 %v3053
    %v3729 = vunpack.c.h.b16 %v3053
    %v3730 = vunpack.c.l.b16 %v3054
    %v3731 = vunpack.c.h.b16 %v3054
    %v3732 = vunpack.c.l.b16 %v3055
    %v3733 = vunpack.c.h.b16 %v3055
    %v3734 = vunpack.c.l.b16 %v3056
    %v3735 = vunpack.c.h.b16 %v3056
    %v3736 = vunpack.c.l.b16 %v3057
    %v3737 = vunpack.c.h.b16 %v3057
    %v3738 = vunpack.c.l.b16 %v3058
    %v3739 = vunpack.c.h.b16 %v3058
    %v3740 = vunpack.c.l.b16 %v3059
    %v3741 = vunpack.c.h.b16 %v3059
    %v3742 = vunpack.c.l.b16 %v3060
    %v3743 = vunpack.c.h.b16 %v3060
    %v3744 = vunpack.c.l.b16 %v3061
    %v3745 = vunpack.c.h.b16 %v3061
    %v3746 = vunpack.c.l.b16 %v3062
    %v3747 = vunpack.c.h.b16 %v3062
    %v3748 = vunpack.c.l.b16 %v3063
    %v3749 = vunpack.c.h.b16 %v3063
    %v3750 = vunpack.c.l.b16 %v3064
    %v3751 = vunpack.c.h.b16 %v3064
    %v3752 = vunpack.c.l.b16 %v3065
    %v3753 = vunpack.c.h.b16 %v3065
    %v3754 = vunpack.c.l.b16 %v3066
    %v3755 = vunpack.c.h.b16 %v3066
    %v3756 = vunpack.c.l.b16 %v3067
    %v3757 = vunpack.c.h.b16 %v3067
    %v3758 = vunpack.c.l.b16 %v3068
    %v3759 = vunpack.c.h.b16 %v3068
    %v3760 = vunpack.c.l.b16 %v3069
    %v3761 = vunpack.c.h.b16 %v3069
    %v3762 = vunpack.c.l.b16 %v3070
    %v3763 = vunpack.c.h.b16 %v3070
    %v3764 = vunpack.c.l.b16 %v3071
    %v3765 = vunpack.c.h.b16 %v3071
    %v3766 = vunpack.c.l.b16 %v3072
    %v3767 = vunpack.c.h.b16 %v3072
    %v3768 = vunpack.c.l.b16 %v3073
    %v3769 = vunpack.c.h.b16 %v3073
    %v3770 = vunpack.c.l.b16 %v3074
    %v3771 = vunpack.c.h.b16 %v3074
    %v3772 = vunpack.c.l.b16 %v3075
    %v3773 = vunpack.c.h.b16 %v3075
    %v3774 = vunpack.c.l.b16 %v3076
    %v3775 = vunpack.c.h.b16 %v3076
    %v3776 = vunpack.c.l.b16 %v3077
    %v3777 = vunpack.c.h.b16 %v3077
    %v3778 = vunpack.c.l.b16 %v3078
    %v3779 = vunpack.c.h.b16 %v3078
    %v3780 = vunpack.c.l.b16 %v3079
    %v3781 = vunpack.c.h.b16 %v3079
    %v3782 = vunpack.c.l.b16 %v3080
    %v3783 = vunpack.c.h.b16 %v3080
    %v3784 = vunpack.c.l.b16 %v3081
    %v3785 = vunpack.c.h.b16 %v3081
    %v3786 = vunpack.c.l.b16 %v3082
    %v3787 = vunpack.c.h.b16 %v3082
    %v3788 = vunpack.c.l.b16 %v3083
    %v3789 = vunpack.c.h.b16 %v3083
    %v3790 = vunpack.c.l.b16 %v3084
    %v3791 = vunpack.c.h.b16 %v3084
    %v3792 = vunpack.c.l.b16 %v3085
    %v3793 = vunpack.c.h.b16 %v3085
    %v3794 = vunpack.c.l.b16 %v3086
    %v3795 = vunpack.c.h.b16 %v3086
    %v3796 = vunpack.c.l.b16 %v3087
    %v3797 = vunpack.c.h.b16 %v3087
    %v3798 = vunpack.c.l.b16 %v3088
    %v3799 = vunpack.c.h.b16 %v3088
    %v3800 = vunpack.c.l.b16 %v3089
    %v3801 = vunpack.c.h.b16 %v3089
    %v3802 = vunpack.c.l.b16 %v3090
    %v3803 = vunpack.c.h.b16 %v3090
    %v3804 = vunpack.c.l.b16 %v3091
    %v3805 = vunpack.c.h.b16 %v3091
    %v3806 = vunpack.c.l.b16 %v3092
    %v3807 = vunpack.c.h.b16 %v3092
    %v3808 = vunpack.c.l.b16 %v3093
    %v3809 = vunpack.c.h.b16 %v3093
    %v3810 = vunpack.c.l.b16 %v3094
    %v3811 = vunpack.c.h.b16 %v3094
    %v3812 = vunpack.c.l.b16 %v3095
    %v3813 = vunpack.c.h.b16 %v3095
    %v3814 = vunpack.c.l.b16 %v3096
    %v3815 = vunpack.c.h.b16 %v3096
    %v3816 = vunpack.c.l.b16 %v3097
    %v3817 = vunpack.c.h.b16 %v3097
    %v3818 = vunpack.c.l.b16 %v3098
    %v3819 = vunpack.c.h.b16 %v3098
    %v3820 = vunpack.c.l.b16 %v3099
    %v3821 = vunpack.c.h.b16 %v3099
    %v3822 = vunpack.c.l.b16 %v3100
    %v3823 = vunpack.c.h.b16 %v3100
    %v3824 = vunpack.c.l.b16 %v3101
    %v3825 = vunpack.c.h.b16 %v3101
    %v3826 = vunpack.c.l.b16 %v3102
    %v3827 = vunpack.c.h.b16 %v3102
    %v3828 = vunpack.c.l.b16 %v3103
    %v3829 = vunpack.c.h.b16 %v3103
    %v3830 = vunpack.c.l.b16 %v3104
    %v3831 = vunpack.c.h.b16 %v3104
    %v3832 = vunpack.c.l.b16 %v3105
    %v3833 = vunpack.c.h.b16 %v3105
    %v3834 = vunpack.c.l.b16 %v3106
    %v3835 = vunpack.c.h.b16 %v3106
    %v3836 = vunpack.c.l.b16 %v3107
    %v3837 = vunpack.c.h.b16 %v3107
    %v3838 = vunpack.c.l.b16 %v3108
    %v3839 = vunpack.c.h.b16 %v3108
    %v3840 = vunpack.c.l.b16 %v3109
    %v3841 = vunpack.c.h.b16 %v3109
    %v3842 = vunpack.c.l.b16 %v3110
    %v3843 = vunpack.c.h.b16 %v3110
    %v3844 = vunpack.c.l.b16 %v3111
    %v3845 = vunpack.c.h.b16 %v3111
    %v3846 = vunpack.c.l.b16 %v3112
    %v3847 = vunpack.c.h.b16 %v3112
    %v3848 = vunpack.c.l.b16 %v3113
    %v3849 = vunpack.c.h.b16 %v3113
    %v3850 = vunpack.c.l.b16 %v3114
    %v3851 = vunpack.c.h.b16 %v3114
    %v3852 = vunpack.c.l.b16 %v3115
    %v3853 = vunpack.c.h.b16 %v3115
    %v3854 = vunpack.c.l.b16 %v3116
    %v3855 = vunpack.c.h.b16 %v3116
    %v3856 = vunpack.c.l.b16 %v3117
    %v3857 = vunpack.c.h.b16 %v3117
    %v3858 = vunpack.c.l.b16 %v3118
    %v3859 = vunpack.c.h.b16 %v3118
    %v3860 = vunpack.c.l.b16 %v3119
    %v3861 = vunpack.c.h.b16 %v3119
    %v3862 = vunpack.c.l.b16 %v3120
    %v3863 = vunpack.c.h.b16 %v3120
    %v3864 = vunpack.c.l.b16 %v3121
    %v3865 = vunpack.c.h.b16 %v3121
    %v3866 = vunpack.c.l.b16 %v3122
    %v3867 = vunpack.c.h.b16 %v3122
    %v3868 = vunpack.c.l.b16 %v3123
    %v3869 = vunpack.c.h.b16 %v3123
    %v3870 = vunpack.c.l.b16 %v3124
    %v3871 = vunpack.c.h.b16 %v3124
    %v3872 = vunpack.c.l.b16 %v3125
    %v3873 = vunpack.c.h.b16 %v3125
    %v3874 = vunpack.c.l.b16 %v3126
    %v3875 = vunpack.c.h.b16 %v3126
    %v3876 = vunpack.c.l.b16 %v3127
    %v3877 = vunpack.c.h.b16 %v3127
    %v3878 = vunpack.c.l.b16 %v3128
    %v3879 = vunpack.c.h.b16 %v3128
    %v3880 = vunpack.c.l.b16 %v3129
    %v3881 = vunpack.c.h.b16 %v3129
    %v3882 = vunpack.c.l.b16 %v3130
    %v3883 = vunpack.c.h.b16 %v3130
    %v3884 = vunpack.c.l.b16 %v3131
    %v3885 = vunpack.c.h.b16 %v3131
    %v3886 = vunpack.c.l.b16 %v3132
    %v3887 = vunpack.c.h.b16 %v3132
    %v3888 = vunpack.c.l.b16 %v3133
    %v3889 = vunpack.c.h.b16 %v3133
    %v3890 = vunpack.c.l.b16 %v3134
    %v3891 = vunpack.c.h.b16 %v3134
    %v3892 = vunpack.c.l.b16 %v3135
    %v3893 = vunpack.c.h.b16 %v3135
    %v3894 = vunpack.c.l.b16 %v3136
    %v3895 = vunpack.c.h.b16 %v3136
    %v3896 = vunpack.c.l.b16 %v3137
    %v3897 = vunpack.c.h.b16 %v3137
    %v3898 = vunpack.c.l.b16 %v3138
    %v3899 = vunpack.c.h.b16 %v3138
    %v3900 = vunpack.c.l.b16 %v3139
    %v3901 = vunpack.c.h.b16 %v3139
    %v3902 = vunpack.c.l.b16 %v3140
    %v3903 = vunpack.c.h.b16 %v3140
    %v3904 = vunpack.c.l.b16 %v3141
    %v3905 = vunpack.c.h.b16 %v3141
    %v3906 = vunpack.c.l.b16 %v3142
    %v3907 = vunpack.c.h.b16 %v3142
    %v3908 = vunpack.c.l.b16 %v3143
    %v3909 = vunpack.c.h.b16 %v3143
    %v3910 = vunpack.c.l.b16 %v3144
    %v3911 = vunpack.c.h.b16 %v3144
    %v3912 = vunpack.c.l.b16 %v3145
    %v3913 = vunpack.c.h.b16 %v3145
    %v3914 = vunpack.c.l.b16 %v3146
    %v3915 = vunpack.c.h.b16 %v3146
    %v3916 = vunpack.c.l.b16 %v3147
    %v3917 = vunpack.c.h.b16 %v3147
    %v3918 = vunpack.c.l.b16 %v3148
    %v3919 = vunpack.c.h.b16 %v3148
    %v3920 = vunpack.c.l.b16 %v3149
    %v3921 = vunpack.c.h.b16 %v3149
    %v3922 = vunpack.c.l.b16 %v3150
    %v3923 = vunpack.c.h.b16 %v3150
    %v3924 = vunpack.c.l.b16 %v3151
    %v3925 = vunpack.c.h.b16 %v3151
    %v3926 = vunpack.c.l.b16 %v3152
    %v3927 = vunpack.c.h.b16 %v3152
    %v3928 = vunpack.c.l.b16 %v3153
    %v3929 = vunpack.c.h.b16 %v3153
    %v3930 = vunpack.c.l.b16 %v3154
    %v3931 = vunpack.c.h.b16 %v3154
    %v3932 = vunpack.c.l.b16 %v3155
    %v3933 = vunpack.c.h.b16 %v3155
    %v3934 = vunpack.c.l.b16 %v3156
    %v3935 = vunpack.c.h.b16 %v3156
    %v3936 = vunpack.c.l.b16 %v3157
    %v3937 = vunpack.c.h.b16 %v3157
    %v3938 = vunpack.c.l.b16 %v3158
    %v3939 = vunpack.c.h.b16 %v3158
    %v3940 = vunpack.c.l.b16 %v3159
    %v3941 = vunpack.c.h.b16 %v3159
    %v3942 = vunpack.c.l.b16 %v3160
    %v3943 = vunpack.c.h.b16 %v3160
    %v3944 = vunpack.c.l.b16 %v3161
    %v3945 = vunpack.c.h.b16 %v3161
    %v3946 = vunpack.c.l.b16 %v3162
    %v3947 = vunpack.c.h.b16 %v3162
    %v3948 = vunpack.c.l.b16 %v3163
    %v3949 = vunpack.c.h.b16 %v3163
    %v3950 = vunpack.c.l.b16 %v3164
    %v3951 = vunpack.c.h.b16 %v3164
    %v3952 = vunpack.c.l.b16 %v3165
    %v3953 = vunpack.c.h.b16 %v3165
    %v3954 = vunpack.c.l.b16 %v3166
    %v3955 = vunpack.c.h.b16 %v3166
    %v3956 = vunpack.c.l.b16 %v3167
    %v3957 = vunpack.c.h.b16 %v3167
    %v3958 = vunpack.c.l.b16 %v3168
    %v3959 = vunpack.c.h.b16 %v3168
    %v3960 = vunpack.c.l.b16 %v3169
    %v3961 = vunpack.c.h.b16 %v3169
    %v3962 = vunpack.c.l.b16 %v3170
    %v3963 = vunpack.c.h.b16 %v3170
    %v3964 = vunpack.c.l.b16 %v3171
    %v3965 = vunpack.c.h.b16 %v3171
    %v3966 = vunpack.c.l.b16 %v3172
    %v3967 = vunpack.c.h.b16 %v3172
    %v3968 = vunpack.c.l.b16 %v3173
    %v3969 = vunpack.c.h.b16 %v3173
    %v3970 = vunpack.c.l.b16 %v3174
    %v3971 = vunpack.c.h.b16 %v3174
    %v3972 = vunpack.c.l.b16 %v3175
    %v3973 = vunpack.c.h.b16 %v3175
    %v3974 = vunpack.c.l.b16 %v3176
    %v3975 = vunpack.c.h.b16 %v3176
    %v3976 = vunpack.c.l.b16 %v3177
    %v3977 = vunpack.c.h.b16 %v3177
    %v3978 = vunpack.c.l.b16 %v3178
    %v3979 = vunpack.c.h.b16 %v3178
    %v3980 = vunpack.c.l.b16 %v3179
    %v3981 = vunpack.c.h.b16 %v3179
    %v3982 = vunpack.c.l.b16 %v3180
    %v3983 = vunpack.c.h.b16 %v3180
    %v3984 = vunpack.c.l.b16 %v3181
    %v3985 = vunpack.c.h.b16 %v3181
    %v3986 = vunpack.c.l.b16 %v3182
    %v3987 = vunpack.c.h.b16 %v3182
    %v3988 = vunpack.c.l.b16 %v3183
    %v3989 = vunpack.c.h.b16 %v3183
    %v3990 = vunpack.c.l.b16 %v3184
    %v3991 = vunpack.c.h.b16 %v3184
    %v3992 = vunpack.c.l.b16 %v3185
    %v3993 = vunpack.c.h.b16 %v3185
    %v3994 = vunpack.c.l.b16 %v3186
    %v3995 = vunpack.c.h.b16 %v3186
    %v3996 = vunpack.c.l.b16 %v3187
    %v3997 = vunpack.c.h.b16 %v3187
    %v3998 = vunpack.c.l.b16 %v3188
    %v3999 = vunpack.c.h.b16 %v3188
    %v4000 = vunpack.c.l.b16 %v3189
    %v4001 = vunpack.c.h.b16 %v3189
    %v4002 = vunpack.c.l.b16 %v3190
    %v4003 = vunpack.c.h.b16 %v3190
    %v4004 = vunpack.c.l.b16 %v3191
    %v4005 = vunpack.c.h.b16 %v3191
    %v4006 = vunpack.c.l.b16 %v3192
    %v4007 = vunpack.c.h.b16 %v3192
    %v4008 = vunpack.c.l.b16 %v3193
    %v4009 = vunpack.c.h.b16 %v3193
    %v4010 = vunpack.c.l.b16 %v3194
    %v4011 = vunpack.c.h.b16 %v3194
    %v4012 = vunpack.c.l.b16 %v3195
    %v4013 = vunpack.c.h.b16 %v3195
    %v4014 = vunpack.c.l.b16 %v3196
    %v4015 = vunpack.c.h.b16 %v3196
    %v4016 = vunpack.c.l.b16 %v3197
    %v4017 = vunpack.c.h.b16 %v3197
    %v4018 = vunpack.c.l.b16 %v3198
    %v4019 = vunpack.c.h.b16 %v3198
    %v4020 = vunpack.c.l.b16 %v3199
    %v4021 = vunpack.c.h.b16 %v3199
    %v4022 = vunpack.c.l.b16 %v3200
    %v4023 = vunpack.c.h.b16 %v3200
    %v4024 = vunpack.c.l.b16 %v3201
    %v4025 = vunpack.c.h.b16 %v3201
    %v4026 = vunpack.c.l.b16 %v3202
    %v4027 = vunpack.c.h.b16 %v3202
    %v4028 = vunpack.c.l.b16 %v3203
    %v4029 = vunpack.c.h.b16 %v3203
    %v4030 = vunpack.c.l.b16 %v3204
    %v4031 = vunpack.c.h.b16 %v3204
    %v4032 = vunpack.c.l.b16 %v3205
    %v4033 = vunpack.c.h.b16 %v3205
    %v4034 = vunpack.c.l.b16 %v3206
    %v4035 = vunpack.c.h.b16 %v3206
    %v4036 = vunpack.c.l.b16 %v3207
    %v4037 = vunpack.c.h.b16 %v3207
    %v4038 = vunpack.c.l.b16 %v3208
    %v4039 = vunpack.c.h.b16 %v3208
    %v4040 = vunpack.c.l.b16 %v3209
    %v4041 = vunpack.c.h.b16 %v3209
    %v4042 = vunpack.c.l.b16 %v3210
    %v4043 = vunpack.c.h.b16 %v3210
    %v4044 = vunpack.c.l.b16 %v3211
    %v4045 = vunpack.c.h.b16 %v3211
    %v4046 = vunpack.c.l.b16 %v3212
    %v4047 = vunpack.c.h.b16 %v3212
    %v4048 = vunpack.c.l.b16 %v3213
    %v4049 = vunpack.c.h.b16 %v3213
    %v4050 = vunpack.c.l.b16 %v3214
    %v4051 = vunpack.c.h.b16 %v3214
    %v4052 = vunpack.c.l.b16 %v3215
    %v4053 = vunpack.c.h.b16 %v3215
    %v4054 = vunpack.c.l.b16 %v3216
    %v4055 = vunpack.c.h.b16 %v3216
    %v4056 = vunpack.c.l.b16 %v3217
    %v4057 = vunpack.c.h.b16 %v3217
    %v4058 = vunpack.c.l.b16 %v3218
    %v4059 = vunpack.c.h.b16 %v3218
    %v4060 = vunpack.c.l.b16 %v3219
    %v4061 = vunpack.c.h.b16 %v3219
    %v4062 = vunpack.c.l.b16 %v3220
    %v4063 = vunpack.c.h.b16 %v3220
    %v4064 = vunpack.c.l.b16 %v3221
    %v4065 = vunpack.c.h.b16 %v3221
    %v4066 = vunpack.c.l.b16 %v3222
    %v4067 = vunpack.c.h.b16 %v3222
    %v4068 = vunpack.c.l.b16 %v3223
    %v4069 = vunpack.c.h.b16 %v3223
    %v4070 = vunpack.c.l.b16 %v3224
    %v4071 = vunpack.c.h.b16 %v3224
    %v4072 = vunpack.c.l.b16 %v3225
    %v4073 = vunpack.c.h.b16 %v3225
    %v4074 = vunpack.c.l.b16 %v3226
    %v4075 = vunpack.c.h.b16 %v3226
    %v4076 = vunpack.c.l.b16 %v3227
    %v4077 = vunpack.c.h.b16 %v3227
    %v4078 = vunpack.c.l.b16 %v3228
    %v4079 = vunpack.c.h.b16 %v3228
    %v4080 = vunpack.c.l.b16 %v3229
    %v4081 = vunpack.c.h.b16 %v3229
    %v4082 = vunpack.c.l.b16 %v3230
    %v4083 = vunpack.c.h.b16 %v3230
    %v4084 = vunpack.c.l.b16 %v3231
    %v4085 = vunpack.c.h.b16 %v3231
    %v4086 = vunpack.c.l.b16 %v3232
    %v4087 = vunpack.c.h.b16 %v3232
    %v4088 = vunpack.c.l.b16 %v3233
    %v4089 = vunpack.c.h.b16 %v3233
    %v4090 = vunpack.c.l.b16 %v3234
    %v4091 = vunpack.c.h.b16 %v3234
    %v4092 = vunpack.c.l.b16 %v3235
    %v4093 = vunpack.c.h.b16 %v3235
    %v4094 = vunpack.c.l.b16 %v3236
    %v4095 = vunpack.c.h.b16 %v3236
    %v4096 = vunpack.c.l.b16 %v3237
    %v4097 = vunpack.c.h.b16 %v3237
    %v4098 = vunpack.c.l.b16 %v3238
    %v4099 = vunpack.c.h.b16 %v3238
    %v4100 = vunpack.c.l.b16 %v3239
    %v4101 = vunpack.c.h.b16 %v3239
    %v4102 = vunpack.c.l.b16 %v3240
    %v4103 = vunpack.c.h.b16 %v3240
    %v4104 = vunpack.c.l.b16 %v3241
    %v4105 = vunpack.c.h.b16 %v3241
    %v4106 = vpack.c.b16 %v3542, %v3530
    %v4107 = vpack.c.b16 %v3543, %v3531
    %v4108 = vpack.c.b16 %v3544, %v3532
    %v4109 = vpack.c.b16 %v3545, %v3533
    %v4110 = vpack.c.b16 %v3546, %v3534
    %v4111 = vpack.c.b16 %v3547, %v3535
    %v4112 = vpack.c.b16 %v3548, %v3536
    %v4113 = vpack.c.b16 %v3549, %v3537
    %v4114 = vpack.c.b16 %v3550, %v3538
    %v4115 = vpack.c.b16 %v3551, %v3539
    %v4116 = vpack.c.b16 %v3552, %v3540
    %v4117 = vpack.c.b16 %v3553, %v3541
    %v4118 = vpack.c.b16 %v3566, %v3554
    %v4119 = vpack.c.b16 %v3567, %v3555
    %v4120 = vpack.c.b16 %v3568, %v3556
    %v4121 = vpack.c.b16 %v3569, %v3557
    %v4122 = vpack.c.b16 %v3570, %v3558
    %v4123 = vpack.c.b16 %v3571, %v3559
    %v4124 = vpack.c.b16 %v3572, %v3560
    %v4125 = vpack.c.b16 %v3573, %v3561
    %v4126 = vpack.c.b16 %v3574, %v3562
    %v4127 = vpack.c.b16 %v3575, %v3563
    %v4128 = vpack.c.b16 %v3576, %v3564
    %v4129 = vpack.c.b16 %v3577, %v3565
    %v4130 = vpack.c.b16 %v3590, %v3578
    %v4131 = vpack.c.b16 %v3591, %v3579
    %v4132 = vpack.c.b16 %v3592, %v3580
    %v4133 = vpack.c.b16 %v3593, %v3581
    %v4134 = vpack.c.b16 %v3594, %v3582
    %v4135 = vpack.c.b16 %v3595, %v3583
    %v4136 = vpack.c.b16 %v3596, %v3584
    %v4137 = vpack.c.b16 %v3597, %v3585
    %v4138 = vpack.c.b16 %v3598, %v3586
    %v4139 = vpack.c.b16 %v3599, %v3587
    %v4140 = vpack.c.b16 %v3600, %v3588
    %v4141 = vpack.c.b16 %v3601, %v3589
    %v4142 = vpack.c.b16 %v3614, %v3602
    %v4143 = vpack.c.b16 %v3615, %v3603
    %v4144 = vpack.c.b16 %v3616, %v3604
    %v4145 = vpack.c.b16 %v3617, %v3605
    %v4146 = vpack.c.b16 %v3618, %v3606
    %v4147 = vpack.c.b16 %v3619, %v3607
    %v4148 = vpack.c.b16 %v3620, %v3608
    %v4149 = vpack.c.b16 %v3621, %v3609
    %v4150 = vpack.c.b16 %v3622, %v3610
    %v4151 = vpack.c.b16 %v3623, %v3611
    %v4152 = vpack.c.b16 %v3624, %v3612
    %v4153 = vpack.c.b16 %v3625, %v3613
    %v4154 = vpack.c.b16 %v3638, %v3626
    %v4155 = vpack.c.b16 %v3639, %v3627
    %v4156 = vpack.c.b16 %v3640, %v3628
    %v4157 = vpack.c.b16 %v3641, %v3629
    %v4158 = vpack.c.b16 %v3642, %v3630
    %v4159 = vpack.c.b16 %v3643, %v3631
    %v4160 = vpack.c.b16 %v3644, %v3632
    %v4161 = vpack.c.b16 %v3645, %v3633
    %v4162 = vpack.c.b16 %v3646, %v3634
    %v4163 = vpack.c.b16 %v3647, %v3635
    %v4164 = vpack.c.b16 %v3648, %v3636
    %v4165 = vpack.c.b16 %v3649, %v3637
    %v4166 = vpack.c.b16 %v3662, %v3650
    %v4167 = vpack.c.b16 %v3663, %v3651
    %v4168 = vpack.c.b16 %v3664, %v3652
    %v4169 = vpack.c.b16 %v3665, %v3653
    %v4170 = vpack.c.b16 %v3666, %v3654
    %v4171 = vpack.c.b16 %v3667, %v3655
    %v4172 = vpack.c.b16 %v3668, %v3656
    %v4173 = vpack.c.b16 %v3669, %v3657
    %v4174 = vpack.c.b16 %v3670, %v3658
    %v4175 = vpack.c.b16 %v3671, %v3659
    %v4176 = vpack.c.b16 %v3672, %v3660
    %v4177 = vpack.c.b16 %v3673, %v3661
    %v4178 = vpack.c.b16 %v3686, %v3674
    %v4179 = vpack.c.b16 %v3687, %v3675
    %v4180 = vpack.c.b16 %v3688, %v3676
    %v4181 = vpack.c.b16 %v3689, %v3677
    %v4182 = vpack.c.b16 %v3690, %v3678
    %v4183 = vpack.c.b16 %v3691, %v3679
    %v4184 = vpack.c.b16 %v3692, %v3680
    %v4185 = vpack.c.b16 %v3693, %v3681
    %v4186 = vpack.c.b16 %v3694, %v3682
    %v4187 = vpack.c.b16 %v3695, %v3683
    %v4188 = vpack.c.b16 %v3696, %v3684
    %v4189 = vpack.c.b16 %v3697, %v3685
    %v4190 = vpack.c.b16 %v3710, %v3698
    %v4191 = vpack.c.b16 %v3711, %v3699
    %v4192 = vpack.c.b16 %v3712, %v3700
    %v4193 = vpack.c.b16 %v3713, %v3701
    %v4194 = vpack.c.b16 %v3714, %v3702
    %v4195 = vpack.c.b16 %v3715, %v3703
    %v4196 = vpack.c.b16 %v3716, %v3704
    %v4197 = vpack.c.b16 %v3717, %v3705
    %v4198 = vpack.c.b16 %v3718, %v3706
    %v4199 = vpack.c.b16 %v3719, %v3707
    %v4200 = vpack.c.b16 %v3720, %v3708
    %v4201 = vpack.c.b16 %v3721, %v3709
    %v4202 = vpack.c.b16 %v3734, %v3722
    %v4203 = vpack.c.b16 %v3735, %v3723
    %v4204 = vpack.c.b16 %v3736, %v3724
    %v4205 = vpack.c.b16 %v3737, %v3725
    %v4206 = vpack.c.b16 %v3738, %v3726
    %v4207 = vpack.c.b16 %v3739, %v3727
    %v4208 = vpack.c.b16 %v3740, %v3728
    %v4209 = vpack.c.b16 %v3741, %v3729
    %v4210 = vpack.c.b16 %v3742, %v3730
    %v4211 = vpack.c.b16 %v3743, %v3731
    %v4212 = vpack.c.b16 %v3744, %v3732
    %v4213 = vpack.c.b16 %v3745, %v3733
    %v4214 = vpack.c.b16 %v3758, %v3746
    %v4215 = vpack.c.b16 %v3759, %v3747
    %v4216 = vpack.c.b16 %v3760, %v3748
    %v4217 = vpack.c.b16 %v3761, %v3749
    %v4218 = vpack.c.b16 %v3762, %v3750
    %v4219 = vpack.c.b16 %v3763, %v3751
    %v4220 = vpack.c.b16 %v3764, %v3752
    %v4221 = vpack.c.b16 %v3765, %v3753
    %v4222 = vpack.c.b16 %v3766, %v3754
    %v4223 = vpack.c.b16 %v3767, %v3755
    %v4224 = vpack.c.b16 %v3768, %v3756
    %v4225 = vpack.c.b16 %v3769, %v3757
    %v4226 = vpack.c.b16 %v3782, %v3770
    %v4227 = vpack.c.b16 %v3783, %v3771
    %v4228 = vpack.c.b16 %v3784, %v3772
    %v4229 = vpack.c.b16 %v3785, %v3773
    %v4230 = vpack.c.b16 %v3786, %v3774
    %v4231 = vpack.c.b16 %v3787, %v3775
    %v4232 = vpack.c.b16 %v3788, %v3776
    %v4233 = vpack.c.b16 %v3789, %v3777
    %v4234 = vpack.c.b16 %v3790, %v3778
    %v4235 = vpack.c.b16 %v3791, %v3779
    %v4236 = vpack.c.b16 %v3792, %v3780
    %v4237 = vpack.c.b16 %v3793, %v3781
    %v4238 = vpack.c.b16 %v3806, %v3794
    %v4239 = vpack.c.b16 %v3807, %v3795
    %v4240 = vpack.c.b16 %v3808, %v3796
    %v4241 = vpack.c.b16 %v3809, %v3797
    %v4242 = vpack.c.b16 %v3810, %v3798
    %v4243 = vpack.c.b16 %v3811, %v3799
    %v4244 = vpack.c.b16 %v3812, %v3800
    %v4245 = vpack.c.b16 %v3813, %v3801
    %v4246 = vpack.c.b16 %v3814, %v3802
    %v4247 = vpack.c.b16 %v3815, %v3803
    %v4248 = vpack.c.b16 %v3816, %v3804
    %v4249 = vpack.c.b16 %v3817, %v3805
    %v4250 = vpack.c.b16 %v3830, %v3818
    %v4251 = vpack.c.b16 %v3831, %v3819
    %v4252 = vpack.c.b16 %v3832, %v3820
    %v4253 = vpack.c.b16 %v3833, %v3821
    %v4254 = vpack.c.b16 %v3834, %v3822
    %v4255 = vpack.c.b16 %v3835, %v3823
    %v4256 = vpack.c.b16 %v3836, %v3824
    %v4257 = vpack.c.b16 %v3837, %v3825
    %v4258 = vpack.c.b16 %v3838, %v3826
    %v4259 = vpack.c.b16 %v3839, %v3827
    %v4260 = vpack.c.b16 %v3840, %v3828
    %v4261 = vpack.c.b16 %v3841, %v3829
    %v4262 = vpack.c.b16 %v3854, %v3842
    %v4263 = vpack.c.b16 %v3855, %v3843
    %v4264 = vpack.c.b16 %v3856, %v3844
    %v4265 = vpack.c.b16 %v3857, %v3845
    %v4266 = vpack.c.b16 %v3858, %v3846
    %v4267 = vpack.c.b16 %v3859, %v3847
    %v4268 = vpack.c.b16 %v3860, %v3848
    %v4269 = vpack.c.b16 %v3861, %v3849
    %v4270 = vpack.c.b16 %v3862, %v3850
    %v4271 = vpack.c.b16 %v3863, %v3851
    %v4272 = vpack.c.b16 %v3864, %v3852
    %v4273 = vpack.c.b16 %v3865, %v3853
    %v4274 = vpack.c.b16 %v3878, %v3866
    %v4275 = vpack.c.b16 %v3879, %v3867
    %v4276 = vpack.c.b16 %v3880, %v3868
    %v4277 = vpack.c.b16 %v3881, %v3869
    %v4278 = vpack.c.b16 %v3882, %v3870
    %v4279 = vpack.c.b16 %v3883, %v3871
    %v4280 = vpack.c.b16 %v3884, %v3872
    %v4281 = vpack.c.b16 %v3885, %v3873
    %v4282 = vpack.c.b16 %v3886, %v3874
    %v4283 = vpack.c.b16 %v3887, %v3875
    %v4284 = vpack.c.b16 %v3888, %v3876
    %v4285 = vpack.c.b16 %v3889, %v3877
    %v4286 = vpack.c.b16 %v3902, %v3890
    %v4287 = vpack.c.b16 %v3903, %v3891
    %v4288 = vpack.c.b16 %v3904, %v3892
    %v4289 = vpack.c.b16 %v3905, %v3893
    %v4290 = vpack.c.b16 %v3906, %v3894
    %v4291 = vpack.c.b16 %v3907, %v3895
    %v4292 = vpack.c.b16 %v3908, %v3896
    %v4293 = vpack.c.b16 %v3909, %v3897
    %v4294 = vpack.c.b16 %v3910, %v3898
    %v4295 = vpack.c.b16 %v3911, %v3899
    %v4296 = vpack.c.b16 %v3912, %v3900
    %v4297 = vpack.c.b16 %v3913, %v3901
    %v4298 = vpack.c.b16 %v3926, %v3914
    %v4299 = vpack.c.b16 %v3927, %v3915
    %v4300 = vpack.c.b16 %v3928, %v3916
    %v4301 = vpack.c.b16 %v3929, %v3917
    %v4302 = vpack.c.b16 %v3930, %v3918
    %v4303 = vpack.c.b16 %v3931, %v3919
    %v4304 = vpack.c.b16 %v3932, %v3920
    %v4305 = vpack.c.b16 %v3933, %v3921
    %v4306 = vpack.c.b16 %v3934, %v3922
    %v4307 = vpack.c.b16 %v3935, %v3923
    %v4308 = vpack.c.b16 %v3936, %v3924
    %v4309 = vpack.c.b16 %v3937, %v3925
    %v4310 = vpack.c.b16 %v3950, %v3938
    %v4311 = vpack.c.b16 %v3951, %v3939
    %v4312 = vpack.c.b16 %v3952, %v3940
    %v4313 = vpack.c.b16 %v3953, %v3941
    %v4314 = vpack.c.b16 %v3954, %v3942
    %v4315 = vpack.c.b16 %v3955, %v3943
    %v4316 = vpack.c.b16 %v3956, %v3944
    %v4317 = vpack.c.b16 %v3957, %v3945
    %v4318 = vpack.c.b16 %v3958, %v3946
    %v4319 = vpack.c.b16 %v3959, %v3947
    %v4320 = vpack.c.b16 %v3960, %v3948
    %v4321 = vpack.c.b16 %v3961, %v3949
    %v4322 = vpack.c.b16 %v3974, %v3962
    %v4323 = vpack.c.b16 %v3975, %v3963
    %v4324 = vpack.c.b16 %v3976, %v3964
    %v4325 = vpack.c.b16 %v3977, %v3965
    %v4326 = vpack.c.b16 %v3978, %v3966
    %v4327 = vpack.c.b16 %v3979, %v3967
    %v4328 = vpack.c.b16 %v3980, %v3968
    %v4329 = vpack.c.b16 %v3981, %v3969
    %v4330 = vpack.c.b16 %v3982, %v3970
    %v4331 = vpack.c.b16 %v3983, %v3971
    %v4332 = vpack.c.b16 %v3984, %v3972
    %v4333 = vpack.c.b16 %v3985, %v3973
    %v4334 = vpack.c.b16 %v3998, %v3986
    %v4335 = vpack.c.b16 %v3999, %v3987
    %v4336 = vpack.c.b16 %v4000, %v3988
    %v4337 = vpack.c.b16 %v4001, %v3989
    %v4338 = vpack.c.b16 %v4002, %v3990
    %v4339 = vpack.c.b16 %v4003, %v3991
    %v4340 = vpack.c.b16 %v4004, %v3992
    %v4341 = vpack.c.b16 %v4005, %v3993
    %v4342 = vpack.c.b16 %v4006, %v3994
    %v4343 = vpack.c.b16 %v4007, %v3995
    %v4344 = vpack.c.b16 %v4008, %v3996
    %v4345 = vpack.c.b16 %v4009, %v3997
    %v4346 = vpack.c.b16 %v4022, %v4010
    %v4347 = vpack.c.b16 %v4023, %v4011
    %v4348 = vpack.c.b16 %v4024, %v4012
    %v4349 = vpack.c.b16 %v4025, %v4013
    %v4350 = vpack.c.b16 %v4026, %v4014
    %v4351 = vpack.c.b16 %v4027, %v4015
    %v4352 = vpack.c.b16 %v4028, %v4016
    %v4353 = vpack.c.b16 %v4029, %v4017
    %v4354 = vpack.c.b16 %v4030, %v4018
    %v4355 = vpack.c.b16 %v4031, %v4019
    %v4356 = vpack.c.b16 %v4032, %v4020
    %v4357 = vpack.c.b16 %v4033, %v4021
    %v4358 = vpack.c.b16 %v4046, %v4034
    %v4359 = vpack.c.b16 %v4047, %v4035
    %v4360 = vpack.c.b16 %v4048, %v4036
    %v4361 = vpack.c.b16 %v4049, %v4037
    %v4362 = vpack.c.b16 %v4050, %v4038
    %v4363 = vpack.c.b16 %v4051, %v4039
    %v4364 = vpack.c.b16 %v4052, %v4040
    %v4365 = vpack.c.b16 %v4053, %v4041
    %v4366 = vpack.c.b16 %v4054, %v4042
    %v4367 = vpack.c.b16 %v4055, %v4043
    %v4368 = vpack.c.b16 %v4056, %v4044
    %v4369 = vpack.c.b16 %v4057, %v4045
    %v4370 = vpack.c.b16 %v4070, %v4058
    %v4371 = vpack.c.b16 %v4071, %v4059
    %v4372 = vpack.c.b16 %v4072, %v4060
    %v4373 = vpack.c.b16 %v4073, %v4061
    %v4374 = vpack.c.b16 %v4074, %v4062
    %v4375 = vpack.c.b16 %v4075, %v4063
    %v4376 = vpack.c.b16 %v4076, %v4064
    %v4377 = vpack.c.b16 %v4077, %v4065
    %v4378 = vpack.c.b16 %v4078, %v4066
    %v4379 = vpack.c.b16 %v4079, %v4067
    %v4380 = vpack.c.b16 %v4080, %v4068
    %v4381 = vpack.c.b16 %v4081, %v4069
    %v4382 = vpack.c.b16 %v4094, %v4082
    %v4383 = vpack.c.b16 %v4095, %v4083
    %v4384 = vpack.c.b16 %v4096, %v4084
    %v4385 = vpack.c.b16 %v4097, %v4085
    %v4386 = vpack.c.b16 %v4098, %v4086
    %v4387 = vpack.c.b16 %v4099, %v4087
    %v4388 = vpack.c.b16 %v4100, %v4088
    %v4389 = vpack.c.b16 %v4101, %v4089
    %v4390 = vpack.c.b16 %v4102, %v4090
    %v4391 = vpack.c.b16 %v4103, %v4091
    %v4392 = vpack.c.b16 %v4104, %v4092
    %v4393 = vpack.c.b16 %v4105, %v4093
    %4682 = vmatprep.subr.bf16.mxu0 %v4191
    %4683 = vmatpush1.bf16.msra.mxu0 %v4190
    %4684 = vmatprep.subr.bf16.mxu0 %v4179
    %4685 = vmatpush1.bf16.msra.mxu0 %v4178
    %4686 = vmatprep.subr.bf16.mxu0 %v4167
    %4687 = vmatpush1.bf16.msra.mxu0 %v4166
    %4688 = vmatprep.subr.bf16.mxu0 %v4155
    %4689 = vmatpush1.bf16.msra.mxu0 %v4154
    %4690 = vmatprep.subr.bf16.mxu0 %v4143
    %4691 = vmatpush1.bf16.msra.mxu0 %v4142
    %4692 = vmatprep.subr.bf16.mxu0 %v4131
    %4693 = vmatpush1.bf16.msra.mxu0 %v4130
    %4694 = vmatprep.subr.bf16.mxu0 %v4119
    %4695 = vmatpush1.bf16.msra.mxu0 %v4118
    %4696 = vmatprep.subr.bf16.mxu0 %v4107
    %4697 = vmatpush1.bf16.msra.mxu0 %v4106
    %4698 = vmatprep.subr.bf16.mxu0 %v4287
    %4699 = vmatpush2.bf16.msra.mxu0 %v4286
    %4700 = vmatprep.subr.bf16.mxu0 %v4275
    %4701 = vmatpush2.bf16.msra.mxu0 %v4274
    %4702 = vmatprep.subr.bf16.mxu0 %v4263
    %4703 = vmatpush2.bf16.msra.mxu0 %v4262
    %4704 = vmatprep.subr.bf16.mxu0 %v4251
    %4705 = vmatpush2.bf16.msra.mxu0 %v4250
    %4706 = vmatprep.subr.bf16.mxu0 %v4239
    %4707 = vmatpush2.bf16.msra.mxu0 %v4238
    %4708 = vmatprep.subr.bf16.mxu0 %v4227
    %4709 = vmatpush2.bf16.msra.mxu0 %v4226
    %4710 = vmatprep.subr.bf16.mxu0 %v4215
    %4711 = vmatpush2.bf16.msra.mxu0 %v4214
    %4712 = vmatprep.subr.bf16.mxu0 %v4203
    %4713 = vmatpush2.bf16.msra.mxu0 %v4202
    %4714 = vmatprep.mubr.bf16.mxu0 0
    %4715 = vmatmul.mubr.bf16.gmra.mxu0 0
    %v4716 = vpop.f32.mrf.mxu0
    %v4717 = vadd.f32 0.0, %v4716
    %v4718 = vpop.f32.mrf.mxu0
    %v4719 = vadd.f32 0.0, %v4718
    %v4720 = vpop.f32.mrf.mxu0
    %v4721 = vpop.f32.mrf.mxu0
    %4722 = vdwg.mxu0
    %4723 = vmatprep.subr.bf16.mxu0 %v4383
    %4724 = vmatpush1.bf16.msra.mxu0 %v4382
    %4725 = vmatprep.subr.bf16.mxu0 %v4371
    %4726 = vmatpush1.bf16.msra.mxu0 %v4370
    %4727 = vmatprep.subr.bf16.mxu0 %v4359
    %4728 = vmatpush1.bf16.msra.mxu0 %v4358
    %4729 = vmatprep.subr.bf16.mxu0 %v4347
    %4730 = vmatpush1.bf16.msra.mxu0 %v4346
    %4731 = vmatprep.subr.bf16.mxu0 %v4335
    %4732 = vmatpush1.bf16.msra.mxu0 %v4334
    %4733 = vmatprep.subr.bf16.mxu0 %v4323
    %4734 = vmatpush1.bf16.msra.mxu0 %v4322
    %4735 = vmatprep.subr.bf16.mxu0 %v4311
    %4736 = vmatpush1.bf16.msra.mxu0 %v4310
    %4737 = vmatprep.subr.bf16.mxu0 %v4299
    %4738 = vmatpush1.bf16.msra.mxu0 %v4298
    %4739 = vmatprep.subr.bf16.mxu0 0
    %4740 = vmatpush2.bf16.msra.mxu0 0
    %4741 = vmatprep.subr.bf16.mxu0 0
    %4742 = vmatpush2.bf16.msra.mxu0 0
    %4743 = vmatprep.subr.bf16.mxu0 0
    %4744 = vmatpush2.bf16.msra.mxu0 0
    %4745 = vmatprep.subr.bf16.mxu0 0
    %4746 = vmatpush2.bf16.msra.mxu0 0
    %4747 = vmatprep.subr.bf16.mxu0 0
    %4748 = vmatpush2.bf16.msra.mxu0 0
    %4749 = vmatprep.subr.bf16.mxu0 0
    %4750 = vmatpush2.bf16.msra.mxu0 0
    %4751 = vmatprep.subr.bf16.mxu0 0
    %4752 = vmatpush2.bf16.msra.mxu0 0
    %4753 = vmatprep.subr.bf16.mxu0 0
    %4754 = vmatpush2.bf16.msra.mxu0 0
    %4755 = vmatprep.mubr.bf16.mxu0 0
    %4756 = vmatmul.mubr.bf16.gmra.mxu0 0
    %v4757 = vpop.f32.mrf.mxu0
    %v4758 = vadd.f32 %v4717, %v4757
    %v4759 = vpop.f32.mrf.mxu0
    %v4760 = vadd.f32 %v4719, %v4759
    %v4761 = vpop.f32.mrf.mxu0
    %v4762 = vpop.f32.mrf.mxu0
    %4763 = vdwg.mxu0
    %4764 = vmatprep.subr.bf16.mxu0 %v4193
    %4765 = vmatpush1.bf16.msra.mxu0 %v4192
    %4766 = vmatprep.subr.bf16.mxu0 %v4181
    %4767 = vmatpush1.bf16.msra.mxu0 %v4180
    %4768 = vmatprep.subr.bf16.mxu0 %v4169
    %4769 = vmatpush1.bf16.msra.mxu0 %v4168
    %4770 = vmatprep.subr.bf16.mxu0 %v4157
    %4771 = vmatpush1.bf16.msra.mxu0 %v4156
    %4772 = vmatprep.subr.bf16.mxu0 %v4145
    %4773 = vmatpush1.bf16.msra.mxu0 %v4144
    %4774 = vmatprep.subr.bf16.mxu0 %v4133
    %4775 = vmatpush1.bf16.msra.mxu0 %v4132
    %4776 = vmatprep.subr.bf16.mxu0 %v4121
    %4777 = vmatpush1.bf16.msra.mxu0 %v4120
    %4778 = vmatprep.subr.bf16.mxu0 %v4109
    %4779 = vmatpush1.bf16.msra.mxu0 %v4108
    %4780 = vmatprep.subr.bf16.mxu0 %v4289
    %4781 = vmatpush2.bf16.msra.mxu0 %v4288
    %4782 = vmatprep.subr.bf16.mxu0 %v4277
    %4783 = vmatpush2.bf16.msra.mxu0 %v4276
    %4784 = vmatprep.subr.bf16.mxu0 %v4265
    %4785 = vmatpush2.bf16.msra.mxu0 %v4264
    %4786 = vmatprep.subr.bf16.mxu0 %v4253
    %4787 = vmatpush2.bf16.msra.mxu0 %v4252
    %4788 = vmatprep.subr.bf16.mxu0 %v4241
    %4789 = vmatpush2.bf16.msra.mxu0 %v4240
    %4790 = vmatprep.subr.bf16.mxu0 %v4229
    %4791 = vmatpush2.bf16.msra.mxu0 %v4228
    %4792 = vmatprep.subr.bf16.mxu0 %v4217
    %4793 = vmatpush2.bf16.msra.mxu0 %v4216
    %4794 = vmatprep.subr.bf16.mxu0 %v4205
    %4795 = vmatpush2.bf16.msra.mxu0 %v4204
    %4796 = vmatprep.mubr.bf16.mxu0 0
    %4797 = vmatmul.mubr.bf16.gmra.mxu0 0
    %v4798 = vpop.f32.mrf.mxu0
    %v4799 = vadd.f32 0.0, %v4798
    %v4800 = vpop.f32.mrf.mxu0
    %v4801 = vadd.f32 0.0, %v4800
    %v4802 = vpop.f32.mrf.mxu0
    %v4803 = vpop.f32.mrf.mxu0
    %4804 = vdwg.mxu0
    %4805 = vmatprep.subr.bf16.mxu0 %v4385
    %4806 = vmatpush1.bf16.msra.mxu0 %v4384
    %4807 = vmatprep.subr.bf16.mxu0 %v4373
    %4808 = vmatpush1.bf16.msra.mxu0 %v4372
    %4809 = vmatprep.subr.bf16.mxu0 %v4361
    %4810 = vmatpush1.bf16.msra.mxu0 %v4360
    %4811 = vmatprep.subr.bf16.mxu0 %v4349
    %4812 = vmatpush1.bf16.msra.mxu0 %v4348
    %4813 = vmatprep.subr.bf16.mxu0 %v4337
    %4814 = vmatpush1.bf16.msra.mxu0 %v4336
    %4815 = vmatprep.subr.bf16.mxu0 %v4325
    %4816 = vmatpush1.bf16.msra.mxu0 %v4324
    %4817 = vmatprep.subr.bf16.mxu0 %v4313
    %4818 = vmatpush1.bf16.msra.mxu0 %v4312
    %4819 = vmatprep.subr.bf16.mxu0 %v4301
    %4820 = vmatpush1.bf16.msra.mxu0 %v4300
    %4821 = vmatprep.subr.bf16.mxu0 0
    %4822 = vmatpush2.bf16.msra.mxu0 0
    %4823 = vmatprep.subr.bf16.mxu0 0
    %4824 = vmatpush2.bf16.msra.mxu0 0
    %4825 = vmatprep.subr.bf16.mxu0 0
    %4826 = vmatpush2.bf16.msra.mxu0 0
    %4827 = vmatprep.subr.bf16.mxu0 0
    %4828 = vmatpush2.bf16.msra.mxu0 0
    %4829 = vmatprep.subr.bf16.mxu0 0
    %4830 = vmatpush2.bf16.msra.mxu0 0
    %4831 = vmatprep.subr.bf16.mxu0 0
    %4832 = vmatpush2.bf16.msra.mxu0 0
    %4833 = vmatprep.subr.bf16.mxu0 0
    %4834 = vmatpush2.bf16.msra.mxu0 0
    %4835 = vmatprep.subr.bf16.mxu0 0
    %4836 = vmatpush2.bf16.msra.mxu0 0
    %4837 = vmatprep.mubr.bf16.mxu0 0
    %4838 = vmatmul.mubr.bf16.gmra.mxu0 0
    %v4839 = vpop.f32.mrf.mxu0
    %v4840 = vadd.f32 %v4799, %v4839
    %v4841 = vpop.f32.mrf.mxu0
    %v4842 = vadd.f32 %v4801, %v4841
    %v4843 = vpop.f32.mrf.mxu0
    %v4844 = vpop.f32.mrf.mxu0
    %4845 = vdwg.mxu0
    %4846 = vmatprep.subr.bf16.mxu0 %v4195
    %4847 = vmatpush1.bf16.msra.mxu0 %v4194
    %4848 = vmatprep.subr.bf16.mxu0 %v4183
    %4849 = vmatpush1.bf16.msra.mxu0 %v4182
    %4850 = vmatprep.subr.bf16.mxu0 %v4171
    %4851 = vmatpush1.bf16.msra.mxu0 %v4170
    %4852 = vmatprep.subr.bf16.mxu0 %v4159
    %4853 = vmatpush1.bf16.msra.mxu0 %v4158
    %4854 = vmatprep.subr.bf16.mxu0 %v4147
    %4855 = vmatpush1.bf16.msra.mxu0 %v4146
    %4856 = vmatprep.subr.bf16.mxu0 %v4135
    %4857 = vmatpush1.bf16.msra.mxu0 %v4134
    %4858 = vmatprep.subr.bf16.mxu0 %v4123
    %4859 = vmatpush1.bf16.msra.mxu0 %v4122
    %4860 = vmatprep.subr.bf16.mxu0 %v4111
    %4861 = vmatpush1.bf16.msra.mxu0 %v4110
    %4862 = vmatprep.subr.bf16.mxu0 %v4291
    %4863 = vmatpush2.bf16.msra.mxu0 %v4290
    %4864 = vmatprep.subr.bf16.mxu0 %v4279
    %4865 = vmatpush2.bf16.msra.mxu0 %v4278
    %4866 = vmatprep.subr.bf16.mxu0 %v4267
    %4867 = vmatpush2.bf16.msra.mxu0 %v4266
    %4868 = vmatprep.subr.bf16.mxu0 %v4255
    %4869 = vmatpush2.bf16.msra.mxu0 %v4254
    %4870 = vmatprep.subr.bf16.mxu0 %v4243
    %4871 = vmatpush2.bf16.msra.mxu0 %v4242
    %4872 = vmatprep.subr.bf16.mxu0 %v4231
    %4873 = vmatpush2.bf16.msra.mxu0 %v4230
    %4874 = vmatprep.subr.bf16.mxu0 %v4219
    %4875 = vmatpush2.bf16.msra.mxu0 %v4218
    %4876 = vmatprep.subr.bf16.mxu0 %v4207
    %4877 = vmatpush2.bf16.msra.mxu0 %v4206
    %4878 = vmatprep.mubr.bf16.mxu0 0
    %4879 = vmatmul.mubr.bf16.gmra.mxu0 0
    %v4880 = vpop.f32.mrf.mxu0
    %v4881 = vadd.f32 0.0, %v4880
    %v4882 = vpop.f32.mrf.mxu0
    %v4883 = vadd.f32 0.0, %v4882
    %v4884 = vpop.f32.mrf.mxu0
    %v4885 = vpop.f32.mrf.mxu0
    %4886 = vdwg.mxu0
    %4887 = vmatprep.subr.bf16.mxu0 %v4387
    %4888 = vmatpush1.bf16.msra.mxu0 %v4386
    %4889 = vmatprep.subr.bf16.mxu0 %v4375
    %4890 = vmatpush1.bf16.msra.mxu0 %v4374
    %4891 = vmatprep.subr.bf16.mxu0 %v4363
    %4892 = vmatpush1.bf16.msra.mxu0 %v4362
    %4893 = vmatprep.subr.bf16.mxu0 %v4351
    %4894 = vmatpush1.bf16.msra.mxu0 %v4350
    %4895 = vmatprep.subr.bf16.mxu0 %v4339
    %4896 = vmatpush1.bf16.msra.mxu0 %v4338
    %4897 = vmatprep.subr.bf16.mxu0 %v4327
    %4898 = vmatpush1.bf16.msra.mxu0 %v4326
    %4899 = vmatprep.subr.bf16.mxu0 %v4315
    %4900 = vmatpush1.bf16.msra.mxu0 %v4314
    %4901 = vmatprep.subr.bf16.mxu0 %v4303
    %4902 = vmatpush1.bf16.msra.mxu0 %v4302
    %4903 = vmatprep.subr.bf16.mxu0 0
    %4904 = vmatpush2.bf16.msra.mxu0 0
    %4905 = vmatprep.subr.bf16.mxu0 0
    %4906 = vmatpush2.bf16.msra.mxu0 0
    %4907 = vmatprep.subr.bf16.mxu0 0
    %4908 = vmatpush2.bf16.msra.mxu0 0
    %4909 = vmatprep.subr.bf16.mxu0 0
    %4910 = vmatpush2.bf16.msra.mxu0 0
    %4911 = vmatprep.subr.bf16.mxu0 0
    %4912 = vmatpush2.bf16.msra.mxu0 0
    %4913 = vmatprep.subr.bf16.mxu0 0
    %4914 = vmatpush2.bf16.msra.mxu0 0
    %4915 = vmatprep.subr.bf16.mxu0 0
    %4916 = vmatpush2.bf16.msra.mxu0 0
    %4917 = vmatprep.subr.bf16.mxu0 0
    %4918 = vmatpush2.bf16.msra.mxu0 0
    %4919 = vmatprep.mubr.bf16.mxu0 0
    %4920 = vmatmul.mubr.bf16.gmra.mxu0 0
    %v4921 = vpop.f32.mrf.mxu0
    %v4922 = vadd.f32 %v4881, %v4921
    %v4923 = vpop.f32.mrf.mxu0
    %v4924 = vadd.f32 %v4883, %v4923
    %v4925 = vpop.f32.mrf.mxu0
    %v4926 = vpop.f32.mrf.mxu0
    %4927 = vdwg.mxu0
    %4928 = vmatprep.subr.bf16.mxu0 %v4197
    %4929 = vmatpush1.bf16.msra.mxu0 %v4196
    %4930 = vmatprep.subr.bf16.mxu0 %v4185
    %4931 = vmatpush1.bf16.msra.mxu0 %v4184
    %4932 = vmatprep.subr.bf16.mxu0 %v4173
    %4933 = vmatpush1.bf16.msra.mxu0 %v4172
    %4934 = vmatprep.subr.bf16.mxu0 %v4161
    %4935 = vmatpush1.bf16.msra.mxu0 %v4160
    %4936 = vmatprep.subr.bf16.mxu0 %v4149
    %4937 = vmatpush1.bf16.msra.mxu0 %v4148
    %4938 = vmatprep.subr.bf16.mxu0 %v4137
    %4939 = vmatpush1.bf16.msra.mxu0 %v4136
    %4940 = vmatprep.subr.bf16.mxu0 %v4125
    %4941 = vmatpush1.bf16.msra.mxu0 %v4124
    %4942 = vmatprep.subr.bf16.mxu0 %v4113
    %4943 = vmatpush1.bf16.msra.mxu0 %v4112
    %4944 = vmatprep.subr.bf16.mxu0 %v4293
    %4945 = vmatpush2.bf16.msra.mxu0 %v4292
    %4946 = vmatprep.subr.bf16.mxu0 %v4281
    %4947 = vmatpush2.bf16.msra.mxu0 %v4280
    %4948 = vmatprep.subr.bf16.mxu0 %v4269
    %4949 = vmatpush2.bf16.msra.mxu0 %v4268
    %4950 = vmatprep.subr.bf16.mxu0 %v4257
    %4951 = vmatpush2.bf16.msra.mxu0 %v4256
    %4952 = vmatprep.subr.bf16.mxu0 %v4245
    %4953 = vmatpush2.bf16.msra.mxu0 %v4244
    %4954 = vmatprep.subr.bf16.mxu0 %v4233
    %4955 = vmatpush2.bf16.msra.mxu0 %v4232
    %4956 = vmatprep.subr.bf16.mxu0 %v4221
    %4957 = vmatpush2.bf16.msra.mxu0 %v4220
    %4958 = vmatprep.subr.bf16.mxu0 %v4209
    %4959 = vmatpush2.bf16.msra.mxu0 %v4208
    %4960 = vmatprep.mubr.bf16.mxu0 0
    %4961 = vmatmul.mubr.bf16.gmra.mxu0 0
    %v4962 = vpop.f32.mrf.mxu0
    %v4963 = vadd.f32 0.0, %v4962
    %v4964 = vpop.f32.mrf.mxu0
    %v4965 = vadd.f32 0.0, %v4964
    %v4966 = vpop.f32.mrf.mxu0
    %v4967 = vpop.f32.mrf.mxu0
    %4968 = vdwg.mxu0
    %4969 = vmatprep.subr.bf16.mxu0 %v4389
    %4970 = vmatpush1.bf16.msra.mxu0 %v4388
    %4971 = vmatprep.subr.bf16.mxu0 %v4377
    %4972 = vmatpush1.bf16.msra.mxu0 %v4376
    %4973 = vmatprep.subr.bf16.mxu0 %v4365
    %4974 = vmatpush1.bf16.msra.mxu0 %v4364
    %4975 = vmatprep.subr.bf16.mxu0 %v4353
    %4976 = vmatpush1.bf16.msra.mxu0 %v4352
    %4977 = vmatprep.subr.bf16.mxu0 %v4341
    %4978 = vmatpush1.bf16.msra.mxu0 %v4340
    %4979 = vmatprep.subr.bf16.mxu0 %v4329
    %4980 = vmatpush1.bf16.msra.mxu0 %v4328
    %4981 = vmatprep.subr.bf16.mxu0 %v4317
    %4982 = vmatpush1.bf16.msra.mxu0 %v4316
    %4983 = vmatprep.subr.bf16.mxu0 %v4305
    %4984 = vmatpush1.bf16.msra.mxu0 %v4304
    %4985 = vmatprep.subr.bf16.mxu0 0
    %4986 = vmatpush2.bf16.msra.mxu0 0
    %4987 = vmatprep.subr.bf16.mxu0 0
    %4988 = vmatpush2.bf16.msra.mxu0 0
    %4989 = vmatprep.subr.bf16.mxu0 0
    %4990 = vmatpush2.bf16.msra.mxu0 0
    %4991 = vmatprep.subr.bf16.mxu0 0
    %4992 = vmatpush2.bf16.msra.mxu0 0
    %4993 = vmatprep.subr.bf16.mxu0 0
    %4994 = vmatpush2.bf16.msra.mxu0 0
    %4995 = vmatprep.subr.bf16.mxu0 0
    %4996 = vmatpush2.bf16.msra.mxu0 0
    %4997 = vmatprep.subr.bf16.mxu0 0
    %4998 = vmatpush2.bf16.msra.mxu0 0
    %4999 = vmatprep.subr.bf16.mxu0 0
    %5000 = vmatpush2.bf16.msra.mxu0 0
    %5001 = vmatprep.mubr.bf16.mxu0 0
    %5002 = vmatmul.mubr.bf16.gmra.mxu0 0
    %v5003 = vpop.f32.mrf.mxu0
    %v5004 = vadd.f32 %v4963, %v5003
    %v5005 = vpop.f32.mrf.mxu0
    %v5006 = vadd.f32 %v4965, %v5005
    %v5007 = vpop.f32.mrf.mxu0
    %v5008 = vpop.f32.mrf.mxu0
    %5009 = vdwg.mxu0
    %5010 = vmatprep.subr.bf16.mxu0 %v4199
    %5011 = vmatpush1.bf16.msra.mxu0 %v4198
    %5012 = vmatprep.subr.bf16.mxu0 %v4187
    %5013 = vmatpush1.bf16.msra.mxu0 %v4186
    %5014 = vmatprep.subr.bf16.mxu0 %v4175
    %5015 = vmatpush1.bf16.msra.mxu0 %v4174
    %5016 = vmatprep.subr.bf16.mxu0 %v4163
    %5017 = vmatpush1.bf16.msra.mxu0 %v4162
    %5018 = vmatprep.subr.bf16.mxu0 %v4151
    %5019 = vmatpush1.bf16.msra.mxu0 %v4150
    %5020 = vmatprep.subr.bf16.mxu0 %v4139
    %5021 = vmatpush1.bf16.msra.mxu0 %v4138
    %5022 = vmatprep.subr.bf16.mxu0 %v4127
    %5023 = vmatpush1.bf16.msra.mxu0 %v4126
    %5024 = vmatprep.subr.bf16.mxu0 %v4115
    %5025 = vmatpush1.bf16.msra.mxu0 %v4114
    %5026 = vmatprep.subr.bf16.mxu0 %v4295
    %5027 = vmatpush2.bf16.msra.mxu0 %v4294
    %5028 = vmatprep.subr.bf16.mxu0 %v4283
    %5029 = vmatpush2.bf16.msra.mxu0 %v4282
    %5030 = vmatprep.subr.bf16.mxu0 %v4271
    %5031 = vmatpush2.bf16.msra.mxu0 %v4270
    %5032 = vmatprep.subr.bf16.mxu0 %v4259
    %5033 = vmatpush2.bf16.msra.mxu0 %v4258
    %5034 = vmatprep.subr.bf16.mxu0 %v4247
    %5035 = vmatpush2.bf16.msra.mxu0 %v4246
    %5036 = vmatprep.subr.bf16.mxu0 %v4235
    %5037 = vmatpush2.bf16.msra.mxu0 %v4234
    %5038 = vmatprep.subr.bf16.mxu0 %v4223
    %5039 = vmatpush2.bf16.msra.mxu0 %v4222
    %5040 = vmatprep.subr.bf16.mxu0 %v4211
    %5041 = vmatpush2.bf16.msra.mxu0 %v4210
    %5042 = vmatprep.mubr.bf16.mxu0 0
    %5043 = vmatmul.mubr.bf16.gmra.mxu0 0
    %v5044 = vpop.f32.mrf.mxu0
    %v5045 = vadd.f32 0.0, %v5044
    %v5046 = vpop.f32.mrf.mxu0
    %v5047 = vadd.f32 0.0, %v5046
    %v5048 = vpop.f32.mrf.mxu0
    %v5049 = vpop.f32.mrf.mxu0
    %5050 = vdwg.mxu0
    %5051 = vmatprep.subr.bf16.mxu0 %v4391
    %5052 = vmatpush1.bf16.msra.mxu0 %v4390
    %5053 = vmatprep.subr.bf16.mxu0 %v4379
    %5054 = vmatpush1.bf16.msra.mxu0 %v4378
    %5055 = vmatprep.subr.bf16.mxu0 %v4367
    %5056 = vmatpush1.bf16.msra.mxu0 %v4366
    %5057 = vmatprep.subr.bf16.mxu0 %v4355
    %5058 = vmatpush1.bf16.msra.mxu0 %v4354
    %5059 = vmatprep.subr.bf16.mxu0 %v4343
    %5060 = vmatpush1.bf16.msra.mxu0 %v4342
    %5061 = vmatprep.subr.bf16.mxu0 %v4331
    %5062 = vmatpush1.bf16.msra.mxu0 %v4330
    %5063 = vmatprep.subr.bf16.mxu0 %v4319
    %5064 = vmatpush1.bf16.msra.mxu0 %v4318
    %5065 = vmatprep.subr.bf16.mxu0 %v4307
    %5066 = vmatpush1.bf16.msra.mxu0 %v4306
    %5067 = vmatprep.subr.bf16.mxu0 0
    %5068 = vmatpush2.bf16.msra.mxu0 0
    %5069 = vmatprep.subr.bf16.mxu0 0
    %5070 = vmatpush2.bf16.msra.mxu0 0
    %5071 = vmatprep.subr.bf16.mxu0 0
    %5072 = vmatpush2.bf16.msra.mxu0 0
    %5073 = vmatprep.subr.bf16.mxu0 0
    %5074 = vmatpush2.bf16.msra.mxu0 0
    %5075 = vmatprep.subr.bf16.mxu0 0
    %5076 = vmatpush2.bf16.msra.mxu0 0
    %5077 = vmatprep.subr.bf16.mxu0 0
    %5078 = vmatpush2.bf16.msra.mxu0 0
    %5079 = vmatprep.subr.bf16.mxu0 0
    %5080 = vmatpush2.bf16.msra.mxu0 0
    %5081 = vmatprep.subr.bf16.mxu0 0
    %5082 = vmatpush2.bf16.msra.mxu0 0
    %5083 = vmatprep.mubr.bf16.mxu0 0
    %5084 = vmatmul.mubr.bf16.gmra.mxu0 0
    %v5085 = vpop.f32.mrf.mxu0
    %v5086 = vadd.f32 %v5045, %v5085
    %v5087 = vpop.f32.mrf.mxu0
    %v5088 = vadd.f32 %v5047, %v5087
    %v5089 = vpop.f32.mrf.mxu0
    %v5090 = vpop.f32.mrf.mxu0
    %5091 = vdwg.mxu0
    %5092 = vmatprep.subr.bf16.mxu0 %v4201
    %5093 = vmatpush1.bf16.msra.mxu0 %v4200
    %5094 = vmatprep.subr.bf16.mxu0 %v4189
    %5095 = vmatpush1.bf16.msra.mxu0 %v4188
    %5096 = vmatprep.subr.bf16.mxu0 %v4177
    %5097 = vmatpush1.bf16.msra.mxu0 %v4176
    %5098 = vmatprep.subr.bf16.mxu0 %v4165
    %5099 = vmatpush1.bf16.msra.mxu0 %v4164
    %5100 = vmatprep.subr.bf16.mxu0 %v4153
    %5101 = vmatpush1.bf16.msra.mxu0 %v4152
    %5102 = vmatprep.subr.bf16.mxu0 %v4141
    %5103 = vmatpush1.bf16.msra.mxu0 %v4140
    %5104 = vmatprep.subr.bf16.mxu0 %v4129
    %5105 = vmatpush1.bf16.msra.mxu0 %v4128
    %5106 = vmatprep.subr.bf16.mxu0 %v4117
    %5107 = vmatpush1.bf16.msra.mxu0 %v4116
    %5108 = vmatprep.subr.bf16.mxu0 %v4297
    %5109 = vmatpush2.bf16.msra.mxu0 %v4296
    %5110 = vmatprep.subr.bf16.mxu0 %v4285
    %5111 = vmatpush2.bf16.msra.mxu0 %v4284
    %5112 = vmatprep.subr.bf16.mxu0 %v4273
    %5113 = vmatpush2.bf16.msra.mxu0 %v4272
    %5114 = vmatprep.subr.bf16.mxu0 %v4261
    %5115 = vmatpush2.bf16.msra.mxu0 %v4260
    %5116 = vmatprep.subr.bf16.mxu0 %v4249
    %5117 = vmatpush2.bf16.msra.mxu0 %v4248
    %5118 = vmatprep.subr.bf16.mxu0 %v4237
    %5119 = vmatpush2.bf16.msra.mxu0 %v4236
    %5120 = vmatprep.subr.bf16.mxu0 %v4225
    %5121 = vmatpush2.bf16.msra.mxu0 %v4224
    %5122 = vmatprep.subr.bf16.mxu0 %v4213
    %5123 = vmatpush2.bf16.msra.mxu0 %v4212
    %5124 = vmatprep.mubr.bf16.mxu0 0
    %5125 = vmatmul.mubr.bf16.gmra.mxu0 0
    %v5126 = vpop.f32.mrf.mxu0
    %v5127 = vadd.f32 0.0, %v5126
    %v5128 = vpop.f32.mrf.mxu0
    %v5129 = vadd.f32 0.0, %v5128
    %v5130 = vpop.f32.mrf.mxu0
    %v5131 = vpop.f32.mrf.mxu0
    %5132 = vdwg.mxu0
    %5133 = vmatprep.subr.bf16.mxu0 %v4393
    %5134 = vmatpush1.bf16.msra.mxu0 %v4392
    %5135 = vmatprep.subr.bf16.mxu0 %v4381
    %5136 = vmatpush1.bf16.msra.mxu0 %v4380
    %5137 = vmatprep.subr.bf16.mxu0 %v4369
    %5138 = vmatpush1.bf16.msra.mxu0 %v4368
    %5139 = vmatprep.subr.bf16.mxu0 %v4357
    %5140 = vmatpush1.bf16.msra.mxu0 %v4356
    %5141 = vmatprep.subr.bf16.mxu0 %v4345
    %5142 = vmatpush1.bf16.msra.mxu0 %v4344
    %5143 = vmatprep.subr.bf16.mxu0 %v4333
    %5144 = vmatpush1.bf16.msra.mxu0 %v4332
    %5145 = vmatprep.subr.bf16.mxu0 %v4321
    %5146 = vmatpush1.bf16.msra.mxu0 %v4320
    %5147 = vmatprep.subr.bf16.mxu0 %v4309
    %5148 = vmatpush1.bf16.msra.mxu0 %v4308
    %5149 = vmatprep.subr.bf16.mxu0 0
    %5150 = vmatpush2.bf16.msra.mxu0 0
    %5151 = vmatprep.subr.bf16.mxu0 0
    %5152 = vmatpush2.bf16.msra.mxu0 0
    %5153 = vmatprep.subr.bf16.mxu0 0
    %5154 = vmatpush2.bf16.msra.mxu0 0
    %5155 = vmatprep.subr.bf16.mxu0 0
    %5156 = vmatpush2.bf16.msra.mxu0 0
    %5157 = vmatprep.subr.bf16.mxu0 0
    %5158 = vmatpush2.bf16.msra.mxu0 0
    %5159 = vmatprep.subr.bf16.mxu0 0
    %5160 = vmatpush2.bf16.msra.mxu0 0
    %5161 = vmatprep.subr.bf16.mxu0 0
    %5162 = vmatpush2.bf16.msra.mxu0 0
    %5163 = vmatprep.subr.bf16.mxu0 0
    %5164 = vmatpush2.bf16.msra.mxu0 0
    %5165 = vmatprep.mubr.bf16.mxu0 0
    %5166 = vmatmul.mubr.bf16.gmra.mxu0 0
    %v5167 = vpop.f32.mrf.mxu0
    %v5168 = vadd.f32 %v5127, %v5167
    %v5169 = vpop.f32.mrf.mxu0
    %v5170 = vadd.f32 %v5129, %v5169
    %v5171 = vpop.f32.mrf.mxu0
    %v5172 = vpop.f32.mrf.mxu0
    %5173 = vdwg.mxu0
    %v5174 = vadd.f32 %v2942, %v4758
    %v5175 = vadd.f32 %v2943, %v4760
    %v5176 = vadd.f32 %v2944, %v4840
    %v5177 = vadd.f32 %v2945, %v4842
    %v5178 = vadd.f32 %v2946, %v4922
    %v5179 = vadd.f32 %v2947, %v4924
    %v5180 = vadd.f32 %v2948, %v5004
    %v5181 = vadd.f32 %v2949, %v5006
    %v5182 = vadd.f32 %v2950, %v5086
    %v5183 = vadd.f32 %v2951, %v5088
    %v5184 = vadd.f32 %v2952, %v5168
    %v5185 = vadd.f32 %v2953, %v5170
    %v5186 = vmul.f32 %v5174, 0.5
    %v5187 = vmul.f32 %v5175, 0.5
    %v5188 = vmul.f32 %v5176, 0.5
    %v5189 = vtanh.pop %v5186
    %v5190 = vtanh.pop %v5187
    %v5191 = vtanh.pop %v5188
    %v5192 = vmul.f32 %v5189, 0.5
    %v5193 = vmul.f32 %v5190, 0.5
    %v5194 = vmul.f32 %v5191, 0.5
    %v5195 = vadd.f32 %v5192, 0.5
    %v5196 = vadd.f32 %v5193, 0.5
    %v5197 = vadd.f32 %v5194, 0.5
    %v5198 = vmul.f32 %v5177, 0.5
    %v5199 = vmul.f32 %v5178, 0.5
    %v5200 = vmul.f32 %v5179, 0.5
    %v5201 = vtanh.pop %v5198
    %v5202 = vtanh.pop %v5199
    %v5203 = vtanh.pop %v5200
    %v5204 = vmul.f32 %v5201, 0.5
    %v5205 = vmul.f32 %v5202, 0.5
    %v5206 = vmul.f32 %v5203, 0.5
    %v5207 = vadd.f32 %v5204, 0.5
    %v5208 = vadd.f32 %v5205, 0.5
    %v5209 = vadd.f32 %v5206, 0.5
    %v5210 = vmul.f32 %v5183, 0.5
    %v5211 = vmul.f32 %v5184, 0.5
    %v5212 = vmul.f32 %v5185, 0.5
    %v5213 = vtanh.pop %v5210
    %v5214 = vtanh.pop %v5211
    %v5215 = vtanh.pop %v5212
    %v5216 = vmul.f32 %v5213, 0.5
    %v5217 = vmul.f32 %v5214, 0.5
    %v5218 = vmul.f32 %v5215, 0.5
    %v5219 = vadd.f32 %v5216, 0.5
    %v5220 = vadd.f32 %v5217, 0.5
    %v5221 = vadd.f32 %v5218, 0.5
    %v5222 = vtanh.pop %v5180
    %v5223 = vtanh.pop %v5181
    %v5224 = vtanh.pop %v5182
    %v5225 = vmul.f32 %v5207, 0.0
    %v5226 = vmul.f32 %v5208, 0.0
    %v5227 = vmul.f32 %v5209, 0.0
    %v5228 = vmul.f32 %v5195, %v5222
    %v5229 = vmul.f32 %v5196, %v5223
    %v5230 = vmul.f32 %v5197, %v5224
    %v5231 = vadd.f32 %v5225, %v5228
    %v5232 = vadd.f32 %v5226, %v5229
    %v5233 = vadd.f32 %v5227, %v5230
    %v5234 = vtanh.pop %v5231
    %v5235 = vtanh.pop %v5232
    %v5236 = vtanh.pop %v5233
    %v5237 = vmul.f32 %v5219, %v5234
    %v5238 = vmul.f32 %v5220, %v5235
    %v5239 = vmul.f32 %v5221, %v5236
    %vm5240 = vcmp.eq.s32.totalorder %v2938, 0
    %v5241 = vsel %vm5240, 1, 0
    %5242 = vset.pattern.permute.xlu0 0
    %5243 = vperm.xlu0 %5242, %v5241
    %v5244 = vpop.permute.xlu0 %5243
    %vm5245 = vcmp.eq.s32.totalorder %v5244, 1
    %v5246 = vsel %vm5245, %v5237, 0.0
    %v5247 = vsel %vm5245, %v5238, 0.0
    %v5248 = vsel %vm5245, %v5239, 0.0
    %s5249 = smul.u32 1, 12
    %s5250 = smul.addr %s5249, 8
    %s5251 = scalar_lea.vmem [#allocation2], %s5250
    %v5252 = vld [vmem:[%s5251] sm:$0xff]
    %v5253 = vld [vmem:[%s5251 + $0x8] sm:$0xff]
    %v5254 = vld [vmem:[%s5251 + $0x10] sm:$0xff]
    %v5255 = vld [vmem:[%s5251 + $0x18] sm:$0xff]
    %v5256 = vld [vmem:[%s5251 + $0x20] sm:$0xff]
    %v5257 = vld [vmem:[%s5251 + $0x28] sm:$0xff]
    %v5258 = vld [vmem:[%s5251 + $0x30] sm:$0xff]
    %v5259 = vld [vmem:[%s5251 + $0x38] sm:$0xff]
    %v5260 = vld [vmem:[%s5251 + $0x40] sm:$0xff]
    %v5261 = vld [vmem:[%s5251 + $0x48] sm:$0xff]
    %v5262 = vld [vmem:[%s5251 + $0x50] sm:$0xff]
    %v5263 = vld [vmem:[%s5251 + $0x58] sm:$0xff]
    %v5264 = vpack.c.bf16 %v5237, %v5237
    %v5265 = vpack.c.bf16 %v5238, %v5238
    %v5266 = vpack.c.bf16 %v5239, %v5239
    %5267 = vmatprep.subr.bf16.mxu0 %v4191
    %5268 = vmatpush1.bf16.msra.mxu0 %v4190
    %5269 = vmatprep.subr.bf16.mxu0 %v4179
    %5270 = vmatpush1.bf16.msra.mxu0 %v4178
    %5271 = vmatprep.subr.bf16.mxu0 %v4167
    %5272 = vmatpush1.bf16.msra.mxu0 %v4166
    %5273 = vmatprep.subr.bf16.mxu0 %v4155
    %5274 = vmatpush1.bf16.msra.mxu0 %v4154
    %5275 = vmatprep.subr.bf16.mxu0 %v4143
    %5276 = vmatpush1.bf16.msra.mxu0 %v4142
    %5277 = vmatprep.subr.bf16.mxu0 %v4131
    %5278 = vmatpush1.bf16.msra.mxu0 %v4130
    %5279 = vmatprep.subr.bf16.mxu0 %v4119
    %5280 = vmatpush1.bf16.msra.mxu0 %v4118
    %5281 = vmatprep.subr.bf16.mxu0 %v4107
    %5282 = vmatpush1.bf16.msra.mxu0 %v4106
    %5283 = vmatprep.subr.bf16.mxu0 %v4287
    %5284 = vmatpush2.bf16.msra.mxu0 %v4286
    %5285 = vmatprep.subr.bf16.mxu0 %v4275
    %5286 = vmatpush2.bf16.msra.mxu0 %v4274
    %5287 = vmatprep.subr.bf16.mxu0 %v4263
    %5288 = vmatpush2.bf16.msra.mxu0 %v4262
    %5289 = vmatprep.subr.bf16.mxu0 %v4251
    %5290 = vmatpush2.bf16.msra.mxu0 %v4250
    %5291 = vmatprep.subr.bf16.mxu0 %v4239
    %5292 = vmatpush2.bf16.msra.mxu0 %v4238
    %5293 = vmatprep.subr.bf16.mxu0 %v4227
    %5294 = vmatpush2.bf16.msra.mxu0 %v4226
    %5295 = vmatprep.subr.bf16.mxu0 %v4215
    %5296 = vmatpush2.bf16.msra.mxu0 %v4214
    %5297 = vmatprep.subr.bf16.mxu0 %v4203
    %5298 = vmatpush2.bf16.msra.mxu0 %v4202
    %5299 = vmatprep.mubr.bf16.mxu0 %v5265
    %5300 = vmatmul.mubr.bf16.gmra.mxu0 %v5264
    %v5301 = vpop.f32.mrf.mxu0
    %v5302 = vadd.f32 0.0, %v5301
    %v5303 = vpop.f32.mrf.mxu0
    %v5304 = vadd.f32 0.0, %v5303
    %v5305 = vpop.f32.mrf.mxu0
    %v5306 = vpop.f32.mrf.mxu0
    %5307 = vdwg.mxu0
    %5308 = vmatprep.subr.bf16.mxu0 %v4383
    %5309 = vmatpush1.bf16.msra.mxu0 %v4382
    %5310 = vmatprep.subr.bf16.mxu0 %v4371
    %5311 = vmatpush1.bf16.msra.mxu0 %v4370
    %5312 = vmatprep.subr.bf16.mxu0 %v4359
    %5313 = vmatpush1.bf16.msra.mxu0 %v4358
    %5314 = vmatprep.subr.bf16.mxu0 %v4347
    %5315 = vmatpush1.bf16.msra.mxu0 %v4346
    %5316 = vmatprep.subr.bf16.mxu0 %v4335
    %5317 = vmatpush1.bf16.msra.mxu0 %v4334
    %5318 = vmatprep.subr.bf16.mxu0 %v4323
    %5319 = vmatpush1.bf16.msra.mxu0 %v4322
    %5320 = vmatprep.subr.bf16.mxu0 %v4311
    %5321 = vmatpush1.bf16.msra.mxu0 %v4310
    %5322 = vmatprep.subr.bf16.mxu0 %v4299
    %5323 = vmatpush1.bf16.msra.mxu0 %v4298
    %5324 = vmatprep.subr.bf16.mxu0 0
    %5325 = vmatpush2.bf16.msra.mxu0 0
    %5326 = vmatprep.subr.bf16.mxu0 0
    %5327 = vmatpush2.bf16.msra.mxu0 0
    %5328 = vmatprep.subr.bf16.mxu0 0
    %5329 = vmatpush2.bf16.msra.mxu0 0
    %5330 = vmatprep.subr.bf16.mxu0 0
    %5331 = vmatpush2.bf16.msra.mxu0 0
    %5332 = vmatprep.subr.bf16.mxu0 0
    %5333 = vmatpush2.bf16.msra.mxu0 0
    %5334 = vmatprep.subr.bf16.mxu0 0
    %5335 = vmatpush2.bf16.msra.mxu0 0
    %5336 = vmatprep.subr.bf16.mxu0 0
    %5337 = vmatpush2.bf16.msra.mxu0 0
    %5338 = vmatprep.subr.bf16.mxu0 0
    %5339 = vmatpush2.bf16.msra.mxu0 0
    %5340 = vmatprep.mubr.bf16.mxu0 0
    %5341 = vmatmul.mubr.bf16.gmra.mxu0 %v5266
    %v5342 = vpop.f32.mrf.mxu0
    %v5343 = vadd.f32 %v5302, %v5342
    %v5344 = vpop.f32.mrf.mxu0
    %v5345 = vadd.f32 %v5304, %v5344
    %v5346 = vpop.f32.mrf.mxu0
    %v5347 = vpop.f32.mrf.mxu0
    %5348 = vdwg.mxu0
    %5349 = vmatprep.subr.bf16.mxu0 %v4193
    %5350 = vmatpush1.bf16.msra.mxu0 %v4192
    %5351 = vmatprep.subr.bf16.mxu0 %v4181
    %5352 = vmatpush1.bf16.msra.mxu0 %v4180
    %5353 = vmatprep.subr.bf16.mxu0 %v4169
    %5354 = vmatpush1.bf16.msra.mxu0 %v4168
    %5355 = vmatprep.subr.bf16.mxu0 %v4157
    %5356 = vmatpush1.bf16.msra.mxu0 %v4156
    %5357 = vmatprep.subr.bf16.mxu0 %v4145
    %5358 = vmatpush1.bf16.msra.mxu0 %v4144
    %5359 = vmatprep.subr.bf16.mxu0 %v4133
    %5360 = vmatpush1.bf16.msra.mxu0 %v4132
    %5361 = vmatprep.subr.bf16.mxu0 %v4121
    %5362 = vmatpush1.bf16.msra.mxu0 %v4120
    %5363 = vmatprep.subr.bf16.mxu0 %v4109
    %5364 = vmatpush1.bf16.msra.mxu0 %v4108
    %5365 = vmatprep.subr.bf16.mxu0 %v4289
    %5366 = vmatpush2.bf16.msra.mxu0 %v4288
    %5367 = vmatprep.subr.bf16.mxu0 %v4277
    %5368 = vmatpush2.bf16.msra.mxu0 %v4276
    %5369 = vmatprep.subr.bf16.mxu0 %v4265
    %5370 = vmatpush2.bf16.msra.mxu0 %v4264
    %5371 = vmatprep.subr.bf16.mxu0 %v4253
    %5372 = vmatpush2.bf16.msra.mxu0 %v4252
    %5373 = vmatprep.subr.bf16.mxu0 %v4241
    %5374 = vmatpush2.bf16.msra.mxu0 %v4240
    %5375 = vmatprep.subr.bf16.mxu0 %v4229
    %5376 = vmatpush2.bf16.msra.mxu0 %v4228
    %5377 = vmatprep.subr.bf16.mxu0 %v4217
    %5378 = vmatpush2.bf16.msra.mxu0 %v4216
    %5379 = vmatprep.subr.bf16.mxu0 %v4205
    %5380 = vmatpush2.bf16.msra.mxu0 %v4204
    %5381 = vmatprep.mubr.bf16.mxu0 %v5265
    %5382 = vmatmul.mubr.bf16.gmra.mxu0 %v5264
    %v5383 = vpop.f32.mrf.mxu0
    %v5384 = vadd.f32 0.0, %v5383
    %v5385 = vpop.f32.mrf.mxu0
    %v5386 = vadd.f32 0.0, %v5385
    %v5387 = vpop.f32.mrf.mxu0
    %v5388 = vpop.f32.mrf.mxu0
    %5389 = vdwg.mxu0
    %5390 = vmatprep.subr.bf16.mxu0 %v4385
    %5391 = vmatpush1.bf16.msra.mxu0 %v4384
    %5392 = vmatprep.subr.bf16.mxu0 %v4373
    %5393 = vmatpush1.bf16.msra.mxu0 %v4372
    %5394 = vmatprep.subr.bf16.mxu0 %v4361
    %5395 = vmatpush1.bf16.msra.mxu0 %v4360
    %5396 = vmatprep.subr.bf16.mxu0 %v4349
    %5397 = vmatpush1.bf16.msra.mxu0 %v4348
    %5398 = vmatprep.subr.bf16.mxu0 %v4337
    %5399 = vmatpush1.bf16.msra.mxu0 %v4336
    %5400 = vmatprep.subr.bf16.mxu0 %v4325
    %5401 = vmatpush1.bf16.msra.mxu0 %v4324
    %5402 = vmatprep.subr.bf16.mxu0 %v4313
    %5403 = vmatpush1.bf16.msra.mxu0 %v4312
    %5404 = vmatprep.subr.bf16.mxu0 %v4301
    %5405 = vmatpush1.bf16.msra.mxu0 %v4300
    %5406 = vmatprep.subr.bf16.mxu0 0
    %5407 = vmatpush2.bf16.msra.mxu0 0
    %5408 = vmatprep.subr.bf16.mxu0 0
    %5409 = vmatpush2.bf16.msra.mxu0 0
    %5410 = vmatprep.subr.bf16.mxu0 0
    %5411 = vmatpush2.bf16.msra.mxu0 0
    %5412 = vmatprep.subr.bf16.mxu0 0
    %5413 = vmatpush2.bf16.msra.mxu0 0
    %5414 = vmatprep.subr.bf16.mxu0 0
    %5415 = vmatpush2.bf16.msra.mxu0 0
    %5416 = vmatprep.subr.bf16.mxu0 0
    %5417 = vmatpush2.bf16.msra.mxu0 0
    %5418 = vmatprep.subr.bf16.mxu0 0
    %5419 = vmatpush2.bf16.msra.mxu0 0
    %5420 = vmatprep.subr.bf16.mxu0 0
    %5421 = vmatpush2.bf16.msra.mxu0 0
    %5422 = vmatprep.mubr.bf16.mxu0 0
    %5423 = vmatmul.mubr.bf16.gmra.mxu0 %v5266
    %v5424 = vpop.f32.mrf.mxu0
    %v5425 = vadd.f32 %v5384, %v5424
    %v5426 = vpop.f32.mrf.mxu0
    %v5427 = vadd.f32 %v5386, %v5426
    %v5428 = vpop.f32.mrf.mxu0
    %v5429 = vpop.f32.mrf.mxu0
    %5430 = vdwg.mxu0
    %5431 = vmatprep.subr.bf16.mxu0 %v4195
    %5432 = vmatpush1.bf16.msra.mxu0 %v4194
    %5433 = vmatprep.subr.bf16.mxu0 %v4183
    %5434 = vmatpush1.bf16.msra.mxu0 %v4182
    %5435 = vmatprep.subr.bf16.mxu0 %v4171
    %5436 = vmatpush1.bf16.msra.mxu0 %v4170
    %5437 = vmatprep.subr.bf16.mxu0 %v4159
    %5438 = vmatpush1.bf16.msra.mxu0 %v4158
    %5439 = vmatprep.subr.bf16.mxu0 %v4147
    %5440 = vmatpush1.bf16.msra.mxu0 %v4146
    %5441 = vmatprep.subr.bf16.mxu0 %v4135
    %5442 = vmatpush1.bf16.msra.mxu0 %v4134
    %5443 = vmatprep.subr.bf16.mxu0 %v4123
    %5444 = vmatpush1.bf16.msra.mxu0 %v4122
    %5445 = vmatprep.subr.bf16.mxu0 %v4111
    %5446 = vmatpush1.bf16.msra.mxu0 %v4110
    %5447 = vmatprep.subr.bf16.mxu0 %v4291
    %5448 = vmatpush2.bf16.msra.mxu0 %v4290
    %5449 = vmatprep.subr.bf16.mxu0 %v4279
    %5450 = vmatpush2.bf16.msra.mxu0 %v4278
    %5451 = vmatprep.subr.bf16.mxu0 %v4267
    %5452 = vmatpush2.bf16.msra.mxu0 %v4266
    %5453 = vmatprep.subr.bf16.mxu0 %v4255
    %5454 = vmatpush2.bf16.msra.mxu0 %v4254
    %5455 = vmatprep.subr.bf16.mxu0 %v4243
    %5456 = vmatpush2.bf16.msra.mxu0 %v4242
    %5457 = vmatprep.subr.bf16.mxu0 %v4231
    %5458 = vmatpush2.bf16.msra.mxu0 %v4230
    %5459 = vmatprep.subr.bf16.mxu0 %v4219
    %5460 = vmatpush2.bf16.msra.mxu0 %v4218
    %5461 = vmatprep.subr.bf16.mxu0 %v4207
    %5462 = vmatpush2.bf16.msra.mxu0 %v4206
    %5463 = vmatprep.mubr.bf16.mxu0 %v5265
    %5464 = vmatmul.mubr.bf16.gmra.mxu0 %v5264
    %v5465 = vpop.f32.mrf.mxu0
    %v5466 = vadd.f32 0.0, %v5465
    %v5467 = vpop.f32.mrf.mxu0
    %v5468 = vadd.f32 0.0, %v5467
    %v5469 = vpop.f32.mrf.mxu0
    %v5470 = vpop.f32.mrf.mxu0
    %5471 = vdwg.mxu0
    %5472 = vmatprep.subr.bf16.mxu0 %v4387
    %5473 = vmatpush1.bf16.msra.mxu0 %v4386
    %5474 = vmatprep.subr.bf16.mxu0 %v4375
    %5475 = vmatpush1.bf16.msra.mxu0 %v4374
    %5476 = vmatprep.subr.bf16.mxu0 %v4363
    %5477 = vmatpush1.bf16.msra.mxu0 %v4362
    %5478 = vmatprep.subr.bf16.mxu0 %v4351
    %5479 = vmatpush1.bf16.msra.mxu0 %v4350
    %5480 = vmatprep.subr.bf16.mxu0 %v4339
    %5481 = vmatpush1.bf16.msra.mxu0 %v4338
    %5482 = vmatprep.subr.bf16.mxu0 %v4327
    %5483 = vmatpush1.bf16.msra.mxu0 %v4326
    %5484 = vmatprep.subr.bf16.mxu0 %v4315
    %5485 = vmatpush1.bf16.msra.mxu0 %v4314
    %5486 = vmatprep.subr.bf16.mxu0 %v4303
    %5487 = vmatpush1.bf16.msra.mxu0 %v4302
    %5488 = vmatprep.subr.bf16.mxu0 0
    %5489 = vmatpush2.bf16.msra.mxu0 0
    %5490 = vmatprep.subr.bf16.mxu0 0
    %5491 = vmatpush2.bf16.msra.mxu0 0
    %5492 = vmatprep.subr.bf16.mxu0 0
    %5493 = vmatpush2.bf16.msra.mxu0 0
    %5494 = vmatprep.subr.bf16.mxu0 0
    %5495 = vmatpush2.bf16.msra.mxu0 0
    %5496 = vmatprep.subr.bf16.mxu0 0
    %5497 = vmatpush2.bf16.msra.mxu0 0
    %5498 = vmatprep.subr.bf16.mxu0 0
    %5499 = vmatpush2.bf16.msra.mxu0 0
    %5500 = vmatprep.subr.bf16.mxu0 0
    %5501 = vmatpush2.bf16.msra.mxu0 0
    %5502 = vmatprep.subr.bf16.mxu0 0
    %5503 = vmatpush2.bf16.msra.mxu0 0
    %5504 = vmatprep.mubr.bf16.mxu0 0
    %5505 = vmatmul.mubr.bf16.gmra.mxu0 %v5266
    %v5506 = vpop.f32.mrf.mxu0
    %v5507 = vadd.f32 %v5466, %v5506
    %v5508 = vpop.f32.mrf.mxu0
    %v5509 = vadd.f32 %v5468, %v5508
    %v5510 = vpop.f32.mrf.mxu0
    %v5511 = vpop.f32.mrf.mxu0
    %5512 = vdwg.mxu0
    %5513 = vmatprep.subr.bf16.mxu0 %v4197
    %5514 = vmatpush1.bf16.msra.mxu0 %v4196
    %5515 = vmatprep.subr.bf16.mxu0 %v4185
    %5516 = vmatpush1.bf16.msra.mxu0 %v4184
    %5517 = vmatprep.subr.bf16.mxu0 %v4173
    %5518 = vmatpush1.bf16.msra.mxu0 %v4172
    %5519 = vmatprep.subr.bf16.mxu0 %v4161
    %5520 = vmatpush1.bf16.msra.mxu0 %v4160
    %5521 = vmatprep.subr.bf16.mxu0 %v4149
    %5522 = vmatpush1.bf16.msra.mxu0 %v4148
    %5523 = vmatprep.subr.bf16.mxu0 %v4137
    %5524 = vmatpush1.bf16.msra.mxu0 %v4136
    %5525 = vmatprep.subr.bf16.mxu0 %v4125
    %5526 = vmatpush1.bf16.msra.mxu0 %v4124
    %5527 = vmatprep.subr.bf16.mxu0 %v4113
    %5528 = vmatpush1.bf16.msra.mxu0 %v4112
    %5529 = vmatprep.subr.bf16.mxu0 %v4293
    %5530 = vmatpush2.bf16.msra.mxu0 %v4292
    %5531 = vmatprep.subr.bf16.mxu0 %v4281
    %5532 = vmatpush2.bf16.msra.mxu0 %v4280
    %5533 = vmatprep.subr.bf16.mxu0 %v4269
    %5534 = vmatpush2.bf16.msra.mxu0 %v4268
    %5535 = vmatprep.subr.bf16.mxu0 %v4257
    %5536 = vmatpush2.bf16.msra.mxu0 %v4256
    %5537 = vmatprep.subr.bf16.mxu0 %v4245
    %5538 = vmatpush2.bf16.msra.mxu0 %v4244
    %5539 = vmatprep.subr.bf16.mxu0 %v4233
    %5540 = vmatpush2.bf16.msra.mxu0 %v4232
    %5541 = vmatprep.subr.bf16.mxu0 %v4221
    %5542 = vmatpush2.bf16.msra.mxu0 %v4220
    %5543 = vmatprep.subr.bf16.mxu0 %v4209
    %5544 = vmatpush2.bf16.msra.mxu0 %v4208
    %5545 = vmatprep.mubr.bf16.mxu0 %v5265
    %5546 = vmatmul.mubr.bf16.gmra.mxu0 %v5264
    %v5547 = vpop.f32.mrf.mxu0
    %v5548 = vadd.f32 0.0, %v5547
    %v5549 = vpop.f32.mrf.mxu0
    %v5550 = vadd.f32 0.0, %v5549
    %v5551 = vpop.f32.mrf.mxu0
    %v5552 = vpop.f32.mrf.mxu0
    %5553 = vdwg.mxu0
    %5554 = vmatprep.subr.bf16.mxu0 %v4389
    %5555 = vmatpush1.bf16.msra.mxu0 %v4388
    %5556 = vmatprep.subr.bf16.mxu0 %v4377
    %5557 = vmatpush1.bf16.msra.mxu0 %v4376
    %5558 = vmatprep.subr.bf16.mxu0 %v4365
    %5559 = vmatpush1.bf16.msra.mxu0 %v4364
    %5560 = vmatprep.subr.bf16.mxu0 %v4353
    %5561 = vmatpush1.bf16.msra.mxu0 %v4352
    %5562 = vmatprep.subr.bf16.mxu0 %v4341
    %5563 = vmatpush1.bf16.msra.mxu0 %v4340
    %5564 = vmatprep.subr.bf16.mxu0 %v4329
    %5565 = vmatpush1.bf16.msra.mxu0 %v4328
    %5566 = vmatprep.subr.bf16.mxu0 %v4317
    %5567 = vmatpush1.bf16.msra.mxu0 %v4316
    %5568 = vmatprep.subr.bf16.mxu0 %v4305
    %5569 = vmatpush1.bf16.msra.mxu0 %v4304
    %5570 = vmatprep.subr.bf16.mxu0 0
    %5571 = vmatpush2.bf16.msra.mxu0 0
    %5572 = vmatprep.subr.bf16.mxu0 0
    %5573 = vmatpush2.bf16.msra.mxu0 0
    %5574 = vmatprep.subr.bf16.mxu0 0
    %5575 = vmatpush2.bf16.msra.mxu0 0
    %5576 = vmatprep.subr.bf16.mxu0 0
    %5577 = vmatpush2.bf16.msra.mxu0 0
    %5578 = vmatprep.subr.bf16.mxu0 0
    %5579 = vmatpush2.bf16.msra.mxu0 0
    %5580 = vmatprep.subr.bf16.mxu0 0
    %5581 = vmatpush2.bf16.msra.mxu0 0
    %5582 = vmatprep.subr.bf16.mxu0 0
    %5583 = vmatpush2.bf16.msra.mxu0 0
    %5584 = vmatprep.subr.bf16.mxu0 0
    %5585 = vmatpush2.bf16.msra.mxu0 0
    %5586 = vmatprep.mubr.bf16.mxu0 0
    %5587 = vmatmul.mubr.bf16.gmra.mxu0 %v5266
    %v5588 = vpop.f32.mrf.mxu0
    %v5589 = vadd.f32 %v5548, %v5588
    %v5590 = vpop.f32.mrf.mxu0
    %v5591 = vadd.f32 %v5550, %v5590
    %v5592 = vpop.f32.mrf.mxu0
    %v5593 = vpop.f32.mrf.mxu0
    %5594 = vdwg.mxu0
    %5595 = vmatprep.subr.bf16.mxu0 %v4199
    %5596 = vmatpush1.bf16.msra.mxu0 %v4198
    %5597 = vmatprep.subr.bf16.mxu0 %v4187
    %5598 = vmatpush1.bf16.msra.mxu0 %v4186
    %5599 = vmatprep.subr.bf16.mxu0 %v4175
    %5600 = vmatpush1.bf16.msra.mxu0 %v4174
    %5601 = vmatprep.subr.bf16.mxu0 %v4163
    %5602 = vmatpush1.bf16.msra.mxu0 %v4162
    %5603 = vmatprep.subr.bf16.mxu0 %v4151
    %5604 = vmatpush1.bf16.msra.mxu0 %v4150
    %5605 = vmatprep.subr.bf16.mxu0 %v4139
    %5606 = vmatpush1.bf16.msra.mxu0 %v4138
    %5607 = vmatprep.subr.bf16.mxu0 %v4127
    %5608 = vmatpush1.bf16.msra.mxu0 %v4126
    %5609 = vmatprep.subr.bf16.mxu0 %v4115
    %5610 = vmatpush1.bf16.msra.mxu0 %v4114
    %5611 = vmatprep.subr.bf16.mxu0 %v4295
    %5612 = vmatpush2.bf16.msra.mxu0 %v4294
    %5613 = vmatprep.subr.bf16.mxu0 %v4283
    %5614 = vmatpush2.bf16.msra.mxu0 %v4282
    %5615 = vmatprep.subr.bf16.mxu0 %v4271
    %5616 = vmatpush2.bf16.msra.mxu0 %v4270
    %5617 = vmatprep.subr.bf16.mxu0 %v4259
    %5618 = vmatpush2.bf16.msra.mxu0 %v4258
    %5619 = vmatprep.subr.bf16.mxu0 %v4247
    %5620 = vmatpush2.bf16.msra.mxu0 %v4246
    %5621 = vmatprep.subr.bf16.mxu0 %v4235
    %5622 = vmatpush2.bf16.msra.mxu0 %v4234
    %5623 = vmatprep.subr.bf16.mxu0 %v4223
    %5624 = vmatpush2.bf16.msra.mxu0 %v4222
    %5625 = vmatprep.subr.bf16.mxu0 %v4211
    %5626 = vmatpush2.bf16.msra.mxu0 %v4210
    %5627 = vmatprep.mubr.bf16.mxu0 %v5265
    %5628 = vmatmul.mubr.bf16.gmra.mxu0 %v5264
    %v5629 = vpop.f32.mrf.mxu0
    %v5630 = vadd.f32 0.0, %v5629
    %v5631 = vpop.f32.mrf.mxu0
    %v5632 = vadd.f32 0.0, %v5631
    %v5633 = vpop.f32.mrf.mxu0
    %v5634 = vpop.f32.mrf.mxu0
    %5635 = vdwg.mxu0
    %5636 = vmatprep.subr.bf16.mxu0 %v4391
    %5637 = vmatpush1.bf16.msra.mxu0 %v4390
    %5638 = vmatprep.subr.bf16.mxu0 %v4379
    %5639 = vmatpush1.bf16.msra.mxu0 %v4378
    %5640 = vmatprep.subr.bf16.mxu0 %v4367
    %5641 = vmatpush1.bf16.msra.mxu0 %v4366
    %5642 = vmatprep.subr.bf16.mxu0 %v4355
    %5643 = vmatpush1.bf16.msra.mxu0 %v4354
    %5644 = vmatprep.subr.bf16.mxu0 %v4343
    %5645 = vmatpush1.bf16.msra.mxu0 %v4342
    %5646 = vmatprep.subr.bf16.mxu0 %v4331
    %5647 = vmatpush1.bf16.msra.mxu0 %v4330
    %5648 = vmatprep.subr.bf16.mxu0 %v4319
    %5649 = vmatpush1.bf16.msra.mxu0 %v4318
    %5650 = vmatprep.subr.bf16.mxu0 %v4307
    %5651 = vmatpush1.bf16.msra.mxu0 %v4306
    %5652 = vmatprep.subr.bf16.mxu0 0
    %5653 = vmatpush2.bf16.msra.mxu0 0
    %5654 = vmatprep.subr.bf16.mxu0 0
    %5655 = vmatpush2.bf16.msra.mxu0 0
    %5656 = vmatprep.subr.bf16.mxu0 0
    %5657 = vmatpush2.bf16.msra.mxu0 0
    %5658 = vmatprep.subr.bf16.mxu0 0
    %5659 = vmatpush2.bf16.msra.mxu0 0
    %5660 = vmatprep.subr.bf16.mxu0 0
    %5661 = vmatpush2.bf16.msra.mxu0 0
    %5662 = vmatprep.subr.bf16.mxu0 0
    %5663 = vmatpush2.bf16.msra.mxu0 0
    %5664 = vmatprep.subr.bf16.mxu0 0
    %5665 = vmatpush2.bf16.msra.mxu0 0
    %5666 = vmatprep.subr.bf16.mxu0 0
    %5667 = vmatpush2.bf16.msra.mxu0 0
    %5668 = vmatprep.mubr.bf16.mxu0 0
    %5669 = vmatmul.mubr.bf16.gmra.mxu0 %v5266
    %v5670 = vpop.f32.mrf.mxu0
    %v5671 = vadd.f32 %v5630, %v5670
    %v5672 = vpop.f32.mrf.mxu0
    %v5673 = vadd.f32 %v5632, %v5672
    %v5674 = vpop.f32.mrf.mxu0
    %v5675 = vpop.f32.mrf.mxu0
    %5676 = vdwg.mxu0
    %5677 = vmatprep.subr.bf16.mxu0 %v4201
    %5678 = vmatpush1.bf16.msra.mxu0 %v4200
    %5679 = vmatprep.subr.bf16.mxu0 %v4189
    %5680 = vmatpush1.bf16.msra.mxu0 %v4188
    %5681 = vmatprep.subr.bf16.mxu0 %v4177
    %5682 = vmatpush1.bf16.msra.mxu0 %v4176
    %5683 = vmatprep.subr.bf16.mxu0 %v4165
    %5684 = vmatpush1.bf16.msra.mxu0 %v4164
    %5685 = vmatprep.subr.bf16.mxu0 %v4153
    %5686 = vmatpush1.bf16.msra.mxu0 %v4152
    %5687 = vmatprep.subr.bf16.mxu0 %v4141
    %5688 = vmatpush1.bf16.msra.mxu0 %v4140
    %5689 = vmatprep.subr.bf16.mxu0 %v4129
    %5690 = vmatpush1.bf16.msra.mxu0 %v4128
    %5691 = vmatprep.subr.bf16.mxu0 %v4117
    %5692 = vmatpush1.bf16.msra.mxu0 %v4116
    %5693 = vmatprep.subr.bf16.mxu0 %v4297
    %5694 = vmatpush2.bf16.msra.mxu0 %v4296
    %5695 = vmatprep.subr.bf16.mxu0 %v4285
    %5696 = vmatpush2.bf16.msra.mxu0 %v4284
    %5697 = vmatprep.subr.bf16.mxu0 %v4273
    %5698 = vmatpush2.bf16.msra.mxu0 %v4272
    %5699 = vmatprep.subr.bf16.mxu0 %v4261
    %5700 = vmatpush2.bf16.msra.mxu0 %v4260
    %5701 = vmatprep.subr.bf16.mxu0 %v4249
    %5702 = vmatpush2.bf16.msra.mxu0 %v4248
    %5703 = vmatprep.subr.bf16.mxu0 %v4237
    %5704 = vmatpush2.bf16.msra.mxu0 %v4236
    %5705 = vmatprep.subr.bf16.mxu0 %v4225
    %5706 = vmatpush2.bf16.msra.mxu0 %v4224
    %5707 = vmatprep.subr.bf16.mxu0 %v4213
    %5708 = vmatpush2.bf16.msra.mxu0 %v4212
    %5709 = vmatprep.mubr.bf16.mxu0 %v5265
    %5710 = vmatmul.mubr.bf16.gmra.mxu0 %v5264
    %v5711 = vpop.f32.mrf.mxu0
    %v5712 = vadd.f32 0.0, %v5711
    %v5713 = vpop.f32.mrf.mxu0
    %v5714 = vadd.f32 0.0, %v5713
    %v5715 = vpop.f32.mrf.mxu0
    %v5716 = vpop.f32.mrf.mxu0
    %5717 = vdwg.mxu0
    %5718 = vmatprep.subr.bf16.mxu0 %v4393
    %5719 = vmatpush1.bf16.msra.mxu0 %v4392
    %5720 = vmatprep.subr.bf16.mxu0 %v4381
    %5721 = vmatpush1.bf16.msra.mxu0 %v4380
    %5722 = vmatprep.subr.bf16.mxu0 %v4369
    %5723 = vmatpush1.bf16.msra.mxu0 %v4368
    %5724 = vmatprep.subr.bf16.mxu0 %v4357
    %5725 = vmatpush1.bf16.msra.mxu0 %v4356
    %5726 = vmatprep.subr.bf16.mxu0 %v4345
    %5727 = vmatpush1.bf16.msra.mxu0 %v4344
    %5728 = vmatprep.subr.bf16.mxu0 %v4333
    %5729 = vmatpush1.bf16.msra.mxu0 %v4332
    %5730 = vmatprep.subr.bf16.mxu0 %v4321
    %5731 = vmatpush1.bf16.msra.mxu0 %v4320
    %5732 = vmatprep.subr.bf16.mxu0 %v4309
    %5733 = vmatpush1.bf16.msra.mxu0 %v4308
    %5734 = vmatprep.subr.bf16.mxu0 0
    %5735 = vmatpush2.bf16.msra.mxu0 0
    %5736 = vmatprep.subr.bf16.mxu0 0
    %5737 = vmatpush2.bf16.msra.mxu0 0
    %5738 = vmatprep.subr.bf16.mxu0 0
    %5739 = vmatpush2.bf16.msra.mxu0 0
    %5740 = vmatprep.subr.bf16.mxu0 0
    %5741 = vmatpush2.bf16.msra.mxu0 0
    %5742 = vmatprep.subr.bf16.mxu0 0
    %5743 = vmatpush2.bf16.msra.mxu0 0
    %5744 = vmatprep.subr.bf16.mxu0 0
    %5745 = vmatpush2.bf16.msra.mxu0 0
    %5746 = vmatprep.subr.bf16.mxu0 0
    %5747 = vmatpush2.bf16.msra.mxu0 0
    %5748 = vmatprep.subr.bf16.mxu0 0
    %5749 = vmatpush2.bf16.msra.mxu0 0
    %5750 = vmatprep.mubr.bf16.mxu0 0
    %5751 = vmatmul.mubr.bf16.gmra.mxu0 %v5266
    %v5752 = vpop.f32.mrf.mxu0
    %v5753 = vadd.f32 %v5712, %v5752
    %v5754 = vpop.f32.mrf.mxu0
    %v5755 = vadd.f32 %v5714, %v5754
    %v5756 = vpop.f32.mrf.mxu0
    %v5757 = vpop.f32.mrf.mxu0
    %5758 = vdwg.mxu0
    %v5759 = vadd.f32 %v5252, %v5343
    %v5760 = vadd.f32 %v5253, %v5345
    %v5761 = vadd.f32 %v5254, %v5425
    %v5762 = vadd.f32 %v5255, %v5427
    %v5763 = vadd.f32 %v5256, %v5507
    %v5764 = vadd.f32 %v5257, %v5509
    %v5765 = vadd.f32 %v5258, %v5589
    %v5766 = vadd.f32 %v5259, %v5591
    %v5767 = vadd.f32 %v5260, %v5671
    %v5768 = vadd.f32 %v5261, %v5673
    %v5769 = vadd.f32 %v5262, %v5753
    %v5770 = vadd.f32 %v5263, %v5755
    %v5771 = vmul.f32 %v5759, 0.5
    %v5772 = vmul.f32 %v5760, 0.5
    %v5773 = vmul.f32 %v5761, 0.5
    %v5774 = vtanh.pop %v5771
    %v5775 = vtanh.pop %v5772
    %v5776 = vtanh.pop %v5773
    %v5777 = vmul.f32 %v5774, 0.5
    %v5778 = vmul.f32 %v5775, 0.5
    %v5779 = vmul.f32 %v5776, 0.5
    %v5780 = vadd.f32 %v5777, 0.5
    %v5781 = vadd.f32 %v5778, 0.5
    %v5782 = vadd.f32 %v5779, 0.5
    %v5783 = vmul.f32 %v5762, 0.5
    %v5784 = vmul.f32 %v5763, 0.5
    %v5785 = vmul.f32 %v5764, 0.5
    %v5786 = vtanh.pop %v5783
    %v5787 = vtanh.pop %v5784
    %v5788 = vtanh.pop %v5785
    %v5789 = vmul.f32 %v5786, 0.5
    %v5790 = vmul.f32 %v5787, 0.5
    %v5791 = vmul.f32 %v5788, 0.5
    %v5792 = vadd.f32 %v5789, 0.5
    %v5793 = vadd.f32 %v5790, 0.5
    %v5794 = vadd.f32 %v5791, 0.5
    %v5795 = vmul.f32 %v5768, 0.5
    %v5796 = vmul.f32 %v5769, 0.5
    %v5797 = vmul.f32 %v5770, 0.5
    %v5798 = vtanh.pop %v5795
    %v5799 = vtanh.pop %v5796
    %v5800 = vtanh.pop %v5797
    %v5801 = vmul.f32 %v5798, 0.5
    %v5802 = vmul.f32 %v5799, 0.5
    %v5803 = vmul.f32 %v5800, 0.5
    %v5804 = vadd.f32 %v5801, 0.5
    %v5805 = vadd.f32 %v5802, 0.5
    %v5806 = vadd.f32 %v5803, 0.5
    %v5807 = vtanh.pop %v5765
    %v5808 = vtanh.pop %v5766
    %v5809 = vtanh.pop %v5767
    %v5810 = vmul.f32 %v5792, %v5231
    %v5811 = vmul.f32 %v5793, %v5232
    %v5812 = vmul.f32 %v5794, %v5233
    %v5813 = vmul.f32 %v5780, %v5807
    %v5814 = vmul.f32 %v5781, %v5808
    %v5815 = vmul.f32 %v5782, %v5809
    %v5816 = vadd.f32 %v5810, %v5813
    %v5817 = vadd.f32 %v5811, %v5814
    %v5818 = vadd.f32 %v5812, %v5815
    %v5819 = vtanh.pop %v5816
    %v5820 = vtanh.pop %v5817
    %v5821 = vtanh.pop %v5818
    %v5822 = vmul.f32 %v5804, %v5819
    %v5823 = vmul.f32 %v5805, %v5820
    %v5824 = vmul.f32 %v5806, %v5821
    %vm5825 = vcmp.eq.s32.totalorder %v2938, 1
    %v5826 = vsel %vm5825, 1, 0
    %5827 = vset.pattern.permute.xlu0 0
    %5828 = vperm.xlu0 %5827, %v5826
    %v5829 = vpop.permute.xlu0 %5828
    %vm5830 = vcmp.eq.s32.totalorder %v5829, 1
    %v5831 = vsel %vm5830, %v5822, %v5246
    %v5832 = vsel %vm5830, %v5823, %v5247
    %v5833 = vsel %vm5830, %v5824, %v5248
    %s5834 = smul.u32 2, 12
    %s5835 = smul.addr %s5834, 8
    %s5836 = scalar_lea.vmem [#allocation2], %s5835
    %v5837 = vld [vmem:[%s5836] sm:$0xff]
    %v5838 = vld [vmem:[%s5836 + $0x8] sm:$0xff]
    %v5839 = vld [vmem:[%s5836 + $0x10] sm:$0xff]
    %v5840 = vld [vmem:[%s5836 + $0x18] sm:$0xff]
    %v5841 = vld [vmem:[%s5836 + $0x20] sm:$0xff]
    %v5842 = vld [vmem:[%s5836 + $0x28] sm:$0xff]
    %v5843 = vld [vmem:[%s5836 + $0x30] sm:$0xff]
    %v5844 = vld [vmem:[%s5836 + $0x38] sm:$0xff]
    %v5845 = vld [vmem:[%s5836 + $0x40] sm:$0xff]
    %v5846 = vld [vmem:[%s5836 + $0x48] sm:$0xff]
    %v5847 = vld [vmem:[%s5836 + $0x50] sm:$0xff]
    %v5848 = vld [vmem:[%s5836 + $0x58] sm:$0xff]
    %v5849 = vpack.c.bf16 %v5822, %v5822
    %v5850 = vpack.c.bf16 %v5823, %v5823
    %v5851 = vpack.c.bf16 %v5824, %v5824
    %5852 = vmatprep.subr.bf16.mxu0 %v4191
    %5853 = vmatpush1.bf16.msra.mxu0 %v4190
    %5854 = vmatprep.subr.bf16.mxu0 %v4179
    %5855 = vmatpush1.bf16.msra.mxu0 %v4178
    %5856 = vmatprep.subr.bf16.mxu0 %v4167
    %5857 = vmatpush1.bf16.msra.mxu0 %v4166
    %5858 = vmatprep.subr.bf16.mxu0 %v4155
    %5859 = vmatpush1.bf16.msra.mxu0 %v4154
    %5860 = vmatprep.subr.bf16.mxu0 %v4143
    %5861 = vmatpush1.bf16.msra.mxu0 %v4142
    %5862 = vmatprep.subr.bf16.mxu0 %v4131
    %5863 = vmatpush1.bf16.msra.mxu0 %v4130
    %5864 = vmatprep.subr.bf16.mxu0 %v4119
    %5865 = vmatpush1.bf16.msra.mxu0 %v4118
    %5866 = vmatprep.subr.bf16.mxu0 %v4107
    %5867 = vmatpush1.bf16.msra.mxu0 %v4106
    %5868 = vmatprep.subr.bf16.mxu0 %v4287
    %5869 = vmatpush2.bf16.msra.mxu0 %v4286
    %5870 = vmatprep.subr.bf16.mxu0 %v4275
    %5871 = vmatpush2.bf16.msra.mxu0 %v4274
    %5872 = vmatprep.subr.bf16.mxu0 %v4263
    %5873 = vmatpush2.bf16.msra.mxu0 %v4262
    %5874 = vmatprep.subr.bf16.mxu0 %v4251
    %5875 = vmatpush2.bf16.msra.mxu0 %v4250
    %5876 = vmatprep.subr.bf16.mxu0 %v4239
    %5877 = vmatpush2.bf16.msra.mxu0 %v4238
    %5878 = vmatprep.subr.bf16.mxu0 %v4227
    %5879 = vmatpush2.bf16.msra.mxu0 %v4226
    %5880 = vmatprep.subr.bf16.mxu0 %v4215
    %5881 = vmatpush2.bf16.msra.mxu0 %v4214
    %5882 = vmatprep.subr.bf16.mxu0 %v4203
    %5883 = vmatpush2.bf16.msra.mxu0 %v4202
    %5884 = vmatprep.mubr.bf16.mxu0 %v5850
    %5885 = vmatmul.mubr.bf16.gmra.mxu0 %v5849
    %v5886 = vpop.f32.mrf.mxu0
    %v5887 = vadd.f32 0.0, %v5886
    %v5888 = vpop.f32.mrf.mxu0
    %v5889 = vadd.f32 0.0, %v5888
    %v5890 = vpop.f32.mrf.mxu0
    %v5891 = vpop.f32.mrf.mxu0
    %5892 = vdwg.mxu0
    %5893 = vmatprep.subr.bf16.mxu0 %v4383
    %5894 = vmatpush1.bf16.msra.mxu0 %v4382
    %5895 = vmatprep.subr.bf16.mxu0 %v4371
    %5896 = vmatpush1.bf16.msra.mxu0 %v4370
    %5897 = vmatprep.subr.bf16.mxu0 %v4359
    %5898 = vmatpush1.bf16.msra.mxu0 %v4358
    %5899 = vmatprep.subr.bf16.mxu0 %v4347
    %5900 = vmatpush1.bf16.msra.mxu0 %v4346
    %5901 = vmatprep.subr.bf16.mxu0 %v4335
    %5902 = vmatpush1.bf16.msra.mxu0 %v4334
    %5903 = vmatprep.subr.bf16.mxu0 %v4323
    %5904 = vmatpush1.bf16.msra.mxu0 %v4322
    %5905 = vmatprep.subr.bf16.mxu0 %v4311
    %5906 = vmatpush1.bf16.msra.mxu0 %v4310
    %5907 = vmatprep.subr.bf16.mxu0 %v4299
    %5908 = vmatpush1.bf16.msra.mxu0 %v4298
    %5909 = vmatprep.subr.bf16.mxu0 0
    %5910 = vmatpush2.bf16.msra.mxu0 0
    %5911 = vmatprep.subr.bf16.mxu0 0
    %5912 = vmatpush2.bf16.msra.mxu0 0
    %5913 = vmatprep.subr.bf16.mxu0 0
    %5914 = vmatpush2.bf16.msra.mxu0 0
    %5915 = vmatprep.subr.bf16.mxu0 0
    %5916 = vmatpush2.bf16.msra.mxu0 0
    %5917 = vmatprep.subr.bf16.mxu0 0
    %5918 = vmatpush2.bf16.msra.mxu0 0
    %5919 = vmatprep.subr.bf16.mxu0 0
    %5920 = vmatpush2.bf16.msra.mxu0 0
    %5921 = vmatprep.subr.bf16.mxu0 0
    %5922 = vmatpush2.bf16.msra.mxu0 0
    %5923 = vmatprep.subr.bf16.mxu0 0
    %5924 = vmatpush2.bf16.msra.mxu0 0
    %5925 = vmatprep.mubr.bf16.mxu0 0
    %5926 = vmatmul.mubr.bf16.gmra.mxu0 %v5851
    %v5927 = vpop.f32.mrf.mxu0
    %v5928 = vadd.f32 %v5887, %v5927
    %v5929 = vpop.f32.mrf.mxu0
    %v5930 = vadd.f32 %v5889, %v5929
    %v5931 = vpop.f32.mrf.mxu0
    %v5932 = vpop.f32.mrf.mxu0
    %5933 = vdwg.mxu0
    %5934 = vmatprep.subr.bf16.mxu0 %v4193
    %5935 = vmatpush1.bf16.msra.mxu0 %v4192
    %5936 = vmatprep.subr.bf16.mxu0 %v4181
    %5937 = vmatpush1.bf16.msra.mxu0 %v4180
    %5938 = vmatprep.subr.bf16.mxu0 %v4169
    %5939 = vmatpush1.bf16.msra.mxu0 %v4168
    %5940 = vmatprep.subr.bf16.mxu0 %v4157
    %5941 = vmatpush1.bf16.msra.mxu0 %v4156
    %5942 = vmatprep.subr.bf16.mxu0 %v4145
    %5943 = vmatpush1.bf16.msra.mxu0 %v4144
    %5944 = vmatprep.subr.bf16.mxu0 %v4133
    %5945 = vmatpush1.bf16.msra.mxu0 %v4132
    %5946 = vmatprep.subr.bf16.mxu0 %v4121
    %5947 = vmatpush1.bf16.msra.mxu0 %v4120
    %5948 = vmatprep.subr.bf16.mxu0 %v4109
    %5949 = vmatpush1.bf16.msra.mxu0 %v4108
    %5950 = vmatprep.subr.bf16.mxu0 %v4289
    %5951 = vmatpush2.bf16.msra.mxu0 %v4288
    %5952 = vmatprep.subr.bf16.mxu0 %v4277
    %5953 = vmatpush2.bf16.msra.mxu0 %v4276
    %5954 = vmatprep.subr.bf16.mxu0 %v4265
    %5955 = vmatpush2.bf16.msra.mxu0 %v4264
    %5956 = vmatprep.subr.bf16.mxu0 %v4253
    %5957 = vmatpush2.bf16.msra.mxu0 %v4252
    %5958 = vmatprep.subr.bf16.mxu0 %v4241
    %5959 = vmatpush2.bf16.msra.mxu0 %v4240
    %5960 = vmatprep.subr.bf16.mxu0 %v4229
    %5961 = vmatpush2.bf16.msra.mxu0 %v4228
    %5962 = vmatprep.subr.bf16.mxu0 %v4217
    %5963 = vmatpush2.bf16.msra.mxu0 %v4216
    %5964 = vmatprep.subr.bf16.mxu0 %v4205
    %5965 = vmatpush2.bf16.msra.mxu0 %v4204
    %5966 = vmatprep.mubr.bf16.mxu0 %v5850
    %5967 = vmatmul.mubr.bf16.gmra.mxu0 %v5849
    %v5968 = vpop.f32.mrf.mxu0
    %v5969 = vadd.f32 0.0, %v5968
    %v5970 = vpop.f32.mrf.mxu0
    %v5971 = vadd.f32 0.0, %v5970
    %v5972 = vpop.f32.mrf.mxu0
    %v5973 = vpop.f32.mrf.mxu0
    %5974 = vdwg.mxu0
    %5975 = vmatprep.subr.bf16.mxu0 %v4385
    %5976 = vmatpush1.bf16.msra.mxu0 %v4384
    %5977 = vmatprep.subr.bf16.mxu0 %v4373
    %5978 = vmatpush1.bf16.msra.mxu0 %v4372
    %5979 = vmatprep.subr.bf16.mxu0 %v4361
    %5980 = vmatpush1.bf16.msra.mxu0 %v4360
    %5981 = vmatprep.subr.bf16.mxu0 %v4349
    %5982 = vmatpush1.bf16.msra.mxu0 %v4348
    %5983 = vmatprep.subr.bf16.mxu0 %v4337
    %5984 = vmatpush1.bf16.msra.mxu0 %v4336
    %5985 = vmatprep.subr.bf16.mxu0 %v4325
    %5986 = vmatpush1.bf16.msra.mxu0 %v4324
    %5987 = vmatprep.subr.bf16.mxu0 %v4313
    %5988 = vmatpush1.bf16.msra.mxu0 %v4312
    %5989 = vmatprep.subr.bf16.mxu0 %v4301
    %5990 = vmatpush1.bf16.msra.mxu0 %v4300
    %5991 = vmatprep.subr.bf16.mxu0 0
    %5992 = vmatpush2.bf16.msra.mxu0 0
    %5993 = vmatprep.subr.bf16.mxu0 0
    %5994 = vmatpush2.bf16.msra.mxu0 0
    %5995 = vmatprep.subr.bf16.mxu0 0
    %5996 = vmatpush2.bf16.msra.mxu0 0
    %5997 = vmatprep.subr.bf16.mxu0 0
    %5998 = vmatpush2.bf16.msra.mxu0 0
    %5999 = vmatprep.subr.bf16.mxu0 0
    %6000 = vmatpush2.bf16.msra.mxu0 0
    %6001 = vmatprep.subr.bf16.mxu0 0
    %6002 = vmatpush2.bf16.msra.mxu0 0
    %6003 = vmatprep.subr.bf16.mxu0 0
    %6004 = vmatpush2.bf16.msra.mxu0 0
    %6005 = vmatprep.subr.bf16.mxu0 0
    %6006 = vmatpush2.bf16.msra.mxu0 0
    %6007 = vmatprep.mubr.bf16.mxu0 0
    %6008 = vmatmul.mubr.bf16.gmra.mxu0 %v5851
    %v6009 = vpop.f32.mrf.mxu0
    %v6010 = vadd.f32 %v5969, %v6009
    %v6011 = vpop.f32.mrf.mxu0
    %v6012 = vadd.f32 %v5971, %v6011
    %v6013 = vpop.f32.mrf.mxu0
    %v6014 = vpop.f32.mrf.mxu0
    %6015 = vdwg.mxu0
    %6016 = vmatprep.subr.bf16.mxu0 %v4195
    %6017 = vmatpush1.bf16.msra.mxu0 %v4194
    %6018 = vmatprep.subr.bf16.mxu0 %v4183
    %6019 = vmatpush1.bf16.msra.mxu0 %v4182
    %6020 = vmatprep.subr.bf16.mxu0 %v4171
    %6021 = vmatpush1.bf16.msra.mxu0 %v4170
    %6022 = vmatprep.subr.bf16.mxu0 %v4159
    %6023 = vmatpush1.bf16.msra.mxu0 %v4158
    %6024 = vmatprep.subr.bf16.mxu0 %v4147
    %6025 = vmatpush1.bf16.msra.mxu0 %v4146
    %6026 = vmatprep.subr.bf16.mxu0 %v4135
    %6027 = vmatpush1.bf16.msra.mxu0 %v4134
    %6028 = vmatprep.subr.bf16.mxu0 %v4123
    %6029 = vmatpush1.bf16.msra.mxu0 %v4122
    %6030 = vmatprep.subr.bf16.mxu0 %v4111
    %6031 = vmatpush1.bf16.msra.mxu0 %v4110
    %6032 = vmatprep.subr.bf16.mxu0 %v4291
    %6033 = vmatpush2.bf16.msra.mxu0 %v4290
    %6034 = vmatprep.subr.bf16.mxu0 %v4279
    %6035 = vmatpush2.bf16.msra.mxu0 %v4278
    %6036 = vmatprep.subr.bf16.mxu0 %v4267
    %6037 = vmatpush2.bf16.msra.mxu0 %v4266
    %6038 = vmatprep.subr.bf16.mxu0 %v4255
    %6039 = vmatpush2.bf16.msra.mxu0 %v4254
    %6040 = vmatprep.subr.bf16.mxu0 %v4243
    %6041 = vmatpush2.bf16.msra.mxu0 %v4242
    %6042 = vmatprep.subr.bf16.mxu0 %v4231
    %6043 = vmatpush2.bf16.msra.mxu0 %v4230
    %6044 = vmatprep.subr.bf16.mxu0 %v4219
    %6045 = vmatpush2.bf16.msra.mxu0 %v4218
    %6046 = vmatprep.subr.bf16.mxu0 %v4207
    %6047 = vmatpush2.bf16.msra.mxu0 %v4206
    %6048 = vmatprep.mubr.bf16.mxu0 %v5850
    %6049 = vmatmul.mubr.bf16.gmra.mxu0 %v5849
    %v6050 = vpop.f32.mrf.mxu0
    %v6051 = vadd.f32 0.0, %v6050
    %v6052 = vpop.f32.mrf.mxu0
    %v6053 = vadd.f32 0.0, %v6052
    %v6054 = vpop.f32.mrf.mxu0
    %v6055 = vpop.f32.mrf.mxu0
    %6056 = vdwg.mxu0
    %6057 = vmatprep.subr.bf16.mxu0 %v4387
    %6058 = vmatpush1.bf16.msra.mxu0 %v4386
    %6059 = vmatprep.subr.bf16.mxu0 %v4375
    %6060 = vmatpush1.bf16.msra.mxu0 %v4374
    %6061 = vmatprep.subr.bf16.mxu0 %v4363
    %6062 = vmatpush1.bf16.msra.mxu0 %v4362
    %6063 = vmatprep.subr.bf16.mxu0 %v4351
    %6064 = vmatpush1.bf16.msra.mxu0 %v4350
    %6065 = vmatprep.subr.bf16.mxu0 %v4339
    %6066 = vmatpush1.bf16.msra.mxu0 %v4338
    %6067 = vmatprep.subr.bf16.mxu0 %v4327
    %6068 = vmatpush1.bf16.msra.mxu0 %v4326
    %6069 = vmatprep.subr.bf16.mxu0 %v4315
    %6070 = vmatpush1.bf16.msra.mxu0 %v4314
    %6071 = vmatprep.subr.bf16.mxu0 %v4303
    %6072 = vmatpush1.bf16.msra.mxu0 %v4302
    %6073 = vmatprep.subr.bf16.mxu0 0
    %6074 = vmatpush2.bf16.msra.mxu0 0
    %6075 = vmatprep.subr.bf16.mxu0 0
    %6076 = vmatpush2.bf16.msra.mxu0 0
    %6077 = vmatprep.subr.bf16.mxu0 0
    %6078 = vmatpush2.bf16.msra.mxu0 0
    %6079 = vmatprep.subr.bf16.mxu0 0
    %6080 = vmatpush2.bf16.msra.mxu0 0
    %6081 = vmatprep.subr.bf16.mxu0 0
    %6082 = vmatpush2.bf16.msra.mxu0 0
    %6083 = vmatprep.subr.bf16.mxu0 0
    %6084 = vmatpush2.bf16.msra.mxu0 0
    %6085 = vmatprep.subr.bf16.mxu0 0
    %6086 = vmatpush2.bf16.msra.mxu0 0
    %6087 = vmatprep.subr.bf16.mxu0 0
    %6088 = vmatpush2.bf16.msra.mxu0 0
    %6089 = vmatprep.mubr.bf16.mxu0 0
    %6090 = vmatmul.mubr.bf16.gmra.mxu0 %v5851
    %v6091 = vpop.f32.mrf.mxu0
    %v6092 = vadd.f32 %v6051, %v6091
    %v6093 = vpop.f32.mrf.mxu0
    %v6094 = vadd.f32 %v6053, %v6093
    %v6095 = vpop.f32.mrf.mxu0
    %v6096 = vpop.f32.mrf.mxu0
    %6097 = vdwg.mxu0
    %6098 = vmatprep.subr.bf16.mxu0 %v4197
    %6099 = vmatpush1.bf16.msra.mxu0 %v4196
    %6100 = vmatprep.subr.bf16.mxu0 %v4185
    %6101 = vmatpush1.bf16.msra.mxu0 %v4184
    %6102 = vmatprep.subr.bf16.mxu0 %v4173
    %6103 = vmatpush1.bf16.msra.mxu0 %v4172
    %6104 = vmatprep.subr.bf16.mxu0 %v4161
    %6105 = vmatpush1.bf16.msra.mxu0 %v4160
    %6106 = vmatprep.subr.bf16.mxu0 %v4149
    %6107 = vmatpush1.bf16.msra.mxu0 %v4148
    %6108 = vmatprep.subr.bf16.mxu0 %v4137
    %6109 = vmatpush1.bf16.msra.mxu0 %v4136
    %6110 = vmatprep.subr.bf16.mxu0 %v4125
    %6111 = vmatpush1.bf16.msra.mxu0 %v4124
    %6112 = vmatprep.subr.bf16.mxu0 %v4113
    %6113 = vmatpush1.bf16.msra.mxu0 %v4112
    %6114 = vmatprep.subr.bf16.mxu0 %v4293
    %6115 = vmatpush2.bf16.msra.mxu0 %v4292
    %6116 = vmatprep.subr.bf16.mxu0 %v4281
    %6117 = vmatpush2.bf16.msra.mxu0 %v4280
    %6118 = vmatprep.subr.bf16.mxu0 %v4269
    %6119 = vmatpush2.bf16.msra.mxu0 %v4268
    %6120 = vmatprep.subr.bf16.mxu0 %v4257
    %6121 = vmatpush2.bf16.msra.mxu0 %v4256
    %6122 = vmatprep.subr.bf16.mxu0 %v4245
    %6123 = vmatpush2.bf16.msra.mxu0 %v4244
    %6124 = vmatprep.subr.bf16.mxu0 %v4233
    %6125 = vmatpush2.bf16.msra.mxu0 %v4232
    %6126 = vmatprep.subr.bf16.mxu0 %v4221
    %6127 = vmatpush2.bf16.msra.mxu0 %v4220
    %6128 = vmatprep.subr.bf16.mxu0 %v4209
    %6129 = vmatpush2.bf16.msra.mxu0 %v4208
    %6130 = vmatprep.mubr.bf16.mxu0 %v5850
    %6131 = vmatmul.mubr.bf16.gmra.mxu0 %v5849
    %v6132 = vpop.f32.mrf.mxu0
    %v6133 = vadd.f32 0.0, %v6132
    %v6134 = vpop.f32.mrf.mxu0
    %v6135 = vadd.f32 0.0, %v6134
    %v6136 = vpop.f32.mrf.mxu0
    %v6137 = vpop.f32.mrf.mxu0
    %6138 = vdwg.mxu0
    %6139 = vmatprep.subr.bf16.mxu0 %v4389
    %6140 = vmatpush1.bf16.msra.mxu0 %v4388
    %6141 = vmatprep.subr.bf16.mxu0 %v4377
    %6142 = vmatpush1.bf16.msra.mxu0 %v4376
    %6143 = vmatprep.subr.bf16.mxu0 %v4365
    %6144 = vmatpush1.bf16.msra.mxu0 %v4364
    %6145 = vmatprep.subr.bf16.mxu0 %v4353
    %6146 = vmatpush1.bf16.msra.mxu0 %v4352
    %6147 = vmatprep.subr.bf16.mxu0 %v4341
    %6148 = vmatpush1.bf16.msra.mxu0 %v4340
    %6149 = vmatprep.subr.bf16.mxu0 %v4329
    %6150 = vmatpush1.bf16.msra.mxu0 %v4328
    %6151 = vmatprep.subr.bf16.mxu0 %v4317
    %6152 = vmatpush1.bf16.msra.mxu0 %v4316
    %6153 = vmatprep.subr.bf16.mxu0 %v4305
    %6154 = vmatpush1.bf16.msra.mxu0 %v4304
    %6155 = vmatprep.subr.bf16.mxu0 0
    %6156 = vmatpush2.bf16.msra.mxu0 0
    %6157 = vmatprep.subr.bf16.mxu0 0
    %6158 = vmatpush2.bf16.msra.mxu0 0
    %6159 = vmatprep.subr.bf16.mxu0 0
    %6160 = vmatpush2.bf16.msra.mxu0 0
    %6161 = vmatprep.subr.bf16.mxu0 0
    %6162 = vmatpush2.bf16.msra.mxu0 0
    %6163 = vmatprep.subr.bf16.mxu0 0
    %6164 = vmatpush2.bf16.msra.mxu0 0
    %6165 = vmatprep.subr.bf16.mxu0 0
    %6166 = vmatpush2.bf16.msra.mxu0 0
    %6167 = vmatprep.subr.bf16.mxu0 0
    %6168 = vmatpush2.bf16.msra.mxu0 0
    %6169 = vmatprep.subr.bf16.mxu0 0
    %6170 = vmatpush2.bf16.msra.mxu0 0
    %6171 = vmatprep.mubr.bf16.mxu0 0
    %6172 = vmatmul.mubr.bf16.gmra.mxu0 %v5851
    %v6173 = vpop.f32.mrf.mxu0
    %v6174 = vadd.f32 %v6133, %v6173
    %v6175 = vpop.f32.mrf.mxu0
    %v6176 = vadd.f32 %v6135, %v6175
    %v6177 = vpop.f32.mrf.mxu0
    %v6178 = vpop.f32.mrf.mxu0
    %6179 = vdwg.mxu0
    %6180 = vmatprep.subr.bf16.mxu0 %v4199
    %6181 = vmatpush1.bf16.msra.mxu0 %v4198
    %6182 = vmatprep.subr.bf16.mxu0 %v4187
    %6183 = vmatpush1.bf16.msra.mxu0 %v4186
    %6184 = vmatprep.subr.bf16.mxu0 %v4175
    %6185 = vmatpush1.bf16.msra.mxu0 %v4174
    %6186 = vmatprep.subr.bf16.mxu0 %v4163
    %6187 = vmatpush1.bf16.msra.mxu0 %v4162
    %6188 = vmatprep.subr.bf16.mxu0 %v4151
    %6189 = vmatpush1.bf16.msra.mxu0 %v4150
    %6190 = vmatprep.subr.bf16.mxu0 %v4139
    %6191 = vmatpush1.bf16.msra.mxu0 %v4138
    %6192 = vmatprep.subr.bf16.mxu0 %v4127
    %6193 = vmatpush1.bf16.msra.mxu0 %v4126
    %6194 = vmatprep.subr.bf16.mxu0 %v4115
    %6195 = vmatpush1.bf16.msra.mxu0 %v4114
    %6196 = vmatprep.subr.bf16.mxu0 %v4295
    %6197 = vmatpush2.bf16.msra.mxu0 %v4294
    %6198 = vmatprep.subr.bf16.mxu0 %v4283
    %6199 = vmatpush2.bf16.msra.mxu0 %v4282
    %6200 = vmatprep.subr.bf16.mxu0 %v4271
    %6201 = vmatpush2.bf16.msra.mxu0 %v4270
    %6202 = vmatprep.subr.bf16.mxu0 %v4259
    %6203 = vmatpush2.bf16.msra.mxu0 %v4258
    %6204 = vmatprep.subr.bf16.mxu0 %v4247
    %6205 = vmatpush2.bf16.msra.mxu0 %v4246
    %6206 = vmatprep.subr.bf16.mxu0 %v4235
    %6207 = vmatpush2.bf16.msra.mxu0 %v4234
    %6208 = vmatprep.subr.bf16.mxu0 %v4223
    %6209 = vmatpush2.bf16.msra.mxu0 %v4222
    %6210 = vmatprep.subr.bf16.mxu0 %v4211
    %6211 = vmatpush2.bf16.msra.mxu0 %v4210
    %6212 = vmatprep.mubr.bf16.mxu0 %v5850
    %6213 = vmatmul.mubr.bf16.gmra.mxu0 %v5849
    %v6214 = vpop.f32.mrf.mxu0
    %v6215 = vadd.f32 0.0, %v6214
    %v6216 = vpop.f32.mrf.mxu0
    %v6217 = vadd.f32 0.0, %v6216
    %v6218 = vpop.f32.mrf.mxu0
    %v6219 = vpop.f32.mrf.mxu0
    %6220 = vdwg.mxu0
    %6221 = vmatprep.subr.bf16.mxu0 %v4391
    %6222 = vmatpush1.bf16.msra.mxu0 %v4390
    %6223 = vmatprep.subr.bf16.mxu0 %v4379
    %6224 = vmatpush1.bf16.msra.mxu0 %v4378
    %6225 = vmatprep.subr.bf16.mxu0 %v4367
    %6226 = vmatpush1.bf16.msra.mxu0 %v4366
    %6227 = vmatprep.subr.bf16.mxu0 %v4355
    %6228 = vmatpush1.bf16.msra.mxu0 %v4354
    %6229 = vmatprep.subr.bf16.mxu0 %v4343
    %6230 = vmatpush1.bf16.msra.mxu0 %v4342
    %6231 = vmatprep.subr.bf16.mxu0 %v4331
    %6232 = vmatpush1.bf16.msra.mxu0 %v4330
    %6233 = vmatprep.subr.bf16.mxu0 %v4319
    %6234 = vmatpush1.bf16.msra.mxu0 %v4318
    %6235 = vmatprep.subr.bf16.mxu0 %v4307
    %6236 = vmatpush1.bf16.msra.mxu0 %v4306
    %6237 = vmatprep.subr.bf16.mxu0 0
    %6238 = vmatpush2.bf16.msra.mxu0 0
    %6239 = vmatprep.subr.bf16.mxu0 0
    %6240 = vmatpush2.bf16.msra.mxu0 0
    %6241 = vmatprep.subr.bf16.mxu0 0
    %6242 = vmatpush2.bf16.msra.mxu0 0
    %6243 = vmatprep.subr.bf16.mxu0 0
    %6244 = vmatpush2.bf16.msra.mxu0 0
    %6245 = vmatprep.subr.bf16.mxu0 0
    %6246 = vmatpush2.bf16.msra.mxu0 0
    %6247 = vmatprep.subr.bf16.mxu0 0
    %6248 = vmatpush2.bf16.msra.mxu0 0
    %6249 = vmatprep.subr.bf16.mxu0 0
    %6250 = vmatpush2.bf16.msra.mxu0 0
    %6251 = vmatprep.subr.bf16.mxu0 0
    %6252 = vmatpush2.bf16.msra.mxu0 0
    %6253 = vmatprep.mubr.bf16.mxu0 0
    %6254 = vmatmul.mubr.bf16.gmra.mxu0 %v5851
    %v6255 = vpop.f32.mrf.mxu0
    %v6256 = vadd.f32 %v6215, %v6255
    %v6257 = vpop.f32.mrf.mxu0
    %v6258 = vadd.f32 %v6217, %v6257
    %v6259 = vpop.f32.mrf.mxu0
    %v6260 = vpop.f32.mrf.mxu0
    %6261 = vdwg.mxu0
    %6262 = vmatprep.subr.bf16.mxu0 %v4201
    %6263 = vmatpush1.bf16.msra.mxu0 %v4200
    %6264 = vmatprep.subr.bf16.mxu0 %v4189
    %6265 = vmatpush1.bf16.msra.mxu0 %v4188
    %6266 = vmatprep.subr.bf16.mxu0 %v4177
    %6267 = vmatpush1.bf16.msra.mxu0 %v4176
    %6268 = vmatprep.subr.bf16.mxu0 %v4165
    %6269 = vmatpush1.bf16.msra.mxu0 %v4164
    %6270 = vmatprep.subr.bf16.mxu0 %v4153
    %6271 = vmatpush1.bf16.msra.mxu0 %v4152
    %6272 = vmatprep.subr.bf16.mxu0 %v4141
    %6273 = vmatpush1.bf16.msra.mxu0 %v4140
    %6274 = vmatprep.subr.bf16.mxu0 %v4129
    %6275 = vmatpush1.bf16.msra.mxu0 %v4128
    %6276 = vmatprep.subr.bf16.mxu0 %v4117
    %6277 = vmatpush1.bf16.msra.mxu0 %v4116
    %6278 = vmatprep.subr.bf16.mxu0 %v4297
    %6279 = vmatpush2.bf16.msra.mxu0 %v4296
    %6280 = vmatprep.subr.bf16.mxu0 %v4285
    %6281 = vmatpush2.bf16.msra.mxu0 %v4284
    %6282 = vmatprep.subr.bf16.mxu0 %v4273
    %6283 = vmatpush2.bf16.msra.mxu0 %v4272
    %6284 = vmatprep.subr.bf16.mxu0 %v4261
    %6285 = vmatpush2.bf16.msra.mxu0 %v4260
    %6286 = vmatprep.subr.bf16.mxu0 %v4249
    %6287 = vmatpush2.bf16.msra.mxu0 %v4248
    %6288 = vmatprep.subr.bf16.mxu0 %v4237
    %6289 = vmatpush2.bf16.msra.mxu0 %v4236
    %6290 = vmatprep.subr.bf16.mxu0 %v4225
    %6291 = vmatpush2.bf16.msra.mxu0 %v4224
    %6292 = vmatprep.subr.bf16.mxu0 %v4213
    %6293 = vmatpush2.bf16.msra.mxu0 %v4212
    %6294 = vmatprep.mubr.bf16.mxu0 %v5850
    %6295 = vmatmul.mubr.bf16.gmra.mxu0 %v5849
    %v6296 = vpop.f32.mrf.mxu0
    %v6297 = vadd.f32 0.0, %v6296
    %v6298 = vpop.f32.mrf.mxu0
    %v6299 = vadd.f32 0.0, %v6298
    %v6300 = vpop.f32.mrf.mxu0
    %v6301 = vpop.f32.mrf.mxu0
    %6302 = vdwg.mxu0
    %6303 = vmatprep.subr.bf16.mxu0 %v4393
    %6304 = vmatpush1.bf16.msra.mxu0 %v4392
    %6305 = vmatprep.subr.bf16.mxu0 %v4381
    %6306 = vmatpush1.bf16.msra.mxu0 %v4380
    %6307 = vmatprep.subr.bf16.mxu0 %v4369
    %6308 = vmatpush1.bf16.msra.mxu0 %v4368
    %6309 = vmatprep.subr.bf16.mxu0 %v4357
    %6310 = vmatpush1.bf16.msra.mxu0 %v4356
    %6311 = vmatprep.subr.bf16.mxu0 %v4345
    %6312 = vmatpush1.bf16.msra.mxu0 %v4344
    %6313 = vmatprep.subr.bf16.mxu0 %v4333
    %6314 = vmatpush1.bf16.msra.mxu0 %v4332
    %6315 = vmatprep.subr.bf16.mxu0 %v4321
    %6316 = vmatpush1.bf16.msra.mxu0 %v4320
    %6317 = vmatprep.subr.bf16.mxu0 %v4309
    %6318 = vmatpush1.bf16.msra.mxu0 %v4308
    %6319 = vmatprep.subr.bf16.mxu0 0
    %6320 = vmatpush2.bf16.msra.mxu0 0
    %6321 = vmatprep.subr.bf16.mxu0 0
    %6322 = vmatpush2.bf16.msra.mxu0 0
    %6323 = vmatprep.subr.bf16.mxu0 0
    %6324 = vmatpush2.bf16.msra.mxu0 0
    %6325 = vmatprep.subr.bf16.mxu0 0
    %6326 = vmatpush2.bf16.msra.mxu0 0
    %6327 = vmatprep.subr.bf16.mxu0 0
    %6328 = vmatpush2.bf16.msra.mxu0 0
    %6329 = vmatprep.subr.bf16.mxu0 0
    %6330 = vmatpush2.bf16.msra.mxu0 0
    %6331 = vmatprep.subr.bf16.mxu0 0
    %6332 = vmatpush2.bf16.msra.mxu0 0
    %6333 = vmatprep.subr.bf16.mxu0 0
    %6334 = vmatpush2.bf16.msra.mxu0 0
    %6335 = vmatprep.mubr.bf16.mxu0 0
    %6336 = vmatmul.mubr.bf16.gmra.mxu0 %v5851
    %v6337 = vpop.f32.mrf.mxu0
    %v6338 = vadd.f32 %v6297, %v6337
    %v6339 = vpop.f32.mrf.mxu0
    %v6340 = vadd.f32 %v6299, %v6339
    %v6341 = vpop.f32.mrf.mxu0
    %v6342 = vpop.f32.mrf.mxu0
    %6343 = vdwg.mxu0
    %v6344 = vadd.f32 %v5837, %v5928
    %v6345 = vadd.f32 %v5838, %v5930
    %v6346 = vadd.f32 %v5839, %v6010
    %v6347 = vadd.f32 %v5840, %v6012
    %v6348 = vadd.f32 %v5841, %v6092
    %v6349 = vadd.f32 %v5842, %v6094
    %v6350 = vadd.f32 %v5843, %v6174
    %v6351 = vadd.f32 %v5844, %v6176
    %v6352 = vadd.f32 %v5845, %v6256
    %v6353 = vadd.f32 %v5846, %v6258
    %v6354 = vadd.f32 %v5847, %v6338
    %v6355 = vadd.f32 %v5848, %v6340
    %v6356 = vmul.f32 %v6344, 0.5
    %v6357 = vmul.f32 %v6345, 0.5
    %v6358 = vmul.f32 %v6346, 0.5
    %v6359 = vtanh.pop %v6356
    %v6360 = vtanh.pop %v6357
    %v6361 = vtanh.pop %v6358
    %v6362 = vmul.f32 %v6359, 0.5
    %v6363 = vmul.f32 %v6360, 0.5
    %v6364 = vmul.f32 %v6361, 0.5
    %v6365 = vadd.f32 %v6362, 0.5
    %v6366 = vadd.f32 %v6363, 0.5
    %v6367 = vadd.f32 %v6364, 0.5
    %v6368 = vmul.f32 %v6347, 0.5
    %v6369 = vmul.f32 %v6348, 0.5
    %v6370 = vmul.f32 %v6349, 0.5
    %v6371 = vtanh.pop %v6368
    %v6372 = vtanh.pop %v6369
    %v6373 = vtanh.pop %v6370
    %v6374 = vmul.f32 %v6371, 0.5
    %v6375 = vmul.f32 %v6372, 0.5
    %v6376 = vmul.f32 %v6373, 0.5
    %v6377 = vadd.f32 %v6374, 0.5
    %v6378 = vadd.f32 %v6375, 0.5
    %v6379 = vadd.f32 %v6376, 0.5
    %v6380 = vmul.f32 %v6353, 0.5
    %v6381 = vmul.f32 %v6354, 0.5
    %v6382 = vmul.f32 %v6355, 0.5
    %v6383 = vtanh.pop %v6380
    %v6384 = vtanh.pop %v6381
    %v6385 = vtanh.pop %v6382
    %v6386 = vmul.f32 %v6383, 0.5
    %v6387 = vmul.f32 %v6384, 0.5
    %v6388 = vmul.f32 %v6385, 0.5
    %v6389 = vadd.f32 %v6386, 0.5
    %v6390 = vadd.f32 %v6387, 0.5
    %v6391 = vadd.f32 %v6388, 0.5
    %v6392 = vtanh.pop %v6350
    %v6393 = vtanh.pop %v6351
    %v6394 = vtanh.pop %v6352
    %v6395 = vmul.f32 %v6377, %v5816
    %v6396 = vmul.f32 %v6378, %v5817
    %v6397 = vmul.f32 %v6379, %v5818
    %v6398 = vmul.f32 %v6365, %v6392
    %v6399 = vmul.f32 %v6366, %v6393
    %v6400 = vmul.f32 %v6367, %v6394
    %v6401 = vadd.f32 %v6395, %v6398
    %v6402 = vadd.f32 %v6396, %v6399
    %v6403 = vadd.f32 %v6397, %v6400
    %v6404 = vtanh.pop %v6401
    %v6405 = vtanh.pop %v6402
    %v6406 = vtanh.pop %v6403
    %v6407 = vmul.f32 %v6389, %v6404
    %v6408 = vmul.f32 %v6390, %v6405
    %v6409 = vmul.f32 %v6391, %v6406
    %vm6410 = vcmp.eq.s32.totalorder %v2938, 2
    %v6411 = vsel %vm6410, 1, 0
    %6412 = vset.pattern.permute.xlu0 0
    %6413 = vperm.xlu0 %6412, %v6411
    %v6414 = vpop.permute.xlu0 %6413
    %vm6415 = vcmp.eq.s32.totalorder %v6414, 1
    %v6416 = vsel %vm6415, %v6407, %v5831
    %v6417 = vsel %vm6415, %v6408, %v5832
    %v6418 = vsel %vm6415, %v6409, %v5833
    %s6419 = smul.u32 3, 12
    %s6420 = smul.addr %s6419, 8
    %s6421 = scalar_lea.vmem [#allocation2], %s6420
    %v6422 = vld [vmem:[%s6421] sm:$0xff]
    %v6423 = vld [vmem:[%s6421 + $0x8] sm:$0xff]
    %v6424 = vld [vmem:[%s6421 + $0x10] sm:$0xff]
    %v6425 = vld [vmem:[%s6421 + $0x18] sm:$0xff]
    %v6426 = vld [vmem:[%s6421 + $0x20] sm:$0xff]
    %v6427 = vld [vmem:[%s6421 + $0x28] sm:$0xff]
    %v6428 = vld [vmem:[%s6421 + $0x30] sm:$0xff]
    %v6429 = vld [vmem:[%s6421 + $0x38] sm:$0xff]
    %v6430 = vld [vmem:[%s6421 + $0x40] sm:$0xff]
    %v6431 = vld [vmem:[%s6421 + $0x48] sm:$0xff]
    %v6432 = vld [vmem:[%s6421 + $0x50] sm:$0xff]
    %v6433 = vld [vmem:[%s6421 + $0x58] sm:$0xff]
    %v6434 = vpack.c.bf16 %v6407, %v6407
    %v6435 = vpack.c.bf16 %v6408, %v6408
    %v6436 = vpack.c.bf16 %v6409, %v6409
    %6437 = vmatprep.subr.bf16.mxu0 %v4191
    %6438 = vmatpush1.bf16.msra.mxu0 %v4190
    %6439 = vmatprep.subr.bf16.mxu0 %v4179
    %6440 = vmatpush1.bf16.msra.mxu0 %v4178
    %6441 = vmatprep.subr.bf16.mxu0 %v4167
    %6442 = vmatpush1.bf16.msra.mxu0 %v4166
    %6443 = vmatprep.subr.bf16.mxu0 %v4155
    %6444 = vmatpush1.bf16.msra.mxu0 %v4154
    %6445 = vmatprep.subr.bf16.mxu0 %v4143
    %6446 = vmatpush1.bf16.msra.mxu0 %v4142
    %6447 = vmatprep.subr.bf16.mxu0 %v4131
    %6448 = vmatpush1.bf16.msra.mxu0 %v4130
    %6449 = vmatprep.subr.bf16.mxu0 %v4119
    %6450 = vmatpush1.bf16.msra.mxu0 %v4118
    %6451 = vmatprep.subr.bf16.mxu0 %v4107
    %6452 = vmatpush1.bf16.msra.mxu0 %v4106
    %6453 = vmatprep.subr.bf16.mxu0 %v4287
    %6454 = vmatpush2.bf16.msra.mxu0 %v4286
    %6455 = vmatprep.subr.bf16.mxu0 %v4275
    %6456 = vmatpush2.bf16.msra.mxu0 %v4274
    %6457 = vmatprep.subr.bf16.mxu0 %v4263
    %6458 = vmatpush2.bf16.msra.mxu0 %v4262
    %6459 = vmatprep.subr.bf16.mxu0 %v4251
    %6460 = vmatpush2.bf16.msra.mxu0 %v4250
    %6461 = vmatprep.subr.bf16.mxu0 %v4239
    %6462 = vmatpush2.bf16.msra.mxu0 %v4238
    %6463 = vmatprep.subr.bf16.mxu0 %v4227
    %6464 = vmatpush2.bf16.msra.mxu0 %v4226
    %6465 = vmatprep.subr.bf16.mxu0 %v4215
    %6466 = vmatpush2.bf16.msra.mxu0 %v4214
    %6467 = vmatprep.subr.bf16.mxu0 %v4203
    %6468 = vmatpush2.bf16.msra.mxu0 %v4202
    %6469 = vmatprep.mubr.bf16.mxu0 %v6435
    %6470 = vmatmul.mubr.bf16.gmra.mxu0 %v6434
    %v6471 = vpop.f32.mrf.mxu0
    %v6472 = vadd.f32 0.0, %v6471
    %v6473 = vpop.f32.mrf.mxu0
    %v6474 = vadd.f32 0.0, %v6473
    %v6475 = vpop.f32.mrf.mxu0
    %v6476 = vpop.f32.mrf.mxu0
    %6477 = vdwg.mxu0
    %6478 = vmatprep.subr.bf16.mxu0 %v4383
    %6479 = vmatpush1.bf16.msra.mxu0 %v4382
    %6480 = vmatprep.subr.bf16.mxu0 %v4371
    %6481 = vmatpush1.bf16.msra.mxu0 %v4370
    %6482 = vmatprep.subr.bf16.mxu0 %v4359
    %6483 = vmatpush1.bf16.msra.mxu0 %v4358
    %6484 = vmatprep.subr.bf16.mxu0 %v4347
    %6485 = vmatpush1.bf16.msra.mxu0 %v4346
    %6486 = vmatprep.subr.bf16.mxu0 %v4335
    %6487 = vmatpush1.bf16.msra.mxu0 %v4334
    %6488 = vmatprep.subr.bf16.mxu0 %v4323
    %6489 = vmatpush1.bf16.msra.mxu0 %v4322
    %6490 = vmatprep.subr.bf16.mxu0 %v4311
    %6491 = vmatpush1.bf16.msra.mxu0 %v4310
    %6492 = vmatprep.subr.bf16.mxu0 %v4299
    %6493 = vmatpush1.bf16.msra.mxu0 %v4298
    %6494 = vmatprep.subr.bf16.mxu0 0
    %6495 = vmatpush2.bf16.msra.mxu0 0
    %6496 = vmatprep.subr.bf16.mxu0 0
    %6497 = vmatpush2.bf16.msra.mxu0 0
    %6498 = vmatprep.subr.bf16.mxu0 0
    %6499 = vmatpush2.bf16.msra.mxu0 0
    %6500 = vmatprep.subr.bf16.mxu0 0
    %6501 = vmatpush2.bf16.msra.mxu0 0
    %6502 = vmatprep.subr.bf16.mxu0 0
    %6503 = vmatpush2.bf16.msra.mxu0 0
    %6504 = vmatprep.subr.bf16.mxu0 0
    %6505 = vmatpush2.bf16.msra.mxu0 0
    %6506 = vmatprep.subr.bf16.mxu0 0
    %6507 = vmatpush2.bf16.msra.mxu0 0
    %6508 = vmatprep.subr.bf16.mxu0 0
    %6509 = vmatpush2.bf16.msra.mxu0 0
    %6510 = vmatprep.mubr.bf16.mxu0 0
    %6511 = vmatmul.mubr.bf16.gmra.mxu0 %v6436
    %v6512 = vpop.f32.mrf.mxu0
    %v6513 = vadd.f32 %v6472, %v6512
    %v6514 = vpop.f32.mrf.mxu0
    %v6515 = vadd.f32 %v6474, %v6514
    %v6516 = vpop.f32.mrf.mxu0
    %v6517 = vpop.f32.mrf.mxu0
    %6518 = vdwg.mxu0
    %6519 = vmatprep.subr.bf16.mxu0 %v4193
    %6520 = vmatpush1.bf16.msra.mxu0 %v4192
    %6521 = vmatprep.subr.bf16.mxu0 %v4181
    %6522 = vmatpush1.bf16.msra.mxu0 %v4180
    %6523 = vmatprep.subr.bf16.mxu0 %v4169
    %6524 = vmatpush1.bf16.msra.mxu0 %v4168
    %6525 = vmatprep.subr.bf16.mxu0 %v4157
    %6526 = vmatpush1.bf16.msra.mxu0 %v4156
    %6527 = vmatprep.subr.bf16.mxu0 %v4145
    %6528 = vmatpush1.bf16.msra.mxu0 %v4144
    %6529 = vmatprep.subr.bf16.mxu0 %v4133
    %6530 = vmatpush1.bf16.msra.mxu0 %v4132
    %6531 = vmatprep.subr.bf16.mxu0 %v4121
    %6532 = vmatpush1.bf16.msra.mxu0 %v4120
    %6533 = vmatprep.subr.bf16.mxu0 %v4109
    %6534 = vmatpush1.bf16.msra.mxu0 %v4108
    %6535 = vmatprep.subr.bf16.mxu0 %v4289
    %6536 = vmatpush2.bf16.msra.mxu0 %v4288
    %6537 = vmatprep.subr.bf16.mxu0 %v4277
    %6538 = vmatpush2.bf16.msra.mxu0 %v4276
    %6539 = vmatprep.subr.bf16.mxu0 %v4265
    %6540 = vmatpush2.bf16.msra.mxu0 %v4264
    %6541 = vmatprep.subr.bf16.mxu0 %v4253
    %6542 = vmatpush2.bf16.msra.mxu0 %v4252
    %6543 = vmatprep.subr.bf16.mxu0 %v4241
    %6544 = vmatpush2.bf16.msra.mxu0 %v4240
    %6545 = vmatprep.subr.bf16.mxu0 %v4229
    %6546 = vmatpush2.bf16.msra.mxu0 %v4228
    %6547 = vmatprep.subr.bf16.mxu0 %v4217
    %6548 = vmatpush2.bf16.msra.mxu0 %v4216
    %6549 = vmatprep.subr.bf16.mxu0 %v4205
    %6550 = vmatpush2.bf16.msra.mxu0 %v4204
    %6551 = vmatprep.mubr.bf16.mxu0 %v6435
    %6552 = vmatmul.mubr.bf16.gmra.mxu0 %v6434
    %v6553 = vpop.f32.mrf.mxu0
    %v6554 = vadd.f32 0.0, %v6553
    %v6555 = vpop.f32.mrf.mxu0
    %v6556 = vadd.f32 0.0, %v6555
    %v6557 = vpop.f32.mrf.mxu0
    %v6558 = vpop.f32.mrf.mxu0
    %6559 = vdwg.mxu0
    %6560 = vmatprep.subr.bf16.mxu0 %v4385
    %6561 = vmatpush1.bf16.msra.mxu0 %v4384
    %6562 = vmatprep.subr.bf16.mxu0 %v4373
    %6563 = vmatpush1.bf16.msra.mxu0 %v4372
    %6564 = vmatprep.subr.bf16.mxu0 %v4361
    %6565 = vmatpush1.bf16.msra.mxu0 %v4360
    %6566 = vmatprep.subr.bf16.mxu0 %v4349
    %6567 = vmatpush1.bf16.msra.mxu0 %v4348
    %6568 = vmatprep.subr.bf16.mxu0 %v4337
    %6569 = vmatpush1.bf16.msra.mxu0 %v4336
    %6570 = vmatprep.subr.bf16.mxu0 %v4325
    %6571 = vmatpush1.bf16.msra.mxu0 %v4324
    %6572 = vmatprep.subr.bf16.mxu0 %v4313
    %6573 = vmatpush1.bf16.msra.mxu0 %v4312
    %6574 = vmatprep.subr.bf16.mxu0 %v4301
    %6575 = vmatpush1.bf16.msra.mxu0 %v4300
    %6576 = vmatprep.subr.bf16.mxu0 0
    %6577 = vmatpush2.bf16.msra.mxu0 0
    %6578 = vmatprep.subr.bf16.mxu0 0
    %6579 = vmatpush2.bf16.msra.mxu0 0
    %6580 = vmatprep.subr.bf16.mxu0 0
    %6581 = vmatpush2.bf16.msra.mxu0 0
    %6582 = vmatprep.subr.bf16.mxu0 0
    %6583 = vmatpush2.bf16.msra.mxu0 0
    %6584 = vmatprep.subr.bf16.mxu0 0
    %6585 = vmatpush2.bf16.msra.mxu0 0
    %6586 = vmatprep.subr.bf16.mxu0 0
    %6587 = vmatpush2.bf16.msra.mxu0 0
    %6588 = vmatprep.subr.bf16.mxu0 0
    %6589 = vmatpush2.bf16.msra.mxu0 0
    %6590 = vmatprep.subr.bf16.mxu0 0
    %6591 = vmatpush2.bf16.msra.mxu0 0
    %6592 = vmatprep.mubr.bf16.mxu0 0
    %6593 = vmatmul.mubr.bf16.gmra.mxu0 %v6436
    %v6594 = vpop.f32.mrf.mxu0
    %v6595 = vadd.f32 %v6554, %v6594
    %v6596 = vpop.f32.mrf.mxu0
    %v6597 = vadd.f32 %v6556, %v6596
    %v6598 = vpop.f32.mrf.mxu0
    %v6599 = vpop.f32.mrf.mxu0
    %6600 = vdwg.mxu0
    %6601 = vmatprep.subr.bf16.mxu0 %v4195
    %6602 = vmatpush1.bf16.msra.mxu0 %v4194
    %6603 = vmatprep.subr.bf16.mxu0 %v4183
    %6604 = vmatpush1.bf16.msra.mxu0 %v4182
    %6605 = vmatprep.subr.bf16.mxu0 %v4171
    %6606 = vmatpush1.bf16.msra.mxu0 %v4170
    %6607 = vmatprep.subr.bf16.mxu0 %v4159
    %6608 = vmatpush1.bf16.msra.mxu0 %v4158
    %6609 = vmatprep.subr.bf16.mxu0 %v4147
    %6610 = vmatpush1.bf16.msra.mxu0 %v4146
    %6611 = vmatprep.subr.bf16.mxu0 %v4135
    %6612 = vmatpush1.bf16.msra.mxu0 %v4134
    %6613 = vmatprep.subr.bf16.mxu0 %v4123
    %6614 = vmatpush1.bf16.msra.mxu0 %v4122
    %6615 = vmatprep.subr.bf16.mxu0 %v4111
    %6616 = vmatpush1.bf16.msra.mxu0 %v4110
    %6617 = vmatprep.subr.bf16.mxu0 %v4291
    %6618 = vmatpush2.bf16.msra.mxu0 %v4290
    %6619 = vmatprep.subr.bf16.mxu0 %v4279
    %6620 = vmatpush2.bf16.msra.mxu0 %v4278
    %6621 = vmatprep.subr.bf16.mxu0 %v4267
    %6622 = vmatpush2.bf16.msra.mxu0 %v4266
    %6623 = vmatprep.subr.bf16.mxu0 %v4255
    %6624 = vmatpush2.bf16.msra.mxu0 %v4254
    %6625 = vmatprep.subr.bf16.mxu0 %v4243
    %6626 = vmatpush2.bf16.msra.mxu0 %v4242
    %6627 = vmatprep.subr.bf16.mxu0 %v4231
    %6628 = vmatpush2.bf16.msra.mxu0 %v4230
    %6629 = vmatprep.subr.bf16.mxu0 %v4219
    %6630 = vmatpush2.bf16.msra.mxu0 %v4218
    %6631 = vmatprep.subr.bf16.mxu0 %v4207
    %6632 = vmatpush2.bf16.msra.mxu0 %v4206
    %6633 = vmatprep.mubr.bf16.mxu0 %v6435
    %6634 = vmatmul.mubr.bf16.gmra.mxu0 %v6434
    %v6635 = vpop.f32.mrf.mxu0
    %v6636 = vadd.f32 0.0, %v6635
    %v6637 = vpop.f32.mrf.mxu0
    %v6638 = vadd.f32 0.0, %v6637
    %v6639 = vpop.f32.mrf.mxu0
    %v6640 = vpop.f32.mrf.mxu0
    %6641 = vdwg.mxu0
    %6642 = vmatprep.subr.bf16.mxu0 %v4387
    %6643 = vmatpush1.bf16.msra.mxu0 %v4386
    %6644 = vmatprep.subr.bf16.mxu0 %v4375
    %6645 = vmatpush1.bf16.msra.mxu0 %v4374
    %6646 = vmatprep.subr.bf16.mxu0 %v4363
    %6647 = vmatpush1.bf16.msra.mxu0 %v4362
    %6648 = vmatprep.subr.bf16.mxu0 %v4351
    %6649 = vmatpush1.bf16.msra.mxu0 %v4350
    %6650 = vmatprep.subr.bf16.mxu0 %v4339
    %6651 = vmatpush1.bf16.msra.mxu0 %v4338
    %6652 = vmatprep.subr.bf16.mxu0 %v4327
    %6653 = vmatpush1.bf16.msra.mxu0 %v4326
    %6654 = vmatprep.subr.bf16.mxu0 %v4315
    %6655 = vmatpush1.bf16.msra.mxu0 %v4314
    %6656 = vmatprep.subr.bf16.mxu0 %v4303
    %6657 = vmatpush1.bf16.msra.mxu0 %v4302
    %6658 = vmatprep.subr.bf16.mxu0 0
    %6659 = vmatpush2.bf16.msra.mxu0 0
    %6660 = vmatprep.subr.bf16.mxu0 0
    %6661 = vmatpush2.bf16.msra.mxu0 0
    %6662 = vmatprep.subr.bf16.mxu0 0
    %6663 = vmatpush2.bf16.msra.mxu0 0
    %6664 = vmatprep.subr.bf16.mxu0 0
    %6665 = vmatpush2.bf16.msra.mxu0 0
    %6666 = vmatprep.subr.bf16.mxu0 0
    %6667 = vmatpush2.bf16.msra.mxu0 0
    %6668 = vmatprep.subr.bf16.mxu0 0
    %6669 = vmatpush2.bf16.msra.mxu0 0
    %6670 = vmatprep.subr.bf16.mxu0 0
    %6671 = vmatpush2.bf16.msra.mxu0 0
    %6672 = vmatprep.subr.bf16.mxu0 0
    %6673 = vmatpush2.bf16.msra.mxu0 0
    %6674 = vmatprep.mubr.bf16.mxu0 0
    %6675 = vmatmul.mubr.bf16.gmra.mxu0 %v6436
    %v6676 = vpop.f32.mrf.mxu0
    %v6677 = vadd.f32 %v6636, %v6676
    %v6678 = vpop.f32.mrf.mxu0
    %v6679 = vadd.f32 %v6638, %v6678
    %v6680 = vpop.f32.mrf.mxu0
    %v6681 = vpop.f32.mrf.mxu0
    %6682 = vdwg.mxu0
    %6683 = vmatprep.subr.bf16.mxu0 %v4197
    %6684 = vmatpush1.bf16.msra.mxu0 %v4196
    %6685 = vmatprep.subr.bf16.mxu0 %v4185
    %6686 = vmatpush1.bf16.msra.mxu0 %v4184
    %6687 = vmatprep.subr.bf16.mxu0 %v4173
    %6688 = vmatpush1.bf16.msra.mxu0 %v4172
    %6689 = vmatprep.subr.bf16.mxu0 %v4161
    %6690 = vmatpush1.bf16.msra.mxu0 %v4160
    %6691 = vmatprep.subr.bf16.mxu0 %v4149
    %6692 = vmatpush1.bf16.msra.mxu0 %v4148
    %6693 = vmatprep.subr.bf16.mxu0 %v4137
    %6694 = vmatpush1.bf16.msra.mxu0 %v4136
    %6695 = vmatprep.subr.bf16.mxu0 %v4125
    %6696 = vmatpush1.bf16.msra.mxu0 %v4124
    %6697 = vmatprep.subr.bf16.mxu0 %v4113
    %6698 = vmatpush1.bf16.msra.mxu0 %v4112
    %6699 = vmatprep.subr.bf16.mxu0 %v4293
    %6700 = vmatpush2.bf16.msra.mxu0 %v4292
    %6701 = vmatprep.subr.bf16.mxu0 %v4281
    %6702 = vmatpush2.bf16.msra.mxu0 %v4280
    %6703 = vmatprep.subr.bf16.mxu0 %v4269
    %6704 = vmatpush2.bf16.msra.mxu0 %v4268
    %6705 = vmatprep.subr.bf16.mxu0 %v4257
    %6706 = vmatpush2.bf16.msra.mxu0 %v4256
    %6707 = vmatprep.subr.bf16.mxu0 %v4245
    %6708 = vmatpush2.bf16.msra.mxu0 %v4244
    %6709 = vmatprep.subr.bf16.mxu0 %v4233
    %6710 = vmatpush2.bf16.msra.mxu0 %v4232
    %6711 = vmatprep.subr.bf16.mxu0 %v4221
    %6712 = vmatpush2.bf16.msra.mxu0 %v4220
    %6713 = vmatprep.subr.bf16.mxu0 %v4209
    %6714 = vmatpush2.bf16.msra.mxu0 %v4208
    %6715 = vmatprep.mubr.bf16.mxu0 %v6435
    %6716 = vmatmul.mubr.bf16.gmra.mxu0 %v6434
    %v6717 = vpop.f32.mrf.mxu0
    %v6718 = vadd.f32 0.0, %v6717
    %v6719 = vpop.f32.mrf.mxu0
    %v6720 = vadd.f32 0.0, %v6719
    %v6721 = vpop.f32.mrf.mxu0
    %v6722 = vpop.f32.mrf.mxu0
    %6723 = vdwg.mxu0
    %6724 = vmatprep.subr.bf16.mxu0 %v4389
    %6725 = vmatpush1.bf16.msra.mxu0 %v4388
    %6726 = vmatprep.subr.bf16.mxu0 %v4377
    %6727 = vmatpush1.bf16.msra.mxu0 %v4376
    %6728 = vmatprep.subr.bf16.mxu0 %v4365
    %6729 = vmatpush1.bf16.msra.mxu0 %v4364
    %6730 = vmatprep.subr.bf16.mxu0 %v4353
    %6731 = vmatpush1.bf16.msra.mxu0 %v4352
    %6732 = vmatprep.subr.bf16.mxu0 %v4341
    %6733 = vmatpush1.bf16.msra.mxu0 %v4340
    %6734 = vmatprep.subr.bf16.mxu0 %v4329
    %6735 = vmatpush1.bf16.msra.mxu0 %v4328
    %6736 = vmatprep.subr.bf16.mxu0 %v4317
    %6737 = vmatpush1.bf16.msra.mxu0 %v4316
    %6738 = vmatprep.subr.bf16.mxu0 %v4305
    %6739 = vmatpush1.bf16.msra.mxu0 %v4304
    %6740 = vmatprep.subr.bf16.mxu0 0
    %6741 = vmatpush2.bf16.msra.mxu0 0
    %6742 = vmatprep.subr.bf16.mxu0 0
    %6743 = vmatpush2.bf16.msra.mxu0 0
    %6744 = vmatprep.subr.bf16.mxu0 0
    %6745 = vmatpush2.bf16.msra.mxu0 0
    %6746 = vmatprep.subr.bf16.mxu0 0
    %6747 = vmatpush2.bf16.msra.mxu0 0
    %6748 = vmatprep.subr.bf16.mxu0 0
    %6749 = vmatpush2.bf16.msra.mxu0 0
    %6750 = vmatprep.subr.bf16.mxu0 0
    %6751 = vmatpush2.bf16.msra.mxu0 0
    %6752 = vmatprep.subr.bf16.mxu0 0
    %6753 = vmatpush2.bf16.msra.mxu0 0
    %6754 = vmatprep.subr.bf16.mxu0 0
    %6755 = vmatpush2.bf16.msra.mxu0 0
    %6756 = vmatprep.mubr.bf16.mxu0 0
    %6757 = vmatmul.mubr.bf16.gmra.mxu0 %v6436
    %v6758 = vpop.f32.mrf.mxu0
    %v6759 = vadd.f32 %v6718, %v6758
    %v6760 = vpop.f32.mrf.mxu0
    %v6761 = vadd.f32 %v6720, %v6760
    %v6762 = vpop.f32.mrf.mxu0
    %v6763 = vpop.f32.mrf.mxu0
    %6764 = vdwg.mxu0
    %6765 = vmatprep.subr.bf16.mxu0 %v4199
    %6766 = vmatpush1.bf16.msra.mxu0 %v4198
    %6767 = vmatprep.subr.bf16.mxu0 %v4187
    %6768 = vmatpush1.bf16.msra.mxu0 %v4186
    %6769 = vmatprep.subr.bf16.mxu0 %v4175
    %6770 = vmatpush1.bf16.msra.mxu0 %v4174
    %6771 = vmatprep.subr.bf16.mxu0 %v4163
    %6772 = vmatpush1.bf16.msra.mxu0 %v4162
    %6773 = vmatprep.subr.bf16.mxu0 %v4151
    %6774 = vmatpush1.bf16.msra.mxu0 %v4150
    %6775 = vmatprep.subr.bf16.mxu0 %v4139
    %6776 = vmatpush1.bf16.msra.mxu0 %v4138
    %6777 = vmatprep.subr.bf16.mxu0 %v4127
    %6778 = vmatpush1.bf16.msra.mxu0 %v4126
    %6779 = vmatprep.subr.bf16.mxu0 %v4115
    %6780 = vmatpush1.bf16.msra.mxu0 %v4114
    %6781 = vmatprep.subr.bf16.mxu0 %v4295
    %6782 = vmatpush2.bf16.msra.mxu0 %v4294
    %6783 = vmatprep.subr.bf16.mxu0 %v4283
    %6784 = vmatpush2.bf16.msra.mxu0 %v4282
    %6785 = vmatprep.subr.bf16.mxu0 %v4271
    %6786 = vmatpush2.bf16.msra.mxu0 %v4270
    %6787 = vmatprep.subr.bf16.mxu0 %v4259
    %6788 = vmatpush2.bf16.msra.mxu0 %v4258
    %6789 = vmatprep.subr.bf16.mxu0 %v4247
    %6790 = vmatpush2.bf16.msra.mxu0 %v4246
    %6791 = vmatprep.subr.bf16.mxu0 %v4235
    %6792 = vmatpush2.bf16.msra.mxu0 %v4234
    %6793 = vmatprep.subr.bf16.mxu0 %v4223
    %6794 = vmatpush2.bf16.msra.mxu0 %v4222
    %6795 = vmatprep.subr.bf16.mxu0 %v4211
    %6796 = vmatpush2.bf16.msra.mxu0 %v4210
    %6797 = vmatprep.mubr.bf16.mxu0 %v6435
    %6798 = vmatmul.mubr.bf16.gmra.mxu0 %v6434
    %v6799 = vpop.f32.mrf.mxu0
    %v6800 = vadd.f32 0.0, %v6799
    %v6801 = vpop.f32.mrf.mxu0
    %v6802 = vadd.f32 0.0, %v6801
    %v6803 = vpop.f32.mrf.mxu0
    %v6804 = vpop.f32.mrf.mxu0
    %6805 = vdwg.mxu0
    %6806 = vmatprep.subr.bf16.mxu0 %v4391
    %6807 = vmatpush1.bf16.msra.mxu0 %v4390
    %6808 = vmatprep.subr.bf16.mxu0 %v4379
    %6809 = vmatpush1.bf16.msra.mxu0 %v4378
    %6810 = vmatprep.subr.bf16.mxu0 %v4367
    %6811 = vmatpush1.bf16.msra.mxu0 %v4366
    %6812 = vmatprep.subr.bf16.mxu0 %v4355
    %6813 = vmatpush1.bf16.msra.mxu0 %v4354
    %6814 = vmatprep.subr.bf16.mxu0 %v4343
    %6815 = vmatpush1.bf16.msra.mxu0 %v4342
    %6816 = vmatprep.subr.bf16.mxu0 %v4331
    %6817 = vmatpush1.bf16.msra.mxu0 %v4330
    %6818 = vmatprep.subr.bf16.mxu0 %v4319
    %6819 = vmatpush1.bf16.msra.mxu0 %v4318
    %6820 = vmatprep.subr.bf16.mxu0 %v4307
    %6821 = vmatpush1.bf16.msra.mxu0 %v4306
    %6822 = vmatprep.subr.bf16.mxu0 0
    %6823 = vmatpush2.bf16.msra.mxu0 0
    %6824 = vmatprep.subr.bf16.mxu0 0
    %6825 = vmatpush2.bf16.msra.mxu0 0
    %6826 = vmatprep.subr.bf16.mxu0 0
    %6827 = vmatpush2.bf16.msra.mxu0 0
    %6828 = vmatprep.subr.bf16.mxu0 0
    %6829 = vmatpush2.bf16.msra.mxu0 0
    %6830 = vmatprep.subr.bf16.mxu0 0
    %6831 = vmatpush2.bf16.msra.mxu0 0
    %6832 = vmatprep.subr.bf16.mxu0 0
    %6833 = vmatpush2.bf16.msra.mxu0 0
    %6834 = vmatprep.subr.bf16.mxu0 0
    %6835 = vmatpush2.bf16.msra.mxu0 0
    %6836 = vmatprep.subr.bf16.mxu0 0
    %6837 = vmatpush2.bf16.msra.mxu0 0
    %6838 = vmatprep.mubr.bf16.mxu0 0
    %6839 = vmatmul.mubr.bf16.gmra.mxu0 %v6436
    %v6840 = vpop.f32.mrf.mxu0
    %v6841 = vadd.f32 %v6800, %v6840
    %v6842 = vpop.f32.mrf.mxu0
    %v6843 = vadd.f32 %v6802, %v6842
    %v6844 = vpop.f32.mrf.mxu0
    %v6845 = vpop.f32.mrf.mxu0
    %6846 = vdwg.mxu0
    %6847 = vmatprep.subr.bf16.mxu0 %v4201
    %6848 = vmatpush1.bf16.msra.mxu0 %v4200
    %6849 = vmatprep.subr.bf16.mxu0 %v4189
    %6850 = vmatpush1.bf16.msra.mxu0 %v4188
    %6851 = vmatprep.subr.bf16.mxu0 %v4177
    %6852 = vmatpush1.bf16.msra.mxu0 %v4176
    %6853 = vmatprep.subr.bf16.mxu0 %v4165
    %6854 = vmatpush1.bf16.msra.mxu0 %v4164
    %6855 = vmatprep.subr.bf16.mxu0 %v4153
    %6856 = vmatpush1.bf16.msra.mxu0 %v4152
    %6857 = vmatprep.subr.bf16.mxu0 %v4141
    %6858 = vmatpush1.bf16.msra.mxu0 %v4140
    %6859 = vmatprep.subr.bf16.mxu0 %v4129
    %6860 = vmatpush1.bf16.msra.mxu0 %v4128
    %6861 = vmatprep.subr.bf16.mxu0 %v4117
    %6862 = vmatpush1.bf16.msra.mxu0 %v4116
    %6863 = vmatprep.subr.bf16.mxu0 %v4297
    %6864 = vmatpush2.bf16.msra.mxu0 %v4296
    %6865 = vmatprep.subr.bf16.mxu0 %v4285
    %6866 = vmatpush2.bf16.msra.mxu0 %v4284
    %6867 = vmatprep.subr.bf16.mxu0 %v4273
    %6868 = vmatpush2.bf16.msra.mxu0 %v4272
    %6869 = vmatprep.subr.bf16.mxu0 %v4261
    %6870 = vmatpush2.bf16.msra.mxu0 %v4260
    %6871 = vmatprep.subr.bf16.mxu0 %v4249
    %6872 = vmatpush2.bf16.msra.mxu0 %v4248
    %6873 = vmatprep.subr.bf16.mxu0 %v4237
    %6874 = vmatpush2.bf16.msra.mxu0 %v4236
    %6875 = vmatprep.subr.bf16.mxu0 %v4225
    %6876 = vmatpush2.bf16.msra.mxu0 %v4224
    %6877 = vmatprep.subr.bf16.mxu0 %v4213
    %6878 = vmatpush2.bf16.msra.mxu0 %v4212
    %6879 = vmatprep.mubr.bf16.mxu0 %v6435
    %6880 = vmatmul.mubr.bf16.gmra.mxu0 %v6434
    %v6881 = vpop.f32.mrf.mxu0
    %v6882 = vadd.f32 0.0, %v6881
    %v6883 = vpop.f32.mrf.mxu0
    %v6884 = vadd.f32 0.0, %v6883
    %v6885 = vpop.f32.mrf.mxu0
    %v6886 = vpop.f32.mrf.mxu0
    %6887 = vdwg.mxu0
    %6888 = vmatprep.subr.bf16.mxu0 %v4393
    %6889 = vmatpush1.bf16.msra.mxu0 %v4392
    %6890 = vmatprep.subr.bf16.mxu0 %v4381
    %6891 = vmatpush1.bf16.msra.mxu0 %v4380
    %6892 = vmatprep.subr.bf16.mxu0 %v4369
    %6893 = vmatpush1.bf16.msra.mxu0 %v4368
    %6894 = vmatprep.subr.bf16.mxu0 %v4357
    %6895 = vmatpush1.bf16.msra.mxu0 %v4356
    %6896 = vmatprep.subr.bf16.mxu0 %v4345
    %6897 = vmatpush1.bf16.msra.mxu0 %v4344
    %6898 = vmatprep.subr.bf16.mxu0 %v4333
    %6899 = vmatpush1.bf16.msra.mxu0 %v4332
    %6900 = vmatprep.subr.bf16.mxu0 %v4321
    %6901 = vmatpush1.bf16.msra.mxu0 %v4320
    %6902 = vmatprep.subr.bf16.mxu0 %v4309
    %6903 = vmatpush1.bf16.msra.mxu0 %v4308
    %6904 = vmatprep.subr.bf16.mxu0 0
    %6905 = vmatpush2.bf16.msra.mxu0 0
    %6906 = vmatprep.subr.bf16.mxu0 0
    %6907 = vmatpush2.bf16.msra.mxu0 0
    %6908 = vmatprep.subr.bf16.mxu0 0
    %6909 = vmatpush2.bf16.msra.mxu0 0
    %6910 = vmatprep.subr.bf16.mxu0 0
    %6911 = vmatpush2.bf16.msra.mxu0 0
    %6912 = vmatprep.subr.bf16.mxu0 0
    %6913 = vmatpush2.bf16.msra.mxu0 0
    %6914 = vmatprep.subr.bf16.mxu0 0
    %6915 = vmatpush2.bf16.msra.mxu0 0
    %6916 = vmatprep.subr.bf16.mxu0 0
    %6917 = vmatpush2.bf16.msra.mxu0 0
    %6918 = vmatprep.subr.bf16.mxu0 0
    %6919 = vmatpush2.bf16.msra.mxu0 0
    %6920 = vmatprep.mubr.bf16.mxu0 0
    %6921 = vmatmul.mubr.bf16.gmra.mxu0 %v6436
    %v6922 = vpop.f32.mrf.mxu0
    %v6923 = vadd.f32 %v6882, %v6922
    %v6924 = vpop.f32.mrf.mxu0
    %v6925 = vadd.f32 %v6884, %v6924
    %v6926 = vpop.f32.mrf.mxu0
    %v6927 = vpop.f32.mrf.mxu0
    %6928 = vdwg.mxu0
    %v6929 = vadd.f32 %v6422, %v6513
    %v6930 = vadd.f32 %v6423, %v6515
    %v6931 = vadd.f32 %v6424, %v6595
    %v6932 = vadd.f32 %v6425, %v6597
    %v6933 = vadd.f32 %v6426, %v6677
    %v6934 = vadd.f32 %v6427, %v6679
    %v6935 = vadd.f32 %v6428, %v6759
    %v6936 = vadd.f32 %v6429, %v6761
    %v6937 = vadd.f32 %v6430, %v6841
    %v6938 = vadd.f32 %v6431, %v6843
    %v6939 = vadd.f32 %v6432, %v6923
    %v6940 = vadd.f32 %v6433, %v6925
    %v6941 = vmul.f32 %v6929, 0.5
    %v6942 = vmul.f32 %v6930, 0.5
    %v6943 = vmul.f32 %v6931, 0.5
    %v6944 = vtanh.pop %v6941
    %v6945 = vtanh.pop %v6942
    %v6946 = vtanh.pop %v6943
    %v6947 = vmul.f32 %v6944, 0.5
    %v6948 = vmul.f32 %v6945, 0.5
    %v6949 = vmul.f32 %v6946, 0.5
    %v6950 = vadd.f32 %v6947, 0.5
    %v6951 = vadd.f32 %v6948, 0.5
    %v6952 = vadd.f32 %v6949, 0.5
    %v6953 = vmul.f32 %v6932, 0.5
    %v6954 = vmul.f32 %v6933, 0.5
    %v6955 = vmul.f32 %v6934, 0.5
    %v6956 = vtanh.pop %v6953
    %v6957 = vtanh.pop %v6954
    %v6958 = vtanh.pop %v6955
    %v6959 = vmul.f32 %v6956, 0.5
    %v6960 = vmul.f32 %v6957, 0.5
    %v6961 = vmul.f32 %v6958, 0.5
    %v6962 = vadd.f32 %v6959, 0.5
    %v6963 = vadd.f32 %v6960, 0.5
    %v6964 = vadd.f32 %v6961, 0.5
    %v6965 = vmul.f32 %v6938, 0.5
    %v6966 = vmul.f32 %v6939, 0.5
    %v6967 = vmul.f32 %v6940, 0.5
    %v6968 = vtanh.pop %v6965
    %v6969 = vtanh.pop %v6966
    %v6970 = vtanh.pop %v6967
    %v6971 = vmul.f32 %v6968, 0.5
    %v6972 = vmul.f32 %v6969, 0.5
    %v6973 = vmul.f32 %v6970, 0.5
    %v6974 = vadd.f32 %v6971, 0.5
    %v6975 = vadd.f32 %v6972, 0.5
    %v6976 = vadd.f32 %v6973, 0.5
    %v6977 = vtanh.pop %v6935
    %v6978 = vtanh.pop %v6936
    %v6979 = vtanh.pop %v6937
    %v6980 = vmul.f32 %v6962, %v6401
    %v6981 = vmul.f32 %v6963, %v6402
    %v6982 = vmul.f32 %v6964, %v6403
    %v6983 = vmul.f32 %v6950, %v6977
    %v6984 = vmul.f32 %v6951, %v6978
    %v6985 = vmul.f32 %v6952, %v6979
    %v6986 = vadd.f32 %v6980, %v6983
    %v6987 = vadd.f32 %v6981, %v6984
    %v6988 = vadd.f32 %v6982, %v6985
    %v6989 = vtanh.pop %v6986
    %v6990 = vtanh.pop %v6987
    %v6991 = vtanh.pop %v6988
    %v6992 = vmul.f32 %v6974, %v6989
    %v6993 = vmul.f32 %v6975, %v6990
    %v6994 = vmul.f32 %v6976, %v6991
    %vm6995 = vcmp.eq.s32.totalorder %v2938, 3
    %v6996 = vsel %vm6995, 1, 0
    %6997 = vset.pattern.permute.xlu0 0
    %6998 = vperm.xlu0 %6997, %v6996
    %v6999 = vpop.permute.xlu0 %6998
    %vm7000 = vcmp.eq.s32.totalorder %v6999, 1
    %v7001 = vsel %vm7000, %v6992, %v6416
    %v7002 = vsel %vm7000, %v6993, %v6417
    %v7003 = vsel %vm7000, %v6994, %v6418
    %s7004 = smul.u32 4, 12
    %s7005 = smul.addr %s7004, 8
    %s7006 = scalar_lea.vmem [#allocation2], %s7005
    %v7007 = vld [vmem:[%s7006] sm:$0xff]
    %v7008 = vld [vmem:[%s7006 + $0x8] sm:$0xff]
    %v7009 = vld [vmem:[%s7006 + $0x10] sm:$0xff]
    %v7010 = vld [vmem:[%s7006 + $0x18] sm:$0xff]
    %v7011 = vld [vmem:[%s7006 + $0x20] sm:$0xff]
    %v7012 = vld [vmem:[%s7006 + $0x28] sm:$0xff]
    %v7013 = vld [vmem:[%s7006 + $0x30] sm:$0xff]
    %v7014 = vld [vmem:[%s7006 + $0x38] sm:$0xff]
    %v7015 = vld [vmem:[%s7006 + $0x40] sm:$0xff]
    %v7016 = vld [vmem:[%s7006 + $0x48] sm:$0xff]
    %v7017 = vld [vmem:[%s7006 + $0x50] sm:$0xff]
    %v7018 = vld [vmem:[%s7006 + $0x58] sm:$0xff]
    %v7019 = vpack.c.bf16 %v6992, %v6992
    %v7020 = vpack.c.bf16 %v6993, %v6993
    %v7021 = vpack.c.bf16 %v6994, %v6994
    %7022 = vmatprep.subr.bf16.mxu0 %v4191
    %7023 = vmatpush1.bf16.msra.mxu0 %v4190
    %7024 = vmatprep.subr.bf16.mxu0 %v4179
    %7025 = vmatpush1.bf16.msra.mxu0 %v4178
    %7026 = vmatprep.subr.bf16.mxu0 %v4167
    %7027 = vmatpush1.bf16.msra.mxu0 %v4166
    %7028 = vmatprep.subr.bf16.mxu0 %v4155
    %7029 = vmatpush1.bf16.msra.mxu0 %v4154
    %7030 = vmatprep.subr.bf16.mxu0 %v4143
    %7031 = vmatpush1.bf16.msra.mxu0 %v4142
    %7032 = vmatprep.subr.bf16.mxu0 %v4131
    %7033 = vmatpush1.bf16.msra.mxu0 %v4130
    %7034 = vmatprep.subr.bf16.mxu0 %v4119
    %7035 = vmatpush1.bf16.msra.mxu0 %v4118
    %7036 = vmatprep.subr.bf16.mxu0 %v4107
    %7037 = vmatpush1.bf16.msra.mxu0 %v4106
    %7038 = vmatprep.subr.bf16.mxu0 %v4287
    %7039 = vmatpush2.bf16.msra.mxu0 %v4286
    %7040 = vmatprep.subr.bf16.mxu0 %v4275
    %7041 = vmatpush2.bf16.msra.mxu0 %v4274
    %7042 = vmatprep.subr.bf16.mxu0 %v4263
    %7043 = vmatpush2.bf16.msra.mxu0 %v4262
    %7044 = vmatprep.subr.bf16.mxu0 %v4251
    %7045 = vmatpush2.bf16.msra.mxu0 %v4250
    %7046 = vmatprep.subr.bf16.mxu0 %v4239
    %7047 = vmatpush2.bf16.msra.mxu0 %v4238
    %7048 = vmatprep.subr.bf16.mxu0 %v4227
    %7049 = vmatpush2.bf16.msra.mxu0 %v4226
    %7050 = vmatprep.subr.bf16.mxu0 %v4215
    %7051 = vmatpush2.bf16.msra.mxu0 %v4214
    %7052 = vmatprep.subr.bf16.mxu0 %v4203
    %7053 = vmatpush2.bf16.msra.mxu0 %v4202
    %7054 = vmatprep.mubr.bf16.mxu0 %v7020
    %7055 = vmatmul.mubr.bf16.gmra.mxu0 %v7019
    %v7056 = vpop.f32.mrf.mxu0
    %v7057 = vadd.f32 0.0, %v7056
    %v7058 = vpop.f32.mrf.mxu0
    %v7059 = vadd.f32 0.0, %v7058
    %v7060 = vpop.f32.mrf.mxu0
    %v7061 = vpop.f32.mrf.mxu0
    %7062 = vdwg.mxu0
    %7063 = vmatprep.subr.bf16.mxu0 %v4383
    %7064 = vmatpush1.bf16.msra.mxu0 %v4382
    %7065 = vmatprep.subr.bf16.mxu0 %v4371
    %7066 = vmatpush1.bf16.msra.mxu0 %v4370
    %7067 = vmatprep.subr.bf16.mxu0 %v4359
    %7068 = vmatpush1.bf16.msra.mxu0 %v4358
    %7069 = vmatprep.subr.bf16.mxu0 %v4347
    %7070 = vmatpush1.bf16.msra.mxu0 %v4346
    %7071 = vmatprep.subr.bf16.mxu0 %v4335
    %7072 = vmatpush1.bf16.msra.mxu0 %v4334
    %7073 = vmatprep.subr.bf16.mxu0 %v4323
    %7074 = vmatpush1.bf16.msra.mxu0 %v4322
    %7075 = vmatprep.subr.bf16.mxu0 %v4311
    %7076 = vmatpush1.bf16.msra.mxu0 %v4310
    %7077 = vmatprep.subr.bf16.mxu0 %v4299
    %7078 = vmatpush1.bf16.msra.mxu0 %v4298
    %7079 = vmatprep.subr.bf16.mxu0 0
    %7080 = vmatpush2.bf16.msra.mxu0 0
    %7081 = vmatprep.subr.bf16.mxu0 0
    %7082 = vmatpush2.bf16.msra.mxu0 0
    %7083 = vmatprep.subr.bf16.mxu0 0
    %7084 = vmatpush2.bf16.msra.mxu0 0
    %7085 = vmatprep.subr.bf16.mxu0 0
    %7086 = vmatpush2.bf16.msra.mxu0 0
    %7087 = vmatprep.subr.bf16.mxu0 0
    %7088 = vmatpush2.bf16.msra.mxu0 0
    %7089 = vmatprep.subr.bf16.mxu0 0
    %7090 = vmatpush2.bf16.msra.mxu0 0
    %7091 = vmatprep.subr.bf16.mxu0 0
    %7092 = vmatpush2.bf16.msra.mxu0 0
    %7093 = vmatprep.subr.bf16.mxu0 0
    %7094 = vmatpush2.bf16.msra.mxu0 0
    %7095 = vmatprep.mubr.bf16.mxu0 0
    %7096 = vmatmul.mubr.bf16.gmra.mxu0 %v7021
    %v7097 = vpop.f32.mrf.mxu0
    %v7098 = vadd.f32 %v7057, %v7097
    %v7099 = vpop.f32.mrf.mxu0
    %v7100 = vadd.f32 %v7059, %v7099
    %v7101 = vpop.f32.mrf.mxu0
    %v7102 = vpop.f32.mrf.mxu0
    %7103 = vdwg.mxu0
    %7104 = vmatprep.subr.bf16.mxu0 %v4193
    %7105 = vmatpush1.bf16.msra.mxu0 %v4192
    %7106 = vmatprep.subr.bf16.mxu0 %v4181
    %7107 = vmatpush1.bf16.msra.mxu0 %v4180
    %7108 = vmatprep.subr.bf16.mxu0 %v4169
    %7109 = vmatpush1.bf16.msra.mxu0 %v4168
    %7110 = vmatprep.subr.bf16.mxu0 %v4157
    %7111 = vmatpush1.bf16.msra.mxu0 %v4156
    %7112 = vmatprep.subr.bf16.mxu0 %v4145
    %7113 = vmatpush1.bf16.msra.mxu0 %v4144
    %7114 = vmatprep.subr.bf16.mxu0 %v4133
    %7115 = vmatpush1.bf16.msra.mxu0 %v4132
    %7116 = vmatprep.subr.bf16.mxu0 %v4121
    %7117 = vmatpush1.bf16.msra.mxu0 %v4120
    %7118 = vmatprep.subr.bf16.mxu0 %v4109
    %7119 = vmatpush1.bf16.msra.mxu0 %v4108
    %7120 = vmatprep.subr.bf16.mxu0 %v4289
    %7121 = vmatpush2.bf16.msra.mxu0 %v4288
    %7122 = vmatprep.subr.bf16.mxu0 %v4277
    %7123 = vmatpush2.bf16.msra.mxu0 %v4276
    %7124 = vmatprep.subr.bf16.mxu0 %v4265
    %7125 = vmatpush2.bf16.msra.mxu0 %v4264
    %7126 = vmatprep.subr.bf16.mxu0 %v4253
    %7127 = vmatpush2.bf16.msra.mxu0 %v4252
    %7128 = vmatprep.subr.bf16.mxu0 %v4241
    %7129 = vmatpush2.bf16.msra.mxu0 %v4240
    %7130 = vmatprep.subr.bf16.mxu0 %v4229
    %7131 = vmatpush2.bf16.msra.mxu0 %v4228
    %7132 = vmatprep.subr.bf16.mxu0 %v4217
    %7133 = vmatpush2.bf16.msra.mxu0 %v4216
    %7134 = vmatprep.subr.bf16.mxu0 %v4205
    %7135 = vmatpush2.bf16.msra.mxu0 %v4204
    %7136 = vmatprep.mubr.bf16.mxu0 %v7020
    %7137 = vmatmul.mubr.bf16.gmra.mxu0 %v7019
    %v7138 = vpop.f32.mrf.mxu0
    %v7139 = vadd.f32 0.0, %v7138
    %v7140 = vpop.f32.mrf.mxu0
    %v7141 = vadd.f32 0.0, %v7140
    %v7142 = vpop.f32.mrf.mxu0
    %v7143 = vpop.f32.mrf.mxu0
    %7144 = vdwg.mxu0
    %7145 = vmatprep.subr.bf16.mxu0 %v4385
    %7146 = vmatpush1.bf16.msra.mxu0 %v4384
    %7147 = vmatprep.subr.bf16.mxu0 %v4373
    %7148 = vmatpush1.bf16.msra.mxu0 %v4372
    %7149 = vmatprep.subr.bf16.mxu0 %v4361
    %7150 = vmatpush1.bf16.msra.mxu0 %v4360
    %7151 = vmatprep.subr.bf16.mxu0 %v4349
    %7152 = vmatpush1.bf16.msra.mxu0 %v4348
    %7153 = vmatprep.subr.bf16.mxu0 %v4337
    %7154 = vmatpush1.bf16.msra.mxu0 %v4336
    %7155 = vmatprep.subr.bf16.mxu0 %v4325
    %7156 = vmatpush1.bf16.msra.mxu0 %v4324
    %7157 = vmatprep.subr.bf16.mxu0 %v4313
    %7158 = vmatpush1.bf16.msra.mxu0 %v4312
    %7159 = vmatprep.subr.bf16.mxu0 %v4301
    %7160 = vmatpush1.bf16.msra.mxu0 %v4300
    %7161 = vmatprep.subr.bf16.mxu0 0
    %7162 = vmatpush2.bf16.msra.mxu0 0
    %7163 = vmatprep.subr.bf16.mxu0 0
    %7164 = vmatpush2.bf16.msra.mxu0 0
    %7165 = vmatprep.subr.bf16.mxu0 0
    %7166 = vmatpush2.bf16.msra.mxu0 0
    %7167 = vmatprep.subr.bf16.mxu0 0
    %7168 = vmatpush2.bf16.msra.mxu0 0
    %7169 = vmatprep.subr.bf16.mxu0 0
    %7170 = vmatpush2.bf16.msra.mxu0 0
    %7171 = vmatprep.subr.bf16.mxu0 0
    %7172 = vmatpush2.bf16.msra.mxu0 0
    %7173 = vmatprep.subr.bf16.mxu0 0
    %7174 = vmatpush2.bf16.msra.mxu0 0
    %7175 = vmatprep.subr.bf16.mxu0 0
    %7176 = vmatpush2.bf16.msra.mxu0 0
    %7177 = vmatprep.mubr.bf16.mxu0 0
    %7178 = vmatmul.mubr.bf16.gmra.mxu0 %v7021
    %v7179 = vpop.f32.mrf.mxu0
    %v7180 = vadd.f32 %v7139, %v7179
    %v7181 = vpop.f32.mrf.mxu0
    %v7182 = vadd.f32 %v7141, %v7181
    %v7183 = vpop.f32.mrf.mxu0
    %v7184 = vpop.f32.mrf.mxu0
    %7185 = vdwg.mxu0
    %7186 = vmatprep.subr.bf16.mxu0 %v4195
    %7187 = vmatpush1.bf16.msra.mxu0 %v4194
    %7188 = vmatprep.subr.bf16.mxu0 %v4183
    %7189 = vmatpush1.bf16.msra.mxu0 %v4182
    %7190 = vmatprep.subr.bf16.mxu0 %v4171
    %7191 = vmatpush1.bf16.msra.mxu0 %v4170
    %7192 = vmatprep.subr.bf16.mxu0 %v4159
    %7193 = vmatpush1.bf16.msra.mxu0 %v4158
    %7194 = vmatprep.subr.bf16.mxu0 %v4147
    %7195 = vmatpush1.bf16.msra.mxu0 %v4146
    %7196 = vmatprep.subr.bf16.mxu0 %v4135
    %7197 = vmatpush1.bf16.msra.mxu0 %v4134
    %7198 = vmatprep.subr.bf16.mxu0 %v4123
    %7199 = vmatpush1.bf16.msra.mxu0 %v4122
    %7200 = vmatprep.subr.bf16.mxu0 %v4111
    %7201 = vmatpush1.bf16.msra.mxu0 %v4110
    %7202 = vmatprep.subr.bf16.mxu0 %v4291
    %7203 = vmatpush2.bf16.msra.mxu0 %v4290
    %7204 = vmatprep.subr.bf16.mxu0 %v4279
    %7205 = vmatpush2.bf16.msra.mxu0 %v4278
    %7206 = vmatprep.subr.bf16.mxu0 %v4267
    %7207 = vmatpush2.bf16.msra.mxu0 %v4266
    %7208 = vmatprep.subr.bf16.mxu0 %v4255
    %7209 = vmatpush2.bf16.msra.mxu0 %v4254
    %7210 = vmatprep.subr.bf16.mxu0 %v4243
    %7211 = vmatpush2.bf16.msra.mxu0 %v4242
    %7212 = vmatprep.subr.bf16.mxu0 %v4231
    %7213 = vmatpush2.bf16.msra.mxu0 %v4230
    %7214 = vmatprep.subr.bf16.mxu0 %v4219
    %7215 = vmatpush2.bf16.msra.mxu0 %v4218
    %7216 = vmatprep.subr.bf16.mxu0 %v4207
    %7217 = vmatpush2.bf16.msra.mxu0 %v4206
    %7218 = vmatprep.mubr.bf16.mxu0 %v7020
    %7219 = vmatmul.mubr.bf16.gmra.mxu0 %v7019
    %v7220 = vpop.f32.mrf.mxu0
    %v7221 = vadd.f32 0.0, %v7220
    %v7222 = vpop.f32.mrf.mxu0
    %v7223 = vadd.f32 0.0, %v7222
    %v7224 = vpop.f32.mrf.mxu0
    %v7225 = vpop.f32.mrf.mxu0
    %7226 = vdwg.mxu0
    %7227 = vmatprep.subr.bf16.mxu0 %v4387
    %7228 = vmatpush1.bf16.msra.mxu0 %v4386
    %7229 = vmatprep.subr.bf16.mxu0 %v4375
    %7230 = vmatpush1.bf16.msra.mxu0 %v4374
    %7231 = vmatprep.subr.bf16.mxu0 %v4363
    %7232 = vmatpush1.bf16.msra.mxu0 %v4362
    %7233 = vmatprep.subr.bf16.mxu0 %v4351
    %7234 = vmatpush1.bf16.msra.mxu0 %v4350
    %7235 = vmatprep.subr.bf16.mxu0 %v4339
    %7236 = vmatpush1.bf16.msra.mxu0 %v4338
    %7237 = vmatprep.subr.bf16.mxu0 %v4327
    %7238 = vmatpush1.bf16.msra.mxu0 %v4326
    %7239 = vmatprep.subr.bf16.mxu0 %v4315
    %7240 = vmatpush1.bf16.msra.mxu0 %v4314
    %7241 = vmatprep.subr.bf16.mxu0 %v4303
    %7242 = vmatpush1.bf16.msra.mxu0 %v4302
    %7243 = vmatprep.subr.bf16.mxu0 0
    %7244 = vmatpush2.bf16.msra.mxu0 0
    %7245 = vmatprep.subr.bf16.mxu0 0
    %7246 = vmatpush2.bf16.msra.mxu0 0
    %7247 = vmatprep.subr.bf16.mxu0 0
    %7248 = vmatpush2.bf16.msra.mxu0 0
    %7249 = vmatprep.subr.bf16.mxu0 0
    %7250 = vmatpush2.bf16.msra.mxu0 0
    %7251 = vmatprep.subr.bf16.mxu0 0
    %7252 = vmatpush2.bf16.msra.mxu0 0
    %7253 = vmatprep.subr.bf16.mxu0 0
    %7254 = vmatpush2.bf16.msra.mxu0 0
    %7255 = vmatprep.subr.bf16.mxu0 0
    %7256 = vmatpush2.bf16.msra.mxu0 0
    %7257 = vmatprep.subr.bf16.mxu0 0
    %7258 = vmatpush2.bf16.msra.mxu0 0
    %7259 = vmatprep.mubr.bf16.mxu0 0
    %7260 = vmatmul.mubr.bf16.gmra.mxu0 %v7021
    %v7261 = vpop.f32.mrf.mxu0
    %v7262 = vadd.f32 %v7221, %v7261
    %v7263 = vpop.f32.mrf.mxu0
    %v7264 = vadd.f32 %v7223, %v7263
    %v7265 = vpop.f32.mrf.mxu0
    %v7266 = vpop.f32.mrf.mxu0
    %7267 = vdwg.mxu0
    %7268 = vmatprep.subr.bf16.mxu0 %v4197
    %7269 = vmatpush1.bf16.msra.mxu0 %v4196
    %7270 = vmatprep.subr.bf16.mxu0 %v4185
    %7271 = vmatpush1.bf16.msra.mxu0 %v4184
    %7272 = vmatprep.subr.bf16.mxu0 %v4173
    %7273 = vmatpush1.bf16.msra.mxu0 %v4172
    %7274 = vmatprep.subr.bf16.mxu0 %v4161
    %7275 = vmatpush1.bf16.msra.mxu0 %v4160
    %7276 = vmatprep.subr.bf16.mxu0 %v4149
    %7277 = vmatpush1.bf16.msra.mxu0 %v4148
    %7278 = vmatprep.subr.bf16.mxu0 %v4137
    %7279 = vmatpush1.bf16.msra.mxu0 %v4136
    %7280 = vmatprep.subr.bf16.mxu0 %v4125
    %7281 = vmatpush1.bf16.msra.mxu0 %v4124
    %7282 = vmatprep.subr.bf16.mxu0 %v4113
    %7283 = vmatpush1.bf16.msra.mxu0 %v4112
    %7284 = vmatprep.subr.bf16.mxu0 %v4293
    %7285 = vmatpush2.bf16.msra.mxu0 %v4292
    %7286 = vmatprep.subr.bf16.mxu0 %v4281
    %7287 = vmatpush2.bf16.msra.mxu0 %v4280
    %7288 = vmatprep.subr.bf16.mxu0 %v4269
    %7289 = vmatpush2.bf16.msra.mxu0 %v4268
    %7290 = vmatprep.subr.bf16.mxu0 %v4257
    %7291 = vmatpush2.bf16.msra.mxu0 %v4256
    %7292 = vmatprep.subr.bf16.mxu0 %v4245
    %7293 = vmatpush2.bf16.msra.mxu0 %v4244
    %7294 = vmatprep.subr.bf16.mxu0 %v4233
    %7295 = vmatpush2.bf16.msra.mxu0 %v4232
    %7296 = vmatprep.subr.bf16.mxu0 %v4221
    %7297 = vmatpush2.bf16.msra.mxu0 %v4220
    %7298 = vmatprep.subr.bf16.mxu0 %v4209
    %7299 = vmatpush2.bf16.msra.mxu0 %v4208
    %7300 = vmatprep.mubr.bf16.mxu0 %v7020
    %7301 = vmatmul.mubr.bf16.gmra.mxu0 %v7019
    %v7302 = vpop.f32.mrf.mxu0
    %v7303 = vadd.f32 0.0, %v7302
    %v7304 = vpop.f32.mrf.mxu0
    %v7305 = vadd.f32 0.0, %v7304
    %v7306 = vpop.f32.mrf.mxu0
    %v7307 = vpop.f32.mrf.mxu0
    %7308 = vdwg.mxu0
    %7309 = vmatprep.subr.bf16.mxu0 %v4389
    %7310 = vmatpush1.bf16.msra.mxu0 %v4388
    %7311 = vmatprep.subr.bf16.mxu0 %v4377
    %7312 = vmatpush1.bf16.msra.mxu0 %v4376
    %7313 = vmatprep.subr.bf16.mxu0 %v4365
    %7314 = vmatpush1.bf16.msra.mxu0 %v4364
    %7315 = vmatprep.subr.bf16.mxu0 %v4353
    %7316 = vmatpush1.bf16.msra.mxu0 %v4352
    %7317 = vmatprep.subr.bf16.mxu0 %v4341
    %7318 = vmatpush1.bf16.msra.mxu0 %v4340
    %7319 = vmatprep.subr.bf16.mxu0 %v4329
    %7320 = vmatpush1.bf16.msra.mxu0 %v4328
    %7321 = vmatprep.subr.bf16.mxu0 %v4317
    %7322 = vmatpush1.bf16.msra.mxu0 %v4316
    %7323 = vmatprep.subr.bf16.mxu0 %v4305
    %7324 = vmatpush1.bf16.msra.mxu0 %v4304
    %7325 = vmatprep.subr.bf16.mxu0 0
    %7326 = vmatpush2.bf16.msra.mxu0 0
    %7327 = vmatprep.subr.bf16.mxu0 0
    %7328 = vmatpush2.bf16.msra.mxu0 0
    %7329 = vmatprep.subr.bf16.mxu0 0
    %7330 = vmatpush2.bf16.msra.mxu0 0
    %7331 = vmatprep.subr.bf16.mxu0 0
    %7332 = vmatpush2.bf16.msra.mxu0 0
    %7333 = vmatprep.subr.bf16.mxu0 0
    %7334 = vmatpush2.bf16.msra.mxu0 0
    %7335 = vmatprep.subr.bf16.mxu0 0
    %7336 = vmatpush2.bf16.msra.mxu0 0
    %7337 = vmatprep.subr.bf16.mxu0 0
    %7338 = vmatpush2.bf16.msra.mxu0 0
    %7339 = vmatprep.subr.bf16.mxu0 0
    %7340 = vmatpush2.bf16.msra.mxu0 0
    %7341 = vmatprep.mubr.bf16.mxu0 0
    %7342 = vmatmul.mubr.bf16.gmra.mxu0 %v7021
    %v7343 = vpop.f32.mrf.mxu0
    %v7344 = vadd.f32 %v7303, %v7343
    %v7345 = vpop.f32.mrf.mxu0
    %v7346 = vadd.f32 %v7305, %v7345
    %v7347 = vpop.f32.mrf.mxu0
    %v7348 = vpop.f32.mrf.mxu0
    %7349 = vdwg.mxu0
    %7350 = vmatprep.subr.bf16.mxu0 %v4199
    %7351 = vmatpush1.bf16.msra.mxu0 %v4198
    %7352 = vmatprep.subr.bf16.mxu0 %v4187
    %7353 = vmatpush1.bf16.msra.mxu0 %v4186
    %7354 = vmatprep.subr.bf16.mxu0 %v4175
    %7355 = vmatpush1.bf16.msra.mxu0 %v4174
    %7356 = vmatprep.subr.bf16.mxu0 %v4163
    %7357 = vmatpush1.bf16.msra.mxu0 %v4162
    %7358 = vmatprep.subr.bf16.mxu0 %v4151
    %7359 = vmatpush1.bf16.msra.mxu0 %v4150
    %7360 = vmatprep.subr.bf16.mxu0 %v4139
    %7361 = vmatpush1.bf16.msra.mxu0 %v4138
    %7362 = vmatprep.subr.bf16.mxu0 %v4127
    %7363 = vmatpush1.bf16.msra.mxu0 %v4126
    %7364 = vmatprep.subr.bf16.mxu0 %v4115
    %7365 = vmatpush1.bf16.msra.mxu0 %v4114
    %7366 = vmatprep.subr.bf16.mxu0 %v4295
    %7367 = vmatpush2.bf16.msra.mxu0 %v4294
    %7368 = vmatprep.subr.bf16.mxu0 %v4283
    %7369 = vmatpush2.bf16.msra.mxu0 %v4282
    %7370 = vmatprep.subr.bf16.mxu0 %v4271
    %7371 = vmatpush2.bf16.msra.mxu0 %v4270
    %7372 = vmatprep.subr.bf16.mxu0 %v4259
    %7373 = vmatpush2.bf16.msra.mxu0 %v4258
    %7374 = vmatprep.subr.bf16.mxu0 %v4247
    %7375 = vmatpush2.bf16.msra.mxu0 %v4246
    %7376 = vmatprep.subr.bf16.mxu0 %v4235
    %7377 = vmatpush2.bf16.msra.mxu0 %v4234
    %7378 = vmatprep.subr.bf16.mxu0 %v4223
    %7379 = vmatpush2.bf16.msra.mxu0 %v4222
    %7380 = vmatprep.subr.bf16.mxu0 %v4211
    %7381 = vmatpush2.bf16.msra.mxu0 %v4210
    %7382 = vmatprep.mubr.bf16.mxu0 %v7020
    %7383 = vmatmul.mubr.bf16.gmra.mxu0 %v7019
    %v7384 = vpop.f32.mrf.mxu0
    %v7385 = vadd.f32 0.0, %v7384
    %v7386 = vpop.f32.mrf.mxu0
    %v7387 = vadd.f32 0.0, %v7386
    %v7388 = vpop.f32.mrf.mxu0
    %v7389 = vpop.f32.mrf.mxu0
    %7390 = vdwg.mxu0
    %7391 = vmatprep.subr.bf16.mxu0 %v4391
    %7392 = vmatpush1.bf16.msra.mxu0 %v4390
    %7393 = vmatprep.subr.bf16.mxu0 %v4379
    %7394 = vmatpush1.bf16.msra.mxu0 %v4378
    %7395 = vmatprep.subr.bf16.mxu0 %v4367
    %7396 = vmatpush1.bf16.msra.mxu0 %v4366
    %7397 = vmatprep.subr.bf16.mxu0 %v4355
    %7398 = vmatpush1.bf16.msra.mxu0 %v4354
    %7399 = vmatprep.subr.bf16.mxu0 %v4343
    %7400 = vmatpush1.bf16.msra.mxu0 %v4342
    %7401 = vmatprep.subr.bf16.mxu0 %v4331
    %7402 = vmatpush1.bf16.msra.mxu0 %v4330
    %7403 = vmatprep.subr.bf16.mxu0 %v4319
    %7404 = vmatpush1.bf16.msra.mxu0 %v4318
    %7405 = vmatprep.subr.bf16.mxu0 %v4307
    %7406 = vmatpush1.bf16.msra.mxu0 %v4306
    %7407 = vmatprep.subr.bf16.mxu0 0
    %7408 = vmatpush2.bf16.msra.mxu0 0
    %7409 = vmatprep.subr.bf16.mxu0 0
    %7410 = vmatpush2.bf16.msra.mxu0 0
    %7411 = vmatprep.subr.bf16.mxu0 0
    %7412 = vmatpush2.bf16.msra.mxu0 0
    %7413 = vmatprep.subr.bf16.mxu0 0
    %7414 = vmatpush2.bf16.msra.mxu0 0
    %7415 = vmatprep.subr.bf16.mxu0 0
    %7416 = vmatpush2.bf16.msra.mxu0 0
    %7417 = vmatprep.subr.bf16.mxu0 0
    %7418 = vmatpush2.bf16.msra.mxu0 0
    %7419 = vmatprep.subr.bf16.mxu0 0
    %7420 = vmatpush2.bf16.msra.mxu0 0
    %7421 = vmatprep.subr.bf16.mxu0 0
    %7422 = vmatpush2.bf16.msra.mxu0 0
    %7423 = vmatprep.mubr.bf16.mxu0 0
    %7424 = vmatmul.mubr.bf16.gmra.mxu0 %v7021
    %v7425 = vpop.f32.mrf.mxu0
    %v7426 = vadd.f32 %v7385, %v7425
    %v7427 = vpop.f32.mrf.mxu0
    %v7428 = vadd.f32 %v7387, %v7427
    %v7429 = vpop.f32.mrf.mxu0
    %v7430 = vpop.f32.mrf.mxu0
    %7431 = vdwg.mxu0
    %7432 = vmatprep.subr.bf16.mxu0 %v4201
    %7433 = vmatpush1.bf16.msra.mxu0 %v4200
    %7434 = vmatprep.subr.bf16.mxu0 %v4189
    %7435 = vmatpush1.bf16.msra.mxu0 %v4188
    %7436 = vmatprep.subr.bf16.mxu0 %v4177
    %7437 = vmatpush1.bf16.msra.mxu0 %v4176
    %7438 = vmatprep.subr.bf16.mxu0 %v4165
    %7439 = vmatpush1.bf16.msra.mxu0 %v4164
    %7440 = vmatprep.subr.bf16.mxu0 %v4153
    %7441 = vmatpush1.bf16.msra.mxu0 %v4152
    %7442 = vmatprep.subr.bf16.mxu0 %v4141
    %7443 = vmatpush1.bf16.msra.mxu0 %v4140
    %7444 = vmatprep.subr.bf16.mxu0 %v4129
    %7445 = vmatpush1.bf16.msra.mxu0 %v4128
    %7446 = vmatprep.subr.bf16.mxu0 %v4117
    %7447 = vmatpush1.bf16.msra.mxu0 %v4116
    %7448 = vmatprep.subr.bf16.mxu0 %v4297
    %7449 = vmatpush2.bf16.msra.mxu0 %v4296
    %7450 = vmatprep.subr.bf16.mxu0 %v4285
    %7451 = vmatpush2.bf16.msra.mxu0 %v4284
    %7452 = vmatprep.subr.bf16.mxu0 %v4273
    %7453 = vmatpush2.bf16.msra.mxu0 %v4272
    %7454 = vmatprep.subr.bf16.mxu0 %v4261
    %7455 = vmatpush2.bf16.msra.mxu0 %v4260
    %7456 = vmatprep.subr.bf16.mxu0 %v4249
    %7457 = vmatpush2.bf16.msra.mxu0 %v4248
    %7458 = vmatprep.subr.bf16.mxu0 %v4237
    %7459 = vmatpush2.bf16.msra.mxu0 %v4236
    %7460 = vmatprep.subr.bf16.mxu0 %v4225
    %7461 = vmatpush2.bf16.msra.mxu0 %v4224
    %7462 = vmatprep.subr.bf16.mxu0 %v4213
    %7463 = vmatpush2.bf16.msra.mxu0 %v4212
    %7464 = vmatprep.mubr.bf16.mxu0 %v7020
    %7465 = vmatmul.mubr.bf16.gmra.mxu0 %v7019
    %v7466 = vpop.f32.mrf.mxu0
    %v7467 = vadd.f32 0.0, %v7466
    %v7468 = vpop.f32.mrf.mxu0
    %v7469 = vadd.f32 0.0, %v7468
    %v7470 = vpop.f32.mrf.mxu0
    %v7471 = vpop.f32.mrf.mxu0
    %7472 = vdwg.mxu0
    %7473 = vmatprep.subr.bf16.mxu0 %v4393
    %7474 = vmatpush1.bf16.msra.mxu0 %v4392
    %7475 = vmatprep.subr.bf16.mxu0 %v4381
    %7476 = vmatpush1.bf16.msra.mxu0 %v4380
    %7477 = vmatprep.subr.bf16.mxu0 %v4369
    %7478 = vmatpush1.bf16.msra.mxu0 %v4368
    %7479 = vmatprep.subr.bf16.mxu0 %v4357
    %7480 = vmatpush1.bf16.msra.mxu0 %v4356
    %7481 = vmatprep.subr.bf16.mxu0 %v4345
    %7482 = vmatpush1.bf16.msra.mxu0 %v4344
    %7483 = vmatprep.subr.bf16.mxu0 %v4333
    %7484 = vmatpush1.bf16.msra.mxu0 %v4332
    %7485 = vmatprep.subr.bf16.mxu0 %v4321
    %7486 = vmatpush1.bf16.msra.mxu0 %v4320
    %7487 = vmatprep.subr.bf16.mxu0 %v4309
    %7488 = vmatpush1.bf16.msra.mxu0 %v4308
    %7489 = vmatprep.subr.bf16.mxu0 0
    %7490 = vmatpush2.bf16.msra.mxu0 0
    %7491 = vmatprep.subr.bf16.mxu0 0
    %7492 = vmatpush2.bf16.msra.mxu0 0
    %7493 = vmatprep.subr.bf16.mxu0 0
    %7494 = vmatpush2.bf16.msra.mxu0 0
    %7495 = vmatprep.subr.bf16.mxu0 0
    %7496 = vmatpush2.bf16.msra.mxu0 0
    %7497 = vmatprep.subr.bf16.mxu0 0
    %7498 = vmatpush2.bf16.msra.mxu0 0
    %7499 = vmatprep.subr.bf16.mxu0 0
    %7500 = vmatpush2.bf16.msra.mxu0 0
    %7501 = vmatprep.subr.bf16.mxu0 0
    %7502 = vmatpush2.bf16.msra.mxu0 0
    %7503 = vmatprep.subr.bf16.mxu0 0
    %7504 = vmatpush2.bf16.msra.mxu0 0
    %7505 = vmatprep.mubr.bf16.mxu0 0
    %7506 = vmatmul.mubr.bf16.gmra.mxu0 %v7021
    %v7507 = vpop.f32.mrf.mxu0
    %v7508 = vadd.f32 %v7467, %v7507
    %v7509 = vpop.f32.mrf.mxu0
    %v7510 = vadd.f32 %v7469, %v7509
    %v7511 = vpop.f32.mrf.mxu0
    %v7512 = vpop.f32.mrf.mxu0
    %7513 = vdwg.mxu0
    %v7514 = vadd.f32 %v7007, %v7098
    %v7515 = vadd.f32 %v7008, %v7100
    %v7516 = vadd.f32 %v7009, %v7180
    %v7517 = vadd.f32 %v7010, %v7182
    %v7518 = vadd.f32 %v7011, %v7262
    %v7519 = vadd.f32 %v7012, %v7264
    %v7520 = vadd.f32 %v7013, %v7344
    %v7521 = vadd.f32 %v7014, %v7346
    %v7522 = vadd.f32 %v7015, %v7426
    %v7523 = vadd.f32 %v7016, %v7428
    %v7524 = vadd.f32 %v7017, %v7508
    %v7525 = vadd.f32 %v7018, %v7510
    %v7526 = vmul.f32 %v7514, 0.5
    %v7527 = vmul.f32 %v7515, 0.5
    %v7528 = vmul.f32 %v7516, 0.5
    %v7529 = vtanh.pop %v7526
    %v7530 = vtanh.pop %v7527
    %v7531 = vtanh.pop %v7528
    %v7532 = vmul.f32 %v7529, 0.5
    %v7533 = vmul.f32 %v7530, 0.5
    %v7534 = vmul.f32 %v7531, 0.5
    %v7535 = vadd.f32 %v7532, 0.5
    %v7536 = vadd.f32 %v7533, 0.5
    %v7537 = vadd.f32 %v7534, 0.5
    %v7538 = vmul.f32 %v7517, 0.5
    %v7539 = vmul.f32 %v7518, 0.5
    %v7540 = vmul.f32 %v7519, 0.5
    %v7541 = vtanh.pop %v7538
    %v7542 = vtanh.pop %v7539
    %v7543 = vtanh.pop %v7540
    %v7544 = vmul.f32 %v7541, 0.5
    %v7545 = vmul.f32 %v7542, 0.5
    %v7546 = vmul.f32 %v7543, 0.5
    %v7547 = vadd.f32 %v7544, 0.5
    %v7548 = vadd.f32 %v7545, 0.5
    %v7549 = vadd.f32 %v7546, 0.5
    %v7550 = vmul.f32 %v7523, 0.5
    %v7551 = vmul.f32 %v7524, 0.5
    %v7552 = vmul.f32 %v7525, 0.5
    %v7553 = vtanh.pop %v7550
    %v7554 = vtanh.pop %v7551
    %v7555 = vtanh.pop %v7552
    %v7556 = vmul.f32 %v7553, 0.5
    %v7557 = vmul.f32 %v7554, 0.5
    %v7558 = vmul.f32 %v7555, 0.5
    %v7559 = vadd.f32 %v7556, 0.5
    %v7560 = vadd.f32 %v7557, 0.5
    %v7561 = vadd.f32 %v7558, 0.5
    %v7562 = vtanh.pop %v7520
    %v7563 = vtanh.pop %v7521
    %v7564 = vtanh.pop %v7522
    %v7565 = vmul.f32 %v7547, %v6986
    %v7566 = vmul.f32 %v7548, %v6987
    %v7567 = vmul.f32 %v7549, %v6988
    %v7568 = vmul.f32 %v7535, %v7562
    %v7569 = vmul.f32 %v7536, %v7563
    %v7570 = vmul.f32 %v7537, %v7564
    %v7571 = vadd.f32 %v7565, %v7568
    %v7572 = vadd.f32 %v7566, %v7569
    %v7573 = vadd.f32 %v7567, %v7570
    %v7574 = vtanh.pop %v7571
    %v7575 = vtanh.pop %v7572
    %v7576 = vtanh.pop %v7573
    %v7577 = vmul.f32 %v7559, %v7574
    %v7578 = vmul.f32 %v7560, %v7575
    %v7579 = vmul.f32 %v7561, %v7576
    %vm7580 = vcmp.eq.s32.totalorder %v2938, 4
    %v7581 = vsel %vm7580, 1, 0
    %7582 = vset.pattern.permute.xlu0 0
    %7583 = vperm.xlu0 %7582, %v7581
    %v7584 = vpop.permute.xlu0 %7583
    %vm7585 = vcmp.eq.s32.totalorder %v7584, 1
    %v7586 = vsel %vm7585, %v7577, %v7001
    %v7587 = vsel %vm7585, %v7578, %v7002
    %v7588 = vsel %vm7585, %v7579, %v7003
    %s7589 = smul.u32 5, 12
    %s7590 = smul.addr %s7589, 8
    %s7591 = scalar_lea.vmem [#allocation2], %s7590
    %v7592 = vld [vmem:[%s7591] sm:$0xff]
    %v7593 = vld [vmem:[%s7591 + $0x8] sm:$0xff]
    %v7594 = vld [vmem:[%s7591 + $0x10] sm:$0xff]
    %v7595 = vld [vmem:[%s7591 + $0x18] sm:$0xff]
    %v7596 = vld [vmem:[%s7591 + $0x20] sm:$0xff]
    %v7597 = vld [vmem:[%s7591 + $0x28] sm:$0xff]
    %v7598 = vld [vmem:[%s7591 + $0x30] sm:$0xff]
    %v7599 = vld [vmem:[%s7591 + $0x38] sm:$0xff]
    %v7600 = vld [vmem:[%s7591 + $0x40] sm:$0xff]
    %v7601 = vld [vmem:[%s7591 + $0x48] sm:$0xff]
    %v7602 = vld [vmem:[%s7591 + $0x50] sm:$0xff]
    %v7603 = vld [vmem:[%s7591 + $0x58] sm:$0xff]
    %v7604 = vpack.c.bf16 %v7577, %v7577
    %v7605 = vpack.c.bf16 %v7578, %v7578
    %v7606 = vpack.c.bf16 %v7579, %v7579
    %7607 = vmatprep.subr.bf16.mxu0 %v4191
    %7608 = vmatpush1.bf16.msra.mxu0 %v4190
    %7609 = vmatprep.subr.bf16.mxu0 %v4179
    %7610 = vmatpush1.bf16.msra.mxu0 %v4178
    %7611 = vmatprep.subr.bf16.mxu0 %v4167
    %7612 = vmatpush1.bf16.msra.mxu0 %v4166
    %7613 = vmatprep.subr.bf16.mxu0 %v4155
    %7614 = vmatpush1.bf16.msra.mxu0 %v4154
    %7615 = vmatprep.subr.bf16.mxu0 %v4143
    %7616 = vmatpush1.bf16.msra.mxu0 %v4142
    %7617 = vmatprep.subr.bf16.mxu0 %v4131
    %7618 = vmatpush1.bf16.msra.mxu0 %v4130
    %7619 = vmatprep.subr.bf16.mxu0 %v4119
    %7620 = vmatpush1.bf16.msra.mxu0 %v4118
    %7621 = vmatprep.subr.bf16.mxu0 %v4107
    %7622 = vmatpush1.bf16.msra.mxu0 %v4106
    %7623 = vmatprep.subr.bf16.mxu0 %v4287
    %7624 = vmatpush2.bf16.msra.mxu0 %v4286
    %7625 = vmatprep.subr.bf16.mxu0 %v4275
    %7626 = vmatpush2.bf16.msra.mxu0 %v4274
    %7627 = vmatprep.subr.bf16.mxu0 %v4263
    %7628 = vmatpush2.bf16.msra.mxu0 %v4262
    %7629 = vmatprep.subr.bf16.mxu0 %v4251
    %7630 = vmatpush2.bf16.msra.mxu0 %v4250
    %7631 = vmatprep.subr.bf16.mxu0 %v4239
    %7632 = vmatpush2.bf16.msra.mxu0 %v4238
    %7633 = vmatprep.subr.bf16.mxu0 %v4227
    %7634 = vmatpush2.bf16.msra.mxu0 %v4226
    %7635 = vmatprep.subr.bf16.mxu0 %v4215
    %7636 = vmatpush2.bf16.msra.mxu0 %v4214
    %7637 = vmatprep.subr.bf16.mxu0 %v4203
    %7638 = vmatpush2.bf16.msra.mxu0 %v4202
    %7639 = vmatprep.mubr.bf16.mxu0 %v7605
    %7640 = vmatmul.mubr.bf16.gmra.mxu0 %v7604
    %v7641 = vpop.f32.mrf.mxu0
    %v7642 = vadd.f32 0.0, %v7641
    %v7643 = vpop.f32.mrf.mxu0
    %v7644 = vadd.f32 0.0, %v7643
    %v7645 = vpop.f32.mrf.mxu0
    %v7646 = vpop.f32.mrf.mxu0
    %7647 = vdwg.mxu0
    %7648 = vmatprep.subr.bf16.mxu0 %v4383
    %7649 = vmatpush1.bf16.msra.mxu0 %v4382
    %7650 = vmatprep.subr.bf16.mxu0 %v4371
    %7651 = vmatpush1.bf16.msra.mxu0 %v4370
    %7652 = vmatprep.subr.bf16.mxu0 %v4359
    %7653 = vmatpush1.bf16.msra.mxu0 %v4358
    %7654 = vmatprep.subr.bf16.mxu0 %v4347
    %7655 = vmatpush1.bf16.msra.mxu0 %v4346
    %7656 = vmatprep.subr.bf16.mxu0 %v4335
    %7657 = vmatpush1.bf16.msra.mxu0 %v4334
    %7658 = vmatprep.subr.bf16.mxu0 %v4323
    %7659 = vmatpush1.bf16.msra.mxu0 %v4322
    %7660 = vmatprep.subr.bf16.mxu0 %v4311
    %7661 = vmatpush1.bf16.msra.mxu0 %v4310
    %7662 = vmatprep.subr.bf16.mxu0 %v4299
    %7663 = vmatpush1.bf16.msra.mxu0 %v4298
    %7664 = vmatprep.subr.bf16.mxu0 0
    %7665 = vmatpush2.bf16.msra.mxu0 0
    %7666 = vmatprep.subr.bf16.mxu0 0
    %7667 = vmatpush2.bf16.msra.mxu0 0
    %7668 = vmatprep.subr.bf16.mxu0 0
    %7669 = vmatpush2.bf16.msra.mxu0 0
    %7670 = vmatprep.subr.bf16.mxu0 0
    %7671 = vmatpush2.bf16.msra.mxu0 0
    %7672 = vmatprep.subr.bf16.mxu0 0
    %7673 = vmatpush2.bf16.msra.mxu0 0
    %7674 = vmatprep.subr.bf16.mxu0 0
    %7675 = vmatpush2.bf16.msra.mxu0 0
    %7676 = vmatprep.subr.bf16.mxu0 0
    %7677 = vmatpush2.bf16.msra.mxu0 0
    %7678 = vmatprep.subr.bf16.mxu0 0
    %7679 = vmatpush2.bf16.msra.mxu0 0
    %7680 = vmatprep.mubr.bf16.mxu0 0
    %7681 = vmatmul.mubr.bf16.gmra.mxu0 %v7606
    %v7682 = vpop.f32.mrf.mxu0
    %v7683 = vadd.f32 %v7642, %v7682
    %v7684 = vpop.f32.mrf.mxu0
    %v7685 = vadd.f32 %v7644, %v7684
    %v7686 = vpop.f32.mrf.mxu0
    %v7687 = vpop.f32.mrf.mxu0
    %7688 = vdwg.mxu0
    %7689 = vmatprep.subr.bf16.mxu0 %v4193
    %7690 = vmatpush1.bf16.msra.mxu0 %v4192
    %7691 = vmatprep.subr.bf16.mxu0 %v4181
    %7692 = vmatpush1.bf16.msra.mxu0 %v4180
    %7693 = vmatprep.subr.bf16.mxu0 %v4169
    %7694 = vmatpush1.bf16.msra.mxu0 %v4168
    %7695 = vmatprep.subr.bf16.mxu0 %v4157
    %7696 = vmatpush1.bf16.msra.mxu0 %v4156
    %7697 = vmatprep.subr.bf16.mxu0 %v4145
    %7698 = vmatpush1.bf16.msra.mxu0 %v4144
    %7699 = vmatprep.subr.bf16.mxu0 %v4133
    %7700 = vmatpush1.bf16.msra.mxu0 %v4132
    %7701 = vmatprep.subr.bf16.mxu0 %v4121
    %7702 = vmatpush1.bf16.msra.mxu0 %v4120
    %7703 = vmatprep.subr.bf16.mxu0 %v4109
    %7704 = vmatpush1.bf16.msra.mxu0 %v4108
    %7705 = vmatprep.subr.bf16.mxu0 %v4289
    %7706 = vmatpush2.bf16.msra.mxu0 %v4288
    %7707 = vmatprep.subr.bf16.mxu0 %v4277
    %7708 = vmatpush2.bf16.msra.mxu0 %v4276
    %7709 = vmatprep.subr.bf16.mxu0 %v4265
    %7710 = vmatpush2.bf16.msra.mxu0 %v4264
    %7711 = vmatprep.subr.bf16.mxu0 %v4253
    %7712 = vmatpush2.bf16.msra.mxu0 %v4252
    %7713 = vmatprep.subr.bf16.mxu0 %v4241
    %7714 = vmatpush2.bf16.msra.mxu0 %v4240
    %7715 = vmatprep.subr.bf16.mxu0 %v4229
    %7716 = vmatpush2.bf16.msra.mxu0 %v4228
    %7717 = vmatprep.subr.bf16.mxu0 %v4217
    %7718 = vmatpush2.bf16.msra.mxu0 %v4216
    %7719 = vmatprep.subr.bf16.mxu0 %v4205
    %7720 = vmatpush2.bf16.msra.mxu0 %v4204
    %7721 = vmatprep.mubr.bf16.mxu0 %v7605
    %7722 = vmatmul.mubr.bf16.gmra.mxu0 %v7604
    %v7723 = vpop.f32.mrf.mxu0
    %v7724 = vadd.f32 0.0, %v7723
    %v7725 = vpop.f32.mrf.mxu0
    %v7726 = vadd.f32 0.0, %v7725
    %v7727 = vpop.f32.mrf.mxu0
    %v7728 = vpop.f32.mrf.mxu0
    %7729 = vdwg.mxu0
    %7730 = vmatprep.subr.bf16.mxu0 %v4385
    %7731 = vmatpush1.bf16.msra.mxu0 %v4384
    %7732 = vmatprep.subr.bf16.mxu0 %v4373
    %7733 = vmatpush1.bf16.msra.mxu0 %v4372
    %7734 = vmatprep.subr.bf16.mxu0 %v4361
    %7735 = vmatpush1.bf16.msra.mxu0 %v4360
    %7736 = vmatprep.subr.bf16.mxu0 %v4349
    %7737 = vmatpush1.bf16.msra.mxu0 %v4348
    %7738 = vmatprep.subr.bf16.mxu0 %v4337
    %7739 = vmatpush1.bf16.msra.mxu0 %v4336
    %7740 = vmatprep.subr.bf16.mxu0 %v4325
    %7741 = vmatpush1.bf16.msra.mxu0 %v4324
    %7742 = vmatprep.subr.bf16.mxu0 %v4313
    %7743 = vmatpush1.bf16.msra.mxu0 %v4312
    %7744 = vmatprep.subr.bf16.mxu0 %v4301
    %7745 = vmatpush1.bf16.msra.mxu0 %v4300
    %7746 = vmatprep.subr.bf16.mxu0 0
    %7747 = vmatpush2.bf16.msra.mxu0 0
    %7748 = vmatprep.subr.bf16.mxu0 0
    %7749 = vmatpush2.bf16.msra.mxu0 0
    %7750 = vmatprep.subr.bf16.mxu0 0
    %7751 = vmatpush2.bf16.msra.mxu0 0
    %7752 = vmatprep.subr.bf16.mxu0 0
    %7753 = vmatpush2.bf16.msra.mxu0 0
    %7754 = vmatprep.subr.bf16.mxu0 0
    %7755 = vmatpush2.bf16.msra.mxu0 0
    %7756 = vmatprep.subr.bf16.mxu0 0
    %7757 = vmatpush2.bf16.msra.mxu0 0
    %7758 = vmatprep.subr.bf16.mxu0 0
    %7759 = vmatpush2.bf16.msra.mxu0 0
    %7760 = vmatprep.subr.bf16.mxu0 0
    %7761 = vmatpush2.bf16.msra.mxu0 0
    %7762 = vmatprep.mubr.bf16.mxu0 0
    %7763 = vmatmul.mubr.bf16.gmra.mxu0 %v7606
    %v7764 = vpop.f32.mrf.mxu0
    %v7765 = vadd.f32 %v7724, %v7764
    %v7766 = vpop.f32.mrf.mxu0
    %v7767 = vadd.f32 %v7726, %v7766
    %v7768 = vpop.f32.mrf.mxu0
    %v7769 = vpop.f32.mrf.mxu0
    %7770 = vdwg.mxu0
    %7771 = vmatprep.subr.bf16.mxu0 %v4195
    %7772 = vmatpush1.bf16.msra.mxu0 %v4194
    %7773 = vmatprep.subr.bf16.mxu0 %v4183
    %7774 = vmatpush1.bf16.msra.mxu0 %v4182
    %7775 = vmatprep.subr.bf16.mxu0 %v4171
    %7776 = vmatpush1.bf16.msra.mxu0 %v4170
    %7777 = vmatprep.subr.bf16.mxu0 %v4159
    %7778 = vmatpush1.bf16.msra.mxu0 %v4158
    %7779 = vmatprep.subr.bf16.mxu0 %v4147
    %7780 = vmatpush1.bf16.msra.mxu0 %v4146
    %7781 = vmatprep.subr.bf16.mxu0 %v4135
    %7782 = vmatpush1.bf16.msra.mxu0 %v4134
    %7783 = vmatprep.subr.bf16.mxu0 %v4123
    %7784 = vmatpush1.bf16.msra.mxu0 %v4122
    %7785 = vmatprep.subr.bf16.mxu0 %v4111
    %7786 = vmatpush1.bf16.msra.mxu0 %v4110
    %7787 = vmatprep.subr.bf16.mxu0 %v4291
    %7788 = vmatpush2.bf16.msra.mxu0 %v4290
    %7789 = vmatprep.subr.bf16.mxu0 %v4279
    %7790 = vmatpush2.bf16.msra.mxu0 %v4278
    %7791 = vmatprep.subr.bf16.mxu0 %v4267
    %7792 = vmatpush2.bf16.msra.mxu0 %v4266
    %7793 = vmatprep.subr.bf16.mxu0 %v4255
    %7794 = vmatpush2.bf16.msra.mxu0 %v4254
    %7795 = vmatprep.subr.bf16.mxu0 %v4243
    %7796 = vmatpush2.bf16.msra.mxu0 %v4242
    %7797 = vmatprep.subr.bf16.mxu0 %v4231
    %7798 = vmatpush2.bf16.msra.mxu0 %v4230
    %7799 = vmatprep.subr.bf16.mxu0 %v4219
    %7800 = vmatpush2.bf16.msra.mxu0 %v4218
    %7801 = vmatprep.subr.bf16.mxu0 %v4207
    %7802 = vmatpush2.bf16.msra.mxu0 %v4206
    %7803 = vmatprep.mubr.bf16.mxu0 %v7605
    %7804 = vmatmul.mubr.bf16.gmra.mxu0 %v7604
    %v7805 = vpop.f32.mrf.mxu0
    %v7806 = vadd.f32 0.0, %v7805
    %v7807 = vpop.f32.mrf.mxu0
    %v7808 = vadd.f32 0.0, %v7807
    %v7809 = vpop.f32.mrf.mxu0
    %v7810 = vpop.f32.mrf.mxu0
    %7811 = vdwg.mxu0
    %7812 = vmatprep.subr.bf16.mxu0 %v4387
    %7813 = vmatpush1.bf16.msra.mxu0 %v4386
    %7814 = vmatprep.subr.bf16.mxu0 %v4375
    %7815 = vmatpush1.bf16.msra.mxu0 %v4374
    %7816 = vmatprep.subr.bf16.mxu0 %v4363
    %7817 = vmatpush1.bf16.msra.mxu0 %v4362
    %7818 = vmatprep.subr.bf16.mxu0 %v4351
    %7819 = vmatpush1.bf16.msra.mxu0 %v4350
    %7820 = vmatprep.subr.bf16.mxu0 %v4339
    %7821 = vmatpush1.bf16.msra.mxu0 %v4338
    %7822 = vmatprep.subr.bf16.mxu0 %v4327
    %7823 = vmatpush1.bf16.msra.mxu0 %v4326
    %7824 = vmatprep.subr.bf16.mxu0 %v4315
    %7825 = vmatpush1.bf16.msra.mxu0 %v4314
    %7826 = vmatprep.subr.bf16.mxu0 %v4303
    %7827 = vmatpush1.bf16.msra.mxu0 %v4302
    %7828 = vmatprep.subr.bf16.mxu0 0
    %7829 = vmatpush2.bf16.msra.mxu0 0
    %7830 = vmatprep.subr.bf16.mxu0 0
    %7831 = vmatpush2.bf16.msra.mxu0 0
    %7832 = vmatprep.subr.bf16.mxu0 0
    %7833 = vmatpush2.bf16.msra.mxu0 0
    %7834 = vmatprep.subr.bf16.mxu0 0
    %7835 = vmatpush2.bf16.msra.mxu0 0
    %7836 = vmatprep.subr.bf16.mxu0 0
    %7837 = vmatpush2.bf16.msra.mxu0 0
    %7838 = vmatprep.subr.bf16.mxu0 0
    %7839 = vmatpush2.bf16.msra.mxu0 0
    %7840 = vmatprep.subr.bf16.mxu0 0
    %7841 = vmatpush2.bf16.msra.mxu0 0
    %7842 = vmatprep.subr.bf16.mxu0 0
    %7843 = vmatpush2.bf16.msra.mxu0 0
    %7844 = vmatprep.mubr.bf16.mxu0 0
    %7845 = vmatmul.mubr.bf16.gmra.mxu0 %v7606
    %v7846 = vpop.f32.mrf.mxu0
    %v7847 = vadd.f32 %v7806, %v7846
    %v7848 = vpop.f32.mrf.mxu0
    %v7849 = vadd.f32 %v7808, %v7848
    %v7850 = vpop.f32.mrf.mxu0
    %v7851 = vpop.f32.mrf.mxu0
    %7852 = vdwg.mxu0
    %7853 = vmatprep.subr.bf16.mxu0 %v4197
    %7854 = vmatpush1.bf16.msra.mxu0 %v4196
    %7855 = vmatprep.subr.bf16.mxu0 %v4185
    %7856 = vmatpush1.bf16.msra.mxu0 %v4184
    %7857 = vmatprep.subr.bf16.mxu0 %v4173
    %7858 = vmatpush1.bf16.msra.mxu0 %v4172
    %7859 = vmatprep.subr.bf16.mxu0 %v4161
    %7860 = vmatpush1.bf16.msra.mxu0 %v4160
    %7861 = vmatprep.subr.bf16.mxu0 %v4149
    %7862 = vmatpush1.bf16.msra.mxu0 %v4148
    %7863 = vmatprep.subr.bf16.mxu0 %v4137
    %7864 = vmatpush1.bf16.msra.mxu0 %v4136
    %7865 = vmatprep.subr.bf16.mxu0 %v4125
    %7866 = vmatpush1.bf16.msra.mxu0 %v4124
    %7867 = vmatprep.subr.bf16.mxu0 %v4113
    %7868 = vmatpush1.bf16.msra.mxu0 %v4112
    %7869 = vmatprep.subr.bf16.mxu0 %v4293
    %7870 = vmatpush2.bf16.msra.mxu0 %v4292
    %7871 = vmatprep.subr.bf16.mxu0 %v4281
    %7872 = vmatpush2.bf16.msra.mxu0 %v4280
    %7873 = vmatprep.subr.bf16.mxu0 %v4269
    %7874 = vmatpush2.bf16.msra.mxu0 %v4268
    %7875 = vmatprep.subr.bf16.mxu0 %v4257
    %7876 = vmatpush2.bf16.msra.mxu0 %v4256
    %7877 = vmatprep.subr.bf16.mxu0 %v4245
    %7878 = vmatpush2.bf16.msra.mxu0 %v4244
    %7879 = vmatprep.subr.bf16.mxu0 %v4233
    %7880 = vmatpush2.bf16.msra.mxu0 %v4232
    %7881 = vmatprep.subr.bf16.mxu0 %v4221
    %7882 = vmatpush2.bf16.msra.mxu0 %v4220
    %7883 = vmatprep.subr.bf16.mxu0 %v4209
    %7884 = vmatpush2.bf16.msra.mxu0 %v4208
    %7885 = vmatprep.mubr.bf16.mxu0 %v7605
    %7886 = vmatmul.mubr.bf16.gmra.mxu0 %v7604
    %v7887 = vpop.f32.mrf.mxu0
    %v7888 = vadd.f32 0.0, %v7887
    %v7889 = vpop.f32.mrf.mxu0
    %v7890 = vadd.f32 0.0, %v7889
    %v7891 = vpop.f32.mrf.mxu0
    %v7892 = vpop.f32.mrf.mxu0
    %7893 = vdwg.mxu0
    %7894 = vmatprep.subr.bf16.mxu0 %v4389
    %7895 = vmatpush1.bf16.msra.mxu0 %v4388
    %7896 = vmatprep.subr.bf16.mxu0 %v4377
    %7897 = vmatpush1.bf16.msra.mxu0 %v4376
    %7898 = vmatprep.subr.bf16.mxu0 %v4365
    %7899 = vmatpush1.bf16.msra.mxu0 %v4364
    %7900 = vmatprep.subr.bf16.mxu0 %v4353
    %7901 = vmatpush1.bf16.msra.mxu0 %v4352
    %7902 = vmatprep.subr.bf16.mxu0 %v4341
    %7903 = vmatpush1.bf16.msra.mxu0 %v4340
    %7904 = vmatprep.subr.bf16.mxu0 %v4329
    %7905 = vmatpush1.bf16.msra.mxu0 %v4328
    %7906 = vmatprep.subr.bf16.mxu0 %v4317
    %7907 = vmatpush1.bf16.msra.mxu0 %v4316
    %7908 = vmatprep.subr.bf16.mxu0 %v4305
    %7909 = vmatpush1.bf16.msra.mxu0 %v4304
    %7910 = vmatprep.subr.bf16.mxu0 0
    %7911 = vmatpush2.bf16.msra.mxu0 0
    %7912 = vmatprep.subr.bf16.mxu0 0
    %7913 = vmatpush2.bf16.msra.mxu0 0
    %7914 = vmatprep.subr.bf16.mxu0 0
    %7915 = vmatpush2.bf16.msra.mxu0 0
    %7916 = vmatprep.subr.bf16.mxu0 0
    %7917 = vmatpush2.bf16.msra.mxu0 0
    %7918 = vmatprep.subr.bf16.mxu0 0
    %7919 = vmatpush2.bf16.msra.mxu0 0
    %7920 = vmatprep.subr.bf16.mxu0 0
    %7921 = vmatpush2.bf16.msra.mxu0 0
    %7922 = vmatprep.subr.bf16.mxu0 0
    %7923 = vmatpush2.bf16.msra.mxu0 0
    %7924 = vmatprep.subr.bf16.mxu0 0
    %7925 = vmatpush2.bf16.msra.mxu0 0
    %7926 = vmatprep.mubr.bf16.mxu0 0
    %7927 = vmatmul.mubr.bf16.gmra.mxu0 %v7606
    %v7928 = vpop.f32.mrf.mxu0
    %v7929 = vadd.f32 %v7888, %v7928
    %v7930 = vpop.f32.mrf.mxu0
    %v7931 = vadd.f32 %v7890, %v7930
    %v7932 = vpop.f32.mrf.mxu0
    %v7933 = vpop.f32.mrf.mxu0
    %7934 = vdwg.mxu0
    %7935 = vmatprep.subr.bf16.mxu0 %v4199
    %7936 = vmatpush1.bf16.msra.mxu0 %v4198
    %7937 = vmatprep.subr.bf16.mxu0 %v4187
    %7938 = vmatpush1.bf16.msra.mxu0 %v4186
    %7939 = vmatprep.subr.bf16.mxu0 %v4175
    %7940 = vmatpush1.bf16.msra.mxu0 %v4174
    %7941 = vmatprep.subr.bf16.mxu0 %v4163
    %7942 = vmatpush1.bf16.msra.mxu0 %v4162
    %7943 = vmatprep.subr.bf16.mxu0 %v4151
    %7944 = vmatpush1.bf16.msra.mxu0 %v4150
    %7945 = vmatprep.subr.bf16.mxu0 %v4139
    %7946 = vmatpush1.bf16.msra.mxu0 %v4138
    %7947 = vmatprep.subr.bf16.mxu0 %v4127
    %7948 = vmatpush1.bf16.msra.mxu0 %v4126
    %7949 = vmatprep.subr.bf16.mxu0 %v4115
    %7950 = vmatpush1.bf16.msra.mxu0 %v4114
    %7951 = vmatprep.subr.bf16.mxu0 %v4295
    %7952 = vmatpush2.bf16.msra.mxu0 %v4294
    %7953 = vmatprep.subr.bf16.mxu0 %v4283
    %7954 = vmatpush2.bf16.msra.mxu0 %v4282
    %7955 = vmatprep.subr.bf16.mxu0 %v4271
    %7956 = vmatpush2.bf16.msra.mxu0 %v4270
    %7957 = vmatprep.subr.bf16.mxu0 %v4259
    %7958 = vmatpush2.bf16.msra.mxu0 %v4258
    %7959 = vmatprep.subr.bf16.mxu0 %v4247
    %7960 = vmatpush2.bf16.msra.mxu0 %v4246
    %7961 = vmatprep.subr.bf16.mxu0 %v4235
    %7962 = vmatpush2.bf16.msra.mxu0 %v4234
    %7963 = vmatprep.subr.bf16.mxu0 %v4223
    %7964 = vmatpush2.bf16.msra.mxu0 %v4222
    %7965 = vmatprep.subr.bf16.mxu0 %v4211
    %7966 = vmatpush2.bf16.msra.mxu0 %v4210
    %7967 = vmatprep.mubr.bf16.mxu0 %v7605
    %7968 = vmatmul.mubr.bf16.gmra.mxu0 %v7604
    %v7969 = vpop.f32.mrf.mxu0
    %v7970 = vadd.f32 0.0, %v7969
    %v7971 = vpop.f32.mrf.mxu0
    %v7972 = vadd.f32 0.0, %v7971
    %v7973 = vpop.f32.mrf.mxu0
    %v7974 = vpop.f32.mrf.mxu0
    %7975 = vdwg.mxu0
    %7976 = vmatprep.subr.bf16.mxu0 %v4391
    %7977 = vmatpush1.bf16.msra.mxu0 %v4390
    %7978 = vmatprep.subr.bf16.mxu0 %v4379
    %7979 = vmatpush1.bf16.msra.mxu0 %v4378
    %7980 = vmatprep.subr.bf16.mxu0 %v4367
    %7981 = vmatpush1.bf16.msra.mxu0 %v4366
    %7982 = vmatprep.subr.bf16.mxu0 %v4355
    %7983 = vmatpush1.bf16.msra.mxu0 %v4354
    %7984 = vmatprep.subr.bf16.mxu0 %v4343
    %7985 = vmatpush1.bf16.msra.mxu0 %v4342
    %7986 = vmatprep.subr.bf16.mxu0 %v4331
    %7987 = vmatpush1.bf16.msra.mxu0 %v4330
    %7988 = vmatprep.subr.bf16.mxu0 %v4319
    %7989 = vmatpush1.bf16.msra.mxu0 %v4318
    %7990 = vmatprep.subr.bf16.mxu0 %v4307
    %7991 = vmatpush1.bf16.msra.mxu0 %v4306
    %7992 = vmatprep.subr.bf16.mxu0 0
    %7993 = vmatpush2.bf16.msra.mxu0 0
    %7994 = vmatprep.subr.bf16.mxu0 0
    %7995 = vmatpush2.bf16.msra.mxu0 0
    %7996 = vmatprep.subr.bf16.mxu0 0
    %7997 = vmatpush2.bf16.msra.mxu0 0
    %7998 = vmatprep.subr.bf16.mxu0 0
    %7999 = vmatpush2.bf16.msra.mxu0 0
    %8000 = vmatprep.subr.bf16.mxu0 0
    %8001 = vmatpush2.bf16.msra.mxu0 0
    %8002 = vmatprep.subr.bf16.mxu0 0
    %8003 = vmatpush2.bf16.msra.mxu0 0
    %8004 = vmatprep.subr.bf16.mxu0 0
    %8005 = vmatpush2.bf16.msra.mxu0 0
    %8006 = vmatprep.subr.bf16.mxu0 0
    %8007 = vmatpush2.bf16.msra.mxu0 0
    %8008 = vmatprep.mubr.bf16.mxu0 0
    %8009 = vmatmul.mubr.bf16.gmra.mxu0 %v7606
    %v8010 = vpop.f32.mrf.mxu0
    %v8011 = vadd.f32 %v7970, %v8010
    %v8012 = vpop.f32.mrf.mxu0
    %v8013 = vadd.f32 %v7972, %v8012
    %v8014 = vpop.f32.mrf.mxu0
    %v8015 = vpop.f32.mrf.mxu0
    %8016 = vdwg.mxu0
    %8017 = vmatprep.subr.bf16.mxu0 %v4201
    %8018 = vmatpush1.bf16.msra.mxu0 %v4200
    %8019 = vmatprep.subr.bf16.mxu0 %v4189
    %8020 = vmatpush1.bf16.msra.mxu0 %v4188
    %8021 = vmatprep.subr.bf16.mxu0 %v4177
    %8022 = vmatpush1.bf16.msra.mxu0 %v4176
    %8023 = vmatprep.subr.bf16.mxu0 %v4165
    %8024 = vmatpush1.bf16.msra.mxu0 %v4164
    %8025 = vmatprep.subr.bf16.mxu0 %v4153
    %8026 = vmatpush1.bf16.msra.mxu0 %v4152
    %8027 = vmatprep.subr.bf16.mxu0 %v4141
    %8028 = vmatpush1.bf16.msra.mxu0 %v4140
    %8029 = vmatprep.subr.bf16.mxu0 %v4129
    %8030 = vmatpush1.bf16.msra.mxu0 %v4128
    %8031 = vmatprep.subr.bf16.mxu0 %v4117
    %8032 = vmatpush1.bf16.msra.mxu0 %v4116
    %8033 = vmatprep.subr.bf16.mxu0 %v4297
    %8034 = vmatpush2.bf16.msra.mxu0 %v4296
    %8035 = vmatprep.subr.bf16.mxu0 %v4285
    %8036 = vmatpush2.bf16.msra.mxu0 %v4284
    %8037 = vmatprep.subr.bf16.mxu0 %v4273
    %8038 = vmatpush2.bf16.msra.mxu0 %v4272
    %8039 = vmatprep.subr.bf16.mxu0 %v4261
    %8040 = vmatpush2.bf16.msra.mxu0 %v4260
    %8041 = vmatprep.subr.bf16.mxu0 %v4249
    %8042 = vmatpush2.bf16.msra.mxu0 %v4248
    %8043 = vmatprep.subr.bf16.mxu0 %v4237
    %8044 = vmatpush2.bf16.msra.mxu0 %v4236
    %8045 = vmatprep.subr.bf16.mxu0 %v4225
    %8046 = vmatpush2.bf16.msra.mxu0 %v4224
    %8047 = vmatprep.subr.bf16.mxu0 %v4213
    %8048 = vmatpush2.bf16.msra.mxu0 %v4212
    %8049 = vmatprep.mubr.bf16.mxu0 %v7605
    %8050 = vmatmul.mubr.bf16.gmra.mxu0 %v7604
    %v8051 = vpop.f32.mrf.mxu0
    %v8052 = vadd.f32 0.0, %v8051
    %v8053 = vpop.f32.mrf.mxu0
    %v8054 = vadd.f32 0.0, %v8053
    %v8055 = vpop.f32.mrf.mxu0
    %v8056 = vpop.f32.mrf.mxu0
    %8057 = vdwg.mxu0
    %8058 = vmatprep.subr.bf16.mxu0 %v4393
    %8059 = vmatpush1.bf16.msra.mxu0 %v4392
    %8060 = vmatprep.subr.bf16.mxu0 %v4381
    %8061 = vmatpush1.bf16.msra.mxu0 %v4380
    %8062 = vmatprep.subr.bf16.mxu0 %v4369
    %8063 = vmatpush1.bf16.msra.mxu0 %v4368
    %8064 = vmatprep.subr.bf16.mxu0 %v4357
    %8065 = vmatpush1.bf16.msra.mxu0 %v4356
    %8066 = vmatprep.subr.bf16.mxu0 %v4345
    %8067 = vmatpush1.bf16.msra.mxu0 %v4344
    %8068 = vmatprep.subr.bf16.mxu0 %v4333
    %8069 = vmatpush1.bf16.msra.mxu0 %v4332
    %8070 = vmatprep.subr.bf16.mxu0 %v4321
    %8071 = vmatpush1.bf16.msra.mxu0 %v4320
    %8072 = vmatprep.subr.bf16.mxu0 %v4309
    %8073 = vmatpush1.bf16.msra.mxu0 %v4308
    %8074 = vmatprep.subr.bf16.mxu0 0
    %8075 = vmatpush2.bf16.msra.mxu0 0
    %8076 = vmatprep.subr.bf16.mxu0 0
    %8077 = vmatpush2.bf16.msra.mxu0 0
    %8078 = vmatprep.subr.bf16.mxu0 0
    %8079 = vmatpush2.bf16.msra.mxu0 0
    %8080 = vmatprep.subr.bf16.mxu0 0
    %8081 = vmatpush2.bf16.msra.mxu0 0
    %8082 = vmatprep.subr.bf16.mxu0 0
    %8083 = vmatpush2.bf16.msra.mxu0 0
    %8084 = vmatprep.subr.bf16.mxu0 0
    %8085 = vmatpush2.bf16.msra.mxu0 0
    %8086 = vmatprep.subr.bf16.mxu0 0
    %8087 = vmatpush2.bf16.msra.mxu0 0
    %8088 = vmatprep.subr.bf16.mxu0 0
    %8089 = vmatpush2.bf16.msra.mxu0 0
    %8090 = vmatprep.mubr.bf16.mxu0 0
    %8091 = vmatmul.mubr.bf16.gmra.mxu0 %v7606
    %v8092 = vpop.f32.mrf.mxu0
    %v8093 = vadd.f32 %v8052, %v8092
    %v8094 = vpop.f32.mrf.mxu0
    %v8095 = vadd.f32 %v8054, %v8094
    %v8096 = vpop.f32.mrf.mxu0
    %v8097 = vpop.f32.mrf.mxu0
    %8098 = vdwg.mxu0
    %v8099 = vadd.f32 %v7592, %v7683
    %v8100 = vadd.f32 %v7593, %v7685
    %v8101 = vadd.f32 %v7594, %v7765
    %v8102 = vadd.f32 %v7595, %v7767
    %v8103 = vadd.f32 %v7596, %v7847
    %v8104 = vadd.f32 %v7597, %v7849
    %v8105 = vadd.f32 %v7598, %v7929
    %v8106 = vadd.f32 %v7599, %v7931
    %v8107 = vadd.f32 %v7600, %v8011
    %v8108 = vadd.f32 %v7601, %v8013
    %v8109 = vadd.f32 %v7602, %v8093
    %v8110 = vadd.f32 %v7603, %v8095
    %v8111 = vmul.f32 %v8099, 0.5
    %v8112 = vmul.f32 %v8100, 0.5
    %v8113 = vmul.f32 %v8101, 0.5
    %v8114 = vtanh.pop %v8111
    %v8115 = vtanh.pop %v8112
    %v8116 = vtanh.pop %v8113
    %v8117 = vmul.f32 %v8114, 0.5
    %v8118 = vmul.f32 %v8115, 0.5
    %v8119 = vmul.f32 %v8116, 0.5
    %v8120 = vadd.f32 %v8117, 0.5
    %v8121 = vadd.f32 %v8118, 0.5
    %v8122 = vadd.f32 %v8119, 0.5
    %v8123 = vmul.f32 %v8102, 0.5
    %v8124 = vmul.f32 %v8103, 0.5
    %v8125 = vmul.f32 %v8104, 0.5
    %v8126 = vtanh.pop %v8123
    %v8127 = vtanh.pop %v8124
    %v8128 = vtanh.pop %v8125
    %v8129 = vmul.f32 %v8126, 0.5
    %v8130 = vmul.f32 %v8127, 0.5
    %v8131 = vmul.f32 %v8128, 0.5
    %v8132 = vadd.f32 %v8129, 0.5
    %v8133 = vadd.f32 %v8130, 0.5
    %v8134 = vadd.f32 %v8131, 0.5
    %v8135 = vmul.f32 %v8108, 0.5
    %v8136 = vmul.f32 %v8109, 0.5
    %v8137 = vmul.f32 %v8110, 0.5
    %v8138 = vtanh.pop %v8135
    %v8139 = vtanh.pop %v8136
    %v8140 = vtanh.pop %v8137
    %v8141 = vmul.f32 %v8138, 0.5
    %v8142 = vmul.f32 %v8139, 0.5
    %v8143 = vmul.f32 %v8140, 0.5
    %v8144 = vadd.f32 %v8141, 0.5
    %v8145 = vadd.f32 %v8142, 0.5
    %v8146 = vadd.f32 %v8143, 0.5
    %v8147 = vtanh.pop %v8105
    %v8148 = vtanh.pop %v8106
    %v8149 = vtanh.pop %v8107
    %v8150 = vmul.f32 %v8132, %v7571
    %v8151 = vmul.f32 %v8133, %v7572
    %v8152 = vmul.f32 %v8134, %v7573
    %v8153 = vmul.f32 %v8120, %v8147
    %v8154 = vmul.f32 %v8121, %v8148
    %v8155 = vmul.f32 %v8122, %v8149
    %v8156 = vadd.f32 %v8150, %v8153
    %v8157 = vadd.f32 %v8151, %v8154
    %v8158 = vadd.f32 %v8152, %v8155
    %v8159 = vtanh.pop %v8156
    %v8160 = vtanh.pop %v8157
    %v8161 = vtanh.pop %v8158
    %v8162 = vmul.f32 %v8144, %v8159
    %v8163 = vmul.f32 %v8145, %v8160
    %v8164 = vmul.f32 %v8146, %v8161
    %vm8165 = vcmp.eq.s32.totalorder %v2938, 5
    %v8166 = vsel %vm8165, 1, 0
    %8167 = vset.pattern.permute.xlu0 0
    %8168 = vperm.xlu0 %8167, %v8166
    %v8169 = vpop.permute.xlu0 %8168
    %vm8170 = vcmp.eq.s32.totalorder %v8169, 1
    %v8171 = vsel %vm8170, %v8162, %v7586
    %v8172 = vsel %vm8170, %v8163, %v7587
    %v8173 = vsel %vm8170, %v8164, %v7588
    %s8174 = smul.u32 6, 12
    %s8175 = smul.addr %s8174, 8
    %s8176 = scalar_lea.vmem [#allocation2], %s8175
    %v8177 = vld [vmem:[%s8176] sm:$0xff]
    %v8178 = vld [vmem:[%s8176 + $0x8] sm:$0xff]
    %v8179 = vld [vmem:[%s8176 + $0x10] sm:$0xff]
    %v8180 = vld [vmem:[%s8176 + $0x18] sm:$0xff]
    %v8181 = vld [vmem:[%s8176 + $0x20] sm:$0xff]
    %v8182 = vld [vmem:[%s8176 + $0x28] sm:$0xff]
    %v8183 = vld [vmem:[%s8176 + $0x30] sm:$0xff]
    %v8184 = vld [vmem:[%s8176 + $0x38] sm:$0xff]
    %v8185 = vld [vmem:[%s8176 + $0x40] sm:$0xff]
    %v8186 = vld [vmem:[%s8176 + $0x48] sm:$0xff]
    %v8187 = vld [vmem:[%s8176 + $0x50] sm:$0xff]
    %v8188 = vld [vmem:[%s8176 + $0x58] sm:$0xff]
    %v8189 = vpack.c.bf16 %v8162, %v8162
    %v8190 = vpack.c.bf16 %v8163, %v8163
    %v8191 = vpack.c.bf16 %v8164, %v8164
    %8192 = vmatprep.subr.bf16.mxu0 %v4191
    %8193 = vmatpush1.bf16.msra.mxu0 %v4190
    %8194 = vmatprep.subr.bf16.mxu0 %v4179
    %8195 = vmatpush1.bf16.msra.mxu0 %v4178
    %8196 = vmatprep.subr.bf16.mxu0 %v4167
    %8197 = vmatpush1.bf16.msra.mxu0 %v4166
    %8198 = vmatprep.subr.bf16.mxu0 %v4155
    %8199 = vmatpush1.bf16.msra.mxu0 %v4154
    %8200 = vmatprep.subr.bf16.mxu0 %v4143
    %8201 = vmatpush1.bf16.msra.mxu0 %v4142
    %8202 = vmatprep.subr.bf16.mxu0 %v4131
    %8203 = vmatpush1.bf16.msra.mxu0 %v4130
    %8204 = vmatprep.subr.bf16.mxu0 %v4119
    %8205 = vmatpush1.bf16.msra.mxu0 %v4118
    %8206 = vmatprep.subr.bf16.mxu0 %v4107
    %8207 = vmatpush1.bf16.msra.mxu0 %v4106
    %8208 = vmatprep.subr.bf16.mxu0 %v4287
    %8209 = vmatpush2.bf16.msra.mxu0 %v4286
    %8210 = vmatprep.subr.bf16.mxu0 %v4275
    %8211 = vmatpush2.bf16.msra.mxu0 %v4274
    %8212 = vmatprep.subr.bf16.mxu0 %v4263
    %8213 = vmatpush2.bf16.msra.mxu0 %v4262
    %8214 = vmatprep.subr.bf16.mxu0 %v4251
    %8215 = vmatpush2.bf16.msra.mxu0 %v4250
    %8216 = vmatprep.subr.bf16.mxu0 %v4239
    %8217 = vmatpush2.bf16.msra.mxu0 %v4238
    %8218 = vmatprep.subr.bf16.mxu0 %v4227
    %8219 = vmatpush2.bf16.msra.mxu0 %v4226
    %8220 = vmatprep.subr.bf16.mxu0 %v4215
    %8221 = vmatpush2.bf16.msra.mxu0 %v4214
    %8222 = vmatprep.subr.bf16.mxu0 %v4203
    %8223 = vmatpush2.bf16.msra.mxu0 %v4202
    %8224 = vmatprep.mubr.bf16.mxu0 %v8190
    %8225 = vmatmul.mubr.bf16.gmra.mxu0 %v8189
    %v8226 = vpop.f32.mrf.mxu0
    %v8227 = vadd.f32 0.0, %v8226
    %v8228 = vpop.f32.mrf.mxu0
    %v8229 = vadd.f32 0.0, %v8228
    %v8230 = vpop.f32.mrf.mxu0
    %v8231 = vpop.f32.mrf.mxu0
    %8232 = vdwg.mxu0
    %8233 = vmatprep.subr.bf16.mxu0 %v4383
    %8234 = vmatpush1.bf16.msra.mxu0 %v4382
    %8235 = vmatprep.subr.bf16.mxu0 %v4371
    %8236 = vmatpush1.bf16.msra.mxu0 %v4370
    %8237 = vmatprep.subr.bf16.mxu0 %v4359
    %8238 = vmatpush1.bf16.msra.mxu0 %v4358
    %8239 = vmatprep.subr.bf16.mxu0 %v4347
    %8240 = vmatpush1.bf16.msra.mxu0 %v4346
    %8241 = vmatprep.subr.bf16.mxu0 %v4335
    %8242 = vmatpush1.bf16.msra.mxu0 %v4334
    %8243 = vmatprep.subr.bf16.mxu0 %v4323
    %8244 = vmatpush1.bf16.msra.mxu0 %v4322
    %8245 = vmatprep.subr.bf16.mxu0 %v4311
    %8246 = vmatpush1.bf16.msra.mxu0 %v4310
    %8247 = vmatprep.subr.bf16.mxu0 %v4299
    %8248 = vmatpush1.bf16.msra.mxu0 %v4298
    %8249 = vmatprep.subr.bf16.mxu0 0
    %8250 = vmatpush2.bf16.msra.mxu0 0
    %8251 = vmatprep.subr.bf16.mxu0 0
    %8252 = vmatpush2.bf16.msra.mxu0 0
    %8253 = vmatprep.subr.bf16.mxu0 0
    %8254 = vmatpush2.bf16.msra.mxu0 0
    %8255 = vmatprep.subr.bf16.mxu0 0
    %8256 = vmatpush2.bf16.msra.mxu0 0
    %8257 = vmatprep.subr.bf16.mxu0 0
    %8258 = vmatpush2.bf16.msra.mxu0 0
    %8259 = vmatprep.subr.bf16.mxu0 0
    %8260 = vmatpush2.bf16.msra.mxu0 0
    %8261 = vmatprep.subr.bf16.mxu0 0
    %8262 = vmatpush2.bf16.msra.mxu0 0
    %8263 = vmatprep.subr.bf16.mxu0 0
    %8264 = vmatpush2.bf16.msra.mxu0 0
    %8265 = vmatprep.mubr.bf16.mxu0 0
    %8266 = vmatmul.mubr.bf16.gmra.mxu0 %v8191
    %v8267 = vpop.f32.mrf.mxu0
    %v8268 = vadd.f32 %v8227, %v8267
    %v8269 = vpop.f32.mrf.mxu0
    %v8270 = vadd.f32 %v8229, %v8269
    %v8271 = vpop.f32.mrf.mxu0
    %v8272 = vpop.f32.mrf.mxu0
    %8273 = vdwg.mxu0
    %8274 = vmatprep.subr.bf16.mxu0 %v4193
    %8275 = vmatpush1.bf16.msra.mxu0 %v4192
    %8276 = vmatprep.subr.bf16.mxu0 %v4181
    %8277 = vmatpush1.bf16.msra.mxu0 %v4180
    %8278 = vmatprep.subr.bf16.mxu0 %v4169
    %8279 = vmatpush1.bf16.msra.mxu0 %v4168
    %8280 = vmatprep.subr.bf16.mxu0 %v4157
    %8281 = vmatpush1.bf16.msra.mxu0 %v4156
    %8282 = vmatprep.subr.bf16.mxu0 %v4145
    %8283 = vmatpush1.bf16.msra.mxu0 %v4144
    %8284 = vmatprep.subr.bf16.mxu0 %v4133
    %8285 = vmatpush1.bf16.msra.mxu0 %v4132
    %8286 = vmatprep.subr.bf16.mxu0 %v4121
    %8287 = vmatpush1.bf16.msra.mxu0 %v4120
    %8288 = vmatprep.subr.bf16.mxu0 %v4109
    %8289 = vmatpush1.bf16.msra.mxu0 %v4108
    %8290 = vmatprep.subr.bf16.mxu0 %v4289
    %8291 = vmatpush2.bf16.msra.mxu0 %v4288
    %8292 = vmatprep.subr.bf16.mxu0 %v4277
    %8293 = vmatpush2.bf16.msra.mxu0 %v4276
    %8294 = vmatprep.subr.bf16.mxu0 %v4265
    %8295 = vmatpush2.bf16.msra.mxu0 %v4264
    %8296 = vmatprep.subr.bf16.mxu0 %v4253
    %8297 = vmatpush2.bf16.msra.mxu0 %v4252
    %8298 = vmatprep.subr.bf16.mxu0 %v4241
    %8299 = vmatpush2.bf16.msra.mxu0 %v4240
    %8300 = vmatprep.subr.bf16.mxu0 %v4229
    %8301 = vmatpush2.bf16.msra.mxu0 %v4228
    %8302 = vmatprep.subr.bf16.mxu0 %v4217
    %8303 = vmatpush2.bf16.msra.mxu0 %v4216
    %8304 = vmatprep.subr.bf16.mxu0 %v4205
    %8305 = vmatpush2.bf16.msra.mxu0 %v4204
    %8306 = vmatprep.mubr.bf16.mxu0 %v8190
    %8307 = vmatmul.mubr.bf16.gmra.mxu0 %v8189
    %v8308 = vpop.f32.mrf.mxu0
    %v8309 = vadd.f32 0.0, %v8308
    %v8310 = vpop.f32.mrf.mxu0
    %v8311 = vadd.f32 0.0, %v8310
    %v8312 = vpop.f32.mrf.mxu0
    %v8313 = vpop.f32.mrf.mxu0
    %8314 = vdwg.mxu0
    %8315 = vmatprep.subr.bf16.mxu0 %v4385
    %8316 = vmatpush1.bf16.msra.mxu0 %v4384
    %8317 = vmatprep.subr.bf16.mxu0 %v4373
    %8318 = vmatpush1.bf16.msra.mxu0 %v4372
    %8319 = vmatprep.subr.bf16.mxu0 %v4361
    %8320 = vmatpush1.bf16.msra.mxu0 %v4360
    %8321 = vmatprep.subr.bf16.mxu0 %v4349
    %8322 = vmatpush1.bf16.msra.mxu0 %v4348
    %8323 = vmatprep.subr.bf16.mxu0 %v4337
    %8324 = vmatpush1.bf16.msra.mxu0 %v4336
    %8325 = vmatprep.subr.bf16.mxu0 %v4325
    %8326 = vmatpush1.bf16.msra.mxu0 %v4324
    %8327 = vmatprep.subr.bf16.mxu0 %v4313
    %8328 = vmatpush1.bf16.msra.mxu0 %v4312
    %8329 = vmatprep.subr.bf16.mxu0 %v4301
    %8330 = vmatpush1.bf16.msra.mxu0 %v4300
    %8331 = vmatprep.subr.bf16.mxu0 0
    %8332 = vmatpush2.bf16.msra.mxu0 0
    %8333 = vmatprep.subr.bf16.mxu0 0
    %8334 = vmatpush2.bf16.msra.mxu0 0
    %8335 = vmatprep.subr.bf16.mxu0 0
    %8336 = vmatpush2.bf16.msra.mxu0 0
    %8337 = vmatprep.subr.bf16.mxu0 0
    %8338 = vmatpush2.bf16.msra.mxu0 0
    %8339 = vmatprep.subr.bf16.mxu0 0
    %8340 = vmatpush2.bf16.msra.mxu0 0
    %8341 = vmatprep.subr.bf16.mxu0 0
    %8342 = vmatpush2.bf16.msra.mxu0 0
    %8343 = vmatprep.subr.bf16.mxu0 0
    %8344 = vmatpush2.bf16.msra.mxu0 0
    %8345 = vmatprep.subr.bf16.mxu0 0
    %8346 = vmatpush2.bf16.msra.mxu0 0
    %8347 = vmatprep.mubr.bf16.mxu0 0
    %8348 = vmatmul.mubr.bf16.gmra.mxu0 %v8191
    %v8349 = vpop.f32.mrf.mxu0
    %v8350 = vadd.f32 %v8309, %v8349
    %v8351 = vpop.f32.mrf.mxu0
    %v8352 = vadd.f32 %v8311, %v8351
    %v8353 = vpop.f32.mrf.mxu0
    %v8354 = vpop.f32.mrf.mxu0
    %8355 = vdwg.mxu0
    %8356 = vmatprep.subr.bf16.mxu0 %v4195
    %8357 = vmatpush1.bf16.msra.mxu0 %v4194
    %8358 = vmatprep.subr.bf16.mxu0 %v4183
    %8359 = vmatpush1.bf16.msra.mxu0 %v4182
    %8360 = vmatprep.subr.bf16.mxu0 %v4171
    %8361 = vmatpush1.bf16.msra.mxu0 %v4170
    %8362 = vmatprep.subr.bf16.mxu0 %v4159
    %8363 = vmatpush1.bf16.msra.mxu0 %v4158
    %8364 = vmatprep.subr.bf16.mxu0 %v4147
    %8365 = vmatpush1.bf16.msra.mxu0 %v4146
    %8366 = vmatprep.subr.bf16.mxu0 %v4135
    %8367 = vmatpush1.bf16.msra.mxu0 %v4134
    %8368 = vmatprep.subr.bf16.mxu0 %v4123
    %8369 = vmatpush1.bf16.msra.mxu0 %v4122
    %8370 = vmatprep.subr.bf16.mxu0 %v4111
    %8371 = vmatpush1.bf16.msra.mxu0 %v4110
    %8372 = vmatprep.subr.bf16.mxu0 %v4291
    %8373 = vmatpush2.bf16.msra.mxu0 %v4290
    %8374 = vmatprep.subr.bf16.mxu0 %v4279
    %8375 = vmatpush2.bf16.msra.mxu0 %v4278
    %8376 = vmatprep.subr.bf16.mxu0 %v4267
    %8377 = vmatpush2.bf16.msra.mxu0 %v4266
    %8378 = vmatprep.subr.bf16.mxu0 %v4255
    %8379 = vmatpush2.bf16.msra.mxu0 %v4254
    %8380 = vmatprep.subr.bf16.mxu0 %v4243
    %8381 = vmatpush2.bf16.msra.mxu0 %v4242
    %8382 = vmatprep.subr.bf16.mxu0 %v4231
    %8383 = vmatpush2.bf16.msra.mxu0 %v4230
    %8384 = vmatprep.subr.bf16.mxu0 %v4219
    %8385 = vmatpush2.bf16.msra.mxu0 %v4218
    %8386 = vmatprep.subr.bf16.mxu0 %v4207
    %8387 = vmatpush2.bf16.msra.mxu0 %v4206
    %8388 = vmatprep.mubr.bf16.mxu0 %v8190
    %8389 = vmatmul.mubr.bf16.gmra.mxu0 %v8189
    %v8390 = vpop.f32.mrf.mxu0
    %v8391 = vadd.f32 0.0, %v8390
    %v8392 = vpop.f32.mrf.mxu0
    %v8393 = vadd.f32 0.0, %v8392
    %v8394 = vpop.f32.mrf.mxu0
    %v8395 = vpop.f32.mrf.mxu0
    %8396 = vdwg.mxu0
    %8397 = vmatprep.subr.bf16.mxu0 %v4387
    %8398 = vmatpush1.bf16.msra.mxu0 %v4386
    %8399 = vmatprep.subr.bf16.mxu0 %v4375
    %8400 = vmatpush1.bf16.msra.mxu0 %v4374
    %8401 = vmatprep.subr.bf16.mxu0 %v4363
    %8402 = vmatpush1.bf16.msra.mxu0 %v4362
    %8403 = vmatprep.subr.bf16.mxu0 %v4351
    %8404 = vmatpush1.bf16.msra.mxu0 %v4350
    %8405 = vmatprep.subr.bf16.mxu0 %v4339
    %8406 = vmatpush1.bf16.msra.mxu0 %v4338
    %8407 = vmatprep.subr.bf16.mxu0 %v4327
    %8408 = vmatpush1.bf16.msra.mxu0 %v4326
    %8409 = vmatprep.subr.bf16.mxu0 %v4315
    %8410 = vmatpush1.bf16.msra.mxu0 %v4314
    %8411 = vmatprep.subr.bf16.mxu0 %v4303
    %8412 = vmatpush1.bf16.msra.mxu0 %v4302
    %8413 = vmatprep.subr.bf16.mxu0 0
    %8414 = vmatpush2.bf16.msra.mxu0 0
    %8415 = vmatprep.subr.bf16.mxu0 0
    %8416 = vmatpush2.bf16.msra.mxu0 0
    %8417 = vmatprep.subr.bf16.mxu0 0
    %8418 = vmatpush2.bf16.msra.mxu0 0
    %8419 = vmatprep.subr.bf16.mxu0 0
    %8420 = vmatpush2.bf16.msra.mxu0 0
    %8421 = vmatprep.subr.bf16.mxu0 0
    %8422 = vmatpush2.bf16.msra.mxu0 0
    %8423 = vmatprep.subr.bf16.mxu0 0
    %8424 = vmatpush2.bf16.msra.mxu0 0
    %8425 = vmatprep.subr.bf16.mxu0 0
    %8426 = vmatpush2.bf16.msra.mxu0 0
    %8427 = vmatprep.subr.bf16.mxu0 0
    %8428 = vmatpush2.bf16.msra.mxu0 0
    %8429 = vmatprep.mubr.bf16.mxu0 0
    %8430 = vmatmul.mubr.bf16.gmra.mxu0 %v8191
    %v8431 = vpop.f32.mrf.mxu0
    %v8432 = vadd.f32 %v8391, %v8431
    %v8433 = vpop.f32.mrf.mxu0
    %v8434 = vadd.f32 %v8393, %v8433
    %v8435 = vpop.f32.mrf.mxu0
    %v8436 = vpop.f32.mrf.mxu0
    %8437 = vdwg.mxu0
    %8438 = vmatprep.subr.bf16.mxu0 %v4197
    %8439 = vmatpush1.bf16.msra.mxu0 %v4196
    %8440 = vmatprep.subr.bf16.mxu0 %v4185
    %8441 = vmatpush1.bf16.msra.mxu0 %v4184
    %8442 = vmatprep.subr.bf16.mxu0 %v4173
    %8443 = vmatpush1.bf16.msra.mxu0 %v4172
    %8444 = vmatprep.subr.bf16.mxu0 %v4161
    %8445 = vmatpush1.bf16.msra.mxu0 %v4160
    %8446 = vmatprep.subr.bf16.mxu0 %v4149
    %8447 = vmatpush1.bf16.msra.mxu0 %v4148
    %8448 = vmatprep.subr.bf16.mxu0 %v4137
    %8449 = vmatpush1.bf16.msra.mxu0 %v4136
    %8450 = vmatprep.subr.bf16.mxu0 %v4125
    %8451 = vmatpush1.bf16.msra.mxu0 %v4124
    %8452 = vmatprep.subr.bf16.mxu0 %v4113
    %8453 = vmatpush1.bf16.msra.mxu0 %v4112
    %8454 = vmatprep.subr.bf16.mxu0 %v4293
    %8455 = vmatpush2.bf16.msra.mxu0 %v4292
    %8456 = vmatprep.subr.bf16.mxu0 %v4281
    %8457 = vmatpush2.bf16.msra.mxu0 %v4280
    %8458 = vmatprep.subr.bf16.mxu0 %v4269
    %8459 = vmatpush2.bf16.msra.mxu0 %v4268
    %8460 = vmatprep.subr.bf16.mxu0 %v4257
    %8461 = vmatpush2.bf16.msra.mxu0 %v4256
    %8462 = vmatprep.subr.bf16.mxu0 %v4245
    %8463 = vmatpush2.bf16.msra.mxu0 %v4244
    %8464 = vmatprep.subr.bf16.mxu0 %v4233
    %8465 = vmatpush2.bf16.msra.mxu0 %v4232
    %8466 = vmatprep.subr.bf16.mxu0 %v4221
    %8467 = vmatpush2.bf16.msra.mxu0 %v4220
    %8468 = vmatprep.subr.bf16.mxu0 %v4209
    %8469 = vmatpush2.bf16.msra.mxu0 %v4208
    %8470 = vmatprep.mubr.bf16.mxu0 %v8190
    %8471 = vmatmul.mubr.bf16.gmra.mxu0 %v8189
    %v8472 = vpop.f32.mrf.mxu0
    %v8473 = vadd.f32 0.0, %v8472
    %v8474 = vpop.f32.mrf.mxu0
    %v8475 = vadd.f32 0.0, %v8474
    %v8476 = vpop.f32.mrf.mxu0
    %v8477 = vpop.f32.mrf.mxu0
    %8478 = vdwg.mxu0
    %8479 = vmatprep.subr.bf16.mxu0 %v4389
    %8480 = vmatpush1.bf16.msra.mxu0 %v4388
    %8481 = vmatprep.subr.bf16.mxu0 %v4377
    %8482 = vmatpush1.bf16.msra.mxu0 %v4376
    %8483 = vmatprep.subr.bf16.mxu0 %v4365
    %8484 = vmatpush1.bf16.msra.mxu0 %v4364
    %8485 = vmatprep.subr.bf16.mxu0 %v4353
    %8486 = vmatpush1.bf16.msra.mxu0 %v4352
    %8487 = vmatprep.subr.bf16.mxu0 %v4341
    %8488 = vmatpush1.bf16.msra.mxu0 %v4340
    %8489 = vmatprep.subr.bf16.mxu0 %v4329
    %8490 = vmatpush1.bf16.msra.mxu0 %v4328
    %8491 = vmatprep.subr.bf16.mxu0 %v4317
    %8492 = vmatpush1.bf16.msra.mxu0 %v4316
    %8493 = vmatprep.subr.bf16.mxu0 %v4305
    %8494 = vmatpush1.bf16.msra.mxu0 %v4304
    %8495 = vmatprep.subr.bf16.mxu0 0
    %8496 = vmatpush2.bf16.msra.mxu0 0
    %8497 = vmatprep.subr.bf16.mxu0 0
    %8498 = vmatpush2.bf16.msra.mxu0 0
    %8499 = vmatprep.subr.bf16.mxu0 0
    %8500 = vmatpush2.bf16.msra.mxu0 0
    %8501 = vmatprep.subr.bf16.mxu0 0
    %8502 = vmatpush2.bf16.msra.mxu0 0
    %8503 = vmatprep.subr.bf16.mxu0 0
    %8504 = vmatpush2.bf16.msra.mxu0 0
    %8505 = vmatprep.subr.bf16.mxu0 0
    %8506 = vmatpush2.bf16.msra.mxu0 0
    %8507 = vmatprep.subr.bf16.mxu0 0
    %8508 = vmatpush2.bf16.msra.mxu0 0
    %8509 = vmatprep.subr.bf16.mxu0 0
    %8510 = vmatpush2.bf16.msra.mxu0 0
    %8511 = vmatprep.mubr.bf16.mxu0 0
    %8512 = vmatmul.mubr.bf16.gmra.mxu0 %v8191
    %v8513 = vpop.f32.mrf.mxu0
    %v8514 = vadd.f32 %v8473, %v8513
    %v8515 = vpop.f32.mrf.mxu0
    %v8516 = vadd.f32 %v8475, %v8515
    %v8517 = vpop.f32.mrf.mxu0
    %v8518 = vpop.f32.mrf.mxu0
    %8519 = vdwg.mxu0
    %8520 = vmatprep.subr.bf16.mxu0 %v4199
    %8521 = vmatpush1.bf16.msra.mxu0 %v4198
    %8522 = vmatprep.subr.bf16.mxu0 %v4187
    %8523 = vmatpush1.bf16.msra.mxu0 %v4186
    %8524 = vmatprep.subr.bf16.mxu0 %v4175
    %8525 = vmatpush1.bf16.msra.mxu0 %v4174
    %8526 = vmatprep.subr.bf16.mxu0 %v4163
    %8527 = vmatpush1.bf16.msra.mxu0 %v4162
    %8528 = vmatprep.subr.bf16.mxu0 %v4151
    %8529 = vmatpush1.bf16.msra.mxu0 %v4150
    %8530 = vmatprep.subr.bf16.mxu0 %v4139
    %8531 = vmatpush1.bf16.msra.mxu0 %v4138
    %8532 = vmatprep.subr.bf16.mxu0 %v4127
    %8533 = vmatpush1.bf16.msra.mxu0 %v4126
    %8534 = vmatprep.subr.bf16.mxu0 %v4115
    %8535 = vmatpush1.bf16.msra.mxu0 %v4114
    %8536 = vmatprep.subr.bf16.mxu0 %v4295
    %8537 = vmatpush2.bf16.msra.mxu0 %v4294
    %8538 = vmatprep.subr.bf16.mxu0 %v4283
    %8539 = vmatpush2.bf16.msra.mxu0 %v4282
    %8540 = vmatprep.subr.bf16.mxu0 %v4271
    %8541 = vmatpush2.bf16.msra.mxu0 %v4270
    %8542 = vmatprep.subr.bf16.mxu0 %v4259
    %8543 = vmatpush2.bf16.msra.mxu0 %v4258
    %8544 = vmatprep.subr.bf16.mxu0 %v4247
    %8545 = vmatpush2.bf16.msra.mxu0 %v4246
    %8546 = vmatprep.subr.bf16.mxu0 %v4235
    %8547 = vmatpush2.bf16.msra.mxu0 %v4234
    %8548 = vmatprep.subr.bf16.mxu0 %v4223
    %8549 = vmatpush2.bf16.msra.mxu0 %v4222
    %8550 = vmatprep.subr.bf16.mxu0 %v4211
    %8551 = vmatpush2.bf16.msra.mxu0 %v4210
    %8552 = vmatprep.mubr.bf16.mxu0 %v8190
    %8553 = vmatmul.mubr.bf16.gmra.mxu0 %v8189
    %v8554 = vpop.f32.mrf.mxu0
    %v8555 = vadd.f32 0.0, %v8554
    %v8556 = vpop.f32.mrf.mxu0
    %v8557 = vadd.f32 0.0, %v8556
    %v8558 = vpop.f32.mrf.mxu0
    %v8559 = vpop.f32.mrf.mxu0
    %8560 = vdwg.mxu0
    %8561 = vmatprep.subr.bf16.mxu0 %v4391
    %8562 = vmatpush1.bf16.msra.mxu0 %v4390
    %8563 = vmatprep.subr.bf16.mxu0 %v4379
    %8564 = vmatpush1.bf16.msra.mxu0 %v4378
    %8565 = vmatprep.subr.bf16.mxu0 %v4367
    %8566 = vmatpush1.bf16.msra.mxu0 %v4366
    %8567 = vmatprep.subr.bf16.mxu0 %v4355
    %8568 = vmatpush1.bf16.msra.mxu0 %v4354
    %8569 = vmatprep.subr.bf16.mxu0 %v4343
    %8570 = vmatpush1.bf16.msra.mxu0 %v4342
    %8571 = vmatprep.subr.bf16.mxu0 %v4331
    %8572 = vmatpush1.bf16.msra.mxu0 %v4330
    %8573 = vmatprep.subr.bf16.mxu0 %v4319
    %8574 = vmatpush1.bf16.msra.mxu0 %v4318
    %8575 = vmatprep.subr.bf16.mxu0 %v4307
    %8576 = vmatpush1.bf16.msra.mxu0 %v4306
    %8577 = vmatprep.subr.bf16.mxu0 0
    %8578 = vmatpush2.bf16.msra.mxu0 0
    %8579 = vmatprep.subr.bf16.mxu0 0
    %8580 = vmatpush2.bf16.msra.mxu0 0
    %8581 = vmatprep.subr.bf16.mxu0 0
    %8582 = vmatpush2.bf16.msra.mxu0 0
    %8583 = vmatprep.subr.bf16.mxu0 0
    %8584 = vmatpush2.bf16.msra.mxu0 0
    %8585 = vmatprep.subr.bf16.mxu0 0
    %8586 = vmatpush2.bf16.msra.mxu0 0
    %8587 = vmatprep.subr.bf16.mxu0 0
    %8588 = vmatpush2.bf16.msra.mxu0 0
    %8589 = vmatprep.subr.bf16.mxu0 0
    %8590 = vmatpush2.bf16.msra.mxu0 0
    %8591 = vmatprep.subr.bf16.mxu0 0
    %8592 = vmatpush2.bf16.msra.mxu0 0
    %8593 = vmatprep.mubr.bf16.mxu0 0
    %8594 = vmatmul.mubr.bf16.gmra.mxu0 %v8191
    %v8595 = vpop.f32.mrf.mxu0
    %v8596 = vadd.f32 %v8555, %v8595
    %v8597 = vpop.f32.mrf.mxu0
    %v8598 = vadd.f32 %v8557, %v8597
    %v8599 = vpop.f32.mrf.mxu0
    %v8600 = vpop.f32.mrf.mxu0
    %8601 = vdwg.mxu0
    %8602 = vmatprep.subr.bf16.mxu0 %v4201
    %8603 = vmatpush1.bf16.msra.mxu0 %v4200
    %8604 = vmatprep.subr.bf16.mxu0 %v4189
    %8605 = vmatpush1.bf16.msra.mxu0 %v4188
    %8606 = vmatprep.subr.bf16.mxu0 %v4177
    %8607 = vmatpush1.bf16.msra.mxu0 %v4176
    %8608 = vmatprep.subr.bf16.mxu0 %v4165
    %8609 = vmatpush1.bf16.msra.mxu0 %v4164
    %8610 = vmatprep.subr.bf16.mxu0 %v4153
    %8611 = vmatpush1.bf16.msra.mxu0 %v4152
    %8612 = vmatprep.subr.bf16.mxu0 %v4141
    %8613 = vmatpush1.bf16.msra.mxu0 %v4140
    %8614 = vmatprep.subr.bf16.mxu0 %v4129
    %8615 = vmatpush1.bf16.msra.mxu0 %v4128
    %8616 = vmatprep.subr.bf16.mxu0 %v4117
    %8617 = vmatpush1.bf16.msra.mxu0 %v4116
    %8618 = vmatprep.subr.bf16.mxu0 %v4297
    %8619 = vmatpush2.bf16.msra.mxu0 %v4296
    %8620 = vmatprep.subr.bf16.mxu0 %v4285
    %8621 = vmatpush2.bf16.msra.mxu0 %v4284
    %8622 = vmatprep.subr.bf16.mxu0 %v4273
    %8623 = vmatpush2.bf16.msra.mxu0 %v4272
    %8624 = vmatprep.subr.bf16.mxu0 %v4261
    %8625 = vmatpush2.bf16.msra.mxu0 %v4260
    %8626 = vmatprep.subr.bf16.mxu0 %v4249
    %8627 = vmatpush2.bf16.msra.mxu0 %v4248
    %8628 = vmatprep.subr.bf16.mxu0 %v4237
    %8629 = vmatpush2.bf16.msra.mxu0 %v4236
    %8630 = vmatprep.subr.bf16.mxu0 %v4225
    %8631 = vmatpush2.bf16.msra.mxu0 %v4224
    %8632 = vmatprep.subr.bf16.mxu0 %v4213
    %8633 = vmatpush2.bf16.msra.mxu0 %v4212
    %8634 = vmatprep.mubr.bf16.mxu0 %v8190
    %8635 = vmatmul.mubr.bf16.gmra.mxu0 %v8189
    %v8636 = vpop.f32.mrf.mxu0
    %v8637 = vadd.f32 0.0, %v8636
    %v8638 = vpop.f32.mrf.mxu0
    %v8639 = vadd.f32 0.0, %v8638
    %v8640 = vpop.f32.mrf.mxu0
    %v8641 = vpop.f32.mrf.mxu0
    %8642 = vdwg.mxu0
    %8643 = vmatprep.subr.bf16.mxu0 %v4393
    %8644 = vmatpush1.bf16.msra.mxu0 %v4392
    %8645 = vmatprep.subr.bf16.mxu0 %v4381
    %8646 = vmatpush1.bf16.msra.mxu0 %v4380
    %8647 = vmatprep.subr.bf16.mxu0 %v4369
    %8648 = vmatpush1.bf16.msra.mxu0 %v4368
    %8649 = vmatprep.subr.bf16.mxu0 %v4357
    %8650 = vmatpush1.bf16.msra.mxu0 %v4356
    %8651 = vmatprep.subr.bf16.mxu0 %v4345
    %8652 = vmatpush1.bf16.msra.mxu0 %v4344
    %8653 = vmatprep.subr.bf16.mxu0 %v4333
    %8654 = vmatpush1.bf16.msra.mxu0 %v4332
    %8655 = vmatprep.subr.bf16.mxu0 %v4321
    %8656 = vmatpush1.bf16.msra.mxu0 %v4320
    %8657 = vmatprep.subr.bf16.mxu0 %v4309
    %8658 = vmatpush1.bf16.msra.mxu0 %v4308
    %8659 = vmatprep.subr.bf16.mxu0 0
    %8660 = vmatpush2.bf16.msra.mxu0 0
    %8661 = vmatprep.subr.bf16.mxu0 0
    %8662 = vmatpush2.bf16.msra.mxu0 0
    %8663 = vmatprep.subr.bf16.mxu0 0
    %8664 = vmatpush2.bf16.msra.mxu0 0
    %8665 = vmatprep.subr.bf16.mxu0 0
    %8666 = vmatpush2.bf16.msra.mxu0 0
    %8667 = vmatprep.subr.bf16.mxu0 0
    %8668 = vmatpush2.bf16.msra.mxu0 0
    %8669 = vmatprep.subr.bf16.mxu0 0
    %8670 = vmatpush2.bf16.msra.mxu0 0
    %8671 = vmatprep.subr.bf16.mxu0 0
    %8672 = vmatpush2.bf16.msra.mxu0 0
    %8673 = vmatprep.subr.bf16.mxu0 0
    %8674 = vmatpush2.bf16.msra.mxu0 0
    %8675 = vmatprep.mubr.bf16.mxu0 0
    %8676 = vmatmul.mubr.bf16.gmra.mxu0 %v8191
    %v8677 = vpop.f32.mrf.mxu0
    %v8678 = vadd.f32 %v8637, %v8677
    %v8679 = vpop.f32.mrf.mxu0
    %v8680 = vadd.f32 %v8639, %v8679
    %v8681 = vpop.f32.mrf.mxu0
    %v8682 = vpop.f32.mrf.mxu0
    %8683 = vdwg.mxu0
    %v8684 = vadd.f32 %v8177, %v8268
    %v8685 = vadd.f32 %v8178, %v8270
    %v8686 = vadd.f32 %v8179, %v8350
    %v8687 = vadd.f32 %v8180, %v8352
    %v8688 = vadd.f32 %v8181, %v8432
    %v8689 = vadd.f32 %v8182, %v8434
    %v8690 = vadd.f32 %v8183, %v8514
    %v8691 = vadd.f32 %v8184, %v8516
    %v8692 = vadd.f32 %v8185, %v8596
    %v8693 = vadd.f32 %v8186, %v8598
    %v8694 = vadd.f32 %v8187, %v8678
    %v8695 = vadd.f32 %v8188, %v8680
    %v8696 = vmul.f32 %v8684, 0.5
    %v8697 = vmul.f32 %v8685, 0.5
    %v8698 = vmul.f32 %v8686, 0.5
    %v8699 = vtanh.pop %v8696
    %v8700 = vtanh.pop %v8697
    %v8701 = vtanh.pop %v8698
    %v8702 = vmul.f32 %v8699, 0.5
    %v8703 = vmul.f32 %v8700, 0.5
    %v8704 = vmul.f32 %v8701, 0.5
    %v8705 = vadd.f32 %v8702, 0.5
    %v8706 = vadd.f32 %v8703, 0.5
    %v8707 = vadd.f32 %v8704, 0.5
    %v8708 = vmul.f32 %v8687, 0.5
    %v8709 = vmul.f32 %v8688, 0.5
    %v8710 = vmul.f32 %v8689, 0.5
    %v8711 = vtanh.pop %v8708
    %v8712 = vtanh.pop %v8709
    %v8713 = vtanh.pop %v8710
    %v8714 = vmul.f32 %v8711, 0.5
    %v8715 = vmul.f32 %v8712, 0.5
    %v8716 = vmul.f32 %v8713, 0.5
    %v8717 = vadd.f32 %v8714, 0.5
    %v8718 = vadd.f32 %v8715, 0.5
    %v8719 = vadd.f32 %v8716, 0.5
    %v8720 = vmul.f32 %v8693, 0.5
    %v8721 = vmul.f32 %v8694, 0.5
    %v8722 = vmul.f32 %v8695, 0.5
    %v8723 = vtanh.pop %v8720
    %v8724 = vtanh.pop %v8721
    %v8725 = vtanh.pop %v8722
    %v8726 = vmul.f32 %v8723, 0.5
    %v8727 = vmul.f32 %v8724, 0.5
    %v8728 = vmul.f32 %v8725, 0.5
    %v8729 = vadd.f32 %v8726, 0.5
    %v8730 = vadd.f32 %v8727, 0.5
    %v8731 = vadd.f32 %v8728, 0.5
    %v8732 = vtanh.pop %v8690
    %v8733 = vtanh.pop %v8691
    %v8734 = vtanh.pop %v8692
    %v8735 = vmul.f32 %v8717, %v8156
    %v8736 = vmul.f32 %v8718, %v8157
    %v8737 = vmul.f32 %v8719, %v8158
    %v8738 = vmul.f32 %v8705, %v8732
    %v8739 = vmul.f32 %v8706, %v8733
    %v8740 = vmul.f32 %v8707, %v8734
    %v8741 = vadd.f32 %v8735, %v8738
    %v8742 = vadd.f32 %v8736, %v8739
    %v8743 = vadd.f32 %v8737, %v8740
    %v8744 = vtanh.pop %v8741
    %v8745 = vtanh.pop %v8742
    %v8746 = vtanh.pop %v8743
    %v8747 = vmul.f32 %v8729, %v8744
    %v8748 = vmul.f32 %v8730, %v8745
    %v8749 = vmul.f32 %v8731, %v8746
    %vm8750 = vcmp.eq.s32.totalorder %v2938, 6
    %v8751 = vsel %vm8750, 1, 0
    %8752 = vset.pattern.permute.xlu0 0
    %8753 = vperm.xlu0 %8752, %v8751
    %v8754 = vpop.permute.xlu0 %8753
    %vm8755 = vcmp.eq.s32.totalorder %v8754, 1
    %v8756 = vsel %vm8755, %v8747, %v8171
    %v8757 = vsel %vm8755, %v8748, %v8172
    %v8758 = vsel %vm8755, %v8749, %v8173
    %s8759 = smul.u32 7, 12
    %s8760 = smul.addr %s8759, 8
    %s8761 = scalar_lea.vmem [#allocation2], %s8760
    %v8762 = vld [vmem:[%s8761] sm:$0xff]
    %v8763 = vld [vmem:[%s8761 + $0x8] sm:$0xff]
    %v8764 = vld [vmem:[%s8761 + $0x10] sm:$0xff]
    %v8765 = vld [vmem:[%s8761 + $0x18] sm:$0xff]
    %v8766 = vld [vmem:[%s8761 + $0x20] sm:$0xff]
    %v8767 = vld [vmem:[%s8761 + $0x28] sm:$0xff]
    %v8768 = vld [vmem:[%s8761 + $0x30] sm:$0xff]
    %v8769 = vld [vmem:[%s8761 + $0x38] sm:$0xff]
    %v8770 = vld [vmem:[%s8761 + $0x40] sm:$0xff]
    %v8771 = vld [vmem:[%s8761 + $0x48] sm:$0xff]
    %v8772 = vld [vmem:[%s8761 + $0x50] sm:$0xff]
    %v8773 = vld [vmem:[%s8761 + $0x58] sm:$0xff]
    %v8774 = vpack.c.bf16 %v8747, %v8747
    %v8775 = vpack.c.bf16 %v8748, %v8748
    %v8776 = vpack.c.bf16 %v8749, %v8749
    %8777 = vmatprep.subr.bf16.mxu0 %v4191
    %8778 = vmatpush1.bf16.msra.mxu0 %v4190
    %8779 = vmatprep.subr.bf16.mxu0 %v4179
    %8780 = vmatpush1.bf16.msra.mxu0 %v4178
    %8781 = vmatprep.subr.bf16.mxu0 %v4167
    %8782 = vmatpush1.bf16.msra.mxu0 %v4166
    %8783 = vmatprep.subr.bf16.mxu0 %v4155
    %8784 = vmatpush1.bf16.msra.mxu0 %v4154
    %8785 = vmatprep.subr.bf16.mxu0 %v4143
    %8786 = vmatpush1.bf16.msra.mxu0 %v4142
    %8787 = vmatprep.subr.bf16.mxu0 %v4131
    %8788 = vmatpush1.bf16.msra.mxu0 %v4130
    %8789 = vmatprep.subr.bf16.mxu0 %v4119
    %8790 = vmatpush1.bf16.msra.mxu0 %v4118
    %8791 = vmatprep.subr.bf16.mxu0 %v4107
    %8792 = vmatpush1.bf16.msra.mxu0 %v4106
    %8793 = vmatprep.subr.bf16.mxu0 %v4287
    %8794 = vmatpush2.bf16.msra.mxu0 %v4286
    %8795 = vmatprep.subr.bf16.mxu0 %v4275
    %8796 = vmatpush2.bf16.msra.mxu0 %v4274
    %8797 = vmatprep.subr.bf16.mxu0 %v4263
    %8798 = vmatpush2.bf16.msra.mxu0 %v4262
    %8799 = vmatprep.subr.bf16.mxu0 %v4251
    %8800 = vmatpush2.bf16.msra.mxu0 %v4250
    %8801 = vmatprep.subr.bf16.mxu0 %v4239
    %8802 = vmatpush2.bf16.msra.mxu0 %v4238
    %8803 = vmatprep.subr.bf16.mxu0 %v4227
    %8804 = vmatpush2.bf16.msra.mxu0 %v4226
    %8805 = vmatprep.subr.bf16.mxu0 %v4215
    %8806 = vmatpush2.bf16.msra.mxu0 %v4214
    %8807 = vmatprep.subr.bf16.mxu0 %v4203
    %8808 = vmatpush2.bf16.msra.mxu0 %v4202
    %8809 = vmatprep.mubr.bf16.mxu0 %v8775
    %8810 = vmatmul.mubr.bf16.gmra.mxu0 %v8774
    %v8811 = vpop.f32.mrf.mxu0
    %v8812 = vadd.f32 0.0, %v8811
    %v8813 = vpop.f32.mrf.mxu0
    %v8814 = vadd.f32 0.0, %v8813
    %v8815 = vpop.f32.mrf.mxu0
    %v8816 = vpop.f32.mrf.mxu0
    %8817 = vdwg.mxu0
    %8818 = vmatprep.subr.bf16.mxu0 %v4383
    %8819 = vmatpush1.bf16.msra.mxu0 %v4382
    %8820 = vmatprep.subr.bf16.mxu0 %v4371
    %8821 = vmatpush1.bf16.msra.mxu0 %v4370
    %8822 = vmatprep.subr.bf16.mxu0 %v4359
    %8823 = vmatpush1.bf16.msra.mxu0 %v4358
    %8824 = vmatprep.subr.bf16.mxu0 %v4347
    %8825 = vmatpush1.bf16.msra.mxu0 %v4346
    %8826 = vmatprep.subr.bf16.mxu0 %v4335
    %8827 = vmatpush1.bf16.msra.mxu0 %v4334
    %8828 = vmatprep.subr.bf16.mxu0 %v4323
    %8829 = vmatpush1.bf16.msra.mxu0 %v4322
    %8830 = vmatprep.subr.bf16.mxu0 %v4311
    %8831 = vmatpush1.bf16.msra.mxu0 %v4310
    %8832 = vmatprep.subr.bf16.mxu0 %v4299
    %8833 = vmatpush1.bf16.msra.mxu0 %v4298
    %8834 = vmatprep.subr.bf16.mxu0 0
    %8835 = vmatpush2.bf16.msra.mxu0 0
    %8836 = vmatprep.subr.bf16.mxu0 0
    %8837 = vmatpush2.bf16.msra.mxu0 0
    %8838 = vmatprep.subr.bf16.mxu0 0
    %8839 = vmatpush2.bf16.msra.mxu0 0
    %8840 = vmatprep.subr.bf16.mxu0 0
    %8841 = vmatpush2.bf16.msra.mxu0 0
    %8842 = vmatprep.subr.bf16.mxu0 0
    %8843 = vmatpush2.bf16.msra.mxu0 0
    %8844 = vmatprep.subr.bf16.mxu0 0
    %8845 = vmatpush2.bf16.msra.mxu0 0
    %8846 = vmatprep.subr.bf16.mxu0 0
    %8847 = vmatpush2.bf16.msra.mxu0 0
    %8848 = vmatprep.subr.bf16.mxu0 0
    %8849 = vmatpush2.bf16.msra.mxu0 0
    %8850 = vmatprep.mubr.bf16.mxu0 0
    %8851 = vmatmul.mubr.bf16.gmra.mxu0 %v8776
    %v8852 = vpop.f32.mrf.mxu0
    %v8853 = vadd.f32 %v8812, %v8852
    %v8854 = vpop.f32.mrf.mxu0
    %v8855 = vadd.f32 %v8814, %v8854
    %v8856 = vpop.f32.mrf.mxu0
    %v8857 = vpop.f32.mrf.mxu0
    %8858 = vdwg.mxu0
    %8859 = vmatprep.subr.bf16.mxu0 %v4193
    %8860 = vmatpush1.bf16.msra.mxu0 %v4192
    %8861 = vmatprep.subr.bf16.mxu0 %v4181
    %8862 = vmatpush1.bf16.msra.mxu0 %v4180
    %8863 = vmatprep.subr.bf16.mxu0 %v4169
    %8864 = vmatpush1.bf16.msra.mxu0 %v4168
    %8865 = vmatprep.subr.bf16.mxu0 %v4157
    %8866 = vmatpush1.bf16.msra.mxu0 %v4156
    %8867 = vmatprep.subr.bf16.mxu0 %v4145
    %8868 = vmatpush1.bf16.msra.mxu0 %v4144
    %8869 = vmatprep.subr.bf16.mxu0 %v4133
    %8870 = vmatpush1.bf16.msra.mxu0 %v4132
    %8871 = vmatprep.subr.bf16.mxu0 %v4121
    %8872 = vmatpush1.bf16.msra.mxu0 %v4120
    %8873 = vmatprep.subr.bf16.mxu0 %v4109
    %8874 = vmatpush1.bf16.msra.mxu0 %v4108
    %8875 = vmatprep.subr.bf16.mxu0 %v4289
    %8876 = vmatpush2.bf16.msra.mxu0 %v4288
    %8877 = vmatprep.subr.bf16.mxu0 %v4277
    %8878 = vmatpush2.bf16.msra.mxu0 %v4276
    %8879 = vmatprep.subr.bf16.mxu0 %v4265
    %8880 = vmatpush2.bf16.msra.mxu0 %v4264
    %8881 = vmatprep.subr.bf16.mxu0 %v4253
    %8882 = vmatpush2.bf16.msra.mxu0 %v4252
    %8883 = vmatprep.subr.bf16.mxu0 %v4241
    %8884 = vmatpush2.bf16.msra.mxu0 %v4240
    %8885 = vmatprep.subr.bf16.mxu0 %v4229
    %8886 = vmatpush2.bf16.msra.mxu0 %v4228
    %8887 = vmatprep.subr.bf16.mxu0 %v4217
    %8888 = vmatpush2.bf16.msra.mxu0 %v4216
    %8889 = vmatprep.subr.bf16.mxu0 %v4205
    %8890 = vmatpush2.bf16.msra.mxu0 %v4204
    %8891 = vmatprep.mubr.bf16.mxu0 %v8775
    %8892 = vmatmul.mubr.bf16.gmra.mxu0 %v8774
    %v8893 = vpop.f32.mrf.mxu0
    %v8894 = vadd.f32 0.0, %v8893
    %v8895 = vpop.f32.mrf.mxu0
    %v8896 = vadd.f32 0.0, %v8895
    %v8897 = vpop.f32.mrf.mxu0
    %v8898 = vpop.f32.mrf.mxu0
    %8899 = vdwg.mxu0
    %8900 = vmatprep.subr.bf16.mxu0 %v4385
    %8901 = vmatpush1.bf16.msra.mxu0 %v4384
    %8902 = vmatprep.subr.bf16.mxu0 %v4373
    %8903 = vmatpush1.bf16.msra.mxu0 %v4372
    %8904 = vmatprep.subr.bf16.mxu0 %v4361
    %8905 = vmatpush1.bf16.msra.mxu0 %v4360
    %8906 = vmatprep.subr.bf16.mxu0 %v4349
    %8907 = vmatpush1.bf16.msra.mxu0 %v4348
    %8908 = vmatprep.subr.bf16.mxu0 %v4337
    %8909 = vmatpush1.bf16.msra.mxu0 %v4336
    %8910 = vmatprep.subr.bf16.mxu0 %v4325
    %8911 = vmatpush1.bf16.msra.mxu0 %v4324
    %8912 = vmatprep.subr.bf16.mxu0 %v4313
    %8913 = vmatpush1.bf16.msra.mxu0 %v4312
    %8914 = vmatprep.subr.bf16.mxu0 %v4301
    %8915 = vmatpush1.bf16.msra.mxu0 %v4300
    %8916 = vmatprep.subr.bf16.mxu0 0
    %8917 = vmatpush2.bf16.msra.mxu0 0
    %8918 = vmatprep.subr.bf16.mxu0 0
    %8919 = vmatpush2.bf16.msra.mxu0 0
    %8920 = vmatprep.subr.bf16.mxu0 0
    %8921 = vmatpush2.bf16.msra.mxu0 0
    %8922 = vmatprep.subr.bf16.mxu0 0
    %8923 = vmatpush2.bf16.msra.mxu0 0
    %8924 = vmatprep.subr.bf16.mxu0 0
    %8925 = vmatpush2.bf16.msra.mxu0 0
    %8926 = vmatprep.subr.bf16.mxu0 0
    %8927 = vmatpush2.bf16.msra.mxu0 0
    %8928 = vmatprep.subr.bf16.mxu0 0
    %8929 = vmatpush2.bf16.msra.mxu0 0
    %8930 = vmatprep.subr.bf16.mxu0 0
    %8931 = vmatpush2.bf16.msra.mxu0 0
    %8932 = vmatprep.mubr.bf16.mxu0 0
    %8933 = vmatmul.mubr.bf16.gmra.mxu0 %v8776
    %v8934 = vpop.f32.mrf.mxu0
    %v8935 = vadd.f32 %v8894, %v8934
    %v8936 = vpop.f32.mrf.mxu0
    %v8937 = vadd.f32 %v8896, %v8936
    %v8938 = vpop.f32.mrf.mxu0
    %v8939 = vpop.f32.mrf.mxu0
    %8940 = vdwg.mxu0
    %8941 = vmatprep.subr.bf16.mxu0 %v4195
    %8942 = vmatpush1.bf16.msra.mxu0 %v4194
    %8943 = vmatprep.subr.bf16.mxu0 %v4183
    %8944 = vmatpush1.bf16.msra.mxu0 %v4182
    %8945 = vmatprep.subr.bf16.mxu0 %v4171
    %8946 = vmatpush1.bf16.msra.mxu0 %v4170
    %8947 = vmatprep.subr.bf16.mxu0 %v4159
    %8948 = vmatpush1.bf16.msra.mxu0 %v4158
    %8949 = vmatprep.subr.bf16.mxu0 %v4147
    %8950 = vmatpush1.bf16.msra.mxu0 %v4146
    %8951 = vmatprep.subr.bf16.mxu0 %v4135
    %8952 = vmatpush1.bf16.msra.mxu0 %v4134
    %8953 = vmatprep.subr.bf16.mxu0 %v4123
    %8954 = vmatpush1.bf16.msra.mxu0 %v4122
    %8955 = vmatprep.subr.bf16.mxu0 %v4111
    %8956 = vmatpush1.bf16.msra.mxu0 %v4110
    %8957 = vmatprep.subr.bf16.mxu0 %v4291
    %8958 = vmatpush2.bf16.msra.mxu0 %v4290
    %8959 = vmatprep.subr.bf16.mxu0 %v4279
    %8960 = vmatpush2.bf16.msra.mxu0 %v4278
    %8961 = vmatprep.subr.bf16.mxu0 %v4267
    %8962 = vmatpush2.bf16.msra.mxu0 %v4266
    %8963 = vmatprep.subr.bf16.mxu0 %v4255
    %8964 = vmatpush2.bf16.msra.mxu0 %v4254
    %8965 = vmatprep.subr.bf16.mxu0 %v4243
    %8966 = vmatpush2.bf16.msra.mxu0 %v4242
    %8967 = vmatprep.subr.bf16.mxu0 %v4231
    %8968 = vmatpush2.bf16.msra.mxu0 %v4230
    %8969 = vmatprep.subr.bf16.mxu0 %v4219
    %8970 = vmatpush2.bf16.msra.mxu0 %v4218
    %8971 = vmatprep.subr.bf16.mxu0 %v4207
    %8972 = vmatpush2.bf16.msra.mxu0 %v4206
    %8973 = vmatprep.mubr.bf16.mxu0 %v8775
    %8974 = vmatmul.mubr.bf16.gmra.mxu0 %v8774
    %v8975 = vpop.f32.mrf.mxu0
    %v8976 = vadd.f32 0.0, %v8975
    %v8977 = vpop.f32.mrf.mxu0
    %v8978 = vadd.f32 0.0, %v8977
    %v8979 = vpop.f32.mrf.mxu0
    %v8980 = vpop.f32.mrf.mxu0
    %8981 = vdwg.mxu0
    %8982 = vmatprep.subr.bf16.mxu0 %v4387
    %8983 = vmatpush1.bf16.msra.mxu0 %v4386
    %8984 = vmatprep.subr.bf16.mxu0 %v4375
    %8985 = vmatpush1.bf16.msra.mxu0 %v4374
    %8986 = vmatprep.subr.bf16.mxu0 %v4363
    %8987 = vmatpush1.bf16.msra.mxu0 %v4362
    %8988 = vmatprep.subr.bf16.mxu0 %v4351
    %8989 = vmatpush1.bf16.msra.mxu0 %v4350
    %8990 = vmatprep.subr.bf16.mxu0 %v4339
    %8991 = vmatpush1.bf16.msra.mxu0 %v4338
    %8992 = vmatprep.subr.bf16.mxu0 %v4327
    %8993 = vmatpush1.bf16.msra.mxu0 %v4326
    %8994 = vmatprep.subr.bf16.mxu0 %v4315
    %8995 = vmatpush1.bf16.msra.mxu0 %v4314
    %8996 = vmatprep.subr.bf16.mxu0 %v4303
    %8997 = vmatpush1.bf16.msra.mxu0 %v4302
    %8998 = vmatprep.subr.bf16.mxu0 0
    %8999 = vmatpush2.bf16.msra.mxu0 0
    %9000 = vmatprep.subr.bf16.mxu0 0
    %9001 = vmatpush2.bf16.msra.mxu0 0
    %9002 = vmatprep.subr.bf16.mxu0 0
    %9003 = vmatpush2.bf16.msra.mxu0 0
    %9004 = vmatprep.subr.bf16.mxu0 0
    %9005 = vmatpush2.bf16.msra.mxu0 0
    %9006 = vmatprep.subr.bf16.mxu0 0
    %9007 = vmatpush2.bf16.msra.mxu0 0
    %9008 = vmatprep.subr.bf16.mxu0 0
    %9009 = vmatpush2.bf16.msra.mxu0 0
    %9010 = vmatprep.subr.bf16.mxu0 0
    %9011 = vmatpush2.bf16.msra.mxu0 0
    %9012 = vmatprep.subr.bf16.mxu0 0
    %9013 = vmatpush2.bf16.msra.mxu0 0
    %9014 = vmatprep.mubr.bf16.mxu0 0
    %9015 = vmatmul.mubr.bf16.gmra.mxu0 %v8776
    %v9016 = vpop.f32.mrf.mxu0
    %v9017 = vadd.f32 %v8976, %v9016
    %v9018 = vpop.f32.mrf.mxu0
    %v9019 = vadd.f32 %v8978, %v9018
    %v9020 = vpop.f32.mrf.mxu0
    %v9021 = vpop.f32.mrf.mxu0
    %9022 = vdwg.mxu0
    %9023 = vmatprep.subr.bf16.mxu0 %v4197
    %9024 = vmatpush1.bf16.msra.mxu0 %v4196
    %9025 = vmatprep.subr.bf16.mxu0 %v4185
    %9026 = vmatpush1.bf16.msra.mxu0 %v4184
    %9027 = vmatprep.subr.bf16.mxu0 %v4173
    %9028 = vmatpush1.bf16.msra.mxu0 %v4172
    %9029 = vmatprep.subr.bf16.mxu0 %v4161
    %9030 = vmatpush1.bf16.msra.mxu0 %v4160
    %9031 = vmatprep.subr.bf16.mxu0 %v4149
    %9032 = vmatpush1.bf16.msra.mxu0 %v4148
    %9033 = vmatprep.subr.bf16.mxu0 %v4137
    %9034 = vmatpush1.bf16.msra.mxu0 %v4136
    %9035 = vmatprep.subr.bf16.mxu0 %v4125
    %9036 = vmatpush1.bf16.msra.mxu0 %v4124
    %9037 = vmatprep.subr.bf16.mxu0 %v4113
    %9038 = vmatpush1.bf16.msra.mxu0 %v4112
    %9039 = vmatprep.subr.bf16.mxu0 %v4293
    %9040 = vmatpush2.bf16.msra.mxu0 %v4292
    %9041 = vmatprep.subr.bf16.mxu0 %v4281
    %9042 = vmatpush2.bf16.msra.mxu0 %v4280
    %9043 = vmatprep.subr.bf16.mxu0 %v4269
    %9044 = vmatpush2.bf16.msra.mxu0 %v4268
    %9045 = vmatprep.subr.bf16.mxu0 %v4257
    %9046 = vmatpush2.bf16.msra.mxu0 %v4256
    %9047 = vmatprep.subr.bf16.mxu0 %v4245
    %9048 = vmatpush2.bf16.msra.mxu0 %v4244
    %9049 = vmatprep.subr.bf16.mxu0 %v4233
    %9050 = vmatpush2.bf16.msra.mxu0 %v4232
    %9051 = vmatprep.subr.bf16.mxu0 %v4221
    %9052 = vmatpush2.bf16.msra.mxu0 %v4220
    %9053 = vmatprep.subr.bf16.mxu0 %v4209
    %9054 = vmatpush2.bf16.msra.mxu0 %v4208
    %9055 = vmatprep.mubr.bf16.mxu0 %v8775
    %9056 = vmatmul.mubr.bf16.gmra.mxu0 %v8774
    %v9057 = vpop.f32.mrf.mxu0
    %v9058 = vadd.f32 0.0, %v9057
    %v9059 = vpop.f32.mrf.mxu0
    %v9060 = vadd.f32 0.0, %v9059
    %v9061 = vpop.f32.mrf.mxu0
    %v9062 = vpop.f32.mrf.mxu0
    %9063 = vdwg.mxu0
    %9064 = vmatprep.subr.bf16.mxu0 %v4389
    %9065 = vmatpush1.bf16.msra.mxu0 %v4388
    %9066 = vmatprep.subr.bf16.mxu0 %v4377
    %9067 = vmatpush1.bf16.msra.mxu0 %v4376
    %9068 = vmatprep.subr.bf16.mxu0 %v4365
    %9069 = vmatpush1.bf16.msra.mxu0 %v4364
    %9070 = vmatprep.subr.bf16.mxu0 %v4353
    %9071 = vmatpush1.bf16.msra.mxu0 %v4352
    %9072 = vmatprep.subr.bf16.mxu0 %v4341
    %9073 = vmatpush1.bf16.msra.mxu0 %v4340
    %9074 = vmatprep.subr.bf16.mxu0 %v4329
    %9075 = vmatpush1.bf16.msra.mxu0 %v4328
    %9076 = vmatprep.subr.bf16.mxu0 %v4317
    %9077 = vmatpush1.bf16.msra.mxu0 %v4316
    %9078 = vmatprep.subr.bf16.mxu0 %v4305
    %9079 = vmatpush1.bf16.msra.mxu0 %v4304
    %9080 = vmatprep.subr.bf16.mxu0 0
    %9081 = vmatpush2.bf16.msra.mxu0 0
    %9082 = vmatprep.subr.bf16.mxu0 0
    %9083 = vmatpush2.bf16.msra.mxu0 0
    %9084 = vmatprep.subr.bf16.mxu0 0
    %9085 = vmatpush2.bf16.msra.mxu0 0
    %9086 = vmatprep.subr.bf16.mxu0 0
    %9087 = vmatpush2.bf16.msra.mxu0 0
    %9088 = vmatprep.subr.bf16.mxu0 0
    %9089 = vmatpush2.bf16.msra.mxu0 0
    %9090 = vmatprep.subr.bf16.mxu0 0
    %9091 = vmatpush2.bf16.msra.mxu0 0
    %9092 = vmatprep.subr.bf16.mxu0 0
    %9093 = vmatpush2.bf16.msra.mxu0 0
    %9094 = vmatprep.subr.bf16.mxu0 0
    %9095 = vmatpush2.bf16.msra.mxu0 0
    %9096 = vmatprep.mubr.bf16.mxu0 0
    %9097 = vmatmul.mubr.bf16.gmra.mxu0 %v8776
    %v9098 = vpop.f32.mrf.mxu0
    %v9099 = vadd.f32 %v9058, %v9098
    %v9100 = vpop.f32.mrf.mxu0
    %v9101 = vadd.f32 %v9060, %v9100
    %v9102 = vpop.f32.mrf.mxu0
    %v9103 = vpop.f32.mrf.mxu0
    %9104 = vdwg.mxu0
    %9105 = vmatprep.subr.bf16.mxu0 %v4199
    %9106 = vmatpush1.bf16.msra.mxu0 %v4198
    %9107 = vmatprep.subr.bf16.mxu0 %v4187
    %9108 = vmatpush1.bf16.msra.mxu0 %v4186
    %9109 = vmatprep.subr.bf16.mxu0 %v4175
    %9110 = vmatpush1.bf16.msra.mxu0 %v4174
    %9111 = vmatprep.subr.bf16.mxu0 %v4163
    %9112 = vmatpush1.bf16.msra.mxu0 %v4162
    %9113 = vmatprep.subr.bf16.mxu0 %v4151
    %9114 = vmatpush1.bf16.msra.mxu0 %v4150
    %9115 = vmatprep.subr.bf16.mxu0 %v4139
    %9116 = vmatpush1.bf16.msra.mxu0 %v4138
    %9117 = vmatprep.subr.bf16.mxu0 %v4127
    %9118 = vmatpush1.bf16.msra.mxu0 %v4126
    %9119 = vmatprep.subr.bf16.mxu0 %v4115
    %9120 = vmatpush1.bf16.msra.mxu0 %v4114
    %9121 = vmatprep.subr.bf16.mxu0 %v4295
    %9122 = vmatpush2.bf16.msra.mxu0 %v4294
    %9123 = vmatprep.subr.bf16.mxu0 %v4283
    %9124 = vmatpush2.bf16.msra.mxu0 %v4282
    %9125 = vmatprep.subr.bf16.mxu0 %v4271
    %9126 = vmatpush2.bf16.msra.mxu0 %v4270
    %9127 = vmatprep.subr.bf16.mxu0 %v4259
    %9128 = vmatpush2.bf16.msra.mxu0 %v4258
    %9129 = vmatprep.subr.bf16.mxu0 %v4247
    %9130 = vmatpush2.bf16.msra.mxu0 %v4246
    %9131 = vmatprep.subr.bf16.mxu0 %v4235
    %9132 = vmatpush2.bf16.msra.mxu0 %v4234
    %9133 = vmatprep.subr.bf16.mxu0 %v4223
    %9134 = vmatpush2.bf16.msra.mxu0 %v4222
    %9135 = vmatprep.subr.bf16.mxu0 %v4211
    %9136 = vmatpush2.bf16.msra.mxu0 %v4210
    %9137 = vmatprep.mubr.bf16.mxu0 %v8775
    %9138 = vmatmul.mubr.bf16.gmra.mxu0 %v8774
    %v9139 = vpop.f32.mrf.mxu0
    %v9140 = vadd.f32 0.0, %v9139
    %v9141 = vpop.f32.mrf.mxu0
    %v9142 = vadd.f32 0.0, %v9141
    %v9143 = vpop.f32.mrf.mxu0
    %v9144 = vpop.f32.mrf.mxu0
    %9145 = vdwg.mxu0
    %9146 = vmatprep.subr.bf16.mxu0 %v4391
    %9147 = vmatpush1.bf16.msra.mxu0 %v4390
    %9148 = vmatprep.subr.bf16.mxu0 %v4379
    %9149 = vmatpush1.bf16.msra.mxu0 %v4378
    %9150 = vmatprep.subr.bf16.mxu0 %v4367
    %9151 = vmatpush1.bf16.msra.mxu0 %v4366
    %9152 = vmatprep.subr.bf16.mxu0 %v4355
    %9153 = vmatpush1.bf16.msra.mxu0 %v4354
    %9154 = vmatprep.subr.bf16.mxu0 %v4343
    %9155 = vmatpush1.bf16.msra.mxu0 %v4342
    %9156 = vmatprep.subr.bf16.mxu0 %v4331
    %9157 = vmatpush1.bf16.msra.mxu0 %v4330
    %9158 = vmatprep.subr.bf16.mxu0 %v4319
    %9159 = vmatpush1.bf16.msra.mxu0 %v4318
    %9160 = vmatprep.subr.bf16.mxu0 %v4307
    %9161 = vmatpush1.bf16.msra.mxu0 %v4306
    %9162 = vmatprep.subr.bf16.mxu0 0
    %9163 = vmatpush2.bf16.msra.mxu0 0
    %9164 = vmatprep.subr.bf16.mxu0 0
    %9165 = vmatpush2.bf16.msra.mxu0 0
    %9166 = vmatprep.subr.bf16.mxu0 0
    %9167 = vmatpush2.bf16.msra.mxu0 0
    %9168 = vmatprep.subr.bf16.mxu0 0
    %9169 = vmatpush2.bf16.msra.mxu0 0
    %9170 = vmatprep.subr.bf16.mxu0 0
    %9171 = vmatpush2.bf16.msra.mxu0 0
    %9172 = vmatprep.subr.bf16.mxu0 0
    %9173 = vmatpush2.bf16.msra.mxu0 0
    %9174 = vmatprep.subr.bf16.mxu0 0
    %9175 = vmatpush2.bf16.msra.mxu0 0
    %9176 = vmatprep.subr.bf16.mxu0 0
    %9177 = vmatpush2.bf16.msra.mxu0 0
    %9178 = vmatprep.mubr.bf16.mxu0 0
    %9179 = vmatmul.mubr.bf16.gmra.mxu0 %v8776
    %v9180 = vpop.f32.mrf.mxu0
    %v9181 = vadd.f32 %v9140, %v9180
    %v9182 = vpop.f32.mrf.mxu0
    %v9183 = vadd.f32 %v9142, %v9182
    %v9184 = vpop.f32.mrf.mxu0
    %v9185 = vpop.f32.mrf.mxu0
    %9186 = vdwg.mxu0
    %9187 = vmatprep.subr.bf16.mxu0 %v4201
    %9188 = vmatpush1.bf16.msra.mxu0 %v4200
    %9189 = vmatprep.subr.bf16.mxu0 %v4189
    %9190 = vmatpush1.bf16.msra.mxu0 %v4188
    %9191 = vmatprep.subr.bf16.mxu0 %v4177
    %9192 = vmatpush1.bf16.msra.mxu0 %v4176
    %9193 = vmatprep.subr.bf16.mxu0 %v4165
    %9194 = vmatpush1.bf16.msra.mxu0 %v4164
    %9195 = vmatprep.subr.bf16.mxu0 %v4153
    %9196 = vmatpush1.bf16.msra.mxu0 %v4152
    %9197 = vmatprep.subr.bf16.mxu0 %v4141
    %9198 = vmatpush1.bf16.msra.mxu0 %v4140
    %9199 = vmatprep.subr.bf16.mxu0 %v4129
    %9200 = vmatpush1.bf16.msra.mxu0 %v4128
    %9201 = vmatprep.subr.bf16.mxu0 %v4117
    %9202 = vmatpush1.bf16.msra.mxu0 %v4116
    %9203 = vmatprep.subr.bf16.mxu0 %v4297
    %9204 = vmatpush2.bf16.msra.mxu0 %v4296
    %9205 = vmatprep.subr.bf16.mxu0 %v4285
    %9206 = vmatpush2.bf16.msra.mxu0 %v4284
    %9207 = vmatprep.subr.bf16.mxu0 %v4273
    %9208 = vmatpush2.bf16.msra.mxu0 %v4272
    %9209 = vmatprep.subr.bf16.mxu0 %v4261
    %9210 = vmatpush2.bf16.msra.mxu0 %v4260
    %9211 = vmatprep.subr.bf16.mxu0 %v4249
    %9212 = vmatpush2.bf16.msra.mxu0 %v4248
    %9213 = vmatprep.subr.bf16.mxu0 %v4237
    %9214 = vmatpush2.bf16.msra.mxu0 %v4236
    %9215 = vmatprep.subr.bf16.mxu0 %v4225
    %9216 = vmatpush2.bf16.msra.mxu0 %v4224
    %9217 = vmatprep.subr.bf16.mxu0 %v4213
    %9218 = vmatpush2.bf16.msra.mxu0 %v4212
    %9219 = vmatprep.mubr.bf16.mxu0 %v8775
    %9220 = vmatmul.mubr.bf16.gmra.mxu0 %v8774
    %v9221 = vpop.f32.mrf.mxu0
    %v9222 = vadd.f32 0.0, %v9221
    %v9223 = vpop.f32.mrf.mxu0
    %v9224 = vadd.f32 0.0, %v9223
    %v9225 = vpop.f32.mrf.mxu0
    %v9226 = vpop.f32.mrf.mxu0
    %9227 = vdwg.mxu0
    %9228 = vmatprep.subr.bf16.mxu0 %v4393
    %9229 = vmatpush1.bf16.msra.mxu0 %v4392
    %9230 = vmatprep.subr.bf16.mxu0 %v4381
    %9231 = vmatpush1.bf16.msra.mxu0 %v4380
    %9232 = vmatprep.subr.bf16.mxu0 %v4369
    %9233 = vmatpush1.bf16.msra.mxu0 %v4368
    %9234 = vmatprep.subr.bf16.mxu0 %v4357
    %9235 = vmatpush1.bf16.msra.mxu0 %v4356
    %9236 = vmatprep.subr.bf16.mxu0 %v4345
    %9237 = vmatpush1.bf16.msra.mxu0 %v4344
    %9238 = vmatprep.subr.bf16.mxu0 %v4333
    %9239 = vmatpush1.bf16.msra.mxu0 %v4332
    %9240 = vmatprep.subr.bf16.mxu0 %v4321
    %9241 = vmatpush1.bf16.msra.mxu0 %v4320
    %9242 = vmatprep.subr.bf16.mxu0 %v4309
    %9243 = vmatpush1.bf16.msra.mxu0 %v4308
    %9244 = vmatprep.subr.bf16.mxu0 0
    %9245 = vmatpush2.bf16.msra.mxu0 0
    %9246 = vmatprep.subr.bf16.mxu0 0
    %9247 = vmatpush2.bf16.msra.mxu0 0
    %9248 = vmatprep.subr.bf16.mxu0 0
    %9249 = vmatpush2.bf16.msra.mxu0 0
    %9250 = vmatprep.subr.bf16.mxu0 0
    %9251 = vmatpush2.bf16.msra.mxu0 0
    %9252 = vmatprep.subr.bf16.mxu0 0
    %9253 = vmatpush2.bf16.msra.mxu0 0
    %9254 = vmatprep.subr.bf16.mxu0 0
    %9255 = vmatpush2.bf16.msra.mxu0 0
    %9256 = vmatprep.subr.bf16.mxu0 0
    %9257 = vmatpush2.bf16.msra.mxu0 0
    %9258 = vmatprep.subr.bf16.mxu0 0
    %9259 = vmatpush2.bf16.msra.mxu0 0
    %9260 = vmatprep.mubr.bf16.mxu0 0
    %9261 = vmatmul.mubr.bf16.gmra.mxu0 %v8776
    %v9262 = vpop.f32.mrf.mxu0
    %v9263 = vadd.f32 %v9222, %v9262
    %v9264 = vpop.f32.mrf.mxu0
    %v9265 = vadd.f32 %v9224, %v9264
    %v9266 = vpop.f32.mrf.mxu0
    %v9267 = vpop.f32.mrf.mxu0
    %9268 = vdwg.mxu0
    %v9269 = vadd.f32 %v8762, %v8853
    %v9270 = vadd.f32 %v8763, %v8855
    %v9271 = vadd.f32 %v8764, %v8935
    %v9272 = vadd.f32 %v8765, %v8937
    %v9273 = vadd.f32 %v8766, %v9017
    %v9274 = vadd.f32 %v8767, %v9019
    %v9275 = vadd.f32 %v8768, %v9099
    %v9276 = vadd.f32 %v8769, %v9101
    %v9277 = vadd.f32 %v8770, %v9181
    %v9278 = vadd.f32 %v8771, %v9183
    %v9279 = vadd.f32 %v8772, %v9263
    %v9280 = vadd.f32 %v8773, %v9265
    %v9281 = vmul.f32 %v9269, 0.5
    %v9282 = vmul.f32 %v9270, 0.5
    %v9283 = vmul.f32 %v9271, 0.5
    %v9284 = vtanh.pop %v9281
    %v9285 = vtanh.pop %v9282
    %v9286 = vtanh.pop %v9283
    %v9287 = vmul.f32 %v9284, 0.5
    %v9288 = vmul.f32 %v9285, 0.5
    %v9289 = vmul.f32 %v9286, 0.5
    %v9290 = vadd.f32 %v9287, 0.5
    %v9291 = vadd.f32 %v9288, 0.5
    %v9292 = vadd.f32 %v9289, 0.5
    %v9293 = vmul.f32 %v9272, 0.5
    %v9294 = vmul.f32 %v9273, 0.5
    %v9295 = vmul.f32 %v9274, 0.5
    %v9296 = vtanh.pop %v9293
    %v9297 = vtanh.pop %v9294
    %v9298 = vtanh.pop %v9295
    %v9299 = vmul.f32 %v9296, 0.5
    %v9300 = vmul.f32 %v9297, 0.5
    %v9301 = vmul.f32 %v9298, 0.5
    %v9302 = vadd.f32 %v9299, 0.5
    %v9303 = vadd.f32 %v9300, 0.5
    %v9304 = vadd.f32 %v9301, 0.5
    %v9305 = vmul.f32 %v9278, 0.5
    %v9306 = vmul.f32 %v9279, 0.5
    %v9307 = vmul.f32 %v9280, 0.5
    %v9308 = vtanh.pop %v9305
    %v9309 = vtanh.pop %v9306
    %v9310 = vtanh.pop %v9307
    %v9311 = vmul.f32 %v9308, 0.5
    %v9312 = vmul.f32 %v9309, 0.5
    %v9313 = vmul.f32 %v9310, 0.5
    %v9314 = vadd.f32 %v9311, 0.5
    %v9315 = vadd.f32 %v9312, 0.5
    %v9316 = vadd.f32 %v9313, 0.5
    %v9317 = vtanh.pop %v9275
    %v9318 = vtanh.pop %v9276
    %v9319 = vtanh.pop %v9277
    %v9320 = vmul.f32 %v9302, %v8741
    %v9321 = vmul.f32 %v9303, %v8742
    %v9322 = vmul.f32 %v9304, %v8743
    %v9323 = vmul.f32 %v9290, %v9317
    %v9324 = vmul.f32 %v9291, %v9318
    %v9325 = vmul.f32 %v9292, %v9319
    %v9326 = vadd.f32 %v9320, %v9323
    %v9327 = vadd.f32 %v9321, %v9324
    %v9328 = vadd.f32 %v9322, %v9325
    %v9329 = vtanh.pop %v9326
    %v9330 = vtanh.pop %v9327
    %v9331 = vtanh.pop %v9328
    %v9332 = vmul.f32 %v9314, %v9329
    %v9333 = vmul.f32 %v9315, %v9330
    %v9334 = vmul.f32 %v9316, %v9331
    %vm9335 = vcmp.eq.s32.totalorder %v2938, 7
    %v9336 = vsel %vm9335, 1, 0
    %9337 = vset.pattern.permute.xlu0 0
    %9338 = vperm.xlu0 %9337, %v9336
    %v9339 = vpop.permute.xlu0 %9338
    %vm9340 = vcmp.eq.s32.totalorder %v9339, 1
    %v9341 = vsel %vm9340, %v9332, %v8756
    %v9342 = vsel %vm9340, %v9333, %v8757
    %v9343 = vsel %vm9340, %v9334, %v8758
    %v9344 = vmax.f32 %v9341, 0.0
    %v9345 = vmax.f32 %v9342, 0.0
    %v9346 = vmax.f32 %v9343, 0.0
    %v9347 = vld [vmem:[#allocation11] sm:$0x7]
    %v9349 = vlaneseq
    %v9350 = vshrl.u32 %v9349, 7
    %v9351 = vsub.s32 0, %v9350
    %v9352 = vrot.slane %v9347, %v9351
    %v9353 = vlaneseq
    %v9354 = vshrl.u32 %v9353, 7
    %v9355 = vsub.s32 1, %v9354
    %v9356 = vrot.slane %v9347, %v9355
    %v9357 = vlaneseq
    %v9358 = vshrl.u32 %v9357, 7
    %v9359 = vsub.s32 2, %v9358
    %v9360 = vrot.slane %v9347, %v9359
    %v9364 = vmul.f32 %v9344, %v9352
    %v9365 = vmul.f32 %v9345, %v9356
    %v9366 = vmul.f32 %v9346, %v9360
    %v9367 = vadd.f32 %v9364, %v9365
    %v9368 = vadd.f32 %v9367, %v9366
    %9369 = vadd.xlane.f32.xlu0 %v9368
    %v9370 = vpop.xlane.xlu0 %9369
    %v9371 = vld [vmem:[#allocation3] sm:$0x1]
    %v9373 = vlaneseq
    %v9374 = vshrl.u32 %v9373, 7
    %v9375 = vsub.s32 0, %v9374
    %v9376 = vrot.slane %v9371, %v9375
    %v9378 = vadd.f32 %v9370, %v9376
    %vm9379 = vcmask 7168
    %9380 = vst.msk [vmem:[%s7] sm:$0xff] %vm9379, %v9378
    // Predicated region
    $region50: #{tpu_custom_call.1} parent=1 // pred_check
      _
    $region51: #{tpu_custom_call.1} parent=1 // pred_check_branch
      %9382 = sbr.rel (0) target = $region53
    $region52: #{tpu_custom_call.1} parent=1 // pred_region
      _
    $region53: #{tpu_custom_call.1} parent=1 // pred_fallthru
      _
    // Predicated region
    $region54: #{tpu_custom_call.1} parent=1 // pred_check
      _
    $region55: #{tpu_custom_call.1} parent=1 // pred_check_branch
      %9384 = sbr.rel (0) target = $region57
    $region56: #{tpu_custom_call.1} parent=1 // pred_region
      _
    $region57: #{tpu_custom_call.1} parent=1 // pred_fallthru
      _
    %9385 = vsyncpa [#allocation5], 1
    %9386 = vsyncpa [#allocation7], 1
    %9387 = vsyncpa [#allocation10], 1

</llo_original>
